<compile_context>
chip_gen: v7x
topology: tpu7x:2x2x1
jax: 0.10.0
libtpu: 0.0.40
codegen_flags: <defaults>
</compile_context>

<pallas_src>
import numpy as np
import jax
import jax.numpy as jnp
from jax import lax
from jax.experimental import pallas as pl
from jax.experimental.pallas import tpu as pltpu


# ----------------------------------------------------------------------------
# Host-side constant builders (baked into the kernel as small inputs).
# ----------------------------------------------------------------------------
def _interp_matrix_2x_align_corners(n):
    """(2n, n) matrix A with A @ v == 1-D bilinear 2x upsample (align_corners=True)."""
    m = 2 * n
    A = np.zeros((m, n), dtype=np.float32)
    if n == 1:
        A[:, 0] = 1.0
        return A
    scale = (n - 1) / (m - 1)
    for i in range(m):
        s = i * scale
        i0 = int(np.floor(s))
        i1 = min(i0 + 1, n - 1)
        f = s - i0
        A[i, i0] += 1.0 - f
        A[i, i1] += f
    return A


def _upsample_place_matrix(H1, W1, H2, W2):
    """(H1*W1, H2*W2) matrix M: (flat x1 frame) @ M == bilinear-2x upsampled frame,
    placed at the F.pad offsets inside a zero (H2, W2) canvas (row-major flattened)."""
    Ah = _interp_matrix_2x_align_corners(H1)          # (2H1, H1)
    Aw = _interp_matrix_2x_align_corners(W1)          # (2W1, W1)
    Mk = np.kron(Ah, Aw)                              # (2H1*2W1, H1*W1)
    pad_t = (H2 - 2 * H1) // 2
    pad_l = (W2 - 2 * W1) // 2
    M = np.zeros((H1 * W1, H2 * W2), dtype=np.float32)
    for i2 in range(2 * H1):
        r = pad_t + i2
        if not (0 <= r < H2):
            continue
        for j2 in range(2 * W1):
            c = pad_l + j2
            if not (0 <= c < W2):
                continue
            M[:, r * W2 + c] = Mk[i2 * (2 * W1) + j2, :]
    return M


def _tap_masks(H, W, n_rep):
    """(9, n_rep*H*W) 0/1 masks.  Tap k = (dy+1)*3 + (dx+1) is valid at output pixel
    (p, q) iff (p+dy, q+dx) lies inside the frame.  Tiled n_rep times along the lane
    axis (one copy per lane-stacked frame); the zeros also kill the wrap-around /
    cross-frame garbage produced by a full-lane-axis roll."""
    masks = np.zeros((9, H, W), dtype=np.float32)
    k = 0
    for dy in (-1, 0, 1):
        for dx in (-1, 0, 1):
            ys0, ys1 = max(0, -dy), min(H, H - dy)
            xs0, xs1 = max(0, -dx), min(W, W - dx)
            masks[k, ys0:ys1, xs0:xs1] = 1.0
            k += 1
    return np.tile(masks.reshape(9, H * W), (1, n_rep))


def fold_bn(gamma, beta, running_mean, running_var, eps=1e-5):
    # TODO(synk): eval-mode (running-stat) BatchNorm only; train-mode batch statistics
    # are not reproduced.
    scale = gamma / jnp.sqrt(running_var + eps)
    bias = beta - running_mean * scale
    return scale, bias


def _largest_divisor_leq(n, cap):
    for d in range(min(n, cap), 0, -1):
        if n % d == 0:
            return d
    return 1


# ----------------------------------------------------------------------------
# Fully fused Up.forward (single pallas_call).
# ----------------------------------------------------------------------------
def up_forward(x1, x2, params):
    """x1: [T, B, C1, H1, W1], x2: [T, B, C2, H2, W2].
    Conv weights in `params` are HWIO (PyTorch OIHW weights transposed (2,3,1,0));
    the input-channel axis of w1 is ordered [skip (C2), upsampled (C1)]."""
    T, B, C1, H1, W1 = x1.shape
    T2, B2, C2, H2, W2 = x2.shape
    assert (T, B) == (T2, B2)
    assert H2 >= 2 * H1 and W2 >= 2 * W1, "skip feature must be >= upsampled size"

    HW = H2 * W2
    H1W1 = H1 * W1
    Cin = C1 + C2

    w1 = params["w1"].astype(jnp.float32)   # (3, 3, Cin,  Cmid) HWIO
    w2 = params["w2"].astype(jnp.float32)   # (3, 3, Cmid, Cout)
    Cmid, Cout = w1.shape[-1], w2.shape[-1]
    assert w1.shape == (3, 3, Cin, Cmid) and w2.shape == (3, 3, Cmid, Cout)

    # ---- block sizes --------------------------------------------------------
    # Batch block lives on the lane axis (needs HW % 128 == 0 unless the block covers
    # the whole batch); keep >= 2 blocks on the parallel axis so both v7x TensorCores
    # get work.  Time block is unrolled inside the kernel (amortizes grid overhead).
    if HW % 128 != 0:
        B_blk = B
    elif B % 2 == 0:
        B_blk = _largest_divisor_leq(B // 2, 4)
    else:
        B_blk = _largest_divisor_leq(B, 4)
    T_blk = _largest_divisor_leq(T, 4)
    GB, GT = B // B_blk, T // T_blk
    LANE_N = B_blk * HW

    # ---- fold BN (eval-mode running stats) into the conv weights ------------
    s1, b1 = fold_bn(params["bn1_gamma"], params["bn1_beta"],
                     params["bn1_mean"], params["bn1_var"])
    s2, b2 = fold_bn(params["bn2_gamma"], params["bn2_beta"],
                     params["bn2_mean"], params["bn2_var"])
    w1f = w1 * s1[None, None, None, :]
    w2f = w2 * s2[None, None, None, :]
    # One im2col weight matrix per conv: W[o, k*Cin + c] = w[ky, kx, c, o], k = ky*3+kx
    w1_im = jnp.transpose(w1f, (3, 0, 1, 2)).reshape(Cmid, 9 * Cin)
    w2_im = jnp.transpose(w2f, (3, 0, 1, 2)).reshape(Cout, 9 * Cmid)
    # Bias pre-broadcast to full lane width -> plain full-vreg VPU add in the kernel.
    b1_full = jnp.broadcast_to(b1.astype(jnp.float32).reshape(Cmid, 1), (Cmid, LANE_N))
    b2_full = jnp.broadcast_to(b2.astype(jnp.float32).reshape(Cout, 1), (Cout, LANE_N))

    # ---- small host constants ------------------------------------------------
    mup = jnp.asarray(_upsample_place_matrix(H1, W1, H2, W2))     # (H1W1, HW)
    masks = jnp.asarray(_tap_masks(H2, W2, B_blk))                # (9, LANE_N)

    # ---- lane-dense input layouts (cheap one-time XLA transposes) ------------
    x1f = x1.astype(jnp.float32).reshape(T, B, C1, H1W1)
    x2f = (x2.astype(jnp.float32).reshape(T, B, C2, HW)
           .transpose(0, 2, 1, 3).reshape(T, C2, B * HW))

    # True-f32 matmuls so spike thresholding at exactly 1.0 matches the f32 reference.
    MXU_PREC = lax.Precision.HIGHEST

    def kernel(x1_ref, x2_ref, mup_ref, masks_ref, w1_ref, b1_ref, w2_ref, b2_ref,
               o_ref, v1_ref, v2_ref):
        @pl.when(pl.program_id(1) == 0)
        def _():
            # fresh membrane potentials at the start of each batch block's sequence
            v1_ref[...] = jnp.zeros_like(v1_ref)
            v2_ref[...] = jnp.zeros_like(v2_ref)

        def nine_taps(x):
            """im2col of lane-flattened frames: (C, LANE_N) -> (9*C, LANE_N).
            Tap k: roll the lane axis by -(dy*W2+dx) (XLU) and zero the out-of-frame
            positions with a 0/1 mask (VPU).  No MXU work, no HW^2 constants."""
            pieces = []
            for k in range(9):
                dy, dx = k // 3 - 1, k % 3 - 1
                s = dy * W2 + dx
                if s == 0:
                    pieces.append(x)                               # center tap
                else:
                    rolled = pltpu.roll(x, (-s) % LANE_N, axis=1)
                    pieces.append(rolled * masks_ref[k:k + 1, :])
            return jnp.concatenate(pieces, axis=0)

        for tt in range(T_blk):                                    # static time unroll
            # -- bilinear 2x + F.pad placement: one small matmul per batch sample ----
            ups = [jnp.dot(x1_ref[tt, bb], mup_ref[...],
                           precision=MXU_PREC, preferred_element_type=jnp.float32)
                   for bb in range(B_blk)]                         # each (C1, HW)
            up = ups[0] if B_blk == 1 else jnp.concatenate(ups, axis=1)
            # channel concat [skip, upsampled]  (== torch.cat([x2, x11], dim=1))
            x_in = jnp.concatenate([x2_ref[tt], up], axis=0)       # (Cin, LANE_N)

            # -- conv1 (BN folded): ONE im2col matmul + bias, fused IF neuron --------
            y1 = jnp.dot(w1_ref[...], nine_taps(x_in),
                         precision=MXU_PREC, preferred_element_type=jnp.float32)
            v1 = v1_ref[...] + y1 + b1_ref[...]
            sp1 = (v1 >= 1.0).astype(jnp.float32)
            v1_ref[...] = jnp.where(v1 >= 1.0, 0.0, v1)            # hard reset to 0

            # -- conv2 + IF neuron 2 --------------------------------------------------
            y2 = jnp.dot(w2_ref[...], nine_taps(sp1),
                         precision=MXU_PREC, preferred_element_type=jnp.float32)
            v2 = v2_ref[...] + y2 + b2_ref[...]
            sp2 = (v2 >= 1.0).astype(jnp.float32)
            v2_ref[...] = jnp.where(v2 >= 1.0, 0.0, v2)

            o_ref[tt] = sp2                                        # lane-dense store

    def _const(shape):
        zeros = (0,) * len(shape)
        return pl.BlockSpec(shape, lambda b, t: zeros)

    out_flat = pl.pallas_call(
        kernel,
        out_shape=jax.ShapeDtypeStruct((T, Cout, B * HW), jnp.float32),
        grid=(GB, GT),
        in_specs=[
            pl.BlockSpec((T_blk, B_blk, C1, H1W1), lambda b, t: (t, b, 0, 0)),  # x1
            pl.BlockSpec((T_blk, C2, LANE_N), lambda b, t: (t, 0, b)),          # x2
            _const((H1W1, HW)),          # upsample + pad placement matrix
            _const((9, LANE_N)),         # 3x3 tap boundary masks
            _const((Cmid, 9 * Cin)),     # conv1 im2col weights (BN folded)
            _const((Cmid, LANE_N)),      # conv1 bias (pre-broadcast)
            _const((Cout, 9 * Cmid)),    # conv2 im2col weights (BN folded)
            _const((Cout, LANE_N)),      # conv2 bias (pre-broadcast)
        ],
        out_specs=pl.BlockSpec((T_blk, Cout, LANE_N), lambda b, t: (t, 0, b)),
        scratch_shapes=[
            pltpu.VMEM((Cmid, LANE_N), jnp.float32),   # membrane potential, IF 1
            pltpu.VMEM((Cout, LANE_N), jnp.float32),   # membrane potential, IF 2
        ],
        compiler_params=pltpu.CompilerParams(
            # batch blocks independent (megacore-parallel on v7x); T carries the
            # membrane state.  All constants now total a few 10s of KB, so the default
            # scoped-VMEM limit is more than enough (no hardcoded limit).
            dimension_semantics=("parallel", "arbitrary"),
        ),
    )(x1f, x2f, mup, masks, w1_im, b1_full, w2_im, b2_full)

    # back to the PyTorch layout [T, B, Cout, H2, W2]
    return out_flat.reshape(T, Cout, B, H2, W2).transpose(0, 2, 1, 3, 4)


# ----------------------------------------------------------------------------
# Dense pure-JAX/XLA reference (lax.conv) for correctness checking.
# ----------------------------------------------------------------------------
def up_forward_reference(x1, x2, params):
    T, B, C1, H1, W1 = x1.shape
    _, _, C2, H2, W2 = x2.shape
    w1 = params["w1"].astype(jnp.float32)
    w2 = params["w2"].astype(jnp.float32)
    Cmid, Cout = w1.shape[-1], w2.shape[-1]
    s1, b1 = fold_bn(params["bn1_gamma"], params["bn1_beta"],
                     params["bn1_mean"], params["bn1_var"])
    s2, b2 = fold_bn(params["bn2_gamma"], params["bn2_beta"],
                     params["bn2_mean"], params["bn2_var"])
    w1f = w1 * s1[None, None, None, :]
    w2f = w2 * s2[None, None, None, :]

    Ah = jnp.asarray(_interp_matrix_2x_align_corners(H1))
    Aw = jnp.asarray(_interp_matrix_2x_align_corners(W1))
    up = jnp.einsum('ph,tbchw,qw->tbcpq', Ah, x1.astype(jnp.float32), Aw,
                    precision=lax.Precision.HIGHEST)
    dY, dX = H2 - 2 * H1, W2 - 2 * W1
    up = jnp.pad(up, ((0, 0), (0, 0), (0, 0),
                      (dY // 2, dY - dY // 2), (dX // 2, dX - dX // 2)))
    xin = jnp.concatenate([x2.astype(jnp.float32), up], axis=2)   # (T, B, Cin, H2, W2)

    def conv(x, w, bias):
        y = lax.conv_general_dilated(x, w, window_strides=(1, 1), padding='SAME',
                                     dimension_numbers=('NCHW', 'HWIO', 'NCHW'),
                                     precision=lax.Precision.HIGHEST)
        return y + bias[None, :, None, None]

    v1 = jnp.zeros((B, Cmid, H2, W2), jnp.float32)
    v2 = jnp.zeros((B, Cout, H2, W2), jnp.float32)
    outs = []
    for t in range(T):
        v1 = v1 + conv(xin[t], w1f, b1)
        sp1 = (v1 >= 1.0).astype(jnp.float32)
        v1 = jnp.where(v1 >= 1.0, 0.0, v1)
        v2 = v2 + conv(sp1, w2f, b2)
        sp2 = (v2 >= 1.0).astype(jnp.float32)
        v2 = jnp.where(v2 >= 1.0, 0.0, v2)
        outs.append(sp2)
    return jnp.stack(outs, axis=0)


if __name__ == "__main__":
    key = jax.random.PRNGKey(0)
    k1, k2, k3, k4 = jax.random.split(key, 4)

    # Up(in_channels=16, out_channels=16, bilinear=True):
    #   x1 = deeper feature (in_channels//2 channels, ~half spatial size),
    #   x2 = skip connection (in_channels//2 channels).
    # H1 = 7 exercises the F.pad placement (diffY = 2); W2 = 2*W1 as the module requires.
    T, B = 2, 2
    in_channels, out_channels = 16, 16
    mid_channels = in_channels // 2
    C1 = C2 = in_channels // 2
    H1, W1 = 7, 8
    H2, W2 = 16, 16

    x1 = jax.random.normal(k1, (T, B, C1, H1, W1), dtype=jnp.float32)
    x2 = jax.random.normal(k2, (T, B, C2, H2, W2), dtype=jnp.float32)

    # Deterministic synthetic parameters (HWIO conv weights; PyTorch-default BN params).
    params = {
        "w1": jax.random.normal(k3, (3, 3, in_channels, mid_channels), jnp.float32) * 0.2,
        "w2": jax.random.normal(k4, (3, 3, mid_channels, out_channels), jnp.float32) * 0.2,
        "bn1_gamma": jnp.ones((mid_channels,), jnp.float32),
        "bn1_beta": jnp.zeros((mid_channels,), jnp.float32),
        "bn1_mean": jnp.zeros((mid_channels,), jnp.float32),
        "bn1_var": jnp.ones((mid_channels,), jnp.float32),
        "bn2_gamma": jnp.ones((out_channels,), jnp.float32),
        "bn2_beta": jnp.zeros((out_channels,), jnp.float32),
        "bn2_mean": jnp.zeros((out_channels,), jnp.float32),
        "bn2_var": jnp.ones((out_channels,), jnp.float32),
    }

    out = jax.block_until_ready(jax.jit(up_forward)(x1, x2, params))
    assert out.shape == (T, B, out_channels, H2, W2), out.shape
    assert bool(jnp.all((out == 0.0) | (out == 1.0))), "non-binary spike output"

    # Dense XLA reference.  Outputs are 0/1 spikes, so the mean abs difference is the
    # spike-mismatch fraction; allow a tiny budget for values landing within
    # accumulation-order noise of the exact 1.0 threshold.
    ref = jax.block_until_ready(jax.jit(up_forward_reference)(x1, x2, params))
    mismatch = float(jnp.mean(jnp.abs(out - ref)))
    assert mismatch < 0.05, f"spike mismatch vs reference: {mismatch:.4f}"

    print("KERNEL_OK")
</pallas_src>

<mosaic_0001>
module attributes {stable_mosaic.version = 11 : i64} {
  func.func @kernel(%arg0: i32, %arg1: i32, %arg2: memref<2x1x8x56xf32, #tpu.memory_space<vmem>>, %arg3: memref<2x8x256xf32, #tpu.memory_space<vmem>>, %arg4: memref<56x256xf32, #tpu.memory_space<vmem>>, %arg5: memref<9x256xf32, #tpu.memory_space<vmem>>, %arg6: memref<8x144xf32, #tpu.memory_space<vmem>>, %arg7: memref<8x256xf32, #tpu.memory_space<vmem>>, %arg8: memref<16x72xf32, #tpu.memory_space<vmem>>, %arg9: memref<16x256xf32, #tpu.memory_space<vmem>>, %arg10: memref<2x16x256xf32, #tpu.memory_space<vmem>>, %arg11: memref<8x256xf32, #tpu.memory_space<vmem>>, %arg12: memref<16x256xf32, #tpu.memory_space<vmem>>) attributes {dimension_semantics = [#tpu.dimension_semantics<parallel>, #tpu.dimension_semantics<arbitrary>], iteration_bounds = array<i64: 2, 1>, scalar_prefetch = 0 : i64, scratch_operands = 2 : i64, tpu.core_type = #tpu.core_type<tc>, window_params = [{transform_indices = @transform_0, window_bounds = array<i64: 2, 1, 8, 56>}, {transform_indices = @transform_1, window_bounds = array<i64: 2, 8, 256>}, {pipeline_mode = #tpu.pipeline_mode<synchronous>, transform_indices = @transform_2, window_bounds = array<i64: 56, 256>}, {pipeline_mode = #tpu.pipeline_mode<synchronous>, transform_indices = @transform_3, window_bounds = array<i64: 9, 256>}, {pipeline_mode = #tpu.pipeline_mode<synchronous>, transform_indices = @transform_4, window_bounds = array<i64: 8, 144>}, {pipeline_mode = #tpu.pipeline_mode<synchronous>, transform_indices = @transform_5, window_bounds = array<i64: 8, 256>}, {pipeline_mode = #tpu.pipeline_mode<synchronous>, transform_indices = @transform_6, window_bounds = array<i64: 16, 72>}, {pipeline_mode = #tpu.pipeline_mode<synchronous>, transform_indices = @transform_7, window_bounds = array<i64: 16, 256>}, {transform_indices = @transform_8, window_bounds = array<i64: 2, 16, 256>}]} {
    %c0_i32 = arith.constant 0 : i32
    %0 = arith.cmpi eq, %arg1, %c0_i32 : i32
    %1 = arith.extui %0 : i1 to i32
    %c0_i32_0 = arith.constant 0 : i32
    %2 = arith.cmpi ne, %1, %c0_i32_0 : i32
    scf.if %2 {
      %cst_154 = arith.constant 0.000000e+00 : f32
      %215 = vector.broadcast %cst_154 : f32 to vector<8x256xf32>
      %c0_155 = arith.constant 0 : index
      %c0_156 = arith.constant 0 : index
      %216 = vector.load %arg11[%c0_155, %c0_156] : memref<8x256xf32, #tpu.memory_space<vmem>>, vector<8x256xf32>
      tpu.vector_store %arg11[%c0_155, %c0_156], %215 {strides = array<i32>} : memref<8x256xf32, #tpu.memory_space<vmem>>, vector<8x256xf32>,
      %cst_157 = arith.constant 0.000000e+00 : f32
      %217 = vector.broadcast %cst_157 : f32 to vector<16x256xf32>
      %c0_158 = arith.constant 0 : index
      %c0_159 = arith.constant 0 : index
      %218 = vector.load %arg12[%c0_158, %c0_159] : memref<16x256xf32, #tpu.memory_space<vmem>>, vector<16x256xf32>
      tpu.vector_store %arg12[%c0_158, %c0_159], %217 {strides = array<i32>} : memref<16x256xf32, #tpu.memory_space<vmem>>, vector<16x256xf32>,
    } else {
    }
    %c0 = arith.constant 0 : index
    %c0_1 = arith.constant 0 : index
    %c0_2 = arith.constant 0 : index
    %c0_3 = arith.constant 0 : index
    %3 = vector.load %arg2[%c0, %c0_1, %c0_2, %c0_3] : memref<2x1x8x56xf32, #tpu.memory_space<vmem>>, vector<1x1x8x56xf32>
    %4 = vector.shape_cast %3 : vector<1x1x8x56xf32> to vector<8x56xf32>
    %c0_4 = arith.constant 0 : index
    %c0_5 = arith.constant 0 : index
    %5 = vector.load %arg4[%c0_4, %c0_5] : memref<56x256xf32, #tpu.memory_space<vmem>>, vector<56x256xf32>
    %cst = arith.constant dense<0.000000e+00> : vector<8x256xf32>
    %6 = tpu.matmul %4, %5, %cst {dimension_numbers = #tpu.dot_dimension_numbers<[1], [0], [0], [1], [0, 0, 1, 1], [], []>, precision = #tpu.contract_precision<fp32>} : vector<8x56xf32>, vector<56x256xf32>, vector<8x256xf32> -> vector<8x256xf32>
    %c0_6 = arith.constant 0 : index
    %c0_7 = arith.constant 0 : index
    %c0_8 = arith.constant 0 : index
    %7 = vector.load %arg3[%c0_6, %c0_7, %c0_8] : memref<2x8x256xf32, #tpu.memory_space<vmem>>, vector<1x8x256xf32>
    %8 = vector.shape_cast %7 : vector<1x8x256xf32> to vector<8x256xf32>
    %9 = tpu.concatenate %8, %6 in 0 : vector<8x256xf32>, vector<8x256xf32> -> vector<16x256xf32>
    %c0_9 = arith.constant 0 : index
    %c0_10 = arith.constant 0 : index
    %10 = vector.load %arg6[%c0_9, %c0_10] : memref<8x144xf32, #tpu.memory_space<vmem>>, vector<8x144xf32>
    %c17_i32 = arith.constant 17 : i32
    %11 = tpu.dynamic_rotate %9 by %c17_i32 dim 1 : vector<16x256xf32>, i32 -> vector<16x256xf32>
    %c0_11 = arith.constant 0 : index
    %c0_12 = arith.constant 0 : index
    %12 = vector.load %arg5[%c0_11, %c0_12] : memref<9x256xf32, #tpu.memory_space<vmem>>, vector<1x256xf32>
    %13 = vector.broadcast %12 : vector<1x256xf32> to vector<16x256xf32>
    %14 = arith.mulf %11, %13 : vector<16x256xf32>
    %c16_i32 = arith.constant 16 : i32
    %15 = tpu.dynamic_rotate %9 by %c16_i32 dim 1 : vector<16x256xf32>, i32 -> vector<16x256xf32>
    %c1 = arith.constant 1 : index
    %c0_13 = arith.constant 0 : index
    %16 = vector.load %arg5[%c1, %c0_13] : memref<9x256xf32, #tpu.memory_space<vmem>>, vector<1x256xf32>
    %17 = vector.broadcast %16 : vector<1x256xf32> to vector<16x256xf32>
    %18 = arith.mulf %15, %17 : vector<16x256xf32>
    %c15_i32 = arith.constant 15 : i32
    %19 = tpu.dynamic_rotate %9 by %c15_i32 dim 1 : vector<16x256xf32>, i32 -> vector<16x256xf32>
    %c2 = arith.constant 2 : index
    %c0_14 = arith.constant 0 : index
    %20 = vector.load %arg5[%c2, %c0_14] : memref<9x256xf32, #tpu.memory_space<vmem>>, vector<1x256xf32>
    %21 = vector.broadcast %20 : vector<1x256xf32> to vector<16x256xf32>
    %22 = arith.mulf %19, %21 : vector<16x256xf32>
    %c1_i32 = arith.constant 1 : i32
    %23 = tpu.dynamic_rotate %9 by %c1_i32 dim 1 : vector<16x256xf32>, i32 -> vector<16x256xf32>
    %c3 = arith.constant 3 : index
    %c0_15 = arith.constant 0 : index
    %24 = vector.load %arg5[%c3, %c0_15] : memref<9x256xf32, #tpu.memory_space<vmem>>, vector<1x256xf32>
    %25 = vector.broadcast %24 : vector<1x256xf32> to vector<16x256xf32>
    %26 = arith.mulf %23, %25 : vector<16x256xf32>
    %c255_i32 = arith.constant 255 : i32
    %27 = tpu.dynamic_rotate %9 by %c255_i32 dim 1 : vector<16x256xf32>, i32 -> vector<16x256xf32>
    %c5 = arith.constant 5 : index
    %c0_16 = arith.constant 0 : index
    %28 = vector.load %arg5[%c5, %c0_16] : memref<9x256xf32, #tpu.memory_space<vmem>>, vector<1x256xf32>
    %29 = vector.broadcast %28 : vector<1x256xf32> to vector<16x256xf32>
    %30 = arith.mulf %27, %29 : vector<16x256xf32>
    %c241_i32 = arith.constant 241 : i32
    %31 = tpu.dynamic_rotate %9 by %c241_i32 dim 1 : vector<16x256xf32>, i32 -> vector<16x256xf32>
    %c6 = arith.constant 6 : index
    %c0_17 = arith.constant 0 : index
    %32 = vector.load %arg5[%c6, %c0_17] : memref<9x256xf32, #tpu.memory_space<vmem>>, vector<1x256xf32>
    %33 = vector.broadcast %32 : vector<1x256xf32> to vector<16x256xf32>
    %34 = arith.mulf %31, %33 : vector<16x256xf32>
    %c240_i32 = arith.constant 240 : i32
    %35 = tpu.dynamic_rotate %9 by %c240_i32 dim 1 : vector<16x256xf32>, i32 -> vector<16x256xf32>
    %c7 = arith.constant 7 : index
    %c0_18 = arith.constant 0 : index
    %36 = vector.load %arg5[%c7, %c0_18] : memref<9x256xf32, #tpu.memory_space<vmem>>, vector<1x256xf32>
    %37 = vector.broadcast %36 : vector<1x256xf32> to vector<16x256xf32>
    %38 = arith.mulf %35, %37 : vector<16x256xf32>
    %c239_i32 = arith.constant 239 : i32
    %39 = tpu.dynamic_rotate %9 by %c239_i32 dim 1 : vector<16x256xf32>, i32 -> vector<16x256xf32>
    %c8 = arith.constant 8 : index
    %c0_19 = arith.constant 0 : index
    %40 = vector.load %arg5[%c8, %c0_19] : memref<9x256xf32, #tpu.memory_space<vmem>>, vector<1x256xf32>
    %41 = vector.broadcast %40 : vector<1x256xf32> to vector<16x256xf32>
    %42 = arith.mulf %39, %41 : vector<16x256xf32>
    %43 = tpu.concatenate %14, %18, %22, %26, %9, %30, %34, %38, %42 in 0 : vector<16x256xf32>, vector<16x256xf32>, vector<16x256xf32>, vector<16x256xf32>, vector<16x256xf32>, vector<16x256xf32>, vector<16x256xf32>, vector<16x256xf32>, vector<16x256xf32> -> vector<144x256xf32>
    %cst_20 = arith.constant dense<0.000000e+00> : vector<8x256xf32>
    %44 = tpu.matmul %10, %43, %cst_20 {dimension_numbers = #tpu.dot_dimension_numbers<[1], [0], [0], [1], [0, 0, 1, 1], [], []>, precision = #tpu.contract_precision<fp32>} : vector<8x144xf32>, vector<144x256xf32>, vector<8x256xf32> -> vector<8x256xf32>
    %c0_21 = arith.constant 0 : index
    %c0_22 = arith.constant 0 : index
    %45 = vector.load %arg11[%c0_21, %c0_22] : memref<8x256xf32, #tpu.memory_space<vmem>>, vector<8x256xf32>
    %46 = arith.addf %45, %44 : vector<8x256xf32>
    %c0_23 = arith.constant 0 : index
    %c0_24 = arith.constant 0 : index
    %47 = vector.load %arg7[%c0_23, %c0_24] : memref<8x256xf32, #tpu.memory_space<vmem>>, vector<8x256xf32>
    %48 = arith.addf %46, %47 : vector<8x256xf32>
    %cst_25 = arith.constant 1.000000e+00 : f32
    %49 = vector.broadcast %cst_25 : f32 to vector<8x256xf32>
    %50 = arith.cmpf oge, %48, %49 : vector<8x256xf32>
    %51 = arith.extui %50 : vector<8x256xi1> to vector<8x256xi32>
    %52 = arith.sitofp %51 : vector<8x256xi32> to vector<8x256xf32>
    %cst_26 = arith.constant 1.000000e+00 : f32
    %53 = vector.broadcast %cst_26 : f32 to vector<8x256xf32>
    %54 = arith.cmpf oge, %48, %53 : vector<8x256xf32>
    %cst_27 = arith.constant 0.000000e+00 : f32
    %55 = vector.broadcast %cst_27 : f32 to vector<8x256xf32>
    %56 = arith.select %54, %55, %48 : vector<8x256xi1>, vector<8x256xf32>
    %c0_28 = arith.constant 0 : index
    %c0_29 = arith.constant 0 : index
    %57 = vector.load %arg11[%c0_28, %c0_29] : memref<8x256xf32, #tpu.memory_space<vmem>>, vector<8x256xf32>
    tpu.vector_store %arg11[%c0_28, %c0_29], %56 {strides = array<i32>} : memref<8x256xf32, #tpu.memory_space<vmem>>, vector<8x256xf32>,
    %c0_30 = arith.constant 0 : index
    %c0_31 = arith.constant 0 : index
    %58 = vector.load %arg8[%c0_30, %c0_31] : memref<16x72xf32, #tpu.memory_space<vmem>>, vector<16x72xf32>
    %c17_i32_32 = arith.constant 17 : i32
    %59 = tpu.dynamic_rotate %52 by %c17_i32_32 dim 1 : vector<8x256xf32>, i32 -> vector<8x256xf32>
    %c0_33 = arith.constant 0 : index
    %c0_34 = arith.constant 0 : index
    %60 = vector.load %arg5[%c0_33, %c0_34] : memref<9x256xf32, #tpu.memory_space<vmem>>, vector<1x256xf32>
    %61 = vector.broadcast %60 : vector<1x256xf32> to vector<8x256xf32>
    %62 = arith.mulf %59, %61 : vector<8x256xf32>
    %c16_i32_35 = arith.constant 16 : i32
    %63 = tpu.dynamic_rotate %52 by %c16_i32_35 dim 1 : vector<8x256xf32>, i32 -> vector<8x256xf32>
    %c1_36 = arith.constant 1 : index
    %c0_37 = arith.constant 0 : index
    %64 = vector.load %arg5[%c1_36, %c0_37] : memref<9x256xf32, #tpu.memory_space<vmem>>, vector<1x256xf32>
    %65 = vector.broadcast %64 : vector<1x256xf32> to vector<8x256xf32>
    %66 = arith.mulf %63, %65 : vector<8x256xf32>
    %c15_i32_38 = arith.constant 15 : i32
    %67 = tpu.dynamic_rotate %52 by %c15_i32_38 dim 1 : vector<8x256xf32>, i32 -> vector<8x256xf32>
    %c2_39 = arith.constant 2 : index
    %c0_40 = arith.constant 0 : index
    %68 = vector.load %arg5[%c2_39, %c0_40] : memref<9x256xf32, #tpu.memory_space<vmem>>, vector<1x256xf32>
    %69 = vector.broadcast %68 : vector<1x256xf32> to vector<8x256xf32>
    %70 = arith.mulf %67, %69 : vector<8x256xf32>
    %c1_i32_41 = arith.constant 1 : i32
    %71 = tpu.dynamic_rotate %52 by %c1_i32_41 dim 1 : vector<8x256xf32>, i32 -> vector<8x256xf32>
    %c3_42 = arith.constant 3 : index
    %c0_43 = arith.constant 0 : index
    %72 = vector.load %arg5[%c3_42, %c0_43] : memref<9x256xf32, #tpu.memory_space<vmem>>, vector<1x256xf32>
    %73 = vector.broadcast %72 : vector<1x256xf32> to vector<8x256xf32>
    %74 = arith.mulf %71, %73 : vector<8x256xf32>
    %c255_i32_44 = arith.constant 255 : i32
    %75 = tpu.dynamic_rotate %52 by %c255_i32_44 dim 1 : vector<8x256xf32>, i32 -> vector<8x256xf32>
    %c5_45 = arith.constant 5 : index
    %c0_46 = arith.constant 0 : index
    %76 = vector.load %arg5[%c5_45, %c0_46] : memref<9x256xf32, #tpu.memory_space<vmem>>, vector<1x256xf32>
    %77 = vector.broadcast %76 : vector<1x256xf32> to vector<8x256xf32>
    %78 = arith.mulf %75, %77 : vector<8x256xf32>
    %c241_i32_47 = arith.constant 241 : i32
    %79 = tpu.dynamic_rotate %52 by %c241_i32_47 dim 1 : vector<8x256xf32>, i32 -> vector<8x256xf32>
    %c6_48 = arith.constant 6 : index
    %c0_49 = arith.constant 0 : index
    %80 = vector.load %arg5[%c6_48, %c0_49] : memref<9x256xf32, #tpu.memory_space<vmem>>, vector<1x256xf32>
    %81 = vector.broadcast %80 : vector<1x256xf32> to vector<8x256xf32>
    %82 = arith.mulf %79, %81 : vector<8x256xf32>
    %c240_i32_50 = arith.constant 240 : i32
    %83 = tpu.dynamic_rotate %52 by %c240_i32_50 dim 1 : vector<8x256xf32>, i32 -> vector<8x256xf32>
    %c7_51 = arith.constant 7 : index
    %c0_52 = arith.constant 0 : index
    %84 = vector.load %arg5[%c7_51, %c0_52] : memref<9x256xf32, #tpu.memory_space<vmem>>, vector<1x256xf32>
    %85 = vector.broadcast %84 : vector<1x256xf32> to vector<8x256xf32>
    %86 = arith.mulf %83, %85 : vector<8x256xf32>
    %c239_i32_53 = arith.constant 239 : i32
    %87 = tpu.dynamic_rotate %52 by %c239_i32_53 dim 1 : vector<8x256xf32>, i32 -> vector<8x256xf32>
    %c8_54 = arith.constant 8 : index
    %c0_55 = arith.constant 0 : index
    %88 = vector.load %arg5[%c8_54, %c0_55] : memref<9x256xf32, #tpu.memory_space<vmem>>, vector<1x256xf32>
    %89 = vector.broadcast %88 : vector<1x256xf32> to vector<8x256xf32>
    %90 = arith.mulf %87, %89 : vector<8x256xf32>
    %91 = tpu.concatenate %62, %66, %70, %74, %52, %78, %82, %86, %90 in 0 : vector<8x256xf32>, vector<8x256xf32>, vector<8x256xf32>, vector<8x256xf32>, vector<8x256xf32>, vector<8x256xf32>, vector<8x256xf32>, vector<8x256xf32>, vector<8x256xf32> -> vector<72x256xf32>
    %cst_56 = arith.constant dense<0.000000e+00> : vector<16x256xf32>
    %92 = tpu.matmul %58, %91, %cst_56 {dimension_numbers = #tpu.dot_dimension_numbers<[1], [0], [0], [1], [0, 0, 1, 1], [], []>, precision = #tpu.contract_precision<fp32>} : vector<16x72xf32>, vector<72x256xf32>, vector<16x256xf32> -> vector<16x256xf32>
    %c0_57 = arith.constant 0 : index
    %c0_58 = arith.constant 0 : index
    %93 = vector.load %arg12[%c0_57, %c0_58] : memref<16x256xf32, #tpu.memory_space<vmem>>, vector<16x256xf32>
    %94 = arith.addf %93, %92 : vector<16x256xf32>
    %c0_59 = arith.constant 0 : index
    %c0_60 = arith.constant 0 : index
    %95 = vector.load %arg9[%c0_59, %c0_60] : memref<16x256xf32, #tpu.memory_space<vmem>>, vector<16x256xf32>
    %96 = arith.addf %94, %95 : vector<16x256xf32>
    %cst_61 = arith.constant 1.000000e+00 : f32
    %97 = vector.broadcast %cst_61 : f32 to vector<16x256xf32>
    %98 = arith.cmpf oge, %96, %97 : vector<16x256xf32>
    %99 = arith.extui %98 : vector<16x256xi1> to vector<16x256xi32>
    %100 = arith.sitofp %99 : vector<16x256xi32> to vector<16x256xf32>
    %cst_62 = arith.constant 1.000000e+00 : f32
    %101 = vector.broadcast %cst_62 : f32 to vector<16x256xf32>
    %102 = arith.cmpf oge, %96, %101 : vector<16x256xf32>
    %cst_63 = arith.constant 0.000000e+00 : f32
    %103 = vector.broadcast %cst_63 : f32 to vector<16x256xf32>
    %104 = arith.select %102, %103, %96 : vector<16x256xi1>, vector<16x256xf32>
    %c0_64 = arith.constant 0 : index
    %c0_65 = arith.constant 0 : index
    %105 = vector.load %arg12[%c0_64, %c0_65] : memref<16x256xf32, #tpu.memory_space<vmem>>, vector<16x256xf32>
    tpu.vector_store %arg12[%c0_64, %c0_65], %104 {strides = array<i32>} : memref<16x256xf32, #tpu.memory_space<vmem>>, vector<16x256xf32>,
    %c0_66 = arith.constant 0 : index
    %c0_67 = arith.constant 0 : index
    %c0_68 = arith.constant 0 : index
    %106 = vector.load %arg10[%c0_66, %c0_67, %c0_68] : memref<2x16x256xf32, #tpu.memory_space<vmem>>, vector<1x16x256xf32>
    %107 = vector.shape_cast %106 : vector<1x16x256xf32> to vector<16x256xf32>
    %108 = vector.shape_cast %100 : vector<16x256xf32> to vector<1x16x256xf32>
    tpu.vector_store %arg10[%c0_66, %c0_67, %c0_68], %108 {strides = array<i32>} : memref<2x16x256xf32, #tpu.memory_space<vmem>>, vector<1x16x256xf32>,
    %c1_69 = arith.constant 1 : index
    %c0_70 = arith.constant 0 : index
    %c0_71 = arith.constant 0 : index
    %c0_72 = arith.constant 0 : index
    %109 = vector.load %arg2[%c1_69, %c0_70, %c0_71, %c0_72] : memref<2x1x8x56xf32, #tpu.memory_space<vmem>>, vector<1x1x8x56xf32>
    %110 = vector.shape_cast %109 : vector<1x1x8x56xf32> to vector<8x56xf32>
    %c0_73 = arith.constant 0 : index
    %c0_74 = arith.constant 0 : index
    %111 = vector.load %arg4[%c0_73, %c0_74] : memref<56x256xf32, #tpu.memory_space<vmem>>, vector<56x256xf32>
    %cst_75 = arith.constant dense<0.000000e+00> : vector<8x256xf32>
    %112 = tpu.matmul %110, %111, %cst_75 {dimension_numbers = #tpu.dot_dimension_numbers<[1], [0], [0], [1], [0, 0, 1, 1], [], []>, precision = #tpu.contract_precision<fp32>} : vector<8x56xf32>, vector<56x256xf32>, vector<8x256xf32> -> vector<8x256xf32>
    %c1_76 = arith.constant 1 : index
    %c0_77 = arith.constant 0 : index
    %c0_78 = arith.constant 0 : index
    %113 = vector.load %arg3[%c1_76, %c0_77, %c0_78] : memref<2x8x256xf32, #tpu.memory_space<vmem>>, vector<1x8x256xf32>
    %114 = vector.shape_cast %113 : vector<1x8x256xf32> to vector<8x256xf32>
    %115 = tpu.concatenate %114, %112 in 0 : vector<8x256xf32>, vector<8x256xf32> -> vector<16x256xf32>
    %c0_79 = arith.constant 0 : index
    %c0_80 = arith.constant 0 : index
    %116 = vector.load %arg6[%c0_79, %c0_80] : memref<8x144xf32, #tpu.memory_space<vmem>>, vector<8x144xf32>
    %c17_i32_81 = arith.constant 17 : i32
    %117 = tpu.dynamic_rotate %115 by %c17_i32_81 dim 1 : vector<16x256xf32>, i32 -> vector<16x256xf32>
    %c0_82 = arith.constant 0 : index
    %c0_83 = arith.constant 0 : index
    %118 = vector.load %arg5[%c0_82, %c0_83] : memref<9x256xf32, #tpu.memory_space<vmem>>, vector<1x256xf32>
    %119 = vector.broadcast %118 : vector<1x256xf32> to vector<16x256xf32>
    %120 = arith.mulf %117, %119 : vector<16x256xf32>
    %c16_i32_84 = arith.constant 16 : i32
    %121 = tpu.dynamic_rotate %115 by %c16_i32_84 dim 1 : vector<16x256xf32>, i32 -> vector<16x256xf32>
    %c1_85 = arith.constant 1 : index
    %c0_86 = arith.constant 0 : index
    %122 = vector.load %arg5[%c1_85, %c0_86] : memref<9x256xf32, #tpu.memory_space<vmem>>, vector<1x256xf32>
    %123 = vector.broadcast %122 : vector<1x256xf32> to vector<16x256xf32>
    %124 = arith.mulf %121, %123 : vector<16x256xf32>
    %c15_i32_87 = arith.constant 15 : i32
    %125 = tpu.dynamic_rotate %115 by %c15_i32_87 dim 1 : vector<16x256xf32>, i32 -> vector<16x256xf32>
    %c2_88 = arith.constant 2 : index
    %c0_89 = arith.constant 0 : index
    %126 = vector.load %arg5[%c2_88, %c0_89] : memref<9x256xf32, #tpu.memory_space<vmem>>, vector<1x256xf32>
    %127 = vector.broadcast %126 : vector<1x256xf32> to vector<16x256xf32>
    %128 = arith.mulf %125, %127 : vector<16x256xf32>
    %c1_i32_90 = arith.constant 1 : i32
    %129 = tpu.dynamic_rotate %115 by %c1_i32_90 dim 1 : vector<16x256xf32>, i32 -> vector<16x256xf32>
    %c3_91 = arith.constant 3 : index
    %c0_92 = arith.constant 0 : index
    %130 = vector.load %arg5[%c3_91, %c0_92] : memref<9x256xf32, #tpu.memory_space<vmem>>, vector<1x256xf32>
    %131 = vector.broadcast %130 : vector<1x256xf32> to vector<16x256xf32>
    %132 = arith.mulf %129, %131 : vector<16x256xf32>
    %c255_i32_93 = arith.constant 255 : i32
    %133 = tpu.dynamic_rotate %115 by %c255_i32_93 dim 1 : vector<16x256xf32>, i32 -> vector<16x256xf32>
    %c5_94 = arith.constant 5 : index
    %c0_95 = arith.constant 0 : index
    %134 = vector.load %arg5[%c5_94, %c0_95] : memref<9x256xf32, #tpu.memory_space<vmem>>, vector<1x256xf32>
    %135 = vector.broadcast %134 : vector<1x256xf32> to vector<16x256xf32>
    %136 = arith.mulf %133, %135 : vector<16x256xf32>
    %c241_i32_96 = arith.constant 241 : i32
    %137 = tpu.dynamic_rotate %115 by %c241_i32_96 dim 1 : vector<16x256xf32>, i32 -> vector<16x256xf32>
    %c6_97 = arith.constant 6 : index
    %c0_98 = arith.constant 0 : index
    %138 = vector.load %arg5[%c6_97, %c0_98] : memref<9x256xf32, #tpu.memory_space<vmem>>, vector<1x256xf32>
    %139 = vector.broadcast %138 : vector<1x256xf32> to vector<16x256xf32>
    %140 = arith.mulf %137, %139 : vector<16x256xf32>
    %c240_i32_99 = arith.constant 240 : i32
    %141 = tpu.dynamic_rotate %115 by %c240_i32_99 dim 1 : vector<16x256xf32>, i32 -> vector<16x256xf32>
    %c7_100 = arith.constant 7 : index
    %c0_101 = arith.constant 0 : index
    %142 = vector.load %arg5[%c7_100, %c0_101] : memref<9x256xf32, #tpu.memory_space<vmem>>, vector<1x256xf32>
    %143 = vector.broadcast %142 : vector<1x256xf32> to vector<16x256xf32>
    %144 = arith.mulf %141, %143 : vector<16x256xf32>
    %c239_i32_102 = arith.constant 239 : i32
    %145 = tpu.dynamic_rotate %115 by %c239_i32_102 dim 1 : vector<16x256xf32>, i32 -> vector<16x256xf32>
    %c8_103 = arith.constant 8 : index
    %c0_104 = arith.constant 0 : index
    %146 = vector.load %arg5[%c8_103, %c0_104] : memref<9x256xf32, #tpu.memory_space<vmem>>, vector<1x256xf32>
    %147 = vector.broadcast %146 : vector<1x256xf32> to vector<16x256xf32>
    %148 = arith.mulf %145, %147 : vector<16x256xf32>
    %149 = tpu.concatenate %120, %124, %128, %132, %115, %136, %140, %144, %148 in 0 : vector<16x256xf32>, vector<16x256xf32>, vector<16x256xf32>, vector<16x256xf32>, vector<16x256xf32>, vector<16x256xf32>, vector<16x256xf32>, vector<16x256xf32>, vector<16x256xf32> -> vector<144x256xf32>
    %cst_105 = arith.constant dense<0.000000e+00> : vector<8x256xf32>
    %150 = tpu.matmul %116, %149, %cst_105 {dimension_numbers = #tpu.dot_dimension_numbers<[1], [0], [0], [1], [0, 0, 1, 1], [], []>, precision = #tpu.contract_precision<fp32>} : vector<8x144xf32>, vector<144x256xf32>, vector<8x256xf32> -> vector<8x256xf32>
    %c0_106 = arith.constant 0 : index
    %c0_107 = arith.constant 0 : index
    %151 = vector.load %arg11[%c0_106, %c0_107] : memref<8x256xf32, #tpu.memory_space<vmem>>, vector<8x256xf32>
    %152 = arith.addf %151, %150 : vector<8x256xf32>
    %c0_108 = arith.constant 0 : index
    %c0_109 = arith.constant 0 : index
    %153 = vector.load %arg7[%c0_108, %c0_109] : memref<8x256xf32, #tpu.memory_space<vmem>>, vector<8x256xf32>
    %154 = arith.addf %152, %153 : vector<8x256xf32>
    %cst_110 = arith.constant 1.000000e+00 : f32
    %155 = vector.broadcast %cst_110 : f32 to vector<8x256xf32>
    %156 = arith.cmpf oge, %154, %155 : vector<8x256xf32>
    %157 = arith.extui %156 : vector<8x256xi1> to vector<8x256xi32>
    %158 = arith.sitofp %157 : vector<8x256xi32> to vector<8x256xf32>
    %cst_111 = arith.constant 1.000000e+00 : f32
    %159 = vector.broadcast %cst_111 : f32 to vector<8x256xf32>
    %160 = arith.cmpf oge, %154, %159 : vector<8x256xf32>
    %cst_112 = arith.constant 0.000000e+00 : f32
    %161 = vector.broadcast %cst_112 : f32 to vector<8x256xf32>
    %162 = arith.select %160, %161, %154 : vector<8x256xi1>, vector<8x256xf32>
    %c0_113 = arith.constant 0 : index
    %c0_114 = arith.constant 0 : index
    %163 = vector.load %arg11[%c0_113, %c0_114] : memref<8x256xf32, #tpu.memory_space<vmem>>, vector<8x256xf32>
    tpu.vector_store %arg11[%c0_113, %c0_114], %162 {strides = array<i32>} : memref<8x256xf32, #tpu.memory_space<vmem>>, vector<8x256xf32>,
    %c0_115 = arith.constant 0 : index
    %c0_116 = arith.constant 0 : index
    %164 = vector.load %arg8[%c0_115, %c0_116] : memref<16x72xf32, #tpu.memory_space<vmem>>, vector<16x72xf32>
    %c17_i32_117 = arith.constant 17 : i32
    %165 = tpu.dynamic_rotate %158 by %c17_i32_117 dim 1 : vector<8x256xf32>, i32 -> vector<8x256xf32>
    %c0_118 = arith.constant 0 : index
    %c0_119 = arith.constant 0 : index
    %166 = vector.load %arg5[%c0_118, %c0_119] : memref<9x256xf32, #tpu.memory_space<vmem>>, vector<1x256xf32>
    %167 = vector.broadcast %166 : vector<1x256xf32> to vector<8x256xf32>
    %168 = arith.mulf %165, %167 : vector<8x256xf32>
    %c16_i32_120 = arith.constant 16 : i32
    %169 = tpu.dynamic_rotate %158 by %c16_i32_120 dim 1 : vector<8x256xf32>, i32 -> vector<8x256xf32>
    %c1_121 = arith.constant 1 : index
    %c0_122 = arith.constant 0 : index
    %170 = vector.load %arg5[%c1_121, %c0_122] : memref<9x256xf32, #tpu.memory_space<vmem>>, vector<1x256xf32>
    %171 = vector.broadcast %170 : vector<1x256xf32> to vector<8x256xf32>
    %172 = arith.mulf %169, %171 : vector<8x256xf32>
    %c15_i32_123 = arith.constant 15 : i32
    %173 = tpu.dynamic_rotate %158 by %c15_i32_123 dim 1 : vector<8x256xf32>, i32 -> vector<8x256xf32>
    %c2_124 = arith.constant 2 : index
    %c0_125 = arith.constant 0 : index
    %174 = vector.load %arg5[%c2_124, %c0_125] : memref<9x256xf32, #tpu.memory_space<vmem>>, vector<1x256xf32>
    %175 = vector.broadcast %174 : vector<1x256xf32> to vector<8x256xf32>
    %176 = arith.mulf %173, %175 : vector<8x256xf32>
    %c1_i32_126 = arith.constant 1 : i32
    %177 = tpu.dynamic_rotate %158 by %c1_i32_126 dim 1 : vector<8x256xf32>, i32 -> vector<8x256xf32>
    %c3_127 = arith.constant 3 : index
    %c0_128 = arith.constant 0 : index
    %178 = vector.load %arg5[%c3_127, %c0_128] : memref<9x256xf32, #tpu.memory_space<vmem>>, vector<1x256xf32>
    %179 = vector.broadcast %178 : vector<1x256xf32> to vector<8x256xf32>
    %180 = arith.mulf %177, %179 : vector<8x256xf32>
    %c255_i32_129 = arith.constant 255 : i32
    %181 = tpu.dynamic_rotate %158 by %c255_i32_129 dim 1 : vector<8x256xf32>, i32 -> vector<8x256xf32>
    %c5_130 = arith.constant 5 : index
    %c0_131 = arith.constant 0 : index
    %182 = vector.load %arg5[%c5_130, %c0_131] : memref<9x256xf32, #tpu.memory_space<vmem>>, vector<1x256xf32>
    %183 = vector.broadcast %182 : vector<1x256xf32> to vector<8x256xf32>
    %184 = arith.mulf %181, %183 : vector<8x256xf32>
    %c241_i32_132 = arith.constant 241 : i32
    %185 = tpu.dynamic_rotate %158 by %c241_i32_132 dim 1 : vector<8x256xf32>, i32 -> vector<8x256xf32>
    %c6_133 = arith.constant 6 : index
    %c0_134 = arith.constant 0 : index
    %186 = vector.load %arg5[%c6_133, %c0_134] : memref<9x256xf32, #tpu.memory_space<vmem>>, vector<1x256xf32>
    %187 = vector.broadcast %186 : vector<1x256xf32> to vector<8x256xf32>
    %188 = arith.mulf %185, %187 : vector<8x256xf32>
    %c240_i32_135 = arith.constant 240 : i32
    %189 = tpu.dynamic_rotate %158 by %c240_i32_135 dim 1 : vector<8x256xf32>, i32 -> vector<8x256xf32>
    %c7_136 = arith.constant 7 : index
    %c0_137 = arith.constant 0 : index
    %190 = vector.load %arg5[%c7_136, %c0_137] : memref<9x256xf32, #tpu.memory_space<vmem>>, vector<1x256xf32>
    %191 = vector.broadcast %190 : vector<1x256xf32> to vector<8x256xf32>
    %192 = arith.mulf %189, %191 : vector<8x256xf32>
    %c239_i32_138 = arith.constant 239 : i32
    %193 = tpu.dynamic_rotate %158 by %c239_i32_138 dim 1 : vector<8x256xf32>, i32 -> vector<8x256xf32>
    %c8_139 = arith.constant 8 : index
    %c0_140 = arith.constant 0 : index
    %194 = vector.load %arg5[%c8_139, %c0_140] : memref<9x256xf32, #tpu.memory_space<vmem>>, vector<1x256xf32>
    %195 = vector.broadcast %194 : vector<1x256xf32> to vector<8x256xf32>
    %196 = arith.mulf %193, %195 : vector<8x256xf32>
    %197 = tpu.concatenate %168, %172, %176, %180, %158, %184, %188, %192, %196 in 0 : vector<8x256xf32>, vector<8x256xf32>, vector<8x256xf32>, vector<8x256xf32>, vector<8x256xf32>, vector<8x256xf32>, vector<8x256xf32>, vector<8x256xf32>, vector<8x256xf32> -> vector<72x256xf32>
    %cst_141 = arith.constant dense<0.000000e+00> : vector<16x256xf32>
    %198 = tpu.matmul %164, %197, %cst_141 {dimension_numbers = #tpu.dot_dimension_numbers<[1], [0], [0], [1], [0, 0, 1, 1], [], []>, precision = #tpu.contract_precision<fp32>} : vector<16x72xf32>, vector<72x256xf32>, vector<16x256xf32> -> vector<16x256xf32>
    %c0_142 = arith.constant 0 : index
    %c0_143 = arith.constant 0 : index
    %199 = vector.load %arg12[%c0_142, %c0_143] : memref<16x256xf32, #tpu.memory_space<vmem>>, vector<16x256xf32>
    %200 = arith.addf %199, %198 : vector<16x256xf32>
    %c0_144 = arith.constant 0 : index
    %c0_145 = arith.constant 0 : index
    %201 = vector.load %arg9[%c0_144, %c0_145] : memref<16x256xf32, #tpu.memory_space<vmem>>, vector<16x256xf32>
    %202 = arith.addf %200, %201 : vector<16x256xf32>
    %cst_146 = arith.constant 1.000000e+00 : f32
    %203 = vector.broadcast %cst_146 : f32 to vector<16x256xf32>
    %204 = arith.cmpf oge, %202, %203 : vector<16x256xf32>
    %205 = arith.extui %204 : vector<16x256xi1> to vector<16x256xi32>
    %206 = arith.sitofp %205 : vector<16x256xi32> to vector<16x256xf32>
    %cst_147 = arith.constant 1.000000e+00 : f32
    %207 = vector.broadcast %cst_147 : f32 to vector<16x256xf32>
    %208 = arith.cmpf oge, %202, %207 : vector<16x256xf32>
    %cst_148 = arith.constant 0.000000e+00 : f32
    %209 = vector.broadcast %cst_148 : f32 to vector<16x256xf32>
    %210 = arith.select %208, %209, %202 : vector<16x256xi1>, vector<16x256xf32>
    %c0_149 = arith.constant 0 : index
    %c0_150 = arith.constant 0 : index
    %211 = vector.load %arg12[%c0_149, %c0_150] : memref<16x256xf32, #tpu.memory_space<vmem>>, vector<16x256xf32>
    tpu.vector_store %arg12[%c0_149, %c0_150], %210 {strides = array<i32>} : memref<16x256xf32, #tpu.memory_space<vmem>>, vector<16x256xf32>,
    %c1_151 = arith.constant 1 : index
    %c0_152 = arith.constant 0 : index
    %c0_153 = arith.constant 0 : index
    %212 = vector.load %arg10[%c1_151, %c0_152, %c0_153] : memref<2x16x256xf32, #tpu.memory_space<vmem>>, vector<1x16x256xf32>
    %213 = vector.shape_cast %212 : vector<1x16x256xf32> to vector<16x256xf32>
    %214 = vector.shape_cast %206 : vector<16x256xf32> to vector<1x16x256xf32>
    tpu.vector_store %arg10[%c1_151, %c0_152, %c0_153], %214 {strides = array<i32>} : memref<2x16x256xf32, #tpu.memory_space<vmem>>, vector<1x16x256xf32>,
    return
  }
  func.func @transform_0(%arg0: i32, %arg1: i32) -> (i32, i32, i32, i32) {
    %c0_i32 = arith.constant 0 : i32
    %c0_i32_0 = arith.constant 0 : i32
    %c0_i32_1 = arith.constant 0 : i32
    return %arg1, %arg0, %c0_i32, %c0_i32_0 : i32, i32, i32, i32
  }
  func.func @transform_1(%arg0: i32, %arg1: i32) -> (i32, i32, i32) {
    %c0_i32 = arith.constant 0 : i32
    %c0_i32_0 = arith.constant 0 : i32
    return %arg1, %c0_i32, %arg0 : i32, i32, i32
  }
  func.func @transform_2(%arg0: i32, %arg1: i32) -> (i32, i32) {
    %c0_i32 = arith.constant 0 : i32
    %c0_i32_0 = arith.constant 0 : i32
    %c0_i32_1 = arith.constant 0 : i32
    return %c0_i32, %c0_i32_0 : i32, i32
  }
  func.func @transform_3(%arg0: i32, %arg1: i32) -> (i32, i32) {
    %c0_i32 = arith.constant 0 : i32
    %c0_i32_0 = arith.constant 0 : i32
    %c0_i32_1 = arith.constant 0 : i32
    return %c0_i32, %c0_i32_0 : i32, i32
  }
  func.func @transform_4(%arg0: i32, %arg1: i32) -> (i32, i32) {
    %c0_i32 = arith.constant 0 : i32
    %c0_i32_0 = arith.constant 0 : i32
    %c0_i32_1 = arith.constant 0 : i32
    return %c0_i32, %c0_i32_0 : i32, i32
  }
  func.func @transform_5(%arg0: i32, %arg1: i32) -> (i32, i32) {
    %c0_i32 = arith.constant 0 : i32
    %c0_i32_0 = arith.constant 0 : i32
    %c0_i32_1 = arith.constant 0 : i32
    return %c0_i32, %c0_i32_0 : i32, i32
  }
  func.func @transform_6(%arg0: i32, %arg1: i32) -> (i32, i32) {
    %c0_i32 = arith.constant 0 : i32
    %c0_i32_0 = arith.constant 0 : i32
    %c0_i32_1 = arith.constant 0 : i32
    return %c0_i32, %c0_i32_0 : i32, i32
  }
  func.func @transform_7(%arg0: i32, %arg1: i32) -> (i32, i32) {
    %c0_i32 = arith.constant 0 : i32
    %c0_i32_0 = arith.constant 0 : i32
    %c0_i32_1 = arith.constant 0 : i32
    return %c0_i32, %c0_i32_0 : i32, i32
  }
  func.func @transform_8(%arg0: i32, %arg1: i32) -> (i32, i32, i32) {
    %c0_i32 = arith.constant 0 : i32
    %c0_i32_0 = arith.constant 0 : i32
    return %arg1, %c0_i32, %arg0 : i32, i32, i32
  }
}

</mosaic_0001>

<llo_original>
// kernel: up_forward.1
$region0: #{up_forward.1}
  #allocation0 [shape = 'u32[]', space=smem, size = 0x4, offset = 0x4, fixed_abs, tag = 'smem constant byte address 0x4 - core index']
  #allocation1 [shape = 'u32[144,128]{1,0:T(1,128)}', space=vmem, size = 0x12000, scoped, tag = 'internal scratch']
  #allocation2 [shape = 'f32[8,256]{1,0:T(8,128)}', space=vmem, size = 0x2000, scoped, tag = 'scratch operand']
  #allocation3 [shape = 'f32[16,256]{1,0:T(8,128)}', space=vmem, size = 0x4000, scoped, tag = 'scratch operand']
  %s0 = inlined_call_operand.vmem [shape: f32[2,2,8,56], index: 0, kind: input, shape index: {}]
  %s1 = inlined_call_operand.vmem [shape: f32[2,8,512], index: 1, kind: input, shape index: {}]
  %s2 = inlined_call_operand.vmem [shape: f32[56,256], index: 2, kind: input, shape index: {}]
  %s3 = inlined_call_operand.vmem [shape: f32[9,256], index: 3, kind: input, shape index: {}]
  %s4 = inlined_call_operand.vmem [shape: f32[8,144], index: 4, kind: input, shape index: {}]
  %s5 = inlined_call_operand.vmem [shape: f32[8,256], index: 5, kind: input, shape index: {}]
  %s6 = inlined_call_operand.vmem [shape: f32[16,72], index: 6, kind: input, shape index: {}]
  %s7 = inlined_call_operand.vmem [shape: f32[16,256], index: 7, kind: input, shape index: {}]
  %s8 = inlined_call_operand.vmem [shape: f32[2,16,512], index: 8, kind: output, shape index: {}]
  %s9 = sld [smem:[#allocation0]]
  $region149: #{up_forward.1} parent=0
    _
  %s11 = ssub.s32 1, %s9
  %s12 = scalar_select 0, %s11, %s9
  $region1: #{up_forward.1} parent=0
    #allocation4 [shape = 'u8[16384]{0}', space=vmem, size = 0x4000, scoped, tag = 'input window, operand 0']
    #allocation5 [shape = 'u8[32768]{0}', space=vmem, size = 0x8000, scoped, tag = 'input window, operand 1']
    #allocation6 [shape = 'u8[65536]{0}', space=vmem, size = 0x10000, scoped, tag = 'output window, operand 0']
    loop: start=0, step=1, limit=4
    $region2: #{up_forward.1} parent=1 // loop_pre_header
      _
    $region3: #{up_forward.1} parent=1 // loop_header
      %s14 = sphi 0, %s18
      %p15 = scmp.ge.s32.totalorder %s14, 4
      %s21 = sphi 0, %s33
      %s22 = sphi 0, %s29
      %s23 = sphi 0, %s21
      %s24 = sphi 0, %s22
      %s25 = sphi 0, %s23
      %s26 = sphi 0, %s24
      %s38 = sphi 0, %s40
      %s41 = sphi 0, %s38
      %s42 = sphi 0, %s41
      %s58 = sphi 0, %s42
      %s66 = sphi 0, %s68
      %s69 = sphi 0, %s66
      %s70 = sphi 0, %s69
      %s86 = sphi 0, %s70
      %s90 = sphi 0, %s90
      %s92 = sphi 0, %s90
      %s93 = sphi 0, %s92
      %s107 = sphi 0, %s93
      %s111 = sphi 0, %s111
      %s113 = sphi 0, %s111
      %s114 = sphi 0, %s113
      %s128 = sphi 0, %s114
      %s132 = sphi 0, %s132
      %s134 = sphi 0, %s132
      %s135 = sphi 0, %s134
      %s149 = sphi 0, %s135
      %s153 = sphi 0, %s153
      %s155 = sphi 0, %s153
      %s156 = sphi 0, %s155
      %s170 = sphi 0, %s156
      %s174 = sphi 0, %s174
      %s176 = sphi 0, %s174
      %s177 = sphi 0, %s176
      %s191 = sphi 0, %s177
      %s195 = sphi 0, %s195
      %s197 = sphi 0, %s195
      %s198 = sphi 0, %s197
      %s212 = sphi 0, %s198
      %s220 = sphi 0, %s222
      %s223 = sphi 0, %s220
      %s224 = sphi 0, %s223
      %s240 = sphi 0, %s224
    $region4: #{up_forward.1} parent=1 // loop_header_branch
      %17 = sbr.rel (%p15) target = $region8
    $region5: #{up_forward.1} parent=1 // loop_body
      %s19 = ssub.s32 %s14, 1
      %s20 = ssub.s32 %s14, 2
      %s27 = sadd.s32 1, %s22
      %p28 = scmp.ge.s32.totalorder %s27, 1
      %s29 = scalar_select %p28, 0, %s27
      %s30 = sadd.s32 1, %s21
      %s31 = scalar_select %p28, %s30, %s21
      %p32 = scmp.ge.s32.totalorder %s31, 2
      %s33 = scalar_select %p32, 0, %s31
      %s34 = ssub.s32 %s22, %s29
      %s35 = ssub.s32 %s21, %s33
      %s36 = sor.u32 %s34, %s35
      %p37 = scmp.eq.s32.totalorder %s36, 0
      %s39 = sadd.s32 %s38, 1
      %s40 = scalar_select %p37, %s38, %s39
      %p43 = pneg %p37
      %p44 = scmp.eq.s32.totalorder %s14, 1
      %p45 = por %p43, %p44
      %p46 = scmp.ne.s32.totalorder %s38, %s41
      %p47 = scmp.eq.s32.totalorder %s14, 0
      %p48 = por %p46, %p47
      %p49 = scmp.ne.s32.totalorder %s38, %s41
      %p50 = scmp.eq.s32.totalorder %s19, 1
      %p51 = por %p49, %p50
      %p52 = scmp.ne.s32.totalorder %s41, %s42
      %p53 = scmp.eq.s32.totalorder %s19, 0
      %p54 = por %p52, %p53
      %p55 = scmp.ne.s32.totalorder %s41, %s42
      %p56 = scmp.eq.s32.totalorder %s20, 1
      %p57 = por %p55, %p56
      %p59 = scmp.ne.s32.totalorder %s42, %s58
      %p60 = scmp.eq.s32.totalorder %s20, 0
      %p61 = por %p59, %p60
      %s62 = ssub.s32 %s22, %s29
      %s63 = ssub.s32 %s21, %s33
      %s64 = sor.u32 %s62, %s63
      %p65 = scmp.eq.s32.totalorder %s64, 0
      %s67 = sadd.s32 %s66, 1
      %s68 = scalar_select %p65, %s66, %s67
      %p71 = pneg %p65
      %p72 = scmp.eq.s32.totalorder %s14, 1
      %p73 = por %p71, %p72
      %p74 = scmp.ne.s32.totalorder %s66, %s69
      %p75 = scmp.eq.s32.totalorder %s14, 0
      %p76 = por %p74, %p75
      %p77 = scmp.ne.s32.totalorder %s66, %s69
      %p78 = scmp.eq.s32.totalorder %s19, 1
      %p79 = por %p77, %p78
      %p80 = scmp.ne.s32.totalorder %s69, %s70
      %p81 = scmp.eq.s32.totalorder %s19, 0
      %p82 = por %p80, %p81
      %p83 = scmp.ne.s32.totalorder %s69, %s70
      %p84 = scmp.eq.s32.totalorder %s20, 1
      %p85 = por %p83, %p84
      %p87 = scmp.ne.s32.totalorder %s70, %s86
      %p88 = scmp.eq.s32.totalorder %s20, 0
      %p89 = por %p87, %p88
      %s91 = sadd.s32 %s90, 1
      %p94 = scmp.eq.s32.totalorder %s14, 1
      %p95 = scmp.ne.s32.totalorder %s90, %s92
      %p96 = scmp.eq.s32.totalorder %s14, 0
      %p97 = por %p95, %p96
      %p98 = scmp.ne.s32.totalorder %s90, %s92
      %p99 = scmp.eq.s32.totalorder %s19, 1
      %p100 = por %p98, %p99
      %p101 = scmp.ne.s32.totalorder %s92, %s93
      %p102 = scmp.eq.s32.totalorder %s19, 0
      %p103 = por %p101, %p102
      %p104 = scmp.ne.s32.totalorder %s92, %s93
      %p105 = scmp.eq.s32.totalorder %s20, 1
      %p106 = por %p104, %p105
      %p108 = scmp.ne.s32.totalorder %s93, %s107
      %p109 = scmp.eq.s32.totalorder %s20, 0
      %p110 = por %p108, %p109
      %s112 = sadd.s32 %s111, 1
      %p115 = scmp.eq.s32.totalorder %s14, 1
      %p116 = scmp.ne.s32.totalorder %s111, %s113
      %p117 = scmp.eq.s32.totalorder %s14, 0
      %p118 = por %p116, %p117
      %p119 = scmp.ne.s32.totalorder %s111, %s113
      %p120 = scmp.eq.s32.totalorder %s19, 1
      %p121 = por %p119, %p120
      %p122 = scmp.ne.s32.totalorder %s113, %s114
      %p123 = scmp.eq.s32.totalorder %s19, 0
      %p124 = por %p122, %p123
      %p125 = scmp.ne.s32.totalorder %s113, %s114
      %p126 = scmp.eq.s32.totalorder %s20, 1
      %p127 = por %p125, %p126
      %p129 = scmp.ne.s32.totalorder %s114, %s128
      %p130 = scmp.eq.s32.totalorder %s20, 0
      %p131 = por %p129, %p130
      %s133 = sadd.s32 %s132, 1
      %p136 = scmp.eq.s32.totalorder %s14, 1
      %p137 = scmp.ne.s32.totalorder %s132, %s134
      %p138 = scmp.eq.s32.totalorder %s14, 0
      %p139 = por %p137, %p138
      %p140 = scmp.ne.s32.totalorder %s132, %s134
      %p141 = scmp.eq.s32.totalorder %s19, 1
      %p142 = por %p140, %p141
      %p143 = scmp.ne.s32.totalorder %s134, %s135
      %p144 = scmp.eq.s32.totalorder %s19, 0
      %p145 = por %p143, %p144
      %p146 = scmp.ne.s32.totalorder %s134, %s135
      %p147 = scmp.eq.s32.totalorder %s20, 1
      %p148 = por %p146, %p147
      %p150 = scmp.ne.s32.totalorder %s135, %s149
      %p151 = scmp.eq.s32.totalorder %s20, 0
      %p152 = por %p150, %p151
      %s154 = sadd.s32 %s153, 1
      %p157 = scmp.eq.s32.totalorder %s14, 1
      %p158 = scmp.ne.s32.totalorder %s153, %s155
      %p159 = scmp.eq.s32.totalorder %s14, 0
      %p160 = por %p158, %p159
      %p161 = scmp.ne.s32.totalorder %s153, %s155
      %p162 = scmp.eq.s32.totalorder %s19, 1
      %p163 = por %p161, %p162
      %p164 = scmp.ne.s32.totalorder %s155, %s156
      %p165 = scmp.eq.s32.totalorder %s19, 0
      %p166 = por %p164, %p165
      %p167 = scmp.ne.s32.totalorder %s155, %s156
      %p168 = scmp.eq.s32.totalorder %s20, 1
      %p169 = por %p167, %p168
      %p171 = scmp.ne.s32.totalorder %s156, %s170
      %p172 = scmp.eq.s32.totalorder %s20, 0
      %p173 = por %p171, %p172
      %s175 = sadd.s32 %s174, 1
      %p178 = scmp.eq.s32.totalorder %s14, 1
      %p179 = scmp.ne.s32.totalorder %s174, %s176
      %p180 = scmp.eq.s32.totalorder %s14, 0
      %p181 = por %p179, %p180
      %p182 = scmp.ne.s32.totalorder %s174, %s176
      %p183 = scmp.eq.s32.totalorder %s19, 1
      %p184 = por %p182, %p183
      %p185 = scmp.ne.s32.totalorder %s176, %s177
      %p186 = scmp.eq.s32.totalorder %s19, 0
      %p187 = por %p185, %p186
      %p188 = scmp.ne.s32.totalorder %s176, %s177
      %p189 = scmp.eq.s32.totalorder %s20, 1
      %p190 = por %p188, %p189
      %p192 = scmp.ne.s32.totalorder %s177, %s191
      %p193 = scmp.eq.s32.totalorder %s20, 0
      %p194 = por %p192, %p193
      %s196 = sadd.s32 %s195, 1
      %p199 = scmp.eq.s32.totalorder %s14, 1
      %p200 = scmp.ne.s32.totalorder %s195, %s197
      %p201 = scmp.eq.s32.totalorder %s14, 0
      %p202 = por %p200, %p201
      %p203 = scmp.ne.s32.totalorder %s195, %s197
      %p204 = scmp.eq.s32.totalorder %s19, 1
      %p205 = por %p203, %p204
      %p206 = scmp.ne.s32.totalorder %s197, %s198
      %p207 = scmp.eq.s32.totalorder %s19, 0
      %p208 = por %p206, %p207
      %p209 = scmp.ne.s32.totalorder %s197, %s198
      %p210 = scmp.eq.s32.totalorder %s20, 1
      %p211 = por %p209, %p210
      %p213 = scmp.ne.s32.totalorder %s198, %s212
      %p214 = scmp.eq.s32.totalorder %s20, 0
      %p215 = por %p213, %p214
      %s216 = ssub.s32 %s22, %s29
      %s217 = ssub.s32 %s21, %s33
      %s218 = sor.u32 %s216, %s217
      %p219 = scmp.eq.s32.totalorder %s218, 0
      %s221 = sadd.s32 %s220, 1
      %s222 = scalar_select %p219, %s220, %s221
      %p225 = pneg %p219
      %p226 = scmp.eq.s32.totalorder %s14, 1
      %p227 = por %p225, %p226
      %p228 = scmp.ne.s32.totalorder %s220, %s223
      %p229 = scmp.eq.s32.totalorder %s14, 0
      %p230 = por %p228, %p229
      %p231 = scmp.ne.s32.totalorder %s220, %s223
      %p232 = scmp.eq.s32.totalorder %s19, 1
      %p233 = por %p231, %p232
      %p234 = scmp.ne.s32.totalorder %s223, %s224
      %p235 = scmp.eq.s32.totalorder %s19, 0
      %p236 = por %p234, %p235
      %p237 = scmp.ne.s32.totalorder %s223, %s224
      %p238 = scmp.eq.s32.totalorder %s20, 1
      %p239 = por %p237, %p238
      %p241 = scmp.ne.s32.totalorder %s224, %s240
      %p242 = scmp.eq.s32.totalorder %s20, 0
      %p243 = por %p241, %p242
      %p244 = scmp.le.s32.totalorder 1, %s14
      %p245 = scmp.lt.s32.totalorder %s14, 3
      %p246 = pnand %p244, %p245
      %p247 = pneg %p246
      // Predicated region
      $region9: #{up_forward.1} parent=5 // pred_check
        _
      $region10: #{up_forward.1} parent=5 // pred_check_branch
        %249 = sbr.rel (%p246) target = $region12
      $region11: #{up_forward.1} parent=5 // pred_region
        %s250 = ssub.s32 %s14, 1
        // Predicated region
        $region13: #{up_forward.1} parent=11 // pred_check
          %p251 = pneg %p103
        $region14: #{up_forward.1} parent=11 // pred_check_branch
          %253 = sbr.rel (%p251) target = $region16
        $region15: #{up_forward.1} parent=11 // pred_region
          _
        $region16: #{up_forward.1} parent=11 // pred_fallthru
          _
        // Predicated region
        $region17: #{up_forward.1} parent=11 // pred_check
          %p254 = pneg %p124
        $region18: #{up_forward.1} parent=11 // pred_check_branch
          %256 = sbr.rel (%p254) target = $region20
        $region19: #{up_forward.1} parent=11 // pred_region
          _
        $region20: #{up_forward.1} parent=11 // pred_fallthru
          _
        // Predicated region
        $region21: #{up_forward.1} parent=11 // pred_check
          %p257 = pneg %p145
        $region22: #{up_forward.1} parent=11 // pred_check_branch
          %259 = sbr.rel (%p257) target = $region24
        $region23: #{up_forward.1} parent=11 // pred_region
          _
        $region24: #{up_forward.1} parent=11 // pred_fallthru
          _
        // Predicated region
        $region25: #{up_forward.1} parent=11 // pred_check
          %p260 = pneg %p166
        $region26: #{up_forward.1} parent=11 // pred_check_branch
          %262 = sbr.rel (%p260) target = $region28
        $region27: #{up_forward.1} parent=11 // pred_region
          _
        $region28: #{up_forward.1} parent=11 // pred_fallthru
          _
        // Predicated region
        $region29: #{up_forward.1} parent=11 // pred_check
          %p263 = pneg %p187
        $region30: #{up_forward.1} parent=11 // pred_check_branch
          %265 = sbr.rel (%p263) target = $region32
        $region31: #{up_forward.1} parent=11 // pred_region
          _
        $region32: #{up_forward.1} parent=11 // pred_fallthru
          _
        // Predicated region
        $region33: #{up_forward.1} parent=11 // pred_check
          %p266 = pneg %p208
        $region34: #{up_forward.1} parent=11 // pred_check_branch
          %268 = sbr.rel (%p266) target = $region36
        $region35: #{up_forward.1} parent=11 // pred_region
          _
        $region36: #{up_forward.1} parent=11 // pred_fallthru
          _
      $region12: #{up_forward.1} parent=5 // pred_fallthru
        _
      %p269 = scmp.lt.s32.totalorder %s14, 2
      // Predicated region
      $region37: #{up_forward.1} parent=5 // pred_check
        %p270 = pneg %p269
      $region38: #{up_forward.1} parent=5 // pred_check_branch
        %272 = sbr.rel (%p270) target = $region40
      $region39: #{up_forward.1} parent=5 // pred_region
        // Predicated region
        $region41: #{up_forward.1} parent=39 // pred_check
          %p273 = pneg %p48
        $region42: #{up_forward.1} parent=39 // pred_check_branch
          %275 = sbr.rel (%p273) target = $region44
        $region43: #{up_forward.1} parent=39 // pred_region
          %s276 = sand.u32 %s38, 1
          %s277 = sand.u32 %s38, 1
          %s278 = smul.addr %s277, 16
          %s279 = scalar_lea.vmem [#allocation4], %s278
          %s280 = smul.u32 2, %s22
          %s281 = smul.addr %s280, 2
          %s282 = sadd.s32 %s21, %s281
          %s283 = smul.addr %s282, 8
          %s284 = scalar_lea.vmem %s0, %s283
          // Predicated region
          $region45: #{up_forward.1} parent=43 // pred_check
            _
          $region46: #{up_forward.1} parent=43 // pred_check_branch
            %286 = sbr.rel (0) target = $region48
          $region47: #{up_forward.1} parent=43 // pred_region
            // Predicated region
            $region49: #{up_forward.1} parent=47 // pred_check
              _
            $region50: #{up_forward.1} parent=47 // pred_check_branch
              %288 = sbr.rel (0) target = $region52
            $region51: #{up_forward.1} parent=47 // pred_region
              // Predicated region
              $region64: #{up_forward.1} parent=51 // pred_check
                _
              $region65: #{up_forward.1} parent=51 // pred_check_branch
                %305 = sbr.rel (0) target = $region67
              $region66: #{up_forward.1} parent=51 // pred_region
                loop: start=0, step=1, limit=1
                $region68: #{up_forward.1} parent=66 // loop_pre_header
                  _
                $region69: #{up_forward.1} parent=66 // loop_header
                  %s307 = sphi 0, %s311
                  %p308 = scmp.ge.s32.totalorder %s307, 1
                  %s312 = sphi %s284, %s284
                  %s313 = sphi %s279, %s279
                $region70: #{up_forward.1} parent=66 // loop_header_branch
                  %310 = sbr.rel (%p308) target = $region74
                $region71: #{up_forward.1} parent=66 // loop_body
                  %v314 = vld [vmem:[%s312] sm:$0xff]
                  %315 = vst [vmem:[%s313] sm:$0xff] %v314
                  %v316 = vld [vmem:[%s312 + $0x10] sm:$0xff]
                  %317 = vst [vmem:[%s313 + $0x8] sm:$0xff] %v316
                $region72: #{up_forward.1} parent=66 // loop_footer
                  %s311 = sadd.s32 1, %s307
                $region73: #{up_forward.1} parent=66 // loop_footer_branch
                  %306 = sbr.rel target = $region69
                $region74: #{up_forward.1} parent=66 // loop_exit
                  _
              $region67: #{up_forward.1} parent=51 // pred_fallthru
                _
              // Predicated region
              $region75: #{up_forward.1} parent=51 // pred_check
                _
              $region76: #{up_forward.1} parent=51 // pred_check_branch
                %319 = sbr.rel target = $region78
              $region77: #{up_forward.1} parent=51 // pred_region
                _
              $region78: #{up_forward.1} parent=51 // pred_fallthru
                _
            $region52: #{up_forward.1} parent=47 // pred_fallthru
              _
            // Predicated region
            $region53: #{up_forward.1} parent=47 // pred_check
              _
            $region54: #{up_forward.1} parent=47 // pred_check_branch
              %290 = sbr.rel target = $region56
            $region55: #{up_forward.1} parent=47 // pred_region
              loop: start=0, step=1, limit=1
              $region57: #{up_forward.1} parent=55 // loop_pre_header
                _
              $region58: #{up_forward.1} parent=55 // loop_header
                %s293 = sphi 0, %s297
                %p294 = scmp.ge.s32.totalorder %s293, 1
                %s298 = sphi %s284, %s284
                %s299 = sphi %s279, %s279
              $region59: #{up_forward.1} parent=55 // loop_header_branch
                %296 = sbr.rel (%p294) target = $region63
              $region60: #{up_forward.1} parent=55 // loop_body
                %v300 = vld [vmem:[%s298] sm:$0xff]
                %301 = vst [vmem:[%s299] sm:$0xff] %v300
                %v302 = vld [vmem:[%s298 + $0x10] sm:$0xff]
                %303 = vst [vmem:[%s299 + $0x8] sm:$0xff] %v302
              $region61: #{up_forward.1} parent=55 // loop_footer
                %s297 = sadd.s32 1, %s293
              $region62: #{up_forward.1} parent=55 // loop_footer_branch
                %292 = sbr.rel target = $region58
              $region63: #{up_forward.1} parent=55 // loop_exit
                _
            $region56: #{up_forward.1} parent=47 // pred_fallthru
              _
          $region48: #{up_forward.1} parent=43 // pred_fallthru
            _
          %320 = vnop
        $region44: #{up_forward.1} parent=39 // pred_fallthru
          _
        // Predicated region
        $region79: #{up_forward.1} parent=39 // pred_check
          %p321 = pneg %p76
        $region80: #{up_forward.1} parent=39 // pred_check_branch
          %323 = sbr.rel (%p321) target = $region82
        $region81: #{up_forward.1} parent=39 // pred_region
          %s324 = sand.u32 %s66, 1
          %s325 = sand.u32 %s66, 1
          %s326 = smul.addr %s325, 32
          %s327 = scalar_lea.vmem [#allocation5], %s326
          %s328 = smul.u32 2, %s22
          %s329 = smul.u32 2, %s21
          %s330 = smul.addr %s328, 4
          %s331 = sadd.s32 %s329, %s330
          %s332 = smul.addr %s331, 8
          %s333 = scalar_lea.vmem %s1, %s332
          // Predicated region
          $region83: #{up_forward.1} parent=81 // pred_check
            _
          $region84: #{up_forward.1} parent=81 // pred_check_branch
            %335 = sbr.rel (0) target = $region86
          $region85: #{up_forward.1} parent=81 // pred_region
            // Predicated region
            $region87: #{up_forward.1} parent=85 // pred_check
              _
            $region88: #{up_forward.1} parent=85 // pred_check_branch
              %337 = sbr.rel (0) target = $region90
            $region89: #{up_forward.1} parent=85 // pred_region
              loop: start=0, step=1, limit=1
              $region91: #{up_forward.1} parent=89 // loop_pre_header
                _
              $region92: #{up_forward.1} parent=89 // loop_header
                %s339 = sphi 0, %s343
                %p340 = scmp.ge.s32.totalorder %s339, 1
                %s344 = sphi %s333, %s333
                %s345 = sphi %s327, %s327
              $region93: #{up_forward.1} parent=89 // loop_header_branch
                %342 = sbr.rel (%p340) target = $region97
              $region94: #{up_forward.1} parent=89 // loop_body
                %v346 = vld [vmem:[%s344] sm:$0xff]
                %347 = vst [vmem:[%s345] sm:$0xff] %v346
                %v348 = vld [vmem:[%s344 + $0x8] sm:$0xff]
                %349 = vst [vmem:[%s345 + $0x8] sm:$0xff] %v348
                %v350 = vld [vmem:[%s344 + $0x20] sm:$0xff]
                %351 = vst [vmem:[%s345 + $0x10] sm:$0xff] %v350
                %v352 = vld [vmem:[%s344 + $0x28] sm:$0xff]
                %353 = vst [vmem:[%s345 + $0x18] sm:$0xff] %v352
              $region95: #{up_forward.1} parent=89 // loop_footer
                %s343 = sadd.s32 1, %s339
              $region96: #{up_forward.1} parent=89 // loop_footer_branch
                %338 = sbr.rel target = $region92
              $region97: #{up_forward.1} parent=89 // loop_exit
                _
            $region90: #{up_forward.1} parent=85 // pred_fallthru
              _
            // Predicated region
            $region98: #{up_forward.1} parent=85 // pred_check
              _
            $region99: #{up_forward.1} parent=85 // pred_check_branch
              %355 = sbr.rel target = $region101
            $region100: #{up_forward.1} parent=85 // pred_region
              _
            $region101: #{up_forward.1} parent=85 // pred_fallthru
              _
          $region86: #{up_forward.1} parent=81 // pred_fallthru
            _
          %356 = vnop
        $region82: #{up_forward.1} parent=39 // pred_fallthru
          _
      $region40: #{up_forward.1} parent=5 // pred_fallthru
        _
      %p357 = scmp.le.s32.totalorder 1, %s14
      %p358 = scmp.lt.s32.totalorder %s14, 3
      %p359 = pnand %p357, %p358
      %p360 = pneg %p359
      // Predicated region
      $region102: #{up_forward.1} parent=5 // pred_check
        _
      $region103: #{up_forward.1} parent=5 // pred_check_branch
        %362 = sbr.rel (%p359) target = $region105
      $region104: #{up_forward.1} parent=5 // pred_region
        %s363 = ssub.s32 %s14, 1
        %s364 = sand.u32 %s41, 1
        %s365 = sand.u32 %s41, 1
        %s366 = smul.addr %s365, 16
        %s367 = scalar_lea.vmem [#allocation4], %s366
        // Predicated region
        $region106: #{up_forward.1} parent=104 // pred_check
          %p368 = pneg %p54
        $region107: #{up_forward.1} parent=104 // pred_check_branch
          %370 = sbr.rel (%p368) target = $region109
        $region108: #{up_forward.1} parent=104 // pred_region
          _
        $region109: #{up_forward.1} parent=104 // pred_fallthru
          _
        %s371 = sand.u32 %s69, 1
        %s372 = sand.u32 %s69, 1
        %s373 = smul.addr %s372, 32
        %s374 = scalar_lea.vmem [#allocation5], %s373
        // Predicated region
        $region110: #{up_forward.1} parent=104 // pred_check
          %p375 = pneg %p82
        $region111: #{up_forward.1} parent=104 // pred_check_branch
          %377 = sbr.rel (%p375) target = $region113
        $region112: #{up_forward.1} parent=104 // pred_region
          _
        $region113: #{up_forward.1} parent=104 // pred_fallthru
          _
        %s378 = sand.u32 %s41, 1
        %s379 = sand.u32 %s41, 1
        %s380 = smul.addr %s379, 16
        %s381 = scalar_lea.vmem [#allocation4], %s380
        %p382 = pneg %p54
        %p383 = pneg %p51
        %s384 = sand.u32 %s69, 1
        %s385 = sand.u32 %s69, 1
        %s386 = smul.addr %s385, 32
        %s387 = scalar_lea.vmem [#allocation5], %s386
        %p388 = pneg %p82
        %p389 = pneg %p79
        %p390 = pneg %p103
        %p391 = pneg %p100
        %p392 = pneg %p124
        %p393 = pneg %p121
        %p394 = pneg %p145
        %p395 = pneg %p142
        %p396 = pneg %p166
        %p397 = pneg %p163
        %p398 = pneg %p187
        %p399 = pneg %p184
        %p400 = pneg %p208
        %p401 = pneg %p205
        %p402 = pneg %p236
        %p403 = pneg %p233
        %s404 = sand.u32 %s223, 1
        %s405 = sand.u32 %s223, 1
        %s406 = smul.addr %s405, 64
        %s407 = scalar_lea.vmem [#allocation6], %s406
        %s408 = smul.u32 2, %s24
        %s409 = smul.u32 2, %s24
        %s410 = smul.u32 2, %s23
        %s411 = smul.u32 2, %s24
        %s412 = smul.u32 2, %s23
        %p413 = scmp.eq.s32.totalorder %s24, 0
        // Predicated region
        $region114: #{up_forward.1} parent=104 // pred_check
          %p414 = pneg %p413
        $region115: #{up_forward.1} parent=104 // pred_check_branch
          %416 = sbr.rel (%p414) target = $region117
        $region116: #{up_forward.1} parent=104 // pred_region
          %417 = vst [vmem:[#allocation2] sm:$0xff] 0.0
          %418 = vst [vmem:[#allocation2 + $0x8] sm:$0xff] 0.0
          %419 = vst [vmem:[#allocation3] sm:$0xff] 0.0
          %420 = vst [vmem:[#allocation3 + $0x8] sm:$0xff] 0.0
          %421 = vst [vmem:[#allocation3 + $0x10] sm:$0xff] 0.0
          %422 = vst [vmem:[#allocation3 + $0x18] sm:$0xff] 0.0
        $region117: #{up_forward.1} parent=104 // pred_fallthru
          _
        %v423 = vld [vmem:[%s367] sm:$0xff]
        %v424 = vld [vmem:[%s2] sm:$0xff]
        %v425 = vld [vmem:[%s2 + $0x8] sm:$0xff]
        %v426 = vld [vmem:[%s2 + $0x10] sm:$0xff]
        %v427 = vld [vmem:[%s2 + $0x18] sm:$0xff]
        %v428 = vld [vmem:[%s2 + $0x20] sm:$0xff]
        %v429 = vld [vmem:[%s2 + $0x28] sm:$0xff]
        %v430 = vld [vmem:[%s2 + $0x30] sm:$0xff]
        %v431 = vld [vmem:[%s2 + $0x38] sm:$0xff]
        %v432 = vld [vmem:[%s2 + $0x40] sm:$0xff]
        %v433 = vld [vmem:[%s2 + $0x48] sm:$0xff]
        %v434 = vld [vmem:[%s2 + $0x50] sm:$0xff]
        %v435 = vld [vmem:[%s2 + $0x58] sm:$0xff]
        %v436 = vld [vmem:[%s2 + $0x60] sm:$0xff]
        %v437 = vld [vmem:[%s2 + $0x68] sm:$0xff]
        %vm438 = vcmask 457728
        %v440 = vsel %vm438, %v423, 0
        %v442 = vand.u32 %v425, 4294901760
        %443 = vmatprep.subr.mxu0 %v442
        %v444 = vand.u32 %v424, 4294901760
        %445 = vmatpush1.msra.mxu0 %v444
        %v446 = vand.u32 %v427, 4294901760
        %447 = vmatprep.subr.mxu0 %v446
        %v448 = vand.u32 %v426, 4294901760
        %449 = vmatpush1.msra.mxu0 %v448
        %v450 = vand.u32 %v429, 4294901760
        %451 = vmatprep.subr.mxu0 %v450
        %v452 = vand.u32 %v428, 4294901760
        %453 = vmatpush1.msra.mxu0 %v452
        %v454 = vand.u32 %v431, 4294901760
        %455 = vmatprep.subr.mxu0 %v454
        %v456 = vand.u32 %v430, 4294901760
        %457 = vmatpush1.msra.mxu0 %v456
        %v458 = vand.u32 %v433, 4294901760
        %459 = vmatprep.subr.mxu0 %v458
        %v460 = vand.u32 %v432, 4294901760
        %461 = vmatpush1.msra.mxu0 %v460
        %v462 = vand.u32 %v435, 4294901760
        %463 = vmatprep.subr.mxu0 %v462
        %v464 = vand.u32 %v434, 4294901760
        %465 = vmatpush1.msra.mxu0 %v464
        %v466 = vand.u32 %v437, 4294901760
        %467 = vmatprep.subr.mxu0 %v466
        %v468 = vand.u32 %v436, 4294901760
        %469 = vmatpush1.msra.mxu0 %v468
        %470 = vmatprep.subr.mxu0 0.0
        %471 = vmatpush1.msra.mxu0 0.0
        %472 = vmatprep.subr.mxu0 0.0
        %473 = vmatpush1.msra.mxu0 0.0
        %474 = vmatprep.subr.mxu0 0.0
        %475 = vmatpush1.msra.mxu0 0.0
        %476 = vmatprep.subr.mxu0 0.0
        %477 = vmatpush1.msra.mxu0 0.0
        %478 = vmatprep.subr.mxu0 0.0
        %479 = vmatpush1.msra.mxu0 0.0
        %480 = vmatprep.subr.mxu0 0.0
        %481 = vmatpush1.msra.mxu0 0.0
        %482 = vmatprep.subr.mxu0 0.0
        %483 = vmatpush1.msra.mxu0 0.0
        %484 = vmatprep.subr.mxu0 0.0
        %485 = vmatpush1.msra.mxu0 0.0
        %486 = vmatprep.subr.mxu0 0.0
        %487 = vmatpush1.msra.mxu0 0.0
        %488 = vmatprep.subr.mxu0 0.0
        %489 = vmatpush1.msra.mxu0 0.0
        %490 = vmatprep.subr.mxu0 0.0
        %491 = vmatpush1.msra.mxu0 0.0
        %492 = vmatprep.subr.mxu0 0.0
        %493 = vmatpush1.msra.mxu0 0.0
        %494 = vmatprep.subr.mxu0 0.0
        %495 = vmatpush1.msra.mxu0 0.0
        %496 = vmatprep.subr.mxu0 0.0
        %497 = vmatpush1.msra.mxu0 0.0
        %498 = vmatprep.subr.mxu0 0.0
        %499 = vmatpush1.msra.mxu0 0.0
        %500 = vmatprep.subr.mxu0 0.0
        %501 = vmatpush1.msra.mxu0 0.0
        %502 = vmatprep.subr.mxu0 0.0
        %503 = vmatpush1.msra.mxu0 0.0
        %504 = vmatprep.subr.mxu0 0.0
        %505 = vmatpush1.msra.mxu0 0.0
        %506 = vmatprep.subr.mxu0 0.0
        %507 = vmatpush1.msra.mxu0 0.0
        %508 = vmatprep.subr.mxu0 0.0
        %509 = vmatpush1.msra.mxu0 0.0
        %510 = vmatprep.subr.mxu0 0.0
        %511 = vmatpush1.msra.mxu0 0.0
        %512 = vmatprep.subr.mxu0 0.0
        %513 = vmatpush1.msra.mxu0 0.0
        %514 = vmatprep.subr.mxu0 0.0
        %515 = vmatpush1.msra.mxu0 0.0
        %516 = vmatprep.subr.mxu0 0.0
        %517 = vmatpush1.msra.mxu0 0.0
        %518 = vmatprep.subr.mxu0 0.0
        %519 = vmatpush1.msra.mxu0 0.0
        %520 = vmatprep.mubr.f32.mxu0 0.0
        %v521 = vand.u32 %v440, 4294901760
        %v522 = vsub.f32 %v440, %v521
        %v523 = vand.u32 %v522, 4294901760
        %v524 = vsub.f32 %v522, %v523
        %v525 = vand.u32 %v524, 4294901760
        %526 = vmatmul.mubr.f32.gmra.mrb[0].mxu0 %v525
        %v527 = vpop.f32.mrb[0].mxu0
        %v528 = vadd.f32 0.0, %v527
        %v529 = vpop.f32.mrb[0].mxu0
        %v530 = vadd.f32 0.0, %v529
        %531 = vdwg.mxu0
        %v532 = vand.u32 %v425, 4294901760
        %v533 = vsub.f32 %v425, %v532
        %v534 = vand.u32 %v533, 4294901760
        %v535 = vsub.f32 %v533, %v534
        %v536 = vand.u32 %v535, 4294901760
        %537 = vmatprep.subr.mxu0 %v536
        %v538 = vand.u32 %v424, 4294901760
        %v539 = vsub.f32 %v424, %v538
        %v540 = vand.u32 %v539, 4294901760
        %v541 = vsub.f32 %v539, %v540
        %v542 = vand.u32 %v541, 4294901760
        %543 = vmatpush1.msra.mxu0 %v542
        %v544 = vand.u32 %v427, 4294901760
        %v545 = vsub.f32 %v427, %v544
        %v546 = vand.u32 %v545, 4294901760
        %v547 = vsub.f32 %v545, %v546
        %v548 = vand.u32 %v547, 4294901760
        %549 = vmatprep.subr.mxu0 %v548
        %v550 = vand.u32 %v426, 4294901760
        %v551 = vsub.f32 %v426, %v550
        %v552 = vand.u32 %v551, 4294901760
        %v553 = vsub.f32 %v551, %v552
        %v554 = vand.u32 %v553, 4294901760
        %555 = vmatpush1.msra.mxu0 %v554
        %v556 = vand.u32 %v429, 4294901760
        %v557 = vsub.f32 %v429, %v556
        %v558 = vand.u32 %v557, 4294901760
        %v559 = vsub.f32 %v557, %v558
        %v560 = vand.u32 %v559, 4294901760
        %561 = vmatprep.subr.mxu0 %v560
        %v562 = vand.u32 %v428, 4294901760
        %v563 = vsub.f32 %v428, %v562
        %v564 = vand.u32 %v563, 4294901760
        %v565 = vsub.f32 %v563, %v564
        %v566 = vand.u32 %v565, 4294901760
        %567 = vmatpush1.msra.mxu0 %v566
        %v568 = vand.u32 %v431, 4294901760
        %v569 = vsub.f32 %v431, %v568
        %v570 = vand.u32 %v569, 4294901760
        %v571 = vsub.f32 %v569, %v570
        %v572 = vand.u32 %v571, 4294901760
        %573 = vmatprep.subr.mxu0 %v572
        %v574 = vand.u32 %v430, 4294901760
        %v575 = vsub.f32 %v430, %v574
        %v576 = vand.u32 %v575, 4294901760
        %v577 = vsub.f32 %v575, %v576
        %v578 = vand.u32 %v577, 4294901760
        %579 = vmatpush1.msra.mxu0 %v578
        %v580 = vand.u32 %v433, 4294901760
        %v581 = vsub.f32 %v433, %v580
        %v582 = vand.u32 %v581, 4294901760
        %v583 = vsub.f32 %v581, %v582
        %v584 = vand.u32 %v583, 4294901760
        %585 = vmatprep.subr.mxu0 %v584
        %v586 = vand.u32 %v432, 4294901760
        %v587 = vsub.f32 %v432, %v586
        %v588 = vand.u32 %v587, 4294901760
        %v589 = vsub.f32 %v587, %v588
        %v590 = vand.u32 %v589, 4294901760
        %591 = vmatpush1.msra.mxu0 %v590
        %v592 = vand.u32 %v435, 4294901760
        %v593 = vsub.f32 %v435, %v592
        %v594 = vand.u32 %v593, 4294901760
        %v595 = vsub.f32 %v593, %v594
        %v596 = vand.u32 %v595, 4294901760
        %597 = vmatprep.subr.mxu0 %v596
        %v598 = vand.u32 %v434, 4294901760
        %v599 = vsub.f32 %v434, %v598
        %v600 = vand.u32 %v599, 4294901760
        %v601 = vsub.f32 %v599, %v600
        %v602 = vand.u32 %v601, 4294901760
        %603 = vmatpush1.msra.mxu0 %v602
        %v604 = vand.u32 %v437, 4294901760
        %v605 = vsub.f32 %v437, %v604
        %v606 = vand.u32 %v605, 4294901760
        %v607 = vsub.f32 %v605, %v606
        %v608 = vand.u32 %v607, 4294901760
        %609 = vmatprep.subr.mxu0 %v608
        %v610 = vand.u32 %v436, 4294901760
        %v611 = vsub.f32 %v436, %v610
        %v612 = vand.u32 %v611, 4294901760
        %v613 = vsub.f32 %v611, %v612
        %v614 = vand.u32 %v613, 4294901760
        %615 = vmatpush1.msra.mxu0 %v614
        %616 = vmatprep.subr.mxu0 0.0
        %617 = vmatpush1.msra.mxu0 0.0
        %618 = vmatprep.subr.mxu0 0.0
        %619 = vmatpush1.msra.mxu0 0.0
        %620 = vmatprep.subr.mxu0 0.0
        %621 = vmatpush1.msra.mxu0 0.0
        %622 = vmatprep.subr.mxu0 0.0
        %623 = vmatpush1.msra.mxu0 0.0
        %624 = vmatprep.subr.mxu0 0.0
        %625 = vmatpush1.msra.mxu0 0.0
        %626 = vmatprep.subr.mxu0 0.0
        %627 = vmatpush1.msra.mxu0 0.0
        %628 = vmatprep.subr.mxu0 0.0
        %629 = vmatpush1.msra.mxu0 0.0
        %630 = vmatprep.subr.mxu0 0.0
        %631 = vmatpush1.msra.mxu0 0.0
        %632 = vmatprep.subr.mxu0 0.0
        %633 = vmatpush1.msra.mxu0 0.0
        %634 = vmatprep.subr.mxu0 0.0
        %635 = vmatpush1.msra.mxu0 0.0
        %636 = vmatprep.subr.mxu0 0.0
        %637 = vmatpush1.msra.mxu0 0.0
        %638 = vmatprep.subr.mxu0 0.0
        %639 = vmatpush1.msra.mxu0 0.0
        %640 = vmatprep.subr.mxu0 0.0
        %641 = vmatpush1.msra.mxu0 0.0
        %642 = vmatprep.subr.mxu0 0.0
        %643 = vmatpush1.msra.mxu0 0.0
        %644 = vmatprep.subr.mxu0 0.0
        %645 = vmatpush1.msra.mxu0 0.0
        %646 = vmatprep.subr.mxu0 0.0
        %647 = vmatpush1.msra.mxu0 0.0
        %648 = vmatprep.subr.mxu0 0.0
        %649 = vmatpush1.msra.mxu0 0.0
        %650 = vmatprep.subr.mxu0 0.0
        %651 = vmatpush1.msra.mxu0 0.0
        %652 = vmatprep.subr.mxu0 0.0
        %653 = vmatpush1.msra.mxu0 0.0
        %654 = vmatprep.subr.mxu0 0.0
        %655 = vmatpush1.msra.mxu0 0.0
        %656 = vmatprep.subr.mxu0 0.0
        %657 = vmatpush1.msra.mxu0 0.0
        %658 = vmatprep.subr.mxu0 0.0
        %659 = vmatpush1.msra.mxu0 0.0
        %660 = vmatprep.subr.mxu0 0.0
        %661 = vmatpush1.msra.mxu0 0.0
        %662 = vmatprep.subr.mxu0 0.0
        %663 = vmatpush1.msra.mxu0 0.0
        %664 = vmatprep.subr.mxu0 0.0
        %665 = vmatpush1.msra.mxu0 0.0
        %666 = vmatprep.mubr.f32.mxu0 0.0
        %v667 = vand.u32 %v440, 4294901760
        %668 = vmatmul.mubr.f32.gmra.mrb[0].mxu0 %v667
        %v669 = vpop.f32.mrb[0].mxu0
        %v670 = vadd.f32 %v528, %v669
        %v671 = vpop.f32.mrb[0].mxu0
        %v672 = vadd.f32 %v530, %v671
        %673 = vdwg.mxu0
        %v674 = vand.u32 %v425, 4294901760
        %v675 = vsub.f32 %v425, %v674
        %676 = vmatprep.subr.mxu0 %v675
        %v677 = vand.u32 %v424, 4294901760
        %v678 = vsub.f32 %v424, %v677
        %679 = vmatpush1.msra.mxu0 %v678
        %v680 = vand.u32 %v427, 4294901760
        %v681 = vsub.f32 %v427, %v680
        %682 = vmatprep.subr.mxu0 %v681
        %v683 = vand.u32 %v426, 4294901760
        %v684 = vsub.f32 %v426, %v683
        %685 = vmatpush1.msra.mxu0 %v684
        %v686 = vand.u32 %v429, 4294901760
        %v687 = vsub.f32 %v429, %v686
        %688 = vmatprep.subr.mxu0 %v687
        %v689 = vand.u32 %v428, 4294901760
        %v690 = vsub.f32 %v428, %v689
        %691 = vmatpush1.msra.mxu0 %v690
        %v692 = vand.u32 %v431, 4294901760
        %v693 = vsub.f32 %v431, %v692
        %694 = vmatprep.subr.mxu0 %v693
        %v695 = vand.u32 %v430, 4294901760
        %v696 = vsub.f32 %v430, %v695
        %697 = vmatpush1.msra.mxu0 %v696
        %v698 = vand.u32 %v433, 4294901760
        %v699 = vsub.f32 %v433, %v698
        %700 = vmatprep.subr.mxu0 %v699
        %v701 = vand.u32 %v432, 4294901760
        %v702 = vsub.f32 %v432, %v701
        %703 = vmatpush1.msra.mxu0 %v702
        %v704 = vand.u32 %v435, 4294901760
        %v705 = vsub.f32 %v435, %v704
        %706 = vmatprep.subr.mxu0 %v705
        %v707 = vand.u32 %v434, 4294901760
        %v708 = vsub.f32 %v434, %v707
        %709 = vmatpush1.msra.mxu0 %v708
        %v710 = vand.u32 %v437, 4294901760
        %v711 = vsub.f32 %v437, %v710
        %712 = vmatprep.subr.mxu0 %v711
        %v713 = vand.u32 %v436, 4294901760
        %v714 = vsub.f32 %v436, %v713
        %715 = vmatpush1.msra.mxu0 %v714
        %716 = vmatprep.subr.mxu0 0.0
        %717 = vmatpush1.msra.mxu0 0.0
        %718 = vmatprep.subr.mxu0 0.0
        %719 = vmatpush1.msra.mxu0 0.0
        %720 = vmatprep.subr.mxu0 0.0
        %721 = vmatpush1.msra.mxu0 0.0
        %722 = vmatprep.subr.mxu0 0.0
        %723 = vmatpush1.msra.mxu0 0.0
        %724 = vmatprep.subr.mxu0 0.0
        %725 = vmatpush1.msra.mxu0 0.0
        %726 = vmatprep.subr.mxu0 0.0
        %727 = vmatpush1.msra.mxu0 0.0
        %728 = vmatprep.subr.mxu0 0.0
        %729 = vmatpush1.msra.mxu0 0.0
        %730 = vmatprep.subr.mxu0 0.0
        %731 = vmatpush1.msra.mxu0 0.0
        %732 = vmatprep.subr.mxu0 0.0
        %733 = vmatpush1.msra.mxu0 0.0
        %734 = vmatprep.subr.mxu0 0.0
        %735 = vmatpush1.msra.mxu0 0.0
        %736 = vmatprep.subr.mxu0 0.0
        %737 = vmatpush1.msra.mxu0 0.0
        %738 = vmatprep.subr.mxu0 0.0
        %739 = vmatpush1.msra.mxu0 0.0
        %740 = vmatprep.subr.mxu0 0.0
        %741 = vmatpush1.msra.mxu0 0.0
        %742 = vmatprep.subr.mxu0 0.0
        %743 = vmatpush1.msra.mxu0 0.0
        %744 = vmatprep.subr.mxu0 0.0
        %745 = vmatpush1.msra.mxu0 0.0
        %746 = vmatprep.subr.mxu0 0.0
        %747 = vmatpush1.msra.mxu0 0.0
        %748 = vmatprep.subr.mxu0 0.0
        %749 = vmatpush1.msra.mxu0 0.0
        %750 = vmatprep.subr.mxu0 0.0
        %751 = vmatpush1.msra.mxu0 0.0
        %752 = vmatprep.subr.mxu0 0.0
        %753 = vmatpush1.msra.mxu0 0.0
        %754 = vmatprep.subr.mxu0 0.0
        %755 = vmatpush1.msra.mxu0 0.0
        %756 = vmatprep.subr.mxu0 0.0
        %757 = vmatpush1.msra.mxu0 0.0
        %758 = vmatprep.subr.mxu0 0.0
        %759 = vmatpush1.msra.mxu0 0.0
        %760 = vmatprep.subr.mxu0 0.0
        %761 = vmatpush1.msra.mxu0 0.0
        %762 = vmatprep.subr.mxu0 0.0
        %763 = vmatpush1.msra.mxu0 0.0
        %764 = vmatprep.subr.mxu0 0.0
        %765 = vmatpush1.msra.mxu0 0.0
        %766 = vmatprep.mubr.f32.mxu0 0.0
        %v767 = vand.u32 %v440, 4294901760
        %v768 = vsub.f32 %v440, %v767
        %769 = vmatmul.mubr.f32.gmra.mrb[0].mxu0 %v768
        %v770 = vpop.f32.mrb[0].mxu0
        %v771 = vadd.f32 %v670, %v770
        %v772 = vpop.f32.mrb[0].mxu0
        %v773 = vadd.f32 %v672, %v772
        %774 = vdwg.mxu0
        %v775 = vand.u32 %v425, 4294901760
        %776 = vmatprep.subr.mxu0 %v775
        %v777 = vand.u32 %v424, 4294901760
        %778 = vmatpush1.msra.mxu0 %v777
        %v779 = vand.u32 %v427, 4294901760
        %780 = vmatprep.subr.mxu0 %v779
        %v781 = vand.u32 %v426, 4294901760
        %782 = vmatpush1.msra.mxu0 %v781
        %v783 = vand.u32 %v429, 4294901760
        %784 = vmatprep.subr.mxu0 %v783
        %v785 = vand.u32 %v428, 4294901760
        %786 = vmatpush1.msra.mxu0 %v785
        %v787 = vand.u32 %v431, 4294901760
        %788 = vmatprep.subr.mxu0 %v787
        %v789 = vand.u32 %v430, 4294901760
        %790 = vmatpush1.msra.mxu0 %v789
        %v791 = vand.u32 %v433, 4294901760
        %792 = vmatprep.subr.mxu0 %v791
        %v793 = vand.u32 %v432, 4294901760
        %794 = vmatpush1.msra.mxu0 %v793
        %v795 = vand.u32 %v435, 4294901760
        %796 = vmatprep.subr.mxu0 %v795
        %v797 = vand.u32 %v434, 4294901760
        %798 = vmatpush1.msra.mxu0 %v797
        %v799 = vand.u32 %v437, 4294901760
        %800 = vmatprep.subr.mxu0 %v799
        %v801 = vand.u32 %v436, 4294901760
        %802 = vmatpush1.msra.mxu0 %v801
        %803 = vmatprep.subr.mxu0 0.0
        %804 = vmatpush1.msra.mxu0 0.0
        %805 = vmatprep.subr.mxu0 0.0
        %806 = vmatpush1.msra.mxu0 0.0
        %807 = vmatprep.subr.mxu0 0.0
        %808 = vmatpush1.msra.mxu0 0.0
        %809 = vmatprep.subr.mxu0 0.0
        %810 = vmatpush1.msra.mxu0 0.0
        %811 = vmatprep.subr.mxu0 0.0
        %812 = vmatpush1.msra.mxu0 0.0
        %813 = vmatprep.subr.mxu0 0.0
        %814 = vmatpush1.msra.mxu0 0.0
        %815 = vmatprep.subr.mxu0 0.0
        %816 = vmatpush1.msra.mxu0 0.0
        %817 = vmatprep.subr.mxu0 0.0
        %818 = vmatpush1.msra.mxu0 0.0
        %819 = vmatprep.subr.mxu0 0.0
        %820 = vmatpush1.msra.mxu0 0.0
        %821 = vmatprep.subr.mxu0 0.0
        %822 = vmatpush1.msra.mxu0 0.0
        %823 = vmatprep.subr.mxu0 0.0
        %824 = vmatpush1.msra.mxu0 0.0
        %825 = vmatprep.subr.mxu0 0.0
        %826 = vmatpush1.msra.mxu0 0.0
        %827 = vmatprep.subr.mxu0 0.0
        %828 = vmatpush1.msra.mxu0 0.0
        %829 = vmatprep.subr.mxu0 0.0
        %830 = vmatpush1.msra.mxu0 0.0
        %831 = vmatprep.subr.mxu0 0.0
        %832 = vmatpush1.msra.mxu0 0.0
        %833 = vmatprep.subr.mxu0 0.0
        %834 = vmatpush1.msra.mxu0 0.0
        %835 = vmatprep.subr.mxu0 0.0
        %836 = vmatpush1.msra.mxu0 0.0
        %837 = vmatprep.subr.mxu0 0.0
        %838 = vmatpush1.msra.mxu0 0.0
        %839 = vmatprep.subr.mxu0 0.0
        %840 = vmatpush1.msra.mxu0 0.0
        %841 = vmatprep.subr.mxu0 0.0
        %842 = vmatpush1.msra.mxu0 0.0
        %843 = vmatprep.subr.mxu0 0.0
        %844 = vmatpush1.msra.mxu0 0.0
        %845 = vmatprep.subr.mxu0 0.0
        %846 = vmatpush1.msra.mxu0 0.0
        %847 = vmatprep.subr.mxu0 0.0
        %848 = vmatpush1.msra.mxu0 0.0
        %849 = vmatprep.subr.mxu0 0.0
        %850 = vmatpush1.msra.mxu0 0.0
        %851 = vmatprep.subr.mxu0 0.0
        %852 = vmatpush1.msra.mxu0 0.0
        %853 = vmatprep.mubr.f32.mxu0 0.0
        %v854 = vand.u32 %v440, 4294901760
        %v855 = vsub.f32 %v440, %v854
        %v856 = vand.u32 %v855, 4294901760
        %857 = vmatmul.mubr.f32.gmra.mrb[0].mxu0 %v856
        %v858 = vpop.f32.mrb[0].mxu0
        %v859 = vadd.f32 %v771, %v858
        %v860 = vpop.f32.mrb[0].mxu0
        %v861 = vadd.f32 %v773, %v860
        %862 = vdwg.mxu0
        %v863 = vand.u32 %v425, 4294901760
        %v864 = vsub.f32 %v425, %v863
        %v865 = vand.u32 %v864, 4294901760
        %866 = vmatprep.subr.mxu0 %v865
        %v867 = vand.u32 %v424, 4294901760
        %v868 = vsub.f32 %v424, %v867
        %v869 = vand.u32 %v868, 4294901760
        %870 = vmatpush1.msra.mxu0 %v869
        %v871 = vand.u32 %v427, 4294901760
        %v872 = vsub.f32 %v427, %v871
        %v873 = vand.u32 %v872, 4294901760
        %874 = vmatprep.subr.mxu0 %v873
        %v875 = vand.u32 %v426, 4294901760
        %v876 = vsub.f32 %v426, %v875
        %v877 = vand.u32 %v876, 4294901760
        %878 = vmatpush1.msra.mxu0 %v877
        %v879 = vand.u32 %v429, 4294901760
        %v880 = vsub.f32 %v429, %v879
        %v881 = vand.u32 %v880, 4294901760
        %882 = vmatprep.subr.mxu0 %v881
        %v883 = vand.u32 %v428, 4294901760
        %v884 = vsub.f32 %v428, %v883
        %v885 = vand.u32 %v884, 4294901760
        %886 = vmatpush1.msra.mxu0 %v885
        %v887 = vand.u32 %v431, 4294901760
        %v888 = vsub.f32 %v431, %v887
        %v889 = vand.u32 %v888, 4294901760
        %890 = vmatprep.subr.mxu0 %v889
        %v891 = vand.u32 %v430, 4294901760
        %v892 = vsub.f32 %v430, %v891
        %v893 = vand.u32 %v892, 4294901760
        %894 = vmatpush1.msra.mxu0 %v893
        %v895 = vand.u32 %v433, 4294901760
        %v896 = vsub.f32 %v433, %v895
        %v897 = vand.u32 %v896, 4294901760
        %898 = vmatprep.subr.mxu0 %v897
        %v899 = vand.u32 %v432, 4294901760
        %v900 = vsub.f32 %v432, %v899
        %v901 = vand.u32 %v900, 4294901760
        %902 = vmatpush1.msra.mxu0 %v901
        %v903 = vand.u32 %v435, 4294901760
        %v904 = vsub.f32 %v435, %v903
        %v905 = vand.u32 %v904, 4294901760
        %906 = vmatprep.subr.mxu0 %v905
        %v907 = vand.u32 %v434, 4294901760
        %v908 = vsub.f32 %v434, %v907
        %v909 = vand.u32 %v908, 4294901760
        %910 = vmatpush1.msra.mxu0 %v909
        %v911 = vand.u32 %v437, 4294901760
        %v912 = vsub.f32 %v437, %v911
        %v913 = vand.u32 %v912, 4294901760
        %914 = vmatprep.subr.mxu0 %v913
        %v915 = vand.u32 %v436, 4294901760
        %v916 = vsub.f32 %v436, %v915
        %v917 = vand.u32 %v916, 4294901760
        %918 = vmatpush1.msra.mxu0 %v917
        %919 = vmatprep.subr.mxu0 0.0
        %920 = vmatpush1.msra.mxu0 0.0
        %921 = vmatprep.subr.mxu0 0.0
        %922 = vmatpush1.msra.mxu0 0.0
        %923 = vmatprep.subr.mxu0 0.0
        %924 = vmatpush1.msra.mxu0 0.0
        %925 = vmatprep.subr.mxu0 0.0
        %926 = vmatpush1.msra.mxu0 0.0
        %927 = vmatprep.subr.mxu0 0.0
        %928 = vmatpush1.msra.mxu0 0.0
        %929 = vmatprep.subr.mxu0 0.0
        %930 = vmatpush1.msra.mxu0 0.0
        %931 = vmatprep.subr.mxu0 0.0
        %932 = vmatpush1.msra.mxu0 0.0
        %933 = vmatprep.subr.mxu0 0.0
        %934 = vmatpush1.msra.mxu0 0.0
        %935 = vmatprep.subr.mxu0 0.0
        %936 = vmatpush1.msra.mxu0 0.0
        %937 = vmatprep.subr.mxu0 0.0
        %938 = vmatpush1.msra.mxu0 0.0
        %939 = vmatprep.subr.mxu0 0.0
        %940 = vmatpush1.msra.mxu0 0.0
        %941 = vmatprep.subr.mxu0 0.0
        %942 = vmatpush1.msra.mxu0 0.0
        %943 = vmatprep.subr.mxu0 0.0
        %944 = vmatpush1.msra.mxu0 0.0
        %945 = vmatprep.subr.mxu0 0.0
        %946 = vmatpush1.msra.mxu0 0.0
        %947 = vmatprep.subr.mxu0 0.0
        %948 = vmatpush1.msra.mxu0 0.0
        %949 = vmatprep.subr.mxu0 0.0
        %950 = vmatpush1.msra.mxu0 0.0
        %951 = vmatprep.subr.mxu0 0.0
        %952 = vmatpush1.msra.mxu0 0.0
        %953 = vmatprep.subr.mxu0 0.0
        %954 = vmatpush1.msra.mxu0 0.0
        %955 = vmatprep.subr.mxu0 0.0
        %956 = vmatpush1.msra.mxu0 0.0
        %957 = vmatprep.subr.mxu0 0.0
        %958 = vmatpush1.msra.mxu0 0.0
        %959 = vmatprep.subr.mxu0 0.0
        %960 = vmatpush1.msra.mxu0 0.0
        %961 = vmatprep.subr.mxu0 0.0
        %962 = vmatpush1.msra.mxu0 0.0
        %963 = vmatprep.subr.mxu0 0.0
        %964 = vmatpush1.msra.mxu0 0.0
        %965 = vmatprep.subr.mxu0 0.0
        %966 = vmatpush1.msra.mxu0 0.0
        %967 = vmatprep.subr.mxu0 0.0
        %968 = vmatpush1.msra.mxu0 0.0
        %969 = vmatprep.mubr.f32.mxu0 0.0
        %v970 = vand.u32 %v440, 4294901760
        %971 = vmatmul.mubr.f32.gmra.mrb[0].mxu0 %v970
        %v972 = vpop.f32.mrb[0].mxu0
        %v973 = vadd.f32 %v859, %v972
        %v974 = vpop.f32.mrb[0].mxu0
        %v975 = vadd.f32 %v861, %v974
        %976 = vdwg.mxu0
        %v977 = vand.u32 %v425, 4294901760
        %978 = vmatprep.subr.mxu0 %v977
        %v979 = vand.u32 %v424, 4294901760
        %980 = vmatpush1.msra.mxu0 %v979
        %v981 = vand.u32 %v427, 4294901760
        %982 = vmatprep.subr.mxu0 %v981
        %v983 = vand.u32 %v426, 4294901760
        %984 = vmatpush1.msra.mxu0 %v983
        %v985 = vand.u32 %v429, 4294901760
        %986 = vmatprep.subr.mxu0 %v985
        %v987 = vand.u32 %v428, 4294901760
        %988 = vmatpush1.msra.mxu0 %v987
        %v989 = vand.u32 %v431, 4294901760
        %990 = vmatprep.subr.mxu0 %v989
        %v991 = vand.u32 %v430, 4294901760
        %992 = vmatpush1.msra.mxu0 %v991
        %v993 = vand.u32 %v433, 4294901760
        %994 = vmatprep.subr.mxu0 %v993
        %v995 = vand.u32 %v432, 4294901760
        %996 = vmatpush1.msra.mxu0 %v995
        %v997 = vand.u32 %v435, 4294901760
        %998 = vmatprep.subr.mxu0 %v997
        %v999 = vand.u32 %v434, 4294901760
        %1000 = vmatpush1.msra.mxu0 %v999
        %v1001 = vand.u32 %v437, 4294901760
        %1002 = vmatprep.subr.mxu0 %v1001
        %v1003 = vand.u32 %v436, 4294901760
        %1004 = vmatpush1.msra.mxu0 %v1003
        %1005 = vmatprep.subr.mxu0 0.0
        %1006 = vmatpush1.msra.mxu0 0.0
        %1007 = vmatprep.subr.mxu0 0.0
        %1008 = vmatpush1.msra.mxu0 0.0
        %1009 = vmatprep.subr.mxu0 0.0
        %1010 = vmatpush1.msra.mxu0 0.0
        %1011 = vmatprep.subr.mxu0 0.0
        %1012 = vmatpush1.msra.mxu0 0.0
        %1013 = vmatprep.subr.mxu0 0.0
        %1014 = vmatpush1.msra.mxu0 0.0
        %1015 = vmatprep.subr.mxu0 0.0
        %1016 = vmatpush1.msra.mxu0 0.0
        %1017 = vmatprep.subr.mxu0 0.0
        %1018 = vmatpush1.msra.mxu0 0.0
        %1019 = vmatprep.subr.mxu0 0.0
        %1020 = vmatpush1.msra.mxu0 0.0
        %1021 = vmatprep.subr.mxu0 0.0
        %1022 = vmatpush1.msra.mxu0 0.0
        %1023 = vmatprep.subr.mxu0 0.0
        %1024 = vmatpush1.msra.mxu0 0.0
        %1025 = vmatprep.subr.mxu0 0.0
        %1026 = vmatpush1.msra.mxu0 0.0
        %1027 = vmatprep.subr.mxu0 0.0
        %1028 = vmatpush1.msra.mxu0 0.0
        %1029 = vmatprep.subr.mxu0 0.0
        %1030 = vmatpush1.msra.mxu0 0.0
        %1031 = vmatprep.subr.mxu0 0.0
        %1032 = vmatpush1.msra.mxu0 0.0
        %1033 = vmatprep.subr.mxu0 0.0
        %1034 = vmatpush1.msra.mxu0 0.0
        %1035 = vmatprep.subr.mxu0 0.0
        %1036 = vmatpush1.msra.mxu0 0.0
        %1037 = vmatprep.subr.mxu0 0.0
        %1038 = vmatpush1.msra.mxu0 0.0
        %1039 = vmatprep.subr.mxu0 0.0
        %1040 = vmatpush1.msra.mxu0 0.0
        %1041 = vmatprep.subr.mxu0 0.0
        %1042 = vmatpush1.msra.mxu0 0.0
        %1043 = vmatprep.subr.mxu0 0.0
        %1044 = vmatpush1.msra.mxu0 0.0
        %1045 = vmatprep.subr.mxu0 0.0
        %1046 = vmatpush1.msra.mxu0 0.0
        %1047 = vmatprep.subr.mxu0 0.0
        %1048 = vmatpush1.msra.mxu0 0.0
        %1049 = vmatprep.subr.mxu0 0.0
        %1050 = vmatpush1.msra.mxu0 0.0
        %1051 = vmatprep.subr.mxu0 0.0
        %1052 = vmatpush1.msra.mxu0 0.0
        %1053 = vmatprep.subr.mxu0 0.0
        %1054 = vmatpush1.msra.mxu0 0.0
        %1055 = vmatprep.mubr.f32.mxu0 0.0
        %v1056 = vand.u32 %v440, 4294901760
        %1057 = vmatmul.mubr.f32.gmra.mrb[0].mxu0 %v1056
        %v1058 = vpop.f32.mrb[0].mxu0
        %v1059 = vadd.f32 %v973, %v1058
        %v1060 = vpop.f32.mrb[0].mxu0
        %v1061 = vadd.f32 %v975, %v1060
        %1062 = vdwg.mxu0
        %v1063 = vld [vmem:[%s374] sm:$0xff]
        %v1064 = vld [vmem:[%s374 + $0x8] sm:$0xff]
        %v1065 = vld [vmem:[%s4] sm:$0xff]
        %v1066 = vld [vmem:[%s4 + $0x8] sm:$0xff]
        %1067 = vrot.lane.b32.xlu0 %v1063, 17
        %v1068 = vpop.permute.xlu0 %1067
        %1069 = vrot.lane.b32.xlu0 %v1059, 17
        %v1070 = vpop.permute.xlu0 %1069
        %1071 = vrot.lane.b32.xlu0 %v1064, 17
        %v1072 = vpop.permute.xlu0 %1071
        %1073 = vrot.lane.b32.xlu0 %v1061, 17
        %v1074 = vpop.permute.xlu0 %1073
        %v1075 = vlaneseq
        %v1076 = vand.u32 %v1075, 127
        %vm1077 = vcmp.lt.s32.totalorder %v1076, 17
        %v1078 = vsel %vm1077, %v1068, %v1072
        %v1079 = vsel %vm1077, %v1070, %v1074
        %v1080 = vsel %vm1077, %v1072, %v1068
        %v1081 = vsel %vm1077, %v1074, %v1070
        %v1082 = vld [vmem:[%s3] ss:$8 sm:$0x3]
        %v1084 = vlaneseq
        %v1085 = vshrl.u32 %v1084, 7
        %v1086 = vsub.s32 0, %v1085
        %v1087 = vrot.slane %v1082, %v1086
        %v1088 = vlaneseq
        %v1089 = vshrl.u32 %v1088, 7
        %v1090 = vsub.s32 1, %v1089
        %v1091 = vrot.slane %v1082, %v1090
        %v1094 = vmul.f32 %v1080, %v1087
        %v1095 = vmul.f32 %v1078, %v1091
        %v1096 = vmul.f32 %v1081, %v1087
        %v1097 = vmul.f32 %v1079, %v1091
        %1098 = vrot.lane.b32.xlu0 %v1063, 16
        %v1099 = vpop.permute.xlu0 %1098
        %1100 = vrot.lane.b32.xlu0 %v1059, 16
        %v1101 = vpop.permute.xlu0 %1100
        %1102 = vrot.lane.b32.xlu0 %v1064, 16
        %v1103 = vpop.permute.xlu0 %1102
        %1104 = vrot.lane.b32.xlu0 %v1061, 16
        %v1105 = vpop.permute.xlu0 %1104
        %vm1106 = vcmp.lt.s32.totalorder %v1076, 16
        %v1107 = vsel %vm1106, %v1099, %v1103
        %v1108 = vsel %vm1106, %v1101, %v1105
        %v1109 = vsel %vm1106, %v1103, %v1099
        %v1110 = vsel %vm1106, %v1105, %v1101
        %s1111 = scalar_lea.vmem %s3, 1
        %v1112 = vld [vmem:[%s1111] ss:$8 sm:$0x3]
        %v1114 = vlaneseq
        %v1115 = vshrl.u32 %v1114, 7
        %v1116 = vsub.s32 0, %v1115
        %v1117 = vrot.slane %v1112, %v1116
        %v1118 = vlaneseq
        %v1119 = vshrl.u32 %v1118, 7
        %v1120 = vsub.s32 1, %v1119
        %v1121 = vrot.slane %v1112, %v1120
        %v1124 = vmul.f32 %v1109, %v1117
        %v1125 = vmul.f32 %v1107, %v1121
        %v1126 = vmul.f32 %v1110, %v1117
        %v1127 = vmul.f32 %v1108, %v1121
        %1128 = vrot.lane.b32.xlu0 %v1063, 15
        %v1129 = vpop.permute.xlu0 %1128
        %1130 = vrot.lane.b32.xlu0 %v1059, 15
        %v1131 = vpop.permute.xlu0 %1130
        %1132 = vrot.lane.b32.xlu0 %v1064, 15
        %v1133 = vpop.permute.xlu0 %1132
        %1134 = vrot.lane.b32.xlu0 %v1061, 15
        %v1135 = vpop.permute.xlu0 %1134
        %vm1136 = vcmp.lt.s32.totalorder %v1076, 15
        %v1137 = vsel %vm1136, %v1129, %v1133
        %v1138 = vsel %vm1136, %v1131, %v1135
        %v1139 = vsel %vm1136, %v1133, %v1129
        %v1140 = vsel %vm1136, %v1135, %v1131
        %s1141 = scalar_lea.vmem %s3, 2
        %v1142 = vld [vmem:[%s1141] ss:$8 sm:$0x3]
        %v1144 = vlaneseq
        %v1145 = vshrl.u32 %v1144, 7
        %v1146 = vsub.s32 0, %v1145
        %v1147 = vrot.slane %v1142, %v1146
        %v1148 = vlaneseq
        %v1149 = vshrl.u32 %v1148, 7
        %v1150 = vsub.s32 1, %v1149
        %v1151 = vrot.slane %v1142, %v1150
        %v1154 = vmul.f32 %v1139, %v1147
        %v1155 = vmul.f32 %v1137, %v1151
        %v1156 = vmul.f32 %v1140, %v1147
        %v1157 = vmul.f32 %v1138, %v1151
        %1158 = vrot.lane.b32.xlu0 %v1063, 1
        %v1159 = vpop.permute.xlu0 %1158
        %1160 = vrot.lane.b32.xlu0 %v1059, 1
        %v1161 = vpop.permute.xlu0 %1160
        %1162 = vrot.lane.b32.xlu0 %v1064, 1
        %v1163 = vpop.permute.xlu0 %1162
        %1164 = vrot.lane.b32.xlu0 %v1061, 1
        %v1165 = vpop.permute.xlu0 %1164
        %vm1166 = vcmp.lt.s32.totalorder %v1076, 1
        %v1167 = vsel %vm1166, %v1159, %v1163
        %v1168 = vsel %vm1166, %v1161, %v1165
        %v1169 = vsel %vm1166, %v1163, %v1159
        %v1170 = vsel %vm1166, %v1165, %v1161
        %s1171 = scalar_lea.vmem %s3, 3
        %v1172 = vld [vmem:[%s1171] ss:$8 sm:$0x3]
        %v1174 = vlaneseq
        %v1175 = vshrl.u32 %v1174, 7
        %v1176 = vsub.s32 0, %v1175
        %v1177 = vrot.slane %v1172, %v1176
        %v1178 = vlaneseq
        %v1179 = vshrl.u32 %v1178, 7
        %v1180 = vsub.s32 1, %v1179
        %v1181 = vrot.slane %v1172, %v1180
        %v1184 = vmul.f32 %v1169, %v1177
        %v1185 = vmul.f32 %v1167, %v1181
        %v1186 = vmul.f32 %v1170, %v1177
        %v1187 = vmul.f32 %v1168, %v1181
        %1188 = vrot.lane.b32.xlu0 %v1063, 127
        %v1189 = vpop.permute.xlu0 %1188
        %1190 = vrot.lane.b32.xlu0 %v1059, 127
        %v1191 = vpop.permute.xlu0 %1190
        %1192 = vrot.lane.b32.xlu0 %v1064, 127
        %v1193 = vpop.permute.xlu0 %1192
        %1194 = vrot.lane.b32.xlu0 %v1061, 127
        %v1195 = vpop.permute.xlu0 %1194
        %vm1196 = vcmp.lt.s32.totalorder %v1076, 127
        %v1197 = vsel %vm1196, %v1189, %v1193
        %v1198 = vsel %vm1196, %v1191, %v1195
        %v1199 = vsel %vm1196, %v1193, %v1189
        %v1200 = vsel %vm1196, %v1195, %v1191
        %s1201 = scalar_lea.vmem %s3, 5
        %v1202 = vld [vmem:[%s1201] ss:$8 sm:$0x3]
        %v1204 = vlaneseq
        %v1205 = vshrl.u32 %v1204, 7
        %v1206 = vsub.s32 0, %v1205
        %v1207 = vrot.slane %v1202, %v1206
        %v1208 = vlaneseq
        %v1209 = vshrl.u32 %v1208, 7
        %v1210 = vsub.s32 1, %v1209
        %v1211 = vrot.slane %v1202, %v1210
        %v1214 = vmul.f32 %v1197, %v1207
        %v1215 = vmul.f32 %v1199, %v1211
        %v1216 = vmul.f32 %v1198, %v1207
        %v1217 = vmul.f32 %v1200, %v1211
        %1218 = vrot.lane.b32.xlu0 %v1063, 113
        %v1219 = vpop.permute.xlu0 %1218
        %1220 = vrot.lane.b32.xlu0 %v1059, 113
        %v1221 = vpop.permute.xlu0 %1220
        %1222 = vrot.lane.b32.xlu0 %v1064, 113
        %v1223 = vpop.permute.xlu0 %1222
        %1224 = vrot.lane.b32.xlu0 %v1061, 113
        %v1225 = vpop.permute.xlu0 %1224
        %vm1226 = vcmp.lt.s32.totalorder %v1076, 113
        %v1227 = vsel %vm1226, %v1219, %v1223
        %v1228 = vsel %vm1226, %v1221, %v1225
        %v1229 = vsel %vm1226, %v1223, %v1219
        %v1230 = vsel %vm1226, %v1225, %v1221
        %s1231 = scalar_lea.vmem %s3, 6
        %v1232 = vld [vmem:[%s1231] ss:$8 sm:$0x3]
        %v1234 = vlaneseq
        %v1235 = vshrl.u32 %v1234, 7
        %v1236 = vsub.s32 0, %v1235
        %v1237 = vrot.slane %v1232, %v1236
        %v1238 = vlaneseq
        %v1239 = vshrl.u32 %v1238, 7
        %v1240 = vsub.s32 1, %v1239
        %v1241 = vrot.slane %v1232, %v1240
        %v1244 = vmul.f32 %v1227, %v1237
        %v1245 = vmul.f32 %v1229, %v1241
        %v1246 = vmul.f32 %v1228, %v1237
        %v1247 = vmul.f32 %v1230, %v1241
        %1248 = vrot.lane.b32.xlu0 %v1063, 112
        %v1249 = vpop.permute.xlu0 %1248
        %1250 = vrot.lane.b32.xlu0 %v1059, 112
        %v1251 = vpop.permute.xlu0 %1250
        %1252 = vrot.lane.b32.xlu0 %v1064, 112
        %v1253 = vpop.permute.xlu0 %1252
        %1254 = vrot.lane.b32.xlu0 %v1061, 112
        %v1255 = vpop.permute.xlu0 %1254
        %vm1256 = vcmp.lt.s32.totalorder %v1076, 112
        %v1257 = vsel %vm1256, %v1249, %v1253
        %v1258 = vsel %vm1256, %v1251, %v1255
        %v1259 = vsel %vm1256, %v1253, %v1249
        %v1260 = vsel %vm1256, %v1255, %v1251
        %s1261 = scalar_lea.vmem %s3, 7
        %v1262 = vld [vmem:[%s1261] ss:$8 sm:$0x3]
        %v1264 = vlaneseq
        %v1265 = vshrl.u32 %v1264, 7
        %v1266 = vsub.s32 0, %v1265
        %v1267 = vrot.slane %v1262, %v1266
        %v1268 = vlaneseq
        %v1269 = vshrl.u32 %v1268, 7
        %v1270 = vsub.s32 1, %v1269
        %v1271 = vrot.slane %v1262, %v1270
        %v1274 = vmul.f32 %v1257, %v1267
        %v1275 = vmul.f32 %v1259, %v1271
        %v1276 = vmul.f32 %v1258, %v1267
        %v1277 = vmul.f32 %v1260, %v1271
        %1278 = vrot.lane.b32.xlu0 %v1063, 111
        %v1279 = vpop.permute.xlu0 %1278
        %1280 = vrot.lane.b32.xlu0 %v1059, 111
        %v1281 = vpop.permute.xlu0 %1280
        %1282 = vrot.lane.b32.xlu0 %v1064, 111
        %v1283 = vpop.permute.xlu0 %1282
        %1284 = vrot.lane.b32.xlu0 %v1061, 111
        %v1285 = vpop.permute.xlu0 %1284
        %vm1286 = vcmp.lt.s32.totalorder %v1076, 111
        %v1287 = vsel %vm1286, %v1279, %v1283
        %v1288 = vsel %vm1286, %v1281, %v1285
        %v1289 = vsel %vm1286, %v1283, %v1279
        %v1290 = vsel %vm1286, %v1285, %v1281
        %s1291 = scalar_lea.vmem %s3, 16
        %v1292 = vld [vmem:[%s1291] ss:$8 sm:$0x3]
        %v1294 = vlaneseq
        %v1295 = vshrl.u32 %v1294, 7
        %v1296 = vsub.s32 0, %v1295
        %v1297 = vrot.slane %v1292, %v1296
        %v1298 = vlaneseq
        %v1299 = vshrl.u32 %v1298, 7
        %v1300 = vsub.s32 1, %v1299
        %v1301 = vrot.slane %v1292, %v1300
        %v1304 = vmul.f32 %v1287, %v1297
        %v1305 = vmul.f32 %v1289, %v1301
        %v1306 = vmul.f32 %v1288, %v1297
        %v1307 = vmul.f32 %v1290, %v1301
        %vm1308 = vcmask 130048
        %v1310 = vsel %vm1308, %v1066, 0
        %v1312 = vand.u32 %v1095, 4294901760
        %1313 = vmatprep.subr.mxu0 %v1312
        %v1314 = vand.u32 %v1094, 4294901760
        %1315 = vmatpush1.msra.mxu0 %v1314
        %v1316 = vand.u32 %v1097, 4294901760
        %1317 = vmatprep.subr.mxu0 %v1316
        %v1318 = vand.u32 %v1096, 4294901760
        %1319 = vmatpush1.msra.mxu0 %v1318
        %v1320 = vand.u32 %v1125, 4294901760
        %1321 = vmatprep.subr.mxu0 %v1320
        %v1322 = vand.u32 %v1124, 4294901760
        %1323 = vmatpush1.msra.mxu0 %v1322
        %v1324 = vand.u32 %v1127, 4294901760
        %1325 = vmatprep.subr.mxu0 %v1324
        %v1326 = vand.u32 %v1126, 4294901760
        %1327 = vmatpush1.msra.mxu0 %v1326
        %v1328 = vand.u32 %v1155, 4294901760
        %1329 = vmatprep.subr.mxu0 %v1328
        %v1330 = vand.u32 %v1154, 4294901760
        %1331 = vmatpush1.msra.mxu0 %v1330
        %v1332 = vand.u32 %v1157, 4294901760
        %1333 = vmatprep.subr.mxu0 %v1332
        %v1334 = vand.u32 %v1156, 4294901760
        %1335 = vmatpush1.msra.mxu0 %v1334
        %v1336 = vand.u32 %v1185, 4294901760
        %1337 = vmatprep.subr.mxu0 %v1336
        %v1338 = vand.u32 %v1184, 4294901760
        %1339 = vmatpush1.msra.mxu0 %v1338
        %v1340 = vand.u32 %v1187, 4294901760
        %1341 = vmatprep.subr.mxu0 %v1340
        %v1342 = vand.u32 %v1186, 4294901760
        %1343 = vmatpush1.msra.mxu0 %v1342
        %v1344 = vand.u32 %v1064, 4294901760
        %1345 = vmatprep.subr.mxu0 %v1344
        %v1346 = vand.u32 %v1063, 4294901760
        %1347 = vmatpush1.msra.mxu0 %v1346
        %v1348 = vand.u32 %v1061, 4294901760
        %1349 = vmatprep.subr.mxu0 %v1348
        %v1350 = vand.u32 %v1059, 4294901760
        %1351 = vmatpush1.msra.mxu0 %v1350
        %v1352 = vand.u32 %v1215, 4294901760
        %1353 = vmatprep.subr.mxu0 %v1352
        %v1354 = vand.u32 %v1214, 4294901760
        %1355 = vmatpush1.msra.mxu0 %v1354
        %v1356 = vand.u32 %v1217, 4294901760
        %1357 = vmatprep.subr.mxu0 %v1356
        %v1358 = vand.u32 %v1216, 4294901760
        %1359 = vmatpush1.msra.mxu0 %v1358
        %v1360 = vand.u32 %v1245, 4294901760
        %1361 = vmatprep.subr.mxu0 %v1360
        %v1362 = vand.u32 %v1244, 4294901760
        %1363 = vmatpush1.msra.mxu0 %v1362
        %v1364 = vand.u32 %v1247, 4294901760
        %1365 = vmatprep.subr.mxu0 %v1364
        %v1366 = vand.u32 %v1246, 4294901760
        %1367 = vmatpush1.msra.mxu0 %v1366
        %v1368 = vand.u32 %v1275, 4294901760
        %1369 = vmatprep.subr.mxu0 %v1368
        %v1370 = vand.u32 %v1274, 4294901760
        %1371 = vmatpush1.msra.mxu0 %v1370
        %v1372 = vand.u32 %v1277, 4294901760
        %1373 = vmatprep.subr.mxu0 %v1372
        %v1374 = vand.u32 %v1276, 4294901760
        %1375 = vmatpush1.msra.mxu0 %v1374
        %v1376 = vand.u32 %v1305, 4294901760
        %1377 = vmatprep.subr.mxu0 %v1376
        %v1378 = vand.u32 %v1304, 4294901760
        %1379 = vmatpush1.msra.mxu0 %v1378
        %v1380 = vand.u32 %v1307, 4294901760
        %1381 = vmatprep.subr.mxu0 %v1380
        %v1382 = vand.u32 %v1306, 4294901760
        %1383 = vmatpush1.msra.mxu0 %v1382
        %1384 = vmatprep.subr.mxu0 0.0
        %1385 = vmatpush1.msra.mxu0 0.0
        %1386 = vmatprep.subr.mxu0 0.0
        %1387 = vmatpush1.msra.mxu0 0.0
        %1388 = vmatprep.subr.mxu0 0.0
        %1389 = vmatpush1.msra.mxu0 0.0
        %1390 = vmatprep.subr.mxu0 0.0
        %1391 = vmatpush1.msra.mxu0 0.0
        %1392 = vmatprep.subr.mxu0 0.0
        %1393 = vmatpush1.msra.mxu0 0.0
        %1394 = vmatprep.subr.mxu0 0.0
        %1395 = vmatpush1.msra.mxu0 0.0
        %1396 = vmatprep.subr.mxu0 0.0
        %1397 = vmatpush1.msra.mxu0 0.0
        %1398 = vmatprep.subr.mxu0 0.0
        %1399 = vmatpush1.msra.mxu0 0.0
        %1400 = vmatprep.subr.mxu0 0.0
        %1401 = vmatpush1.msra.mxu0 0.0
        %1402 = vmatprep.subr.mxu0 0.0
        %1403 = vmatpush1.msra.mxu0 0.0
        %1404 = vmatprep.subr.mxu0 0.0
        %1405 = vmatpush1.msra.mxu0 0.0
        %1406 = vmatprep.subr.mxu0 0.0
        %1407 = vmatpush1.msra.mxu0 0.0
        %1408 = vmatprep.subr.mxu0 0.0
        %1409 = vmatpush1.msra.mxu0 0.0
        %1410 = vmatprep.subr.mxu0 0.0
        %1411 = vmatpush1.msra.mxu0 0.0
        %v1412 = vand.u32 %v1310, 4294901760
        %v1413 = vsub.f32 %v1310, %v1412
        %v1414 = vand.u32 %v1413, 4294901760
        %v1415 = vsub.f32 %v1413, %v1414
        %v1416 = vand.u32 %v1415, 4294901760
        %1417 = vmatprep.mubr.f32.mxu0 %v1416
        %v1418 = vand.u32 %v1065, 4294901760
        %v1419 = vsub.f32 %v1065, %v1418
        %v1420 = vand.u32 %v1419, 4294901760
        %v1421 = vsub.f32 %v1419, %v1420
        %v1422 = vand.u32 %v1421, 4294901760
        %1423 = vmatmul.mubr.f32.gmra.mrb[0].mxu0 %v1422
        %v1424 = vpop.f32.mrb[0].mxu0
        %v1425 = vadd.f32 0.0, %v1424
        %v1426 = vpop.f32.mrb[0].mxu0
        %v1427 = vadd.f32 0.0, %v1426
        %1428 = vdwg.mxu0
        %v1429 = vand.u32 %v1095, 4294901760
        %v1430 = vsub.f32 %v1095, %v1429
        %v1431 = vand.u32 %v1430, 4294901760
        %v1432 = vsub.f32 %v1430, %v1431
        %v1433 = vand.u32 %v1432, 4294901760
        %1434 = vmatprep.subr.mxu0 %v1433
        %v1435 = vand.u32 %v1094, 4294901760
        %v1436 = vsub.f32 %v1094, %v1435
        %v1437 = vand.u32 %v1436, 4294901760
        %v1438 = vsub.f32 %v1436, %v1437
        %v1439 = vand.u32 %v1438, 4294901760
        %1440 = vmatpush1.msra.mxu0 %v1439
        %v1441 = vand.u32 %v1097, 4294901760
        %v1442 = vsub.f32 %v1097, %v1441
        %v1443 = vand.u32 %v1442, 4294901760
        %v1444 = vsub.f32 %v1442, %v1443
        %v1445 = vand.u32 %v1444, 4294901760
        %1446 = vmatprep.subr.mxu0 %v1445
        %v1447 = vand.u32 %v1096, 4294901760
        %v1448 = vsub.f32 %v1096, %v1447
        %v1449 = vand.u32 %v1448, 4294901760
        %v1450 = vsub.f32 %v1448, %v1449
        %v1451 = vand.u32 %v1450, 4294901760
        %1452 = vmatpush1.msra.mxu0 %v1451
        %v1453 = vand.u32 %v1125, 4294901760
        %v1454 = vsub.f32 %v1125, %v1453
        %v1455 = vand.u32 %v1454, 4294901760
        %v1456 = vsub.f32 %v1454, %v1455
        %v1457 = vand.u32 %v1456, 4294901760
        %1458 = vmatprep.subr.mxu0 %v1457
        %v1459 = vand.u32 %v1124, 4294901760
        %v1460 = vsub.f32 %v1124, %v1459
        %v1461 = vand.u32 %v1460, 4294901760
        %v1462 = vsub.f32 %v1460, %v1461
        %v1463 = vand.u32 %v1462, 4294901760
        %1464 = vmatpush1.msra.mxu0 %v1463
        %v1465 = vand.u32 %v1127, 4294901760
        %v1466 = vsub.f32 %v1127, %v1465
        %v1467 = vand.u32 %v1466, 4294901760
        %v1468 = vsub.f32 %v1466, %v1467
        %v1469 = vand.u32 %v1468, 4294901760
        %1470 = vmatprep.subr.mxu0 %v1469
        %v1471 = vand.u32 %v1126, 4294901760
        %v1472 = vsub.f32 %v1126, %v1471
        %v1473 = vand.u32 %v1472, 4294901760
        %v1474 = vsub.f32 %v1472, %v1473
        %v1475 = vand.u32 %v1474, 4294901760
        %1476 = vmatpush1.msra.mxu0 %v1475
        %v1477 = vand.u32 %v1155, 4294901760
        %v1478 = vsub.f32 %v1155, %v1477
        %v1479 = vand.u32 %v1478, 4294901760
        %v1480 = vsub.f32 %v1478, %v1479
        %v1481 = vand.u32 %v1480, 4294901760
        %1482 = vmatprep.subr.mxu0 %v1481
        %v1483 = vand.u32 %v1154, 4294901760
        %v1484 = vsub.f32 %v1154, %v1483
        %v1485 = vand.u32 %v1484, 4294901760
        %v1486 = vsub.f32 %v1484, %v1485
        %v1487 = vand.u32 %v1486, 4294901760
        %1488 = vmatpush1.msra.mxu0 %v1487
        %v1489 = vand.u32 %v1157, 4294901760
        %v1490 = vsub.f32 %v1157, %v1489
        %v1491 = vand.u32 %v1490, 4294901760
        %v1492 = vsub.f32 %v1490, %v1491
        %v1493 = vand.u32 %v1492, 4294901760
        %1494 = vmatprep.subr.mxu0 %v1493
        %v1495 = vand.u32 %v1156, 4294901760
        %v1496 = vsub.f32 %v1156, %v1495
        %v1497 = vand.u32 %v1496, 4294901760
        %v1498 = vsub.f32 %v1496, %v1497
        %v1499 = vand.u32 %v1498, 4294901760
        %1500 = vmatpush1.msra.mxu0 %v1499
        %v1501 = vand.u32 %v1185, 4294901760
        %v1502 = vsub.f32 %v1185, %v1501
        %v1503 = vand.u32 %v1502, 4294901760
        %v1504 = vsub.f32 %v1502, %v1503
        %v1505 = vand.u32 %v1504, 4294901760
        %1506 = vmatprep.subr.mxu0 %v1505
        %v1507 = vand.u32 %v1184, 4294901760
        %v1508 = vsub.f32 %v1184, %v1507
        %v1509 = vand.u32 %v1508, 4294901760
        %v1510 = vsub.f32 %v1508, %v1509
        %v1511 = vand.u32 %v1510, 4294901760
        %1512 = vmatpush1.msra.mxu0 %v1511
        %v1513 = vand.u32 %v1187, 4294901760
        %v1514 = vsub.f32 %v1187, %v1513
        %v1515 = vand.u32 %v1514, 4294901760
        %v1516 = vsub.f32 %v1514, %v1515
        %v1517 = vand.u32 %v1516, 4294901760
        %1518 = vmatprep.subr.mxu0 %v1517
        %v1519 = vand.u32 %v1186, 4294901760
        %v1520 = vsub.f32 %v1186, %v1519
        %v1521 = vand.u32 %v1520, 4294901760
        %v1522 = vsub.f32 %v1520, %v1521
        %v1523 = vand.u32 %v1522, 4294901760
        %1524 = vmatpush1.msra.mxu0 %v1523
        %v1525 = vand.u32 %v1064, 4294901760
        %v1526 = vsub.f32 %v1064, %v1525
        %v1527 = vand.u32 %v1526, 4294901760
        %v1528 = vsub.f32 %v1526, %v1527
        %v1529 = vand.u32 %v1528, 4294901760
        %1530 = vmatprep.subr.mxu0 %v1529
        %v1531 = vand.u32 %v1063, 4294901760
        %v1532 = vsub.f32 %v1063, %v1531
        %v1533 = vand.u32 %v1532, 4294901760
        %v1534 = vsub.f32 %v1532, %v1533
        %v1535 = vand.u32 %v1534, 4294901760
        %1536 = vmatpush1.msra.mxu0 %v1535
        %v1537 = vand.u32 %v1061, 4294901760
        %v1538 = vsub.f32 %v1061, %v1537
        %v1539 = vand.u32 %v1538, 4294901760
        %v1540 = vsub.f32 %v1538, %v1539
        %v1541 = vand.u32 %v1540, 4294901760
        %1542 = vmatprep.subr.mxu0 %v1541
        %v1543 = vand.u32 %v1059, 4294901760
        %v1544 = vsub.f32 %v1059, %v1543
        %v1545 = vand.u32 %v1544, 4294901760
        %v1546 = vsub.f32 %v1544, %v1545
        %v1547 = vand.u32 %v1546, 4294901760
        %1548 = vmatpush1.msra.mxu0 %v1547
        %v1549 = vand.u32 %v1215, 4294901760
        %v1550 = vsub.f32 %v1215, %v1549
        %v1551 = vand.u32 %v1550, 4294901760
        %v1552 = vsub.f32 %v1550, %v1551
        %v1553 = vand.u32 %v1552, 4294901760
        %1554 = vmatprep.subr.mxu0 %v1553
        %v1555 = vand.u32 %v1214, 4294901760
        %v1556 = vsub.f32 %v1214, %v1555
        %v1557 = vand.u32 %v1556, 4294901760
        %v1558 = vsub.f32 %v1556, %v1557
        %v1559 = vand.u32 %v1558, 4294901760
        %1560 = vmatpush1.msra.mxu0 %v1559
        %v1561 = vand.u32 %v1217, 4294901760
        %v1562 = vsub.f32 %v1217, %v1561
        %v1563 = vand.u32 %v1562, 4294901760
        %v1564 = vsub.f32 %v1562, %v1563
        %v1565 = vand.u32 %v1564, 4294901760
        %1566 = vmatprep.subr.mxu0 %v1565
        %v1567 = vand.u32 %v1216, 4294901760
        %v1568 = vsub.f32 %v1216, %v1567
        %v1569 = vand.u32 %v1568, 4294901760
        %v1570 = vsub.f32 %v1568, %v1569
        %v1571 = vand.u32 %v1570, 4294901760
        %1572 = vmatpush1.msra.mxu0 %v1571
        %v1573 = vand.u32 %v1245, 4294901760
        %v1574 = vsub.f32 %v1245, %v1573
        %v1575 = vand.u32 %v1574, 4294901760
        %v1576 = vsub.f32 %v1574, %v1575
        %v1577 = vand.u32 %v1576, 4294901760
        %1578 = vmatprep.subr.mxu0 %v1577
        %v1579 = vand.u32 %v1244, 4294901760
        %v1580 = vsub.f32 %v1244, %v1579
        %v1581 = vand.u32 %v1580, 4294901760
        %v1582 = vsub.f32 %v1580, %v1581
        %v1583 = vand.u32 %v1582, 4294901760
        %1584 = vmatpush1.msra.mxu0 %v1583
        %v1585 = vand.u32 %v1247, 4294901760
        %v1586 = vsub.f32 %v1247, %v1585
        %v1587 = vand.u32 %v1586, 4294901760
        %v1588 = vsub.f32 %v1586, %v1587
        %v1589 = vand.u32 %v1588, 4294901760
        %1590 = vmatprep.subr.mxu0 %v1589
        %v1591 = vand.u32 %v1246, 4294901760
        %v1592 = vsub.f32 %v1246, %v1591
        %v1593 = vand.u32 %v1592, 4294901760
        %v1594 = vsub.f32 %v1592, %v1593
        %v1595 = vand.u32 %v1594, 4294901760
        %1596 = vmatpush1.msra.mxu0 %v1595
        %v1597 = vand.u32 %v1275, 4294901760
        %v1598 = vsub.f32 %v1275, %v1597
        %v1599 = vand.u32 %v1598, 4294901760
        %v1600 = vsub.f32 %v1598, %v1599
        %v1601 = vand.u32 %v1600, 4294901760
        %1602 = vmatprep.subr.mxu0 %v1601
        %v1603 = vand.u32 %v1274, 4294901760
        %v1604 = vsub.f32 %v1274, %v1603
        %v1605 = vand.u32 %v1604, 4294901760
        %v1606 = vsub.f32 %v1604, %v1605
        %v1607 = vand.u32 %v1606, 4294901760
        %1608 = vmatpush1.msra.mxu0 %v1607
        %v1609 = vand.u32 %v1277, 4294901760
        %v1610 = vsub.f32 %v1277, %v1609
        %v1611 = vand.u32 %v1610, 4294901760
        %v1612 = vsub.f32 %v1610, %v1611
        %v1613 = vand.u32 %v1612, 4294901760
        %1614 = vmatprep.subr.mxu0 %v1613
        %v1615 = vand.u32 %v1276, 4294901760
        %v1616 = vsub.f32 %v1276, %v1615
        %v1617 = vand.u32 %v1616, 4294901760
        %v1618 = vsub.f32 %v1616, %v1617
        %v1619 = vand.u32 %v1618, 4294901760
        %1620 = vmatpush1.msra.mxu0 %v1619
        %v1621 = vand.u32 %v1305, 4294901760
        %v1622 = vsub.f32 %v1305, %v1621
        %v1623 = vand.u32 %v1622, 4294901760
        %v1624 = vsub.f32 %v1622, %v1623
        %v1625 = vand.u32 %v1624, 4294901760
        %1626 = vmatprep.subr.mxu0 %v1625
        %v1627 = vand.u32 %v1304, 4294901760
        %v1628 = vsub.f32 %v1304, %v1627
        %v1629 = vand.u32 %v1628, 4294901760
        %v1630 = vsub.f32 %v1628, %v1629
        %v1631 = vand.u32 %v1630, 4294901760
        %1632 = vmatpush1.msra.mxu0 %v1631
        %v1633 = vand.u32 %v1307, 4294901760
        %v1634 = vsub.f32 %v1307, %v1633
        %v1635 = vand.u32 %v1634, 4294901760
        %v1636 = vsub.f32 %v1634, %v1635
        %v1637 = vand.u32 %v1636, 4294901760
        %1638 = vmatprep.subr.mxu0 %v1637
        %v1639 = vand.u32 %v1306, 4294901760
        %v1640 = vsub.f32 %v1306, %v1639
        %v1641 = vand.u32 %v1640, 4294901760
        %v1642 = vsub.f32 %v1640, %v1641
        %v1643 = vand.u32 %v1642, 4294901760
        %1644 = vmatpush1.msra.mxu0 %v1643
        %1645 = vmatprep.subr.mxu0 0.0
        %1646 = vmatpush1.msra.mxu0 0.0
        %1647 = vmatprep.subr.mxu0 0.0
        %1648 = vmatpush1.msra.mxu0 0.0
        %1649 = vmatprep.subr.mxu0 0.0
        %1650 = vmatpush1.msra.mxu0 0.0
        %1651 = vmatprep.subr.mxu0 0.0
        %1652 = vmatpush1.msra.mxu0 0.0
        %1653 = vmatprep.subr.mxu0 0.0
        %1654 = vmatpush1.msra.mxu0 0.0
        %1655 = vmatprep.subr.mxu0 0.0
        %1656 = vmatpush1.msra.mxu0 0.0
        %1657 = vmatprep.subr.mxu0 0.0
        %1658 = vmatpush1.msra.mxu0 0.0
        %1659 = vmatprep.subr.mxu0 0.0
        %1660 = vmatpush1.msra.mxu0 0.0
        %1661 = vmatprep.subr.mxu0 0.0
        %1662 = vmatpush1.msra.mxu0 0.0
        %1663 = vmatprep.subr.mxu0 0.0
        %1664 = vmatpush1.msra.mxu0 0.0
        %1665 = vmatprep.subr.mxu0 0.0
        %1666 = vmatpush1.msra.mxu0 0.0
        %1667 = vmatprep.subr.mxu0 0.0
        %1668 = vmatpush1.msra.mxu0 0.0
        %1669 = vmatprep.subr.mxu0 0.0
        %1670 = vmatpush1.msra.mxu0 0.0
        %1671 = vmatprep.subr.mxu0 0.0
        %1672 = vmatpush1.msra.mxu0 0.0
        %v1673 = vand.u32 %v1310, 4294901760
        %1674 = vmatprep.mubr.f32.mxu0 %v1673
        %v1675 = vand.u32 %v1065, 4294901760
        %1676 = vmatmul.mubr.f32.gmra.mrb[0].mxu0 %v1675
        %v1677 = vpop.f32.mrb[0].mxu0
        %v1678 = vadd.f32 %v1425, %v1677
        %v1679 = vpop.f32.mrb[0].mxu0
        %v1680 = vadd.f32 %v1427, %v1679
        %1681 = vdwg.mxu0
        %v1682 = vand.u32 %v1095, 4294901760
        %v1683 = vsub.f32 %v1095, %v1682
        %1684 = vmatprep.subr.mxu0 %v1683
        %v1685 = vand.u32 %v1094, 4294901760
        %v1686 = vsub.f32 %v1094, %v1685
        %1687 = vmatpush1.msra.mxu0 %v1686
        %v1688 = vand.u32 %v1097, 4294901760
        %v1689 = vsub.f32 %v1097, %v1688
        %1690 = vmatprep.subr.mxu0 %v1689
        %v1691 = vand.u32 %v1096, 4294901760
        %v1692 = vsub.f32 %v1096, %v1691
        %1693 = vmatpush1.msra.mxu0 %v1692
        %v1694 = vand.u32 %v1125, 4294901760
        %v1695 = vsub.f32 %v1125, %v1694
        %1696 = vmatprep.subr.mxu0 %v1695
        %v1697 = vand.u32 %v1124, 4294901760
        %v1698 = vsub.f32 %v1124, %v1697
        %1699 = vmatpush1.msra.mxu0 %v1698
        %v1700 = vand.u32 %v1127, 4294901760
        %v1701 = vsub.f32 %v1127, %v1700
        %1702 = vmatprep.subr.mxu0 %v1701
        %v1703 = vand.u32 %v1126, 4294901760
        %v1704 = vsub.f32 %v1126, %v1703
        %1705 = vmatpush1.msra.mxu0 %v1704
        %v1706 = vand.u32 %v1155, 4294901760
        %v1707 = vsub.f32 %v1155, %v1706
        %1708 = vmatprep.subr.mxu0 %v1707
        %v1709 = vand.u32 %v1154, 4294901760
        %v1710 = vsub.f32 %v1154, %v1709
        %1711 = vmatpush1.msra.mxu0 %v1710
        %v1712 = vand.u32 %v1157, 4294901760
        %v1713 = vsub.f32 %v1157, %v1712
        %1714 = vmatprep.subr.mxu0 %v1713
        %v1715 = vand.u32 %v1156, 4294901760
        %v1716 = vsub.f32 %v1156, %v1715
        %1717 = vmatpush1.msra.mxu0 %v1716
        %v1718 = vand.u32 %v1185, 4294901760
        %v1719 = vsub.f32 %v1185, %v1718
        %1720 = vmatprep.subr.mxu0 %v1719
        %v1721 = vand.u32 %v1184, 4294901760
        %v1722 = vsub.f32 %v1184, %v1721
        %1723 = vmatpush1.msra.mxu0 %v1722
        %v1724 = vand.u32 %v1187, 4294901760
        %v1725 = vsub.f32 %v1187, %v1724
        %1726 = vmatprep.subr.mxu0 %v1725
        %v1727 = vand.u32 %v1186, 4294901760
        %v1728 = vsub.f32 %v1186, %v1727
        %1729 = vmatpush1.msra.mxu0 %v1728
        %v1730 = vand.u32 %v1064, 4294901760
        %v1731 = vsub.f32 %v1064, %v1730
        %1732 = vmatprep.subr.mxu0 %v1731
        %v1733 = vand.u32 %v1063, 4294901760
        %v1734 = vsub.f32 %v1063, %v1733
        %1735 = vmatpush1.msra.mxu0 %v1734
        %v1736 = vand.u32 %v1061, 4294901760
        %v1737 = vsub.f32 %v1061, %v1736
        %1738 = vmatprep.subr.mxu0 %v1737
        %v1739 = vand.u32 %v1059, 4294901760
        %v1740 = vsub.f32 %v1059, %v1739
        %1741 = vmatpush1.msra.mxu0 %v1740
        %v1742 = vand.u32 %v1215, 4294901760
        %v1743 = vsub.f32 %v1215, %v1742
        %1744 = vmatprep.subr.mxu0 %v1743
        %v1745 = vand.u32 %v1214, 4294901760
        %v1746 = vsub.f32 %v1214, %v1745
        %1747 = vmatpush1.msra.mxu0 %v1746
        %v1748 = vand.u32 %v1217, 4294901760
        %v1749 = vsub.f32 %v1217, %v1748
        %1750 = vmatprep.subr.mxu0 %v1749
        %v1751 = vand.u32 %v1216, 4294901760
        %v1752 = vsub.f32 %v1216, %v1751
        %1753 = vmatpush1.msra.mxu0 %v1752
        %v1754 = vand.u32 %v1245, 4294901760
        %v1755 = vsub.f32 %v1245, %v1754
        %1756 = vmatprep.subr.mxu0 %v1755
        %v1757 = vand.u32 %v1244, 4294901760
        %v1758 = vsub.f32 %v1244, %v1757
        %1759 = vmatpush1.msra.mxu0 %v1758
        %v1760 = vand.u32 %v1247, 4294901760
        %v1761 = vsub.f32 %v1247, %v1760
        %1762 = vmatprep.subr.mxu0 %v1761
        %v1763 = vand.u32 %v1246, 4294901760
        %v1764 = vsub.f32 %v1246, %v1763
        %1765 = vmatpush1.msra.mxu0 %v1764
        %v1766 = vand.u32 %v1275, 4294901760
        %v1767 = vsub.f32 %v1275, %v1766
        %1768 = vmatprep.subr.mxu0 %v1767
        %v1769 = vand.u32 %v1274, 4294901760
        %v1770 = vsub.f32 %v1274, %v1769
        %1771 = vmatpush1.msra.mxu0 %v1770
        %v1772 = vand.u32 %v1277, 4294901760
        %v1773 = vsub.f32 %v1277, %v1772
        %1774 = vmatprep.subr.mxu0 %v1773
        %v1775 = vand.u32 %v1276, 4294901760
        %v1776 = vsub.f32 %v1276, %v1775
        %1777 = vmatpush1.msra.mxu0 %v1776
        %v1778 = vand.u32 %v1305, 4294901760
        %v1779 = vsub.f32 %v1305, %v1778
        %1780 = vmatprep.subr.mxu0 %v1779
        %v1781 = vand.u32 %v1304, 4294901760
        %v1782 = vsub.f32 %v1304, %v1781
        %1783 = vmatpush1.msra.mxu0 %v1782
        %v1784 = vand.u32 %v1307, 4294901760
        %v1785 = vsub.f32 %v1307, %v1784
        %1786 = vmatprep.subr.mxu0 %v1785
        %v1787 = vand.u32 %v1306, 4294901760
        %v1788 = vsub.f32 %v1306, %v1787
        %1789 = vmatpush1.msra.mxu0 %v1788
        %1790 = vmatprep.subr.mxu0 0.0
        %1791 = vmatpush1.msra.mxu0 0.0
        %1792 = vmatprep.subr.mxu0 0.0
        %1793 = vmatpush1.msra.mxu0 0.0
        %1794 = vmatprep.subr.mxu0 0.0
        %1795 = vmatpush1.msra.mxu0 0.0
        %1796 = vmatprep.subr.mxu0 0.0
        %1797 = vmatpush1.msra.mxu0 0.0
        %1798 = vmatprep.subr.mxu0 0.0
        %1799 = vmatpush1.msra.mxu0 0.0
        %1800 = vmatprep.subr.mxu0 0.0
        %1801 = vmatpush1.msra.mxu0 0.0
        %1802 = vmatprep.subr.mxu0 0.0
        %1803 = vmatpush1.msra.mxu0 0.0
        %1804 = vmatprep.subr.mxu0 0.0
        %1805 = vmatpush1.msra.mxu0 0.0
        %1806 = vmatprep.subr.mxu0 0.0
        %1807 = vmatpush1.msra.mxu0 0.0
        %1808 = vmatprep.subr.mxu0 0.0
        %1809 = vmatpush1.msra.mxu0 0.0
        %1810 = vmatprep.subr.mxu0 0.0
        %1811 = vmatpush1.msra.mxu0 0.0
        %1812 = vmatprep.subr.mxu0 0.0
        %1813 = vmatpush1.msra.mxu0 0.0
        %1814 = vmatprep.subr.mxu0 0.0
        %1815 = vmatpush1.msra.mxu0 0.0
        %1816 = vmatprep.subr.mxu0 0.0
        %1817 = vmatpush1.msra.mxu0 0.0
        %v1818 = vand.u32 %v1310, 4294901760
        %v1819 = vsub.f32 %v1310, %v1818
        %1820 = vmatprep.mubr.f32.mxu0 %v1819
        %v1821 = vand.u32 %v1065, 4294901760
        %v1822 = vsub.f32 %v1065, %v1821
        %1823 = vmatmul.mubr.f32.gmra.mrb[0].mxu0 %v1822
        %v1824 = vpop.f32.mrb[0].mxu0
        %v1825 = vadd.f32 %v1678, %v1824
        %v1826 = vpop.f32.mrb[0].mxu0
        %v1827 = vadd.f32 %v1680, %v1826
        %1828 = vdwg.mxu0
        %v1829 = vand.u32 %v1095, 4294901760
        %1830 = vmatprep.subr.mxu0 %v1829
        %v1831 = vand.u32 %v1094, 4294901760
        %1832 = vmatpush1.msra.mxu0 %v1831
        %v1833 = vand.u32 %v1097, 4294901760
        %1834 = vmatprep.subr.mxu0 %v1833
        %v1835 = vand.u32 %v1096, 4294901760
        %1836 = vmatpush1.msra.mxu0 %v1835
        %v1837 = vand.u32 %v1125, 4294901760
        %1838 = vmatprep.subr.mxu0 %v1837
        %v1839 = vand.u32 %v1124, 4294901760
        %1840 = vmatpush1.msra.mxu0 %v1839
        %v1841 = vand.u32 %v1127, 4294901760
        %1842 = vmatprep.subr.mxu0 %v1841
        %v1843 = vand.u32 %v1126, 4294901760
        %1844 = vmatpush1.msra.mxu0 %v1843
        %v1845 = vand.u32 %v1155, 4294901760
        %1846 = vmatprep.subr.mxu0 %v1845
        %v1847 = vand.u32 %v1154, 4294901760
        %1848 = vmatpush1.msra.mxu0 %v1847
        %v1849 = vand.u32 %v1157, 4294901760
        %1850 = vmatprep.subr.mxu0 %v1849
        %v1851 = vand.u32 %v1156, 4294901760
        %1852 = vmatpush1.msra.mxu0 %v1851
        %v1853 = vand.u32 %v1185, 4294901760
        %1854 = vmatprep.subr.mxu0 %v1853
        %v1855 = vand.u32 %v1184, 4294901760
        %1856 = vmatpush1.msra.mxu0 %v1855
        %v1857 = vand.u32 %v1187, 4294901760
        %1858 = vmatprep.subr.mxu0 %v1857
        %v1859 = vand.u32 %v1186, 4294901760
        %1860 = vmatpush1.msra.mxu0 %v1859
        %v1861 = vand.u32 %v1064, 4294901760
        %1862 = vmatprep.subr.mxu0 %v1861
        %v1863 = vand.u32 %v1063, 4294901760
        %1864 = vmatpush1.msra.mxu0 %v1863
        %v1865 = vand.u32 %v1061, 4294901760
        %1866 = vmatprep.subr.mxu0 %v1865
        %v1867 = vand.u32 %v1059, 4294901760
        %1868 = vmatpush1.msra.mxu0 %v1867
        %v1869 = vand.u32 %v1215, 4294901760
        %1870 = vmatprep.subr.mxu0 %v1869
        %v1871 = vand.u32 %v1214, 4294901760
        %1872 = vmatpush1.msra.mxu0 %v1871
        %v1873 = vand.u32 %v1217, 4294901760
        %1874 = vmatprep.subr.mxu0 %v1873
        %v1875 = vand.u32 %v1216, 4294901760
        %1876 = vmatpush1.msra.mxu0 %v1875
        %v1877 = vand.u32 %v1245, 4294901760
        %1878 = vmatprep.subr.mxu0 %v1877
        %v1879 = vand.u32 %v1244, 4294901760
        %1880 = vmatpush1.msra.mxu0 %v1879
        %v1881 = vand.u32 %v1247, 4294901760
        %1882 = vmatprep.subr.mxu0 %v1881
        %v1883 = vand.u32 %v1246, 4294901760
        %1884 = vmatpush1.msra.mxu0 %v1883
        %v1885 = vand.u32 %v1275, 4294901760
        %1886 = vmatprep.subr.mxu0 %v1885
        %v1887 = vand.u32 %v1274, 4294901760
        %1888 = vmatpush1.msra.mxu0 %v1887
        %v1889 = vand.u32 %v1277, 4294901760
        %1890 = vmatprep.subr.mxu0 %v1889
        %v1891 = vand.u32 %v1276, 4294901760
        %1892 = vmatpush1.msra.mxu0 %v1891
        %v1893 = vand.u32 %v1305, 4294901760
        %1894 = vmatprep.subr.mxu0 %v1893
        %v1895 = vand.u32 %v1304, 4294901760
        %1896 = vmatpush1.msra.mxu0 %v1895
        %v1897 = vand.u32 %v1307, 4294901760
        %1898 = vmatprep.subr.mxu0 %v1897
        %v1899 = vand.u32 %v1306, 4294901760
        %1900 = vmatpush1.msra.mxu0 %v1899
        %1901 = vmatprep.subr.mxu0 0.0
        %1902 = vmatpush1.msra.mxu0 0.0
        %1903 = vmatprep.subr.mxu0 0.0
        %1904 = vmatpush1.msra.mxu0 0.0
        %1905 = vmatprep.subr.mxu0 0.0
        %1906 = vmatpush1.msra.mxu0 0.0
        %1907 = vmatprep.subr.mxu0 0.0
        %1908 = vmatpush1.msra.mxu0 0.0
        %1909 = vmatprep.subr.mxu0 0.0
        %1910 = vmatpush1.msra.mxu0 0.0
        %1911 = vmatprep.subr.mxu0 0.0
        %1912 = vmatpush1.msra.mxu0 0.0
        %1913 = vmatprep.subr.mxu0 0.0
        %1914 = vmatpush1.msra.mxu0 0.0
        %1915 = vmatprep.subr.mxu0 0.0
        %1916 = vmatpush1.msra.mxu0 0.0
        %1917 = vmatprep.subr.mxu0 0.0
        %1918 = vmatpush1.msra.mxu0 0.0
        %1919 = vmatprep.subr.mxu0 0.0
        %1920 = vmatpush1.msra.mxu0 0.0
        %1921 = vmatprep.subr.mxu0 0.0
        %1922 = vmatpush1.msra.mxu0 0.0
        %1923 = vmatprep.subr.mxu0 0.0
        %1924 = vmatpush1.msra.mxu0 0.0
        %1925 = vmatprep.subr.mxu0 0.0
        %1926 = vmatpush1.msra.mxu0 0.0
        %1927 = vmatprep.subr.mxu0 0.0
        %1928 = vmatpush1.msra.mxu0 0.0
        %v1929 = vand.u32 %v1310, 4294901760
        %v1930 = vsub.f32 %v1310, %v1929
        %v1931 = vand.u32 %v1930, 4294901760
        %1932 = vmatprep.mubr.f32.mxu0 %v1931
        %v1933 = vand.u32 %v1065, 4294901760
        %v1934 = vsub.f32 %v1065, %v1933
        %v1935 = vand.u32 %v1934, 4294901760
        %1936 = vmatmul.mubr.f32.gmra.mrb[0].mxu0 %v1935
        %v1937 = vpop.f32.mrb[0].mxu0
        %v1938 = vadd.f32 %v1825, %v1937
        %v1939 = vpop.f32.mrb[0].mxu0
        %v1940 = vadd.f32 %v1827, %v1939
        %1941 = vdwg.mxu0
        %v1942 = vand.u32 %v1095, 4294901760
        %v1943 = vsub.f32 %v1095, %v1942
        %v1944 = vand.u32 %v1943, 4294901760
        %1945 = vmatprep.subr.mxu0 %v1944
        %v1946 = vand.u32 %v1094, 4294901760
        %v1947 = vsub.f32 %v1094, %v1946
        %v1948 = vand.u32 %v1947, 4294901760
        %1949 = vmatpush1.msra.mxu0 %v1948
        %v1950 = vand.u32 %v1097, 4294901760
        %v1951 = vsub.f32 %v1097, %v1950
        %v1952 = vand.u32 %v1951, 4294901760
        %1953 = vmatprep.subr.mxu0 %v1952
        %v1954 = vand.u32 %v1096, 4294901760
        %v1955 = vsub.f32 %v1096, %v1954
        %v1956 = vand.u32 %v1955, 4294901760
        %1957 = vmatpush1.msra.mxu0 %v1956
        %v1958 = vand.u32 %v1125, 4294901760
        %v1959 = vsub.f32 %v1125, %v1958
        %v1960 = vand.u32 %v1959, 4294901760
        %1961 = vmatprep.subr.mxu0 %v1960
        %v1962 = vand.u32 %v1124, 4294901760
        %v1963 = vsub.f32 %v1124, %v1962
        %v1964 = vand.u32 %v1963, 4294901760
        %1965 = vmatpush1.msra.mxu0 %v1964
        %v1966 = vand.u32 %v1127, 4294901760
        %v1967 = vsub.f32 %v1127, %v1966
        %v1968 = vand.u32 %v1967, 4294901760
        %1969 = vmatprep.subr.mxu0 %v1968
        %v1970 = vand.u32 %v1126, 4294901760
        %v1971 = vsub.f32 %v1126, %v1970
        %v1972 = vand.u32 %v1971, 4294901760
        %1973 = vmatpush1.msra.mxu0 %v1972
        %v1974 = vand.u32 %v1155, 4294901760
        %v1975 = vsub.f32 %v1155, %v1974
        %v1976 = vand.u32 %v1975, 4294901760
        %1977 = vmatprep.subr.mxu0 %v1976
        %v1978 = vand.u32 %v1154, 4294901760
        %v1979 = vsub.f32 %v1154, %v1978
        %v1980 = vand.u32 %v1979, 4294901760
        %1981 = vmatpush1.msra.mxu0 %v1980
        %v1982 = vand.u32 %v1157, 4294901760
        %v1983 = vsub.f32 %v1157, %v1982
        %v1984 = vand.u32 %v1983, 4294901760
        %1985 = vmatprep.subr.mxu0 %v1984
        %v1986 = vand.u32 %v1156, 4294901760
        %v1987 = vsub.f32 %v1156, %v1986
        %v1988 = vand.u32 %v1987, 4294901760
        %1989 = vmatpush1.msra.mxu0 %v1988
        %v1990 = vand.u32 %v1185, 4294901760
        %v1991 = vsub.f32 %v1185, %v1990
        %v1992 = vand.u32 %v1991, 4294901760
        %1993 = vmatprep.subr.mxu0 %v1992
        %v1994 = vand.u32 %v1184, 4294901760
        %v1995 = vsub.f32 %v1184, %v1994
        %v1996 = vand.u32 %v1995, 4294901760
        %1997 = vmatpush1.msra.mxu0 %v1996
        %v1998 = vand.u32 %v1187, 4294901760
        %v1999 = vsub.f32 %v1187, %v1998
        %v2000 = vand.u32 %v1999, 4294901760
        %2001 = vmatprep.subr.mxu0 %v2000
        %v2002 = vand.u32 %v1186, 4294901760
        %v2003 = vsub.f32 %v1186, %v2002
        %v2004 = vand.u32 %v2003, 4294901760
        %2005 = vmatpush1.msra.mxu0 %v2004
        %v2006 = vand.u32 %v1064, 4294901760
        %v2007 = vsub.f32 %v1064, %v2006
        %v2008 = vand.u32 %v2007, 4294901760
        %2009 = vmatprep.subr.mxu0 %v2008
        %v2010 = vand.u32 %v1063, 4294901760
        %v2011 = vsub.f32 %v1063, %v2010
        %v2012 = vand.u32 %v2011, 4294901760
        %2013 = vmatpush1.msra.mxu0 %v2012
        %v2014 = vand.u32 %v1061, 4294901760
        %v2015 = vsub.f32 %v1061, %v2014
        %v2016 = vand.u32 %v2015, 4294901760
        %2017 = vmatprep.subr.mxu0 %v2016
        %v2018 = vand.u32 %v1059, 4294901760
        %v2019 = vsub.f32 %v1059, %v2018
        %v2020 = vand.u32 %v2019, 4294901760
        %2021 = vmatpush1.msra.mxu0 %v2020
        %v2022 = vand.u32 %v1215, 4294901760
        %v2023 = vsub.f32 %v1215, %v2022
        %v2024 = vand.u32 %v2023, 4294901760
        %2025 = vmatprep.subr.mxu0 %v2024
        %v2026 = vand.u32 %v1214, 4294901760
        %v2027 = vsub.f32 %v1214, %v2026
        %v2028 = vand.u32 %v2027, 4294901760
        %2029 = vmatpush1.msra.mxu0 %v2028
        %v2030 = vand.u32 %v1217, 4294901760
        %v2031 = vsub.f32 %v1217, %v2030
        %v2032 = vand.u32 %v2031, 4294901760
        %2033 = vmatprep.subr.mxu0 %v2032
        %v2034 = vand.u32 %v1216, 4294901760
        %v2035 = vsub.f32 %v1216, %v2034
        %v2036 = vand.u32 %v2035, 4294901760
        %2037 = vmatpush1.msra.mxu0 %v2036
        %v2038 = vand.u32 %v1245, 4294901760
        %v2039 = vsub.f32 %v1245, %v2038
        %v2040 = vand.u32 %v2039, 4294901760
        %2041 = vmatprep.subr.mxu0 %v2040
        %v2042 = vand.u32 %v1244, 4294901760
        %v2043 = vsub.f32 %v1244, %v2042
        %v2044 = vand.u32 %v2043, 4294901760
        %2045 = vmatpush1.msra.mxu0 %v2044
        %v2046 = vand.u32 %v1247, 4294901760
        %v2047 = vsub.f32 %v1247, %v2046
        %v2048 = vand.u32 %v2047, 4294901760
        %2049 = vmatprep.subr.mxu0 %v2048
        %v2050 = vand.u32 %v1246, 4294901760
        %v2051 = vsub.f32 %v1246, %v2050
        %v2052 = vand.u32 %v2051, 4294901760
        %2053 = vmatpush1.msra.mxu0 %v2052
        %v2054 = vand.u32 %v1275, 4294901760
        %v2055 = vsub.f32 %v1275, %v2054
        %v2056 = vand.u32 %v2055, 4294901760
        %2057 = vmatprep.subr.mxu0 %v2056
        %v2058 = vand.u32 %v1274, 4294901760
        %v2059 = vsub.f32 %v1274, %v2058
        %v2060 = vand.u32 %v2059, 4294901760
        %2061 = vmatpush1.msra.mxu0 %v2060
        %v2062 = vand.u32 %v1277, 4294901760
        %v2063 = vsub.f32 %v1277, %v2062
        %v2064 = vand.u32 %v2063, 4294901760
        %2065 = vmatprep.subr.mxu0 %v2064
        %v2066 = vand.u32 %v1276, 4294901760
        %v2067 = vsub.f32 %v1276, %v2066
        %v2068 = vand.u32 %v2067, 4294901760
        %2069 = vmatpush1.msra.mxu0 %v2068
        %v2070 = vand.u32 %v1305, 4294901760
        %v2071 = vsub.f32 %v1305, %v2070
        %v2072 = vand.u32 %v2071, 4294901760
        %2073 = vmatprep.subr.mxu0 %v2072
        %v2074 = vand.u32 %v1304, 4294901760
        %v2075 = vsub.f32 %v1304, %v2074
        %v2076 = vand.u32 %v2075, 4294901760
        %2077 = vmatpush1.msra.mxu0 %v2076
        %v2078 = vand.u32 %v1307, 4294901760
        %v2079 = vsub.f32 %v1307, %v2078
        %v2080 = vand.u32 %v2079, 4294901760
        %2081 = vmatprep.subr.mxu0 %v2080
        %v2082 = vand.u32 %v1306, 4294901760
        %v2083 = vsub.f32 %v1306, %v2082
        %v2084 = vand.u32 %v2083, 4294901760
        %2085 = vmatpush1.msra.mxu0 %v2084
        %2086 = vmatprep.subr.mxu0 0.0
        %2087 = vmatpush1.msra.mxu0 0.0
        %2088 = vmatprep.subr.mxu0 0.0
        %2089 = vmatpush1.msra.mxu0 0.0
        %2090 = vmatprep.subr.mxu0 0.0
        %2091 = vmatpush1.msra.mxu0 0.0
        %2092 = vmatprep.subr.mxu0 0.0
        %2093 = vmatpush1.msra.mxu0 0.0
        %2094 = vmatprep.subr.mxu0 0.0
        %2095 = vmatpush1.msra.mxu0 0.0
        %2096 = vmatprep.subr.mxu0 0.0
        %2097 = vmatpush1.msra.mxu0 0.0
        %2098 = vmatprep.subr.mxu0 0.0
        %2099 = vmatpush1.msra.mxu0 0.0
        %2100 = vmatprep.subr.mxu0 0.0
        %2101 = vmatpush1.msra.mxu0 0.0
        %2102 = vmatprep.subr.mxu0 0.0
        %2103 = vmatpush1.msra.mxu0 0.0
        %2104 = vmatprep.subr.mxu0 0.0
        %2105 = vmatpush1.msra.mxu0 0.0
        %2106 = vmatprep.subr.mxu0 0.0
        %2107 = vmatpush1.msra.mxu0 0.0
        %2108 = vmatprep.subr.mxu0 0.0
        %2109 = vmatpush1.msra.mxu0 0.0
        %2110 = vmatprep.subr.mxu0 0.0
        %2111 = vmatpush1.msra.mxu0 0.0
        %2112 = vmatprep.subr.mxu0 0.0
        %2113 = vmatpush1.msra.mxu0 0.0
        %v2114 = vand.u32 %v1310, 4294901760
        %2115 = vmatprep.mubr.f32.mxu0 %v2114
        %v2116 = vand.u32 %v1065, 4294901760
        %2117 = vmatmul.mubr.f32.gmra.mrb[0].mxu0 %v2116
        %v2118 = vpop.f32.mrb[0].mxu0
        %v2119 = vadd.f32 %v1938, %v2118
        %v2120 = vpop.f32.mrb[0].mxu0
        %v2121 = vadd.f32 %v1940, %v2120
        %2122 = vdwg.mxu0
        %v2123 = vand.u32 %v1095, 4294901760
        %2124 = vmatprep.subr.mxu0 %v2123
        %v2125 = vand.u32 %v1094, 4294901760
        %2126 = vmatpush1.msra.mxu0 %v2125
        %v2127 = vand.u32 %v1097, 4294901760
        %2128 = vmatprep.subr.mxu0 %v2127
        %v2129 = vand.u32 %v1096, 4294901760
        %2130 = vmatpush1.msra.mxu0 %v2129
        %v2131 = vand.u32 %v1125, 4294901760
        %2132 = vmatprep.subr.mxu0 %v2131
        %v2133 = vand.u32 %v1124, 4294901760
        %2134 = vmatpush1.msra.mxu0 %v2133
        %v2135 = vand.u32 %v1127, 4294901760
        %2136 = vmatprep.subr.mxu0 %v2135
        %v2137 = vand.u32 %v1126, 4294901760
        %2138 = vmatpush1.msra.mxu0 %v2137
        %v2139 = vand.u32 %v1155, 4294901760
        %2140 = vmatprep.subr.mxu0 %v2139
        %v2141 = vand.u32 %v1154, 4294901760
        %2142 = vmatpush1.msra.mxu0 %v2141
        %v2143 = vand.u32 %v1157, 4294901760
        %2144 = vmatprep.subr.mxu0 %v2143
        %v2145 = vand.u32 %v1156, 4294901760
        %2146 = vmatpush1.msra.mxu0 %v2145
        %v2147 = vand.u32 %v1185, 4294901760
        %2148 = vmatprep.subr.mxu0 %v2147
        %v2149 = vand.u32 %v1184, 4294901760
        %2150 = vmatpush1.msra.mxu0 %v2149
        %v2151 = vand.u32 %v1187, 4294901760
        %2152 = vmatprep.subr.mxu0 %v2151
        %v2153 = vand.u32 %v1186, 4294901760
        %2154 = vmatpush1.msra.mxu0 %v2153
        %v2155 = vand.u32 %v1064, 4294901760
        %2156 = vmatprep.subr.mxu0 %v2155
        %v2157 = vand.u32 %v1063, 4294901760
        %2158 = vmatpush1.msra.mxu0 %v2157
        %v2159 = vand.u32 %v1061, 4294901760
        %2160 = vmatprep.subr.mxu0 %v2159
        %v2161 = vand.u32 %v1059, 4294901760
        %2162 = vmatpush1.msra.mxu0 %v2161
        %v2163 = vand.u32 %v1215, 4294901760
        %2164 = vmatprep.subr.mxu0 %v2163
        %v2165 = vand.u32 %v1214, 4294901760
        %2166 = vmatpush1.msra.mxu0 %v2165
        %v2167 = vand.u32 %v1217, 4294901760
        %2168 = vmatprep.subr.mxu0 %v2167
        %v2169 = vand.u32 %v1216, 4294901760
        %2170 = vmatpush1.msra.mxu0 %v2169
        %v2171 = vand.u32 %v1245, 4294901760
        %2172 = vmatprep.subr.mxu0 %v2171
        %v2173 = vand.u32 %v1244, 4294901760
        %2174 = vmatpush1.msra.mxu0 %v2173
        %v2175 = vand.u32 %v1247, 4294901760
        %2176 = vmatprep.subr.mxu0 %v2175
        %v2177 = vand.u32 %v1246, 4294901760
        %2178 = vmatpush1.msra.mxu0 %v2177
        %v2179 = vand.u32 %v1275, 4294901760
        %2180 = vmatprep.subr.mxu0 %v2179
        %v2181 = vand.u32 %v1274, 4294901760
        %2182 = vmatpush1.msra.mxu0 %v2181
        %v2183 = vand.u32 %v1277, 4294901760
        %2184 = vmatprep.subr.mxu0 %v2183
        %v2185 = vand.u32 %v1276, 4294901760
        %2186 = vmatpush1.msra.mxu0 %v2185
        %v2187 = vand.u32 %v1305, 4294901760
        %2188 = vmatprep.subr.mxu0 %v2187
        %v2189 = vand.u32 %v1304, 4294901760
        %2190 = vmatpush1.msra.mxu0 %v2189
        %v2191 = vand.u32 %v1307, 4294901760
        %2192 = vmatprep.subr.mxu0 %v2191
        %v2193 = vand.u32 %v1306, 4294901760
        %2194 = vmatpush1.msra.mxu0 %v2193
        %2195 = vmatprep.subr.mxu0 0.0
        %2196 = vmatpush1.msra.mxu0 0.0
        %2197 = vmatprep.subr.mxu0 0.0
        %2198 = vmatpush1.msra.mxu0 0.0
        %2199 = vmatprep.subr.mxu0 0.0
        %2200 = vmatpush1.msra.mxu0 0.0
        %2201 = vmatprep.subr.mxu0 0.0
        %2202 = vmatpush1.msra.mxu0 0.0
        %2203 = vmatprep.subr.mxu0 0.0
        %2204 = vmatpush1.msra.mxu0 0.0
        %2205 = vmatprep.subr.mxu0 0.0
        %2206 = vmatpush1.msra.mxu0 0.0
        %2207 = vmatprep.subr.mxu0 0.0
        %2208 = vmatpush1.msra.mxu0 0.0
        %2209 = vmatprep.subr.mxu0 0.0
        %2210 = vmatpush1.msra.mxu0 0.0
        %2211 = vmatprep.subr.mxu0 0.0
        %2212 = vmatpush1.msra.mxu0 0.0
        %2213 = vmatprep.subr.mxu0 0.0
        %2214 = vmatpush1.msra.mxu0 0.0
        %2215 = vmatprep.subr.mxu0 0.0
        %2216 = vmatpush1.msra.mxu0 0.0
        %2217 = vmatprep.subr.mxu0 0.0
        %2218 = vmatpush1.msra.mxu0 0.0
        %2219 = vmatprep.subr.mxu0 0.0
        %2220 = vmatpush1.msra.mxu0 0.0
        %2221 = vmatprep.subr.mxu0 0.0
        %2222 = vmatpush1.msra.mxu0 0.0
        %v2223 = vand.u32 %v1310, 4294901760
        %2224 = vmatprep.mubr.f32.mxu0 %v2223
        %v2225 = vand.u32 %v1065, 4294901760
        %2226 = vmatmul.mubr.f32.gmra.mrb[0].mxu0 %v2225
        %v2227 = vpop.f32.mrb[0].mxu0
        %v2228 = vadd.f32 %v2119, %v2227
        %v2229 = vpop.f32.mrb[0].mxu0
        %v2230 = vadd.f32 %v2121, %v2229
        %2231 = vdwg.mxu0
        %v2232 = vld [vmem:[#allocation2] sm:$0xff]
        %v2233 = vld [vmem:[#allocation2 + $0x8] sm:$0xff]
        %v2234 = vadd.f32 %v2232, %v2228
        %v2235 = vadd.f32 %v2233, %v2230
        %v2236 = vld [vmem:[%s5] sm:$0xff]
        %v2237 = vld [vmem:[%s5 + $0x8] sm:$0xff]
        %v2238 = vadd.f32 %v2234, %v2236
        %v2239 = vadd.f32 %v2235, %v2237
        %vm2240 = vcmp.ge.f32.partialorder %v2238, 1.0
        %vm2241 = vcmp.ge.f32.partialorder %v2239, 1.0
        %v2242 = vsel %vm2240, 1, 0
        %v2243 = vsel %vm2241, 1, 0
        %v2244 = vcvt.s32.f32 %v2242
        %v2245 = vcvt.s32.f32 %v2243
        %v2246 = vsel %vm2240, 0.0, %v2238
        %v2247 = vsel %vm2241, 0.0, %v2239
        %2248 = vst [vmem:[#allocation2] sm:$0xff] %v2246
        %2249 = vst [vmem:[#allocation2 + $0x8] sm:$0xff] %v2247
        %v2250 = vld [vmem:[%s6] sm:$0xff]
        %v2251 = vld [vmem:[%s6 + $0x8] sm:$0xff]
        %2252 = vrot.lane.b32.xlu0 %v2244, 17
        %v2253 = vpop.permute.xlu0 %2252
        %2254 = vrot.lane.b32.xlu0 %v2245, 17
        %v2255 = vpop.permute.xlu0 %2254
        %v2256 = vsel %vm1077, %v2253, %v2255
        %v2257 = vsel %vm1077, %v2255, %v2253
        %v2258 = vld [vmem:[%s3] ss:$8 sm:$0x3]
        %v2260 = vlaneseq
        %v2261 = vshrl.u32 %v2260, 7
        %v2262 = vsub.s32 0, %v2261
        %v2263 = vrot.slane %v2258, %v2262
        %v2264 = vlaneseq
        %v2265 = vshrl.u32 %v2264, 7
        %v2266 = vsub.s32 1, %v2265
        %v2267 = vrot.slane %v2258, %v2266
        %v2270 = vmul.f32 %v2257, %v2263
        %v2271 = vmul.f32 %v2256, %v2267
        %2272 = vrot.lane.b32.xlu0 %v2244, 16
        %v2273 = vpop.permute.xlu0 %2272
        %2274 = vrot.lane.b32.xlu0 %v2245, 16
        %v2275 = vpop.permute.xlu0 %2274
        %v2276 = vsel %vm1106, %v2273, %v2275
        %v2277 = vsel %vm1106, %v2275, %v2273
        %v2278 = vld [vmem:[%s1111] ss:$8 sm:$0x3]
        %v2280 = vlaneseq
        %v2281 = vshrl.u32 %v2280, 7
        %v2282 = vsub.s32 0, %v2281
        %v2283 = vrot.slane %v2278, %v2282
        %v2284 = vlaneseq
        %v2285 = vshrl.u32 %v2284, 7
        %v2286 = vsub.s32 1, %v2285
        %v2287 = vrot.slane %v2278, %v2286
        %v2290 = vmul.f32 %v2277, %v2283
        %v2291 = vmul.f32 %v2276, %v2287
        %2292 = vrot.lane.b32.xlu0 %v2244, 15
        %v2293 = vpop.permute.xlu0 %2292
        %2294 = vrot.lane.b32.xlu0 %v2245, 15
        %v2295 = vpop.permute.xlu0 %2294
        %v2296 = vsel %vm1136, %v2293, %v2295
        %v2297 = vsel %vm1136, %v2295, %v2293
        %v2298 = vld [vmem:[%s1141] ss:$8 sm:$0x3]
        %v2300 = vlaneseq
        %v2301 = vshrl.u32 %v2300, 7
        %v2302 = vsub.s32 0, %v2301
        %v2303 = vrot.slane %v2298, %v2302
        %v2304 = vlaneseq
        %v2305 = vshrl.u32 %v2304, 7
        %v2306 = vsub.s32 1, %v2305
        %v2307 = vrot.slane %v2298, %v2306
        %v2310 = vmul.f32 %v2297, %v2303
        %v2311 = vmul.f32 %v2296, %v2307
        %2312 = vrot.lane.b32.xlu0 %v2244, 1
        %v2313 = vpop.permute.xlu0 %2312
        %2314 = vrot.lane.b32.xlu0 %v2245, 1
        %v2315 = vpop.permute.xlu0 %2314
        %v2316 = vsel %vm1166, %v2313, %v2315
        %v2317 = vsel %vm1166, %v2315, %v2313
        %v2318 = vld [vmem:[%s1171] ss:$8 sm:$0x3]
        %v2320 = vlaneseq
        %v2321 = vshrl.u32 %v2320, 7
        %v2322 = vsub.s32 0, %v2321
        %v2323 = vrot.slane %v2318, %v2322
        %v2324 = vlaneseq
        %v2325 = vshrl.u32 %v2324, 7
        %v2326 = vsub.s32 1, %v2325
        %v2327 = vrot.slane %v2318, %v2326
        %v2330 = vmul.f32 %v2317, %v2323
        %v2331 = vmul.f32 %v2316, %v2327
        %2332 = vrot.lane.b32.xlu0 %v2244, 127
        %v2333 = vpop.permute.xlu0 %2332
        %2334 = vrot.lane.b32.xlu0 %v2245, 127
        %v2335 = vpop.permute.xlu0 %2334
        %v2336 = vsel %vm1196, %v2333, %v2335
        %v2337 = vsel %vm1196, %v2335, %v2333
        %v2338 = vld [vmem:[%s1201] ss:$8 sm:$0x3]
        %v2340 = vlaneseq
        %v2341 = vshrl.u32 %v2340, 7
        %v2342 = vsub.s32 0, %v2341
        %v2343 = vrot.slane %v2338, %v2342
        %v2344 = vlaneseq
        %v2345 = vshrl.u32 %v2344, 7
        %v2346 = vsub.s32 1, %v2345
        %v2347 = vrot.slane %v2338, %v2346
        %v2350 = vmul.f32 %v2336, %v2343
        %v2351 = vmul.f32 %v2337, %v2347
        %2352 = vrot.lane.b32.xlu0 %v2244, 113
        %v2353 = vpop.permute.xlu0 %2352
        %2354 = vrot.lane.b32.xlu0 %v2245, 113
        %v2355 = vpop.permute.xlu0 %2354
        %v2356 = vsel %vm1226, %v2353, %v2355
        %v2357 = vsel %vm1226, %v2355, %v2353
        %v2358 = vld [vmem:[%s1231] ss:$8 sm:$0x3]
        %v2360 = vlaneseq
        %v2361 = vshrl.u32 %v2360, 7
        %v2362 = vsub.s32 0, %v2361
        %v2363 = vrot.slane %v2358, %v2362
        %v2364 = vlaneseq
        %v2365 = vshrl.u32 %v2364, 7
        %v2366 = vsub.s32 1, %v2365
        %v2367 = vrot.slane %v2358, %v2366
        %v2370 = vmul.f32 %v2356, %v2363
        %v2371 = vmul.f32 %v2357, %v2367
        %2372 = vrot.lane.b32.xlu0 %v2244, 112
        %v2373 = vpop.permute.xlu0 %2372
        %2374 = vrot.lane.b32.xlu0 %v2245, 112
        %v2375 = vpop.permute.xlu0 %2374
        %v2376 = vsel %vm1256, %v2373, %v2375
        %v2377 = vsel %vm1256, %v2375, %v2373
        %v2378 = vld [vmem:[%s1261] ss:$8 sm:$0x3]
        %v2380 = vlaneseq
        %v2381 = vshrl.u32 %v2380, 7
        %v2382 = vsub.s32 0, %v2381
        %v2383 = vrot.slane %v2378, %v2382
        %v2384 = vlaneseq
        %v2385 = vshrl.u32 %v2384, 7
        %v2386 = vsub.s32 1, %v2385
        %v2387 = vrot.slane %v2378, %v2386
        %v2390 = vmul.f32 %v2376, %v2383
        %v2391 = vmul.f32 %v2377, %v2387
        %2392 = vrot.lane.b32.xlu0 %v2244, 111
        %v2393 = vpop.permute.xlu0 %2392
        %2394 = vrot.lane.b32.xlu0 %v2245, 111
        %v2395 = vpop.permute.xlu0 %2394
        %v2396 = vsel %vm1286, %v2393, %v2395
        %v2397 = vsel %vm1286, %v2395, %v2393
        %v2398 = vld [vmem:[%s1291] ss:$8 sm:$0x3]
        %v2400 = vlaneseq
        %v2401 = vshrl.u32 %v2400, 7
        %v2402 = vsub.s32 0, %v2401
        %v2403 = vrot.slane %v2398, %v2402
        %v2404 = vlaneseq
        %v2405 = vshrl.u32 %v2404, 7
        %v2406 = vsub.s32 1, %v2405
        %v2407 = vrot.slane %v2398, %v2406
        %v2410 = vmul.f32 %v2396, %v2403
        %v2411 = vmul.f32 %v2397, %v2407
        %vm2412 = vcmask 588800
        %v2414 = vsel %vm2412, %v2250, 0
        %v2417 = vsel %vm2412, %v2251, 0
        %v2419 = vand.u32 %v2271, 4294901760
        %2420 = vmatprep.subr.mxu0 %v2419
        %v2421 = vand.u32 %v2270, 4294901760
        %2422 = vmatpush1.msra.mxu0 %v2421
        %v2423 = vand.u32 %v2291, 4294901760
        %2424 = vmatprep.subr.mxu0 %v2423
        %v2425 = vand.u32 %v2290, 4294901760
        %2426 = vmatpush1.msra.mxu0 %v2425
        %v2427 = vand.u32 %v2311, 4294901760
        %2428 = vmatprep.subr.mxu0 %v2427
        %v2429 = vand.u32 %v2310, 4294901760
        %2430 = vmatpush1.msra.mxu0 %v2429
        %v2431 = vand.u32 %v2331, 4294901760
        %2432 = vmatprep.subr.mxu0 %v2431
        %v2433 = vand.u32 %v2330, 4294901760
        %2434 = vmatpush1.msra.mxu0 %v2433
        %v2435 = vand.u32 %v2245, 4294901760
        %2436 = vmatprep.subr.mxu0 %v2435
        %v2437 = vand.u32 %v2244, 4294901760
        %2438 = vmatpush1.msra.mxu0 %v2437
        %v2439 = vand.u32 %v2351, 4294901760
        %2440 = vmatprep.subr.mxu0 %v2439
        %v2441 = vand.u32 %v2350, 4294901760
        %2442 = vmatpush1.msra.mxu0 %v2441
        %v2443 = vand.u32 %v2371, 4294901760
        %2444 = vmatprep.subr.mxu0 %v2443
        %v2445 = vand.u32 %v2370, 4294901760
        %2446 = vmatpush1.msra.mxu0 %v2445
        %v2447 = vand.u32 %v2391, 4294901760
        %2448 = vmatprep.subr.mxu0 %v2447
        %v2449 = vand.u32 %v2390, 4294901760
        %2450 = vmatpush1.msra.mxu0 %v2449
        %v2451 = vand.u32 %v2411, 4294901760
        %2452 = vmatprep.subr.mxu0 %v2451
        %v2453 = vand.u32 %v2410, 4294901760
        %2454 = vmatpush1.msra.mxu0 %v2453
        %2455 = vmatprep.subr.mxu0 0.0
        %2456 = vmatpush1.msra.mxu0 0.0
        %2457 = vmatprep.subr.mxu0 0.0
        %2458 = vmatpush1.msra.mxu0 0.0
        %2459 = vmatprep.subr.mxu0 0.0
        %2460 = vmatpush1.msra.mxu0 0.0
        %2461 = vmatprep.subr.mxu0 0.0
        %2462 = vmatpush1.msra.mxu0 0.0
        %2463 = vmatprep.subr.mxu0 0.0
        %2464 = vmatpush1.msra.mxu0 0.0
        %2465 = vmatprep.subr.mxu0 0.0
        %2466 = vmatpush1.msra.mxu0 0.0
        %2467 = vmatprep.subr.mxu0 0.0
        %2468 = vmatpush1.msra.mxu0 0.0
        %2469 = vmatprep.subr.mxu0 0.0
        %2470 = vmatpush1.msra.mxu0 0.0
        %2471 = vmatprep.subr.mxu0 0.0
        %2472 = vmatpush1.msra.mxu0 0.0
        %2473 = vmatprep.subr.mxu0 0.0
        %2474 = vmatpush1.msra.mxu0 0.0
        %2475 = vmatprep.subr.mxu0 0.0
        %2476 = vmatpush1.msra.mxu0 0.0
        %2477 = vmatprep.subr.mxu0 0.0
        %2478 = vmatpush1.msra.mxu0 0.0
        %2479 = vmatprep.subr.mxu0 0.0
        %2480 = vmatpush1.msra.mxu0 0.0
        %2481 = vmatprep.subr.mxu0 0.0
        %2482 = vmatpush1.msra.mxu0 0.0
        %2483 = vmatprep.subr.mxu0 0.0
        %2484 = vmatpush1.msra.mxu0 0.0
        %2485 = vmatprep.subr.mxu0 0.0
        %2486 = vmatpush1.msra.mxu0 0.0
        %2487 = vmatprep.subr.mxu0 0.0
        %2488 = vmatpush1.msra.mxu0 0.0
        %2489 = vmatprep.subr.mxu0 0.0
        %2490 = vmatpush1.msra.mxu0 0.0
        %2491 = vmatprep.subr.mxu0 0.0
        %2492 = vmatpush1.msra.mxu0 0.0
        %2493 = vmatprep.subr.mxu0 0.0
        %2494 = vmatpush1.msra.mxu0 0.0
        %2495 = vmatprep.subr.mxu0 0.0
        %2496 = vmatpush1.msra.mxu0 0.0
        %2497 = vmatprep.subr.mxu0 0.0
        %2498 = vmatpush1.msra.mxu0 0.0
        %2499 = vmatprep.subr.mxu0 0.0
        %2500 = vmatpush1.msra.mxu0 0.0
        %2501 = vmatprep.mubr.f32.mxu0 0.0
        %v2502 = vand.u32 %v2414, 4294901760
        %v2503 = vsub.f32 %v2414, %v2502
        %v2504 = vand.u32 %v2503, 4294901760
        %v2505 = vsub.f32 %v2503, %v2504
        %v2506 = vand.u32 %v2505, 4294901760
        %2507 = vmatmul.mubr.f32.gmra.mrb[0].mxu0 %v2506
        %v2508 = vpop.f32.mrb[0].mxu0
        %v2509 = vadd.f32 0.0, %v2508
        %v2510 = vpop.f32.mrb[0].mxu0
        %v2511 = vadd.f32 0.0, %v2510
        %2512 = vmatprep.mubr.f32.mxu0 0.0
        %v2513 = vand.u32 %v2417, 4294901760
        %v2514 = vsub.f32 %v2417, %v2513
        %v2515 = vand.u32 %v2514, 4294901760
        %v2516 = vsub.f32 %v2514, %v2515
        %v2517 = vand.u32 %v2516, 4294901760
        %2518 = vmatmul.mubr.f32.gmra.mrb[0].mxu0 %v2517
        %v2519 = vpop.f32.mrb[0].mxu0
        %v2520 = vadd.f32 0.0, %v2519
        %v2521 = vpop.f32.mrb[0].mxu0
        %v2522 = vadd.f32 0.0, %v2521
        %2523 = vdwg.mxu0
        %v2524 = vand.u32 %v2271, 4294901760
        %v2525 = vsub.f32 %v2271, %v2524
        %v2526 = vand.u32 %v2525, 4294901760
        %v2527 = vsub.f32 %v2525, %v2526
        %v2528 = vand.u32 %v2527, 4294901760
        %2529 = vmatprep.subr.mxu0 %v2528
        %v2530 = vand.u32 %v2270, 4294901760
        %v2531 = vsub.f32 %v2270, %v2530
        %v2532 = vand.u32 %v2531, 4294901760
        %v2533 = vsub.f32 %v2531, %v2532
        %v2534 = vand.u32 %v2533, 4294901760
        %2535 = vmatpush1.msra.mxu0 %v2534
        %v2536 = vand.u32 %v2291, 4294901760
        %v2537 = vsub.f32 %v2291, %v2536
        %v2538 = vand.u32 %v2537, 4294901760
        %v2539 = vsub.f32 %v2537, %v2538
        %v2540 = vand.u32 %v2539, 4294901760
        %2541 = vmatprep.subr.mxu0 %v2540
        %v2542 = vand.u32 %v2290, 4294901760
        %v2543 = vsub.f32 %v2290, %v2542
        %v2544 = vand.u32 %v2543, 4294901760
        %v2545 = vsub.f32 %v2543, %v2544
        %v2546 = vand.u32 %v2545, 4294901760
        %2547 = vmatpush1.msra.mxu0 %v2546
        %v2548 = vand.u32 %v2311, 4294901760
        %v2549 = vsub.f32 %v2311, %v2548
        %v2550 = vand.u32 %v2549, 4294901760
        %v2551 = vsub.f32 %v2549, %v2550
        %v2552 = vand.u32 %v2551, 4294901760
        %2553 = vmatprep.subr.mxu0 %v2552
        %v2554 = vand.u32 %v2310, 4294901760
        %v2555 = vsub.f32 %v2310, %v2554
        %v2556 = vand.u32 %v2555, 4294901760
        %v2557 = vsub.f32 %v2555, %v2556
        %v2558 = vand.u32 %v2557, 4294901760
        %2559 = vmatpush1.msra.mxu0 %v2558
        %v2560 = vand.u32 %v2331, 4294901760
        %v2561 = vsub.f32 %v2331, %v2560
        %v2562 = vand.u32 %v2561, 4294901760
        %v2563 = vsub.f32 %v2561, %v2562
        %v2564 = vand.u32 %v2563, 4294901760
        %2565 = vmatprep.subr.mxu0 %v2564
        %v2566 = vand.u32 %v2330, 4294901760
        %v2567 = vsub.f32 %v2330, %v2566
        %v2568 = vand.u32 %v2567, 4294901760
        %v2569 = vsub.f32 %v2567, %v2568
        %v2570 = vand.u32 %v2569, 4294901760
        %2571 = vmatpush1.msra.mxu0 %v2570
        %v2572 = vand.u32 %v2245, 4294901760
        %v2573 = vsub.f32 %v2245, %v2572
        %v2574 = vand.u32 %v2573, 4294901760
        %v2575 = vsub.f32 %v2573, %v2574
        %v2576 = vand.u32 %v2575, 4294901760
        %2577 = vmatprep.subr.mxu0 %v2576
        %v2578 = vand.u32 %v2244, 4294901760
        %v2579 = vsub.f32 %v2244, %v2578
        %v2580 = vand.u32 %v2579, 4294901760
        %v2581 = vsub.f32 %v2579, %v2580
        %v2582 = vand.u32 %v2581, 4294901760
        %2583 = vmatpush1.msra.mxu0 %v2582
        %v2584 = vand.u32 %v2351, 4294901760
        %v2585 = vsub.f32 %v2351, %v2584
        %v2586 = vand.u32 %v2585, 4294901760
        %v2587 = vsub.f32 %v2585, %v2586
        %v2588 = vand.u32 %v2587, 4294901760
        %2589 = vmatprep.subr.mxu0 %v2588
        %v2590 = vand.u32 %v2350, 4294901760
        %v2591 = vsub.f32 %v2350, %v2590
        %v2592 = vand.u32 %v2591, 4294901760
        %v2593 = vsub.f32 %v2591, %v2592
        %v2594 = vand.u32 %v2593, 4294901760
        %2595 = vmatpush1.msra.mxu0 %v2594
        %v2596 = vand.u32 %v2371, 4294901760
        %v2597 = vsub.f32 %v2371, %v2596
        %v2598 = vand.u32 %v2597, 4294901760
        %v2599 = vsub.f32 %v2597, %v2598
        %v2600 = vand.u32 %v2599, 4294901760
        %2601 = vmatprep.subr.mxu0 %v2600
        %v2602 = vand.u32 %v2370, 4294901760
        %v2603 = vsub.f32 %v2370, %v2602
        %v2604 = vand.u32 %v2603, 4294901760
        %v2605 = vsub.f32 %v2603, %v2604
        %v2606 = vand.u32 %v2605, 4294901760
        %2607 = vmatpush1.msra.mxu0 %v2606
        %v2608 = vand.u32 %v2391, 4294901760
        %v2609 = vsub.f32 %v2391, %v2608
        %v2610 = vand.u32 %v2609, 4294901760
        %v2611 = vsub.f32 %v2609, %v2610
        %v2612 = vand.u32 %v2611, 4294901760
        %2613 = vmatprep.subr.mxu0 %v2612
        %v2614 = vand.u32 %v2390, 4294901760
        %v2615 = vsub.f32 %v2390, %v2614
        %v2616 = vand.u32 %v2615, 4294901760
        %v2617 = vsub.f32 %v2615, %v2616
        %v2618 = vand.u32 %v2617, 4294901760
        %2619 = vmatpush1.msra.mxu0 %v2618
        %v2620 = vand.u32 %v2411, 4294901760
        %v2621 = vsub.f32 %v2411, %v2620
        %v2622 = vand.u32 %v2621, 4294901760
        %v2623 = vsub.f32 %v2621, %v2622
        %v2624 = vand.u32 %v2623, 4294901760
        %2625 = vmatprep.subr.mxu0 %v2624
        %v2626 = vand.u32 %v2410, 4294901760
        %v2627 = vsub.f32 %v2410, %v2626
        %v2628 = vand.u32 %v2627, 4294901760
        %v2629 = vsub.f32 %v2627, %v2628
        %v2630 = vand.u32 %v2629, 4294901760
        %2631 = vmatpush1.msra.mxu0 %v2630
        %2632 = vmatprep.subr.mxu0 0.0
        %2633 = vmatpush1.msra.mxu0 0.0
        %2634 = vmatprep.subr.mxu0 0.0
        %2635 = vmatpush1.msra.mxu0 0.0
        %2636 = vmatprep.subr.mxu0 0.0
        %2637 = vmatpush1.msra.mxu0 0.0
        %2638 = vmatprep.subr.mxu0 0.0
        %2639 = vmatpush1.msra.mxu0 0.0
        %2640 = vmatprep.subr.mxu0 0.0
        %2641 = vmatpush1.msra.mxu0 0.0
        %2642 = vmatprep.subr.mxu0 0.0
        %2643 = vmatpush1.msra.mxu0 0.0
        %2644 = vmatprep.subr.mxu0 0.0
        %2645 = vmatpush1.msra.mxu0 0.0
        %2646 = vmatprep.subr.mxu0 0.0
        %2647 = vmatpush1.msra.mxu0 0.0
        %2648 = vmatprep.subr.mxu0 0.0
        %2649 = vmatpush1.msra.mxu0 0.0
        %2650 = vmatprep.subr.mxu0 0.0
        %2651 = vmatpush1.msra.mxu0 0.0
        %2652 = vmatprep.subr.mxu0 0.0
        %2653 = vmatpush1.msra.mxu0 0.0
        %2654 = vmatprep.subr.mxu0 0.0
        %2655 = vmatpush1.msra.mxu0 0.0
        %2656 = vmatprep.subr.mxu0 0.0
        %2657 = vmatpush1.msra.mxu0 0.0
        %2658 = vmatprep.subr.mxu0 0.0
        %2659 = vmatpush1.msra.mxu0 0.0
        %2660 = vmatprep.subr.mxu0 0.0
        %2661 = vmatpush1.msra.mxu0 0.0
        %2662 = vmatprep.subr.mxu0 0.0
        %2663 = vmatpush1.msra.mxu0 0.0
        %2664 = vmatprep.subr.mxu0 0.0
        %2665 = vmatpush1.msra.mxu0 0.0
        %2666 = vmatprep.subr.mxu0 0.0
        %2667 = vmatpush1.msra.mxu0 0.0
        %2668 = vmatprep.subr.mxu0 0.0
        %2669 = vmatpush1.msra.mxu0 0.0
        %2670 = vmatprep.subr.mxu0 0.0
        %2671 = vmatpush1.msra.mxu0 0.0
        %2672 = vmatprep.subr.mxu0 0.0
        %2673 = vmatpush1.msra.mxu0 0.0
        %2674 = vmatprep.subr.mxu0 0.0
        %2675 = vmatpush1.msra.mxu0 0.0
        %2676 = vmatprep.subr.mxu0 0.0
        %2677 = vmatpush1.msra.mxu0 0.0
        %2678 = vmatprep.mubr.f32.mxu0 0.0
        %v2679 = vand.u32 %v2414, 4294901760
        %2680 = vmatmul.mubr.f32.gmra.mrb[0].mxu0 %v2679
        %v2681 = vpop.f32.mrb[0].mxu0
        %v2682 = vadd.f32 %v2509, %v2681
        %v2683 = vpop.f32.mrb[0].mxu0
        %v2684 = vadd.f32 %v2511, %v2683
        %2685 = vmatprep.mubr.f32.mxu0 0.0
        %v2686 = vand.u32 %v2417, 4294901760
        %2687 = vmatmul.mubr.f32.gmra.mrb[0].mxu0 %v2686
        %v2688 = vpop.f32.mrb[0].mxu0
        %v2689 = vadd.f32 %v2520, %v2688
        %v2690 = vpop.f32.mrb[0].mxu0
        %v2691 = vadd.f32 %v2522, %v2690
        %2692 = vdwg.mxu0
        %v2693 = vand.u32 %v2271, 4294901760
        %v2694 = vsub.f32 %v2271, %v2693
        %2695 = vmatprep.subr.mxu0 %v2694
        %v2696 = vand.u32 %v2270, 4294901760
        %v2697 = vsub.f32 %v2270, %v2696
        %2698 = vmatpush1.msra.mxu0 %v2697
        %v2699 = vand.u32 %v2291, 4294901760
        %v2700 = vsub.f32 %v2291, %v2699
        %2701 = vmatprep.subr.mxu0 %v2700
        %v2702 = vand.u32 %v2290, 4294901760
        %v2703 = vsub.f32 %v2290, %v2702
        %2704 = vmatpush1.msra.mxu0 %v2703
        %v2705 = vand.u32 %v2311, 4294901760
        %v2706 = vsub.f32 %v2311, %v2705
        %2707 = vmatprep.subr.mxu0 %v2706
        %v2708 = vand.u32 %v2310, 4294901760
        %v2709 = vsub.f32 %v2310, %v2708
        %2710 = vmatpush1.msra.mxu0 %v2709
        %v2711 = vand.u32 %v2331, 4294901760
        %v2712 = vsub.f32 %v2331, %v2711
        %2713 = vmatprep.subr.mxu0 %v2712
        %v2714 = vand.u32 %v2330, 4294901760
        %v2715 = vsub.f32 %v2330, %v2714
        %2716 = vmatpush1.msra.mxu0 %v2715
        %v2717 = vand.u32 %v2245, 4294901760
        %v2718 = vsub.f32 %v2245, %v2717
        %2719 = vmatprep.subr.mxu0 %v2718
        %v2720 = vand.u32 %v2244, 4294901760
        %v2721 = vsub.f32 %v2244, %v2720
        %2722 = vmatpush1.msra.mxu0 %v2721
        %v2723 = vand.u32 %v2351, 4294901760
        %v2724 = vsub.f32 %v2351, %v2723
        %2725 = vmatprep.subr.mxu0 %v2724
        %v2726 = vand.u32 %v2350, 4294901760
        %v2727 = vsub.f32 %v2350, %v2726
        %2728 = vmatpush1.msra.mxu0 %v2727
        %v2729 = vand.u32 %v2371, 4294901760
        %v2730 = vsub.f32 %v2371, %v2729
        %2731 = vmatprep.subr.mxu0 %v2730
        %v2732 = vand.u32 %v2370, 4294901760
        %v2733 = vsub.f32 %v2370, %v2732
        %2734 = vmatpush1.msra.mxu0 %v2733
        %v2735 = vand.u32 %v2391, 4294901760
        %v2736 = vsub.f32 %v2391, %v2735
        %2737 = vmatprep.subr.mxu0 %v2736
        %v2738 = vand.u32 %v2390, 4294901760
        %v2739 = vsub.f32 %v2390, %v2738
        %2740 = vmatpush1.msra.mxu0 %v2739
        %v2741 = vand.u32 %v2411, 4294901760
        %v2742 = vsub.f32 %v2411, %v2741
        %2743 = vmatprep.subr.mxu0 %v2742
        %v2744 = vand.u32 %v2410, 4294901760
        %v2745 = vsub.f32 %v2410, %v2744
        %2746 = vmatpush1.msra.mxu0 %v2745
        %2747 = vmatprep.subr.mxu0 0.0
        %2748 = vmatpush1.msra.mxu0 0.0
        %2749 = vmatprep.subr.mxu0 0.0
        %2750 = vmatpush1.msra.mxu0 0.0
        %2751 = vmatprep.subr.mxu0 0.0
        %2752 = vmatpush1.msra.mxu0 0.0
        %2753 = vmatprep.subr.mxu0 0.0
        %2754 = vmatpush1.msra.mxu0 0.0
        %2755 = vmatprep.subr.mxu0 0.0
        %2756 = vmatpush1.msra.mxu0 0.0
        %2757 = vmatprep.subr.mxu0 0.0
        %2758 = vmatpush1.msra.mxu0 0.0
        %2759 = vmatprep.subr.mxu0 0.0
        %2760 = vmatpush1.msra.mxu0 0.0
        %2761 = vmatprep.subr.mxu0 0.0
        %2762 = vmatpush1.msra.mxu0 0.0
        %2763 = vmatprep.subr.mxu0 0.0
        %2764 = vmatpush1.msra.mxu0 0.0
        %2765 = vmatprep.subr.mxu0 0.0
        %2766 = vmatpush1.msra.mxu0 0.0
        %2767 = vmatprep.subr.mxu0 0.0
        %2768 = vmatpush1.msra.mxu0 0.0
        %2769 = vmatprep.subr.mxu0 0.0
        %2770 = vmatpush1.msra.mxu0 0.0
        %2771 = vmatprep.subr.mxu0 0.0
        %2772 = vmatpush1.msra.mxu0 0.0
        %2773 = vmatprep.subr.mxu0 0.0
        %2774 = vmatpush1.msra.mxu0 0.0
        %2775 = vmatprep.subr.mxu0 0.0
        %2776 = vmatpush1.msra.mxu0 0.0
        %2777 = vmatprep.subr.mxu0 0.0
        %2778 = vmatpush1.msra.mxu0 0.0
        %2779 = vmatprep.subr.mxu0 0.0
        %2780 = vmatpush1.msra.mxu0 0.0
        %2781 = vmatprep.subr.mxu0 0.0
        %2782 = vmatpush1.msra.mxu0 0.0
        %2783 = vmatprep.subr.mxu0 0.0
        %2784 = vmatpush1.msra.mxu0 0.0
        %2785 = vmatprep.subr.mxu0 0.0
        %2786 = vmatpush1.msra.mxu0 0.0
        %2787 = vmatprep.subr.mxu0 0.0
        %2788 = vmatpush1.msra.mxu0 0.0
        %2789 = vmatprep.subr.mxu0 0.0
        %2790 = vmatpush1.msra.mxu0 0.0
        %2791 = vmatprep.subr.mxu0 0.0
        %2792 = vmatpush1.msra.mxu0 0.0
        %2793 = vmatprep.mubr.f32.mxu0 0.0
        %v2794 = vand.u32 %v2414, 4294901760
        %v2795 = vsub.f32 %v2414, %v2794
        %2796 = vmatmul.mubr.f32.gmra.mrb[0].mxu0 %v2795
        %v2797 = vpop.f32.mrb[0].mxu0
        %v2798 = vadd.f32 %v2682, %v2797
        %v2799 = vpop.f32.mrb[0].mxu0
        %v2800 = vadd.f32 %v2684, %v2799
        %2801 = vmatprep.mubr.f32.mxu0 0.0
        %v2802 = vand.u32 %v2417, 4294901760
        %v2803 = vsub.f32 %v2417, %v2802
        %2804 = vmatmul.mubr.f32.gmra.mrb[0].mxu0 %v2803
        %v2805 = vpop.f32.mrb[0].mxu0
        %v2806 = vadd.f32 %v2689, %v2805
        %v2807 = vpop.f32.mrb[0].mxu0
        %v2808 = vadd.f32 %v2691, %v2807
        %2809 = vdwg.mxu0
        %v2810 = vand.u32 %v2271, 4294901760
        %2811 = vmatprep.subr.mxu0 %v2810
        %v2812 = vand.u32 %v2270, 4294901760
        %2813 = vmatpush1.msra.mxu0 %v2812
        %v2814 = vand.u32 %v2291, 4294901760
        %2815 = vmatprep.subr.mxu0 %v2814
        %v2816 = vand.u32 %v2290, 4294901760
        %2817 = vmatpush1.msra.mxu0 %v2816
        %v2818 = vand.u32 %v2311, 4294901760
        %2819 = vmatprep.subr.mxu0 %v2818
        %v2820 = vand.u32 %v2310, 4294901760
        %2821 = vmatpush1.msra.mxu0 %v2820
        %v2822 = vand.u32 %v2331, 4294901760
        %2823 = vmatprep.subr.mxu0 %v2822
        %v2824 = vand.u32 %v2330, 4294901760
        %2825 = vmatpush1.msra.mxu0 %v2824
        %v2826 = vand.u32 %v2245, 4294901760
        %2827 = vmatprep.subr.mxu0 %v2826
        %v2828 = vand.u32 %v2244, 4294901760
        %2829 = vmatpush1.msra.mxu0 %v2828
        %v2830 = vand.u32 %v2351, 4294901760
        %2831 = vmatprep.subr.mxu0 %v2830
        %v2832 = vand.u32 %v2350, 4294901760
        %2833 = vmatpush1.msra.mxu0 %v2832
        %v2834 = vand.u32 %v2371, 4294901760
        %2835 = vmatprep.subr.mxu0 %v2834
        %v2836 = vand.u32 %v2370, 4294901760
        %2837 = vmatpush1.msra.mxu0 %v2836
        %v2838 = vand.u32 %v2391, 4294901760
        %2839 = vmatprep.subr.mxu0 %v2838
        %v2840 = vand.u32 %v2390, 4294901760
        %2841 = vmatpush1.msra.mxu0 %v2840
        %v2842 = vand.u32 %v2411, 4294901760
        %2843 = vmatprep.subr.mxu0 %v2842
        %v2844 = vand.u32 %v2410, 4294901760
        %2845 = vmatpush1.msra.mxu0 %v2844
        %2846 = vmatprep.subr.mxu0 0.0
        %2847 = vmatpush1.msra.mxu0 0.0
        %2848 = vmatprep.subr.mxu0 0.0
        %2849 = vmatpush1.msra.mxu0 0.0
        %2850 = vmatprep.subr.mxu0 0.0
        %2851 = vmatpush1.msra.mxu0 0.0
        %2852 = vmatprep.subr.mxu0 0.0
        %2853 = vmatpush1.msra.mxu0 0.0
        %2854 = vmatprep.subr.mxu0 0.0
        %2855 = vmatpush1.msra.mxu0 0.0
        %2856 = vmatprep.subr.mxu0 0.0
        %2857 = vmatpush1.msra.mxu0 0.0
        %2858 = vmatprep.subr.mxu0 0.0
        %2859 = vmatpush1.msra.mxu0 0.0
        %2860 = vmatprep.subr.mxu0 0.0
        %2861 = vmatpush1.msra.mxu0 0.0
        %2862 = vmatprep.subr.mxu0 0.0
        %2863 = vmatpush1.msra.mxu0 0.0
        %2864 = vmatprep.subr.mxu0 0.0
        %2865 = vmatpush1.msra.mxu0 0.0
        %2866 = vmatprep.subr.mxu0 0.0
        %2867 = vmatpush1.msra.mxu0 0.0
        %2868 = vmatprep.subr.mxu0 0.0
        %2869 = vmatpush1.msra.mxu0 0.0
        %2870 = vmatprep.subr.mxu0 0.0
        %2871 = vmatpush1.msra.mxu0 0.0
        %2872 = vmatprep.subr.mxu0 0.0
        %2873 = vmatpush1.msra.mxu0 0.0
        %2874 = vmatprep.subr.mxu0 0.0
        %2875 = vmatpush1.msra.mxu0 0.0
        %2876 = vmatprep.subr.mxu0 0.0
        %2877 = vmatpush1.msra.mxu0 0.0
        %2878 = vmatprep.subr.mxu0 0.0
        %2879 = vmatpush1.msra.mxu0 0.0
        %2880 = vmatprep.subr.mxu0 0.0
        %2881 = vmatpush1.msra.mxu0 0.0
        %2882 = vmatprep.subr.mxu0 0.0
        %2883 = vmatpush1.msra.mxu0 0.0
        %2884 = vmatprep.subr.mxu0 0.0
        %2885 = vmatpush1.msra.mxu0 0.0
        %2886 = vmatprep.subr.mxu0 0.0
        %2887 = vmatpush1.msra.mxu0 0.0
        %2888 = vmatprep.subr.mxu0 0.0
        %2889 = vmatpush1.msra.mxu0 0.0
        %2890 = vmatprep.subr.mxu0 0.0
        %2891 = vmatpush1.msra.mxu0 0.0
        %2892 = vmatprep.mubr.f32.mxu0 0.0
        %v2893 = vand.u32 %v2414, 4294901760
        %v2894 = vsub.f32 %v2414, %v2893
        %v2895 = vand.u32 %v2894, 4294901760
        %2896 = vmatmul.mubr.f32.gmra.mrb[0].mxu0 %v2895
        %v2897 = vpop.f32.mrb[0].mxu0
        %v2898 = vadd.f32 %v2798, %v2897
        %v2899 = vpop.f32.mrb[0].mxu0
        %v2900 = vadd.f32 %v2800, %v2899
        %2901 = vmatprep.mubr.f32.mxu0 0.0
        %v2902 = vand.u32 %v2417, 4294901760
        %v2903 = vsub.f32 %v2417, %v2902
        %v2904 = vand.u32 %v2903, 4294901760
        %2905 = vmatmul.mubr.f32.gmra.mrb[0].mxu0 %v2904
        %v2906 = vpop.f32.mrb[0].mxu0
        %v2907 = vadd.f32 %v2806, %v2906
        %v2908 = vpop.f32.mrb[0].mxu0
        %v2909 = vadd.f32 %v2808, %v2908
        %2910 = vdwg.mxu0
        %v2911 = vand.u32 %v2271, 4294901760
        %v2912 = vsub.f32 %v2271, %v2911
        %v2913 = vand.u32 %v2912, 4294901760
        %2914 = vmatprep.subr.mxu0 %v2913
        %v2915 = vand.u32 %v2270, 4294901760
        %v2916 = vsub.f32 %v2270, %v2915
        %v2917 = vand.u32 %v2916, 4294901760
        %2918 = vmatpush1.msra.mxu0 %v2917
        %v2919 = vand.u32 %v2291, 4294901760
        %v2920 = vsub.f32 %v2291, %v2919
        %v2921 = vand.u32 %v2920, 4294901760
        %2922 = vmatprep.subr.mxu0 %v2921
        %v2923 = vand.u32 %v2290, 4294901760
        %v2924 = vsub.f32 %v2290, %v2923
        %v2925 = vand.u32 %v2924, 4294901760
        %2926 = vmatpush1.msra.mxu0 %v2925
        %v2927 = vand.u32 %v2311, 4294901760
        %v2928 = vsub.f32 %v2311, %v2927
        %v2929 = vand.u32 %v2928, 4294901760
        %2930 = vmatprep.subr.mxu0 %v2929
        %v2931 = vand.u32 %v2310, 4294901760
        %v2932 = vsub.f32 %v2310, %v2931
        %v2933 = vand.u32 %v2932, 4294901760
        %2934 = vmatpush1.msra.mxu0 %v2933
        %v2935 = vand.u32 %v2331, 4294901760
        %v2936 = vsub.f32 %v2331, %v2935
        %v2937 = vand.u32 %v2936, 4294901760
        %2938 = vmatprep.subr.mxu0 %v2937
        %v2939 = vand.u32 %v2330, 4294901760
        %v2940 = vsub.f32 %v2330, %v2939
        %v2941 = vand.u32 %v2940, 4294901760
        %2942 = vmatpush1.msra.mxu0 %v2941
        %v2943 = vand.u32 %v2245, 4294901760
        %v2944 = vsub.f32 %v2245, %v2943
        %v2945 = vand.u32 %v2944, 4294901760
        %2946 = vmatprep.subr.mxu0 %v2945
        %v2947 = vand.u32 %v2244, 4294901760
        %v2948 = vsub.f32 %v2244, %v2947
        %v2949 = vand.u32 %v2948, 4294901760
        %2950 = vmatpush1.msra.mxu0 %v2949
        %v2951 = vand.u32 %v2351, 4294901760
        %v2952 = vsub.f32 %v2351, %v2951
        %v2953 = vand.u32 %v2952, 4294901760
        %2954 = vmatprep.subr.mxu0 %v2953
        %v2955 = vand.u32 %v2350, 4294901760
        %v2956 = vsub.f32 %v2350, %v2955
        %v2957 = vand.u32 %v2956, 4294901760
        %2958 = vmatpush1.msra.mxu0 %v2957
        %v2959 = vand.u32 %v2371, 4294901760
        %v2960 = vsub.f32 %v2371, %v2959
        %v2961 = vand.u32 %v2960, 4294901760
        %2962 = vmatprep.subr.mxu0 %v2961
        %v2963 = vand.u32 %v2370, 4294901760
        %v2964 = vsub.f32 %v2370, %v2963
        %v2965 = vand.u32 %v2964, 4294901760
        %2966 = vmatpush1.msra.mxu0 %v2965
        %v2967 = vand.u32 %v2391, 4294901760
        %v2968 = vsub.f32 %v2391, %v2967
        %v2969 = vand.u32 %v2968, 4294901760
        %2970 = vmatprep.subr.mxu0 %v2969
        %v2971 = vand.u32 %v2390, 4294901760
        %v2972 = vsub.f32 %v2390, %v2971
        %v2973 = vand.u32 %v2972, 4294901760
        %2974 = vmatpush1.msra.mxu0 %v2973
        %v2975 = vand.u32 %v2411, 4294901760
        %v2976 = vsub.f32 %v2411, %v2975
        %v2977 = vand.u32 %v2976, 4294901760
        %2978 = vmatprep.subr.mxu0 %v2977
        %v2979 = vand.u32 %v2410, 4294901760
        %v2980 = vsub.f32 %v2410, %v2979
        %v2981 = vand.u32 %v2980, 4294901760
        %2982 = vmatpush1.msra.mxu0 %v2981
        %2983 = vmatprep.subr.mxu0 0.0
        %2984 = vmatpush1.msra.mxu0 0.0
        %2985 = vmatprep.subr.mxu0 0.0
        %2986 = vmatpush1.msra.mxu0 0.0
        %2987 = vmatprep.subr.mxu0 0.0
        %2988 = vmatpush1.msra.mxu0 0.0
        %2989 = vmatprep.subr.mxu0 0.0
        %2990 = vmatpush1.msra.mxu0 0.0
        %2991 = vmatprep.subr.mxu0 0.0
        %2992 = vmatpush1.msra.mxu0 0.0
        %2993 = vmatprep.subr.mxu0 0.0
        %2994 = vmatpush1.msra.mxu0 0.0
        %2995 = vmatprep.subr.mxu0 0.0
        %2996 = vmatpush1.msra.mxu0 0.0
        %2997 = vmatprep.subr.mxu0 0.0
        %2998 = vmatpush1.msra.mxu0 0.0
        %2999 = vmatprep.subr.mxu0 0.0
        %3000 = vmatpush1.msra.mxu0 0.0
        %3001 = vmatprep.subr.mxu0 0.0
        %3002 = vmatpush1.msra.mxu0 0.0
        %3003 = vmatprep.subr.mxu0 0.0
        %3004 = vmatpush1.msra.mxu0 0.0
        %3005 = vmatprep.subr.mxu0 0.0
        %3006 = vmatpush1.msra.mxu0 0.0
        %3007 = vmatprep.subr.mxu0 0.0
        %3008 = vmatpush1.msra.mxu0 0.0
        %3009 = vmatprep.subr.mxu0 0.0
        %3010 = vmatpush1.msra.mxu0 0.0
        %3011 = vmatprep.subr.mxu0 0.0
        %3012 = vmatpush1.msra.mxu0 0.0
        %3013 = vmatprep.subr.mxu0 0.0
        %3014 = vmatpush1.msra.mxu0 0.0
        %3015 = vmatprep.subr.mxu0 0.0
        %3016 = vmatpush1.msra.mxu0 0.0
        %3017 = vmatprep.subr.mxu0 0.0
        %3018 = vmatpush1.msra.mxu0 0.0
        %3019 = vmatprep.subr.mxu0 0.0
        %3020 = vmatpush1.msra.mxu0 0.0
        %3021 = vmatprep.subr.mxu0 0.0
        %3022 = vmatpush1.msra.mxu0 0.0
        %3023 = vmatprep.subr.mxu0 0.0
        %3024 = vmatpush1.msra.mxu0 0.0
        %3025 = vmatprep.subr.mxu0 0.0
        %3026 = vmatpush1.msra.mxu0 0.0
        %3027 = vmatprep.subr.mxu0 0.0
        %3028 = vmatpush1.msra.mxu0 0.0
        %3029 = vmatprep.mubr.f32.mxu0 0.0
        %v3030 = vand.u32 %v2414, 4294901760
        %3031 = vmatmul.mubr.f32.gmra.mrb[0].mxu0 %v3030
        %v3032 = vpop.f32.mrb[0].mxu0
        %v3033 = vadd.f32 %v2898, %v3032
        %v3034 = vpop.f32.mrb[0].mxu0
        %v3035 = vadd.f32 %v2900, %v3034
        %3036 = vmatprep.mubr.f32.mxu0 0.0
        %v3037 = vand.u32 %v2417, 4294901760
        %3038 = vmatmul.mubr.f32.gmra.mrb[0].mxu0 %v3037
        %v3039 = vpop.f32.mrb[0].mxu0
        %v3040 = vadd.f32 %v2907, %v3039
        %v3041 = vpop.f32.mrb[0].mxu0
        %v3042 = vadd.f32 %v2909, %v3041
        %3043 = vdwg.mxu0
        %v3044 = vand.u32 %v2271, 4294901760
        %3045 = vmatprep.subr.mxu0 %v3044
        %v3046 = vand.u32 %v2270, 4294901760
        %3047 = vmatpush1.msra.mxu0 %v3046
        %v3048 = vand.u32 %v2291, 4294901760
        %3049 = vmatprep.subr.mxu0 %v3048
        %v3050 = vand.u32 %v2290, 4294901760
        %3051 = vmatpush1.msra.mxu0 %v3050
        %v3052 = vand.u32 %v2311, 4294901760
        %3053 = vmatprep.subr.mxu0 %v3052
        %v3054 = vand.u32 %v2310, 4294901760
        %3055 = vmatpush1.msra.mxu0 %v3054
        %v3056 = vand.u32 %v2331, 4294901760
        %3057 = vmatprep.subr.mxu0 %v3056
        %v3058 = vand.u32 %v2330, 4294901760
        %3059 = vmatpush1.msra.mxu0 %v3058
        %v3060 = vand.u32 %v2245, 4294901760
        %3061 = vmatprep.subr.mxu0 %v3060
        %v3062 = vand.u32 %v2244, 4294901760
        %3063 = vmatpush1.msra.mxu0 %v3062
        %v3064 = vand.u32 %v2351, 4294901760
        %3065 = vmatprep.subr.mxu0 %v3064
        %v3066 = vand.u32 %v2350, 4294901760
        %3067 = vmatpush1.msra.mxu0 %v3066
        %v3068 = vand.u32 %v2371, 4294901760
        %3069 = vmatprep.subr.mxu0 %v3068
        %v3070 = vand.u32 %v2370, 4294901760
        %3071 = vmatpush1.msra.mxu0 %v3070
        %v3072 = vand.u32 %v2391, 4294901760
        %3073 = vmatprep.subr.mxu0 %v3072
        %v3074 = vand.u32 %v2390, 4294901760
        %3075 = vmatpush1.msra.mxu0 %v3074
        %v3076 = vand.u32 %v2411, 4294901760
        %3077 = vmatprep.subr.mxu0 %v3076
        %v3078 = vand.u32 %v2410, 4294901760
        %3079 = vmatpush1.msra.mxu0 %v3078
        %3080 = vmatprep.subr.mxu0 0.0
        %3081 = vmatpush1.msra.mxu0 0.0
        %3082 = vmatprep.subr.mxu0 0.0
        %3083 = vmatpush1.msra.mxu0 0.0
        %3084 = vmatprep.subr.mxu0 0.0
        %3085 = vmatpush1.msra.mxu0 0.0
        %3086 = vmatprep.subr.mxu0 0.0
        %3087 = vmatpush1.msra.mxu0 0.0
        %3088 = vmatprep.subr.mxu0 0.0
        %3089 = vmatpush1.msra.mxu0 0.0
        %3090 = vmatprep.subr.mxu0 0.0
        %3091 = vmatpush1.msra.mxu0 0.0
        %3092 = vmatprep.subr.mxu0 0.0
        %3093 = vmatpush1.msra.mxu0 0.0
        %3094 = vmatprep.subr.mxu0 0.0
        %3095 = vmatpush1.msra.mxu0 0.0
        %3096 = vmatprep.subr.mxu0 0.0
        %3097 = vmatpush1.msra.mxu0 0.0
        %3098 = vmatprep.subr.mxu0 0.0
        %3099 = vmatpush1.msra.mxu0 0.0
        %3100 = vmatprep.subr.mxu0 0.0
        %3101 = vmatpush1.msra.mxu0 0.0
        %3102 = vmatprep.subr.mxu0 0.0
        %3103 = vmatpush1.msra.mxu0 0.0
        %3104 = vmatprep.subr.mxu0 0.0
        %3105 = vmatpush1.msra.mxu0 0.0
        %3106 = vmatprep.subr.mxu0 0.0
        %3107 = vmatpush1.msra.mxu0 0.0
        %3108 = vmatprep.subr.mxu0 0.0
        %3109 = vmatpush1.msra.mxu0 0.0
        %3110 = vmatprep.subr.mxu0 0.0
        %3111 = vmatpush1.msra.mxu0 0.0
        %3112 = vmatprep.subr.mxu0 0.0
        %3113 = vmatpush1.msra.mxu0 0.0
        %3114 = vmatprep.subr.mxu0 0.0
        %3115 = vmatpush1.msra.mxu0 0.0
        %3116 = vmatprep.subr.mxu0 0.0
        %3117 = vmatpush1.msra.mxu0 0.0
        %3118 = vmatprep.subr.mxu0 0.0
        %3119 = vmatpush1.msra.mxu0 0.0
        %3120 = vmatprep.subr.mxu0 0.0
        %3121 = vmatpush1.msra.mxu0 0.0
        %3122 = vmatprep.subr.mxu0 0.0
        %3123 = vmatpush1.msra.mxu0 0.0
        %3124 = vmatprep.subr.mxu0 0.0
        %3125 = vmatpush1.msra.mxu0 0.0
        %3126 = vmatprep.mubr.f32.mxu0 0.0
        %v3127 = vand.u32 %v2414, 4294901760
        %3128 = vmatmul.mubr.f32.gmra.mrb[0].mxu0 %v3127
        %v3129 = vpop.f32.mrb[0].mxu0
        %v3130 = vadd.f32 %v3033, %v3129
        %v3131 = vpop.f32.mrb[0].mxu0
        %v3132 = vadd.f32 %v3035, %v3131
        %3133 = vmatprep.mubr.f32.mxu0 0.0
        %v3134 = vand.u32 %v2417, 4294901760
        %3135 = vmatmul.mubr.f32.gmra.mrb[0].mxu0 %v3134
        %v3136 = vpop.f32.mrb[0].mxu0
        %v3137 = vadd.f32 %v3040, %v3136
        %v3138 = vpop.f32.mrb[0].mxu0
        %v3139 = vadd.f32 %v3042, %v3138
        %3140 = vdwg.mxu0
        %v3141 = vld [vmem:[#allocation3] sm:$0xff]
        %v3142 = vld [vmem:[#allocation3 + $0x8] sm:$0xff]
        %v3143 = vld [vmem:[#allocation3 + $0x10] sm:$0xff]
        %v3144 = vld [vmem:[#allocation3 + $0x18] sm:$0xff]
        %v3145 = vadd.f32 %v3141, %v3130
        %v3146 = vadd.f32 %v3142, %v3132
        %v3147 = vadd.f32 %v3143, %v3137
        %v3148 = vadd.f32 %v3144, %v3139
        %v3149 = vld [vmem:[%s7] sm:$0xff]
        %v3150 = vld [vmem:[%s7 + $0x8] sm:$0xff]
        %v3151 = vld [vmem:[%s7 + $0x10] sm:$0xff]
        %v3152 = vld [vmem:[%s7 + $0x18] sm:$0xff]
        %v3153 = vadd.f32 %v3145, %v3149
        %v3154 = vadd.f32 %v3146, %v3150
        %v3155 = vadd.f32 %v3147, %v3151
        %v3156 = vadd.f32 %v3148, %v3152
        %vm3157 = vcmp.ge.f32.partialorder %v3153, 1.0
        %vm3158 = vcmp.ge.f32.partialorder %v3154, 1.0
        %vm3159 = vcmp.ge.f32.partialorder %v3155, 1.0
        %vm3160 = vcmp.ge.f32.partialorder %v3156, 1.0
        %v3161 = vsel %vm3157, 1, 0
        %v3162 = vsel %vm3158, 1, 0
        %v3163 = vsel %vm3159, 1, 0
        %v3164 = vsel %vm3160, 1, 0
        %v3165 = vcvt.s32.f32 %v3161
        %v3166 = vcvt.s32.f32 %v3162
        %v3167 = vcvt.s32.f32 %v3163
        %v3168 = vcvt.s32.f32 %v3164
        %v3169 = vsel %vm3157, 0.0, %v3153
        %v3170 = vsel %vm3158, 0.0, %v3154
        %v3171 = vsel %vm3159, 0.0, %v3155
        %v3172 = vsel %vm3160, 0.0, %v3156
        %3173 = vst [vmem:[#allocation3] sm:$0xff] %v3169
        %3174 = vst [vmem:[#allocation3 + $0x8] sm:$0xff] %v3170
        %3175 = vst [vmem:[#allocation3 + $0x10] sm:$0xff] %v3171
        %3176 = vst [vmem:[#allocation3 + $0x18] sm:$0xff] %v3172
        %3177 = vst [vmem:[%s407] sm:$0xff] %v3165
        %3178 = vst [vmem:[%s407 + $0x8] sm:$0xff] %v3166
        %3179 = vst [vmem:[%s407 + $0x10] sm:$0xff] %v3167
        %3180 = vst [vmem:[%s407 + $0x18] sm:$0xff] %v3168
        %s3181 = scalar_lea.vmem %s367, 8 [#allocation4]
        %v3182 = vld [vmem:[%s3181] sm:$0xff]
        %v3183 = vld [vmem:[%s2] sm:$0xff]
        %v3184 = vld [vmem:[%s2 + $0x8] sm:$0xff]
        %v3185 = vld [vmem:[%s2 + $0x10] sm:$0xff]
        %v3186 = vld [vmem:[%s2 + $0x18] sm:$0xff]
        %v3187 = vld [vmem:[%s2 + $0x20] sm:$0xff]
        %v3188 = vld [vmem:[%s2 + $0x28] sm:$0xff]
        %v3189 = vld [vmem:[%s2 + $0x30] sm:$0xff]
        %v3190 = vld [vmem:[%s2 + $0x38] sm:$0xff]
        %v3191 = vld [vmem:[%s2 + $0x40] sm:$0xff]
        %v3192 = vld [vmem:[%s2 + $0x48] sm:$0xff]
        %v3193 = vld [vmem:[%s2 + $0x50] sm:$0xff]
        %v3194 = vld [vmem:[%s2 + $0x58] sm:$0xff]
        %v3195 = vld [vmem:[%s2 + $0x60] sm:$0xff]
        %v3196 = vld [vmem:[%s2 + $0x68] sm:$0xff]
        %v3198 = vsel %vm438, %v3182, 0
        %v3200 = vand.u32 %v3184, 4294901760
        %3201 = vmatprep.subr.mxu0 %v3200
        %v3202 = vand.u32 %v3183, 4294901760
        %3203 = vmatpush1.msra.mxu0 %v3202
        %v3204 = vand.u32 %v3186, 4294901760
        %3205 = vmatprep.subr.mxu0 %v3204
        %v3206 = vand.u32 %v3185, 4294901760
        %3207 = vmatpush1.msra.mxu0 %v3206
        %v3208 = vand.u32 %v3188, 4294901760
        %3209 = vmatprep.subr.mxu0 %v3208
        %v3210 = vand.u32 %v3187, 4294901760
        %3211 = vmatpush1.msra.mxu0 %v3210
        %v3212 = vand.u32 %v3190, 4294901760
        %3213 = vmatprep.subr.mxu0 %v3212
        %v3214 = vand.u32 %v3189, 4294901760
        %3215 = vmatpush1.msra.mxu0 %v3214
        %v3216 = vand.u32 %v3192, 4294901760
        %3217 = vmatprep.subr.mxu0 %v3216
        %v3218 = vand.u32 %v3191, 4294901760
        %3219 = vmatpush1.msra.mxu0 %v3218
        %v3220 = vand.u32 %v3194, 4294901760
        %3221 = vmatprep.subr.mxu0 %v3220
        %v3222 = vand.u32 %v3193, 4294901760
        %3223 = vmatpush1.msra.mxu0 %v3222
        %v3224 = vand.u32 %v3196, 4294901760
        %3225 = vmatprep.subr.mxu0 %v3224
        %v3226 = vand.u32 %v3195, 4294901760
        %3227 = vmatpush1.msra.mxu0 %v3226
        %3228 = vmatprep.subr.mxu0 0.0
        %3229 = vmatpush1.msra.mxu0 0.0
        %3230 = vmatprep.subr.mxu0 0.0
        %3231 = vmatpush1.msra.mxu0 0.0
        %3232 = vmatprep.subr.mxu0 0.0
        %3233 = vmatpush1.msra.mxu0 0.0
        %3234 = vmatprep.subr.mxu0 0.0
        %3235 = vmatpush1.msra.mxu0 0.0
        %3236 = vmatprep.subr.mxu0 0.0
        %3237 = vmatpush1.msra.mxu0 0.0
        %3238 = vmatprep.subr.mxu0 0.0
        %3239 = vmatpush1.msra.mxu0 0.0
        %3240 = vmatprep.subr.mxu0 0.0
        %3241 = vmatpush1.msra.mxu0 0.0
        %3242 = vmatprep.subr.mxu0 0.0
        %3243 = vmatpush1.msra.mxu0 0.0
        %3244 = vmatprep.subr.mxu0 0.0
        %3245 = vmatpush1.msra.mxu0 0.0
        %3246 = vmatprep.subr.mxu0 0.0
        %3247 = vmatpush1.msra.mxu0 0.0
        %3248 = vmatprep.subr.mxu0 0.0
        %3249 = vmatpush1.msra.mxu0 0.0
        %3250 = vmatprep.subr.mxu0 0.0
        %3251 = vmatpush1.msra.mxu0 0.0
        %3252 = vmatprep.subr.mxu0 0.0
        %3253 = vmatpush1.msra.mxu0 0.0
        %3254 = vmatprep.subr.mxu0 0.0
        %3255 = vmatpush1.msra.mxu0 0.0
        %3256 = vmatprep.subr.mxu0 0.0
        %3257 = vmatpush1.msra.mxu0 0.0
        %3258 = vmatprep.subr.mxu0 0.0
        %3259 = vmatpush1.msra.mxu0 0.0
        %3260 = vmatprep.subr.mxu0 0.0
        %3261 = vmatpush1.msra.mxu0 0.0
        %3262 = vmatprep.subr.mxu0 0.0
        %3263 = vmatpush1.msra.mxu0 0.0
        %3264 = vmatprep.subr.mxu0 0.0
        %3265 = vmatpush1.msra.mxu0 0.0
        %3266 = vmatprep.subr.mxu0 0.0
        %3267 = vmatpush1.msra.mxu0 0.0
        %3268 = vmatprep.subr.mxu0 0.0
        %3269 = vmatpush1.msra.mxu0 0.0
        %3270 = vmatprep.subr.mxu0 0.0
        %3271 = vmatpush1.msra.mxu0 0.0
        %3272 = vmatprep.subr.mxu0 0.0
        %3273 = vmatpush1.msra.mxu0 0.0
        %3274 = vmatprep.subr.mxu0 0.0
        %3275 = vmatpush1.msra.mxu0 0.0
        %3276 = vmatprep.subr.mxu0 0.0
        %3277 = vmatpush1.msra.mxu0 0.0
        %3278 = vmatprep.mubr.f32.mxu0 0.0
        %v3279 = vand.u32 %v3198, 4294901760
        %v3280 = vsub.f32 %v3198, %v3279
        %v3281 = vand.u32 %v3280, 4294901760
        %v3282 = vsub.f32 %v3280, %v3281
        %v3283 = vand.u32 %v3282, 4294901760
        %3284 = vmatmul.mubr.f32.gmra.mrb[0].mxu0 %v3283
        %v3285 = vpop.f32.mrb[0].mxu0
        %v3286 = vadd.f32 0.0, %v3285
        %v3287 = vpop.f32.mrb[0].mxu0
        %v3288 = vadd.f32 0.0, %v3287
        %3289 = vdwg.mxu0
        %v3290 = vand.u32 %v3184, 4294901760
        %v3291 = vsub.f32 %v3184, %v3290
        %v3292 = vand.u32 %v3291, 4294901760
        %v3293 = vsub.f32 %v3291, %v3292
        %v3294 = vand.u32 %v3293, 4294901760
        %3295 = vmatprep.subr.mxu0 %v3294
        %v3296 = vand.u32 %v3183, 4294901760
        %v3297 = vsub.f32 %v3183, %v3296
        %v3298 = vand.u32 %v3297, 4294901760
        %v3299 = vsub.f32 %v3297, %v3298
        %v3300 = vand.u32 %v3299, 4294901760
        %3301 = vmatpush1.msra.mxu0 %v3300
        %v3302 = vand.u32 %v3186, 4294901760
        %v3303 = vsub.f32 %v3186, %v3302
        %v3304 = vand.u32 %v3303, 4294901760
        %v3305 = vsub.f32 %v3303, %v3304
        %v3306 = vand.u32 %v3305, 4294901760
        %3307 = vmatprep.subr.mxu0 %v3306
        %v3308 = vand.u32 %v3185, 4294901760
        %v3309 = vsub.f32 %v3185, %v3308
        %v3310 = vand.u32 %v3309, 4294901760
        %v3311 = vsub.f32 %v3309, %v3310
        %v3312 = vand.u32 %v3311, 4294901760
        %3313 = vmatpush1.msra.mxu0 %v3312
        %v3314 = vand.u32 %v3188, 4294901760
        %v3315 = vsub.f32 %v3188, %v3314
        %v3316 = vand.u32 %v3315, 4294901760
        %v3317 = vsub.f32 %v3315, %v3316
        %v3318 = vand.u32 %v3317, 4294901760
        %3319 = vmatprep.subr.mxu0 %v3318
        %v3320 = vand.u32 %v3187, 4294901760
        %v3321 = vsub.f32 %v3187, %v3320
        %v3322 = vand.u32 %v3321, 4294901760
        %v3323 = vsub.f32 %v3321, %v3322
        %v3324 = vand.u32 %v3323, 4294901760
        %3325 = vmatpush1.msra.mxu0 %v3324
        %v3326 = vand.u32 %v3190, 4294901760
        %v3327 = vsub.f32 %v3190, %v3326
        %v3328 = vand.u32 %v3327, 4294901760
        %v3329 = vsub.f32 %v3327, %v3328
        %v3330 = vand.u32 %v3329, 4294901760
        %3331 = vmatprep.subr.mxu0 %v3330
        %v3332 = vand.u32 %v3189, 4294901760
        %v3333 = vsub.f32 %v3189, %v3332
        %v3334 = vand.u32 %v3333, 4294901760
        %v3335 = vsub.f32 %v3333, %v3334
        %v3336 = vand.u32 %v3335, 4294901760
        %3337 = vmatpush1.msra.mxu0 %v3336
        %v3338 = vand.u32 %v3192, 4294901760
        %v3339 = vsub.f32 %v3192, %v3338
        %v3340 = vand.u32 %v3339, 4294901760
        %v3341 = vsub.f32 %v3339, %v3340
        %v3342 = vand.u32 %v3341, 4294901760
        %3343 = vmatprep.subr.mxu0 %v3342
        %v3344 = vand.u32 %v3191, 4294901760
        %v3345 = vsub.f32 %v3191, %v3344
        %v3346 = vand.u32 %v3345, 4294901760
        %v3347 = vsub.f32 %v3345, %v3346
        %v3348 = vand.u32 %v3347, 4294901760
        %3349 = vmatpush1.msra.mxu0 %v3348
        %v3350 = vand.u32 %v3194, 4294901760
        %v3351 = vsub.f32 %v3194, %v3350
        %v3352 = vand.u32 %v3351, 4294901760
        %v3353 = vsub.f32 %v3351, %v3352
        %v3354 = vand.u32 %v3353, 4294901760
        %3355 = vmatprep.subr.mxu0 %v3354
        %v3356 = vand.u32 %v3193, 4294901760
        %v3357 = vsub.f32 %v3193, %v3356
        %v3358 = vand.u32 %v3357, 4294901760
        %v3359 = vsub.f32 %v3357, %v3358
        %v3360 = vand.u32 %v3359, 4294901760
        %3361 = vmatpush1.msra.mxu0 %v3360
        %v3362 = vand.u32 %v3196, 4294901760
        %v3363 = vsub.f32 %v3196, %v3362
        %v3364 = vand.u32 %v3363, 4294901760
        %v3365 = vsub.f32 %v3363, %v3364
        %v3366 = vand.u32 %v3365, 4294901760
        %3367 = vmatprep.subr.mxu0 %v3366
        %v3368 = vand.u32 %v3195, 4294901760
        %v3369 = vsub.f32 %v3195, %v3368
        %v3370 = vand.u32 %v3369, 4294901760
        %v3371 = vsub.f32 %v3369, %v3370
        %v3372 = vand.u32 %v3371, 4294901760
        %3373 = vmatpush1.msra.mxu0 %v3372
        %3374 = vmatprep.subr.mxu0 0.0
        %3375 = vmatpush1.msra.mxu0 0.0
        %3376 = vmatprep.subr.mxu0 0.0
        %3377 = vmatpush1.msra.mxu0 0.0
        %3378 = vmatprep.subr.mxu0 0.0
        %3379 = vmatpush1.msra.mxu0 0.0
        %3380 = vmatprep.subr.mxu0 0.0
        %3381 = vmatpush1.msra.mxu0 0.0
        %3382 = vmatprep.subr.mxu0 0.0
        %3383 = vmatpush1.msra.mxu0 0.0
        %3384 = vmatprep.subr.mxu0 0.0
        %3385 = vmatpush1.msra.mxu0 0.0
        %3386 = vmatprep.subr.mxu0 0.0
        %3387 = vmatpush1.msra.mxu0 0.0
        %3388 = vmatprep.subr.mxu0 0.0
        %3389 = vmatpush1.msra.mxu0 0.0
        %3390 = vmatprep.subr.mxu0 0.0
        %3391 = vmatpush1.msra.mxu0 0.0
        %3392 = vmatprep.subr.mxu0 0.0
        %3393 = vmatpush1.msra.mxu0 0.0
        %3394 = vmatprep.subr.mxu0 0.0
        %3395 = vmatpush1.msra.mxu0 0.0
        %3396 = vmatprep.subr.mxu0 0.0
        %3397 = vmatpush1.msra.mxu0 0.0
        %3398 = vmatprep.subr.mxu0 0.0
        %3399 = vmatpush1.msra.mxu0 0.0
        %3400 = vmatprep.subr.mxu0 0.0
        %3401 = vmatpush1.msra.mxu0 0.0
        %3402 = vmatprep.subr.mxu0 0.0
        %3403 = vmatpush1.msra.mxu0 0.0
        %3404 = vmatprep.subr.mxu0 0.0
        %3405 = vmatpush1.msra.mxu0 0.0
        %3406 = vmatprep.subr.mxu0 0.0
        %3407 = vmatpush1.msra.mxu0 0.0
        %3408 = vmatprep.subr.mxu0 0.0
        %3409 = vmatpush1.msra.mxu0 0.0
        %3410 = vmatprep.subr.mxu0 0.0
        %3411 = vmatpush1.msra.mxu0 0.0
        %3412 = vmatprep.subr.mxu0 0.0
        %3413 = vmatpush1.msra.mxu0 0.0
        %3414 = vmatprep.subr.mxu0 0.0
        %3415 = vmatpush1.msra.mxu0 0.0
        %3416 = vmatprep.subr.mxu0 0.0
        %3417 = vmatpush1.msra.mxu0 0.0
        %3418 = vmatprep.subr.mxu0 0.0
        %3419 = vmatpush1.msra.mxu0 0.0
        %3420 = vmatprep.subr.mxu0 0.0
        %3421 = vmatpush1.msra.mxu0 0.0
        %3422 = vmatprep.subr.mxu0 0.0
        %3423 = vmatpush1.msra.mxu0 0.0
        %3424 = vmatprep.mubr.f32.mxu0 0.0
        %v3425 = vand.u32 %v3198, 4294901760
        %3426 = vmatmul.mubr.f32.gmra.mrb[0].mxu0 %v3425
        %v3427 = vpop.f32.mrb[0].mxu0
        %v3428 = vadd.f32 %v3286, %v3427
        %v3429 = vpop.f32.mrb[0].mxu0
        %v3430 = vadd.f32 %v3288, %v3429
        %3431 = vdwg.mxu0
        %v3432 = vand.u32 %v3184, 4294901760
        %v3433 = vsub.f32 %v3184, %v3432
        %3434 = vmatprep.subr.mxu0 %v3433
        %v3435 = vand.u32 %v3183, 4294901760
        %v3436 = vsub.f32 %v3183, %v3435
        %3437 = vmatpush1.msra.mxu0 %v3436
        %v3438 = vand.u32 %v3186, 4294901760
        %v3439 = vsub.f32 %v3186, %v3438
        %3440 = vmatprep.subr.mxu0 %v3439
        %v3441 = vand.u32 %v3185, 4294901760
        %v3442 = vsub.f32 %v3185, %v3441
        %3443 = vmatpush1.msra.mxu0 %v3442
        %v3444 = vand.u32 %v3188, 4294901760
        %v3445 = vsub.f32 %v3188, %v3444
        %3446 = vmatprep.subr.mxu0 %v3445
        %v3447 = vand.u32 %v3187, 4294901760
        %v3448 = vsub.f32 %v3187, %v3447
        %3449 = vmatpush1.msra.mxu0 %v3448
        %v3450 = vand.u32 %v3190, 4294901760
        %v3451 = vsub.f32 %v3190, %v3450
        %3452 = vmatprep.subr.mxu0 %v3451
        %v3453 = vand.u32 %v3189, 4294901760
        %v3454 = vsub.f32 %v3189, %v3453
        %3455 = vmatpush1.msra.mxu0 %v3454
        %v3456 = vand.u32 %v3192, 4294901760
        %v3457 = vsub.f32 %v3192, %v3456
        %3458 = vmatprep.subr.mxu0 %v3457
        %v3459 = vand.u32 %v3191, 4294901760
        %v3460 = vsub.f32 %v3191, %v3459
        %3461 = vmatpush1.msra.mxu0 %v3460
        %v3462 = vand.u32 %v3194, 4294901760
        %v3463 = vsub.f32 %v3194, %v3462
        %3464 = vmatprep.subr.mxu0 %v3463
        %v3465 = vand.u32 %v3193, 4294901760
        %v3466 = vsub.f32 %v3193, %v3465
        %3467 = vmatpush1.msra.mxu0 %v3466
        %v3468 = vand.u32 %v3196, 4294901760
        %v3469 = vsub.f32 %v3196, %v3468
        %3470 = vmatprep.subr.mxu0 %v3469
        %v3471 = vand.u32 %v3195, 4294901760
        %v3472 = vsub.f32 %v3195, %v3471
        %3473 = vmatpush1.msra.mxu0 %v3472
        %3474 = vmatprep.subr.mxu0 0.0
        %3475 = vmatpush1.msra.mxu0 0.0
        %3476 = vmatprep.subr.mxu0 0.0
        %3477 = vmatpush1.msra.mxu0 0.0
        %3478 = vmatprep.subr.mxu0 0.0
        %3479 = vmatpush1.msra.mxu0 0.0
        %3480 = vmatprep.subr.mxu0 0.0
        %3481 = vmatpush1.msra.mxu0 0.0
        %3482 = vmatprep.subr.mxu0 0.0
        %3483 = vmatpush1.msra.mxu0 0.0
        %3484 = vmatprep.subr.mxu0 0.0
        %3485 = vmatpush1.msra.mxu0 0.0
        %3486 = vmatprep.subr.mxu0 0.0
        %3487 = vmatpush1.msra.mxu0 0.0
        %3488 = vmatprep.subr.mxu0 0.0
        %3489 = vmatpush1.msra.mxu0 0.0
        %3490 = vmatprep.subr.mxu0 0.0
        %3491 = vmatpush1.msra.mxu0 0.0
        %3492 = vmatprep.subr.mxu0 0.0
        %3493 = vmatpush1.msra.mxu0 0.0
        %3494 = vmatprep.subr.mxu0 0.0
        %3495 = vmatpush1.msra.mxu0 0.0
        %3496 = vmatprep.subr.mxu0 0.0
        %3497 = vmatpush1.msra.mxu0 0.0
        %3498 = vmatprep.subr.mxu0 0.0
        %3499 = vmatpush1.msra.mxu0 0.0
        %3500 = vmatprep.subr.mxu0 0.0
        %3501 = vmatpush1.msra.mxu0 0.0
        %3502 = vmatprep.subr.mxu0 0.0
        %3503 = vmatpush1.msra.mxu0 0.0
        %3504 = vmatprep.subr.mxu0 0.0
        %3505 = vmatpush1.msra.mxu0 0.0
        %3506 = vmatprep.subr.mxu0 0.0
        %3507 = vmatpush1.msra.mxu0 0.0
        %3508 = vmatprep.subr.mxu0 0.0
        %3509 = vmatpush1.msra.mxu0 0.0
        %3510 = vmatprep.subr.mxu0 0.0
        %3511 = vmatpush1.msra.mxu0 0.0
        %3512 = vmatprep.subr.mxu0 0.0
        %3513 = vmatpush1.msra.mxu0 0.0
        %3514 = vmatprep.subr.mxu0 0.0
        %3515 = vmatpush1.msra.mxu0 0.0
        %3516 = vmatprep.subr.mxu0 0.0
        %3517 = vmatpush1.msra.mxu0 0.0
        %3518 = vmatprep.subr.mxu0 0.0
        %3519 = vmatpush1.msra.mxu0 0.0
        %3520 = vmatprep.subr.mxu0 0.0
        %3521 = vmatpush1.msra.mxu0 0.0
        %3522 = vmatprep.subr.mxu0 0.0
        %3523 = vmatpush1.msra.mxu0 0.0
        %3524 = vmatprep.mubr.f32.mxu0 0.0
        %v3525 = vand.u32 %v3198, 4294901760
        %v3526 = vsub.f32 %v3198, %v3525
        %3527 = vmatmul.mubr.f32.gmra.mrb[0].mxu0 %v3526
        %v3528 = vpop.f32.mrb[0].mxu0
        %v3529 = vadd.f32 %v3428, %v3528
        %v3530 = vpop.f32.mrb[0].mxu0
        %v3531 = vadd.f32 %v3430, %v3530
        %3532 = vdwg.mxu0
        %v3533 = vand.u32 %v3184, 4294901760
        %3534 = vmatprep.subr.mxu0 %v3533
        %v3535 = vand.u32 %v3183, 4294901760
        %3536 = vmatpush1.msra.mxu0 %v3535
        %v3537 = vand.u32 %v3186, 4294901760
        %3538 = vmatprep.subr.mxu0 %v3537
        %v3539 = vand.u32 %v3185, 4294901760
        %3540 = vmatpush1.msra.mxu0 %v3539
        %v3541 = vand.u32 %v3188, 4294901760
        %3542 = vmatprep.subr.mxu0 %v3541
        %v3543 = vand.u32 %v3187, 4294901760
        %3544 = vmatpush1.msra.mxu0 %v3543
        %v3545 = vand.u32 %v3190, 4294901760
        %3546 = vmatprep.subr.mxu0 %v3545
        %v3547 = vand.u32 %v3189, 4294901760
        %3548 = vmatpush1.msra.mxu0 %v3547
        %v3549 = vand.u32 %v3192, 4294901760
        %3550 = vmatprep.subr.mxu0 %v3549
        %v3551 = vand.u32 %v3191, 4294901760
        %3552 = vmatpush1.msra.mxu0 %v3551
        %v3553 = vand.u32 %v3194, 4294901760
        %3554 = vmatprep.subr.mxu0 %v3553
        %v3555 = vand.u32 %v3193, 4294901760
        %3556 = vmatpush1.msra.mxu0 %v3555
        %v3557 = vand.u32 %v3196, 4294901760
        %3558 = vmatprep.subr.mxu0 %v3557
        %v3559 = vand.u32 %v3195, 4294901760
        %3560 = vmatpush1.msra.mxu0 %v3559
        %3561 = vmatprep.subr.mxu0 0.0
        %3562 = vmatpush1.msra.mxu0 0.0
        %3563 = vmatprep.subr.mxu0 0.0
        %3564 = vmatpush1.msra.mxu0 0.0
        %3565 = vmatprep.subr.mxu0 0.0
        %3566 = vmatpush1.msra.mxu0 0.0
        %3567 = vmatprep.subr.mxu0 0.0
        %3568 = vmatpush1.msra.mxu0 0.0
        %3569 = vmatprep.subr.mxu0 0.0
        %3570 = vmatpush1.msra.mxu0 0.0
        %3571 = vmatprep.subr.mxu0 0.0
        %3572 = vmatpush1.msra.mxu0 0.0
        %3573 = vmatprep.subr.mxu0 0.0
        %3574 = vmatpush1.msra.mxu0 0.0
        %3575 = vmatprep.subr.mxu0 0.0
        %3576 = vmatpush1.msra.mxu0 0.0
        %3577 = vmatprep.subr.mxu0 0.0
        %3578 = vmatpush1.msra.mxu0 0.0
        %3579 = vmatprep.subr.mxu0 0.0
        %3580 = vmatpush1.msra.mxu0 0.0
        %3581 = vmatprep.subr.mxu0 0.0
        %3582 = vmatpush1.msra.mxu0 0.0
        %3583 = vmatprep.subr.mxu0 0.0
        %3584 = vmatpush1.msra.mxu0 0.0
        %3585 = vmatprep.subr.mxu0 0.0
        %3586 = vmatpush1.msra.mxu0 0.0
        %3587 = vmatprep.subr.mxu0 0.0
        %3588 = vmatpush1.msra.mxu0 0.0
        %3589 = vmatprep.subr.mxu0 0.0
        %3590 = vmatpush1.msra.mxu0 0.0
        %3591 = vmatprep.subr.mxu0 0.0
        %3592 = vmatpush1.msra.mxu0 0.0
        %3593 = vmatprep.subr.mxu0 0.0
        %3594 = vmatpush1.msra.mxu0 0.0
        %3595 = vmatprep.subr.mxu0 0.0
        %3596 = vmatpush1.msra.mxu0 0.0
        %3597 = vmatprep.subr.mxu0 0.0
        %3598 = vmatpush1.msra.mxu0 0.0
        %3599 = vmatprep.subr.mxu0 0.0
        %3600 = vmatpush1.msra.mxu0 0.0
        %3601 = vmatprep.subr.mxu0 0.0
        %3602 = vmatpush1.msra.mxu0 0.0
        %3603 = vmatprep.subr.mxu0 0.0
        %3604 = vmatpush1.msra.mxu0 0.0
        %3605 = vmatprep.subr.mxu0 0.0
        %3606 = vmatpush1.msra.mxu0 0.0
        %3607 = vmatprep.subr.mxu0 0.0
        %3608 = vmatpush1.msra.mxu0 0.0
        %3609 = vmatprep.subr.mxu0 0.0
        %3610 = vmatpush1.msra.mxu0 0.0
        %3611 = vmatprep.mubr.f32.mxu0 0.0
        %v3612 = vand.u32 %v3198, 4294901760
        %v3613 = vsub.f32 %v3198, %v3612
        %v3614 = vand.u32 %v3613, 4294901760
        %3615 = vmatmul.mubr.f32.gmra.mrb[0].mxu0 %v3614
        %v3616 = vpop.f32.mrb[0].mxu0
        %v3617 = vadd.f32 %v3529, %v3616
        %v3618 = vpop.f32.mrb[0].mxu0
        %v3619 = vadd.f32 %v3531, %v3618
        %3620 = vdwg.mxu0
        %v3621 = vand.u32 %v3184, 4294901760
        %v3622 = vsub.f32 %v3184, %v3621
        %v3623 = vand.u32 %v3622, 4294901760
        %3624 = vmatprep.subr.mxu0 %v3623
        %v3625 = vand.u32 %v3183, 4294901760
        %v3626 = vsub.f32 %v3183, %v3625
        %v3627 = vand.u32 %v3626, 4294901760
        %3628 = vmatpush1.msra.mxu0 %v3627
        %v3629 = vand.u32 %v3186, 4294901760
        %v3630 = vsub.f32 %v3186, %v3629
        %v3631 = vand.u32 %v3630, 4294901760
        %3632 = vmatprep.subr.mxu0 %v3631
        %v3633 = vand.u32 %v3185, 4294901760
        %v3634 = vsub.f32 %v3185, %v3633
        %v3635 = vand.u32 %v3634, 4294901760
        %3636 = vmatpush1.msra.mxu0 %v3635
        %v3637 = vand.u32 %v3188, 4294901760
        %v3638 = vsub.f32 %v3188, %v3637
        %v3639 = vand.u32 %v3638, 4294901760
        %3640 = vmatprep.subr.mxu0 %v3639
        %v3641 = vand.u32 %v3187, 4294901760
        %v3642 = vsub.f32 %v3187, %v3641
        %v3643 = vand.u32 %v3642, 4294901760
        %3644 = vmatpush1.msra.mxu0 %v3643
        %v3645 = vand.u32 %v3190, 4294901760
        %v3646 = vsub.f32 %v3190, %v3645
        %v3647 = vand.u32 %v3646, 4294901760
        %3648 = vmatprep.subr.mxu0 %v3647
        %v3649 = vand.u32 %v3189, 4294901760
        %v3650 = vsub.f32 %v3189, %v3649
        %v3651 = vand.u32 %v3650, 4294901760
        %3652 = vmatpush1.msra.mxu0 %v3651
        %v3653 = vand.u32 %v3192, 4294901760
        %v3654 = vsub.f32 %v3192, %v3653
        %v3655 = vand.u32 %v3654, 4294901760
        %3656 = vmatprep.subr.mxu0 %v3655
        %v3657 = vand.u32 %v3191, 4294901760
        %v3658 = vsub.f32 %v3191, %v3657
        %v3659 = vand.u32 %v3658, 4294901760
        %3660 = vmatpush1.msra.mxu0 %v3659
        %v3661 = vand.u32 %v3194, 4294901760
        %v3662 = vsub.f32 %v3194, %v3661
        %v3663 = vand.u32 %v3662, 4294901760
        %3664 = vmatprep.subr.mxu0 %v3663
        %v3665 = vand.u32 %v3193, 4294901760
        %v3666 = vsub.f32 %v3193, %v3665
        %v3667 = vand.u32 %v3666, 4294901760
        %3668 = vmatpush1.msra.mxu0 %v3667
        %v3669 = vand.u32 %v3196, 4294901760
        %v3670 = vsub.f32 %v3196, %v3669
        %v3671 = vand.u32 %v3670, 4294901760
        %3672 = vmatprep.subr.mxu0 %v3671
        %v3673 = vand.u32 %v3195, 4294901760
        %v3674 = vsub.f32 %v3195, %v3673
        %v3675 = vand.u32 %v3674, 4294901760
        %3676 = vmatpush1.msra.mxu0 %v3675
        %3677 = vmatprep.subr.mxu0 0.0
        %3678 = vmatpush1.msra.mxu0 0.0
        %3679 = vmatprep.subr.mxu0 0.0
        %3680 = vmatpush1.msra.mxu0 0.0
        %3681 = vmatprep.subr.mxu0 0.0
        %3682 = vmatpush1.msra.mxu0 0.0
        %3683 = vmatprep.subr.mxu0 0.0
        %3684 = vmatpush1.msra.mxu0 0.0
        %3685 = vmatprep.subr.mxu0 0.0
        %3686 = vmatpush1.msra.mxu0 0.0
        %3687 = vmatprep.subr.mxu0 0.0
        %3688 = vmatpush1.msra.mxu0 0.0
        %3689 = vmatprep.subr.mxu0 0.0
        %3690 = vmatpush1.msra.mxu0 0.0
        %3691 = vmatprep.subr.mxu0 0.0
        %3692 = vmatpush1.msra.mxu0 0.0
        %3693 = vmatprep.subr.mxu0 0.0
        %3694 = vmatpush1.msra.mxu0 0.0
        %3695 = vmatprep.subr.mxu0 0.0
        %3696 = vmatpush1.msra.mxu0 0.0
        %3697 = vmatprep.subr.mxu0 0.0
        %3698 = vmatpush1.msra.mxu0 0.0
        %3699 = vmatprep.subr.mxu0 0.0
        %3700 = vmatpush1.msra.mxu0 0.0
        %3701 = vmatprep.subr.mxu0 0.0
        %3702 = vmatpush1.msra.mxu0 0.0
        %3703 = vmatprep.subr.mxu0 0.0
        %3704 = vmatpush1.msra.mxu0 0.0
        %3705 = vmatprep.subr.mxu0 0.0
        %3706 = vmatpush1.msra.mxu0 0.0
        %3707 = vmatprep.subr.mxu0 0.0
        %3708 = vmatpush1.msra.mxu0 0.0
        %3709 = vmatprep.subr.mxu0 0.0
        %3710 = vmatpush1.msra.mxu0 0.0
        %3711 = vmatprep.subr.mxu0 0.0
        %3712 = vmatpush1.msra.mxu0 0.0
        %3713 = vmatprep.subr.mxu0 0.0
        %3714 = vmatpush1.msra.mxu0 0.0
        %3715 = vmatprep.subr.mxu0 0.0
        %3716 = vmatpush1.msra.mxu0 0.0
        %3717 = vmatprep.subr.mxu0 0.0
        %3718 = vmatpush1.msra.mxu0 0.0
        %3719 = vmatprep.subr.mxu0 0.0
        %3720 = vmatpush1.msra.mxu0 0.0
        %3721 = vmatprep.subr.mxu0 0.0
        %3722 = vmatpush1.msra.mxu0 0.0
        %3723 = vmatprep.subr.mxu0 0.0
        %3724 = vmatpush1.msra.mxu0 0.0
        %3725 = vmatprep.subr.mxu0 0.0
        %3726 = vmatpush1.msra.mxu0 0.0
        %3727 = vmatprep.mubr.f32.mxu0 0.0
        %v3728 = vand.u32 %v3198, 4294901760
        %3729 = vmatmul.mubr.f32.gmra.mrb[0].mxu0 %v3728
        %v3730 = vpop.f32.mrb[0].mxu0
        %v3731 = vadd.f32 %v3617, %v3730
        %v3732 = vpop.f32.mrb[0].mxu0
        %v3733 = vadd.f32 %v3619, %v3732
        %3734 = vdwg.mxu0
        %v3735 = vand.u32 %v3184, 4294901760
        %3736 = vmatprep.subr.mxu0 %v3735
        %v3737 = vand.u32 %v3183, 4294901760
        %3738 = vmatpush1.msra.mxu0 %v3737
        %v3739 = vand.u32 %v3186, 4294901760
        %3740 = vmatprep.subr.mxu0 %v3739
        %v3741 = vand.u32 %v3185, 4294901760
        %3742 = vmatpush1.msra.mxu0 %v3741
        %v3743 = vand.u32 %v3188, 4294901760
        %3744 = vmatprep.subr.mxu0 %v3743
        %v3745 = vand.u32 %v3187, 4294901760
        %3746 = vmatpush1.msra.mxu0 %v3745
        %v3747 = vand.u32 %v3190, 4294901760
        %3748 = vmatprep.subr.mxu0 %v3747
        %v3749 = vand.u32 %v3189, 4294901760
        %3750 = vmatpush1.msra.mxu0 %v3749
        %v3751 = vand.u32 %v3192, 4294901760
        %3752 = vmatprep.subr.mxu0 %v3751
        %v3753 = vand.u32 %v3191, 4294901760
        %3754 = vmatpush1.msra.mxu0 %v3753
        %v3755 = vand.u32 %v3194, 4294901760
        %3756 = vmatprep.subr.mxu0 %v3755
        %v3757 = vand.u32 %v3193, 4294901760
        %3758 = vmatpush1.msra.mxu0 %v3757
        %v3759 = vand.u32 %v3196, 4294901760
        %3760 = vmatprep.subr.mxu0 %v3759
        %v3761 = vand.u32 %v3195, 4294901760
        %3762 = vmatpush1.msra.mxu0 %v3761
        %3763 = vmatprep.subr.mxu0 0.0
        %3764 = vmatpush1.msra.mxu0 0.0
        %3765 = vmatprep.subr.mxu0 0.0
        %3766 = vmatpush1.msra.mxu0 0.0
        %3767 = vmatprep.subr.mxu0 0.0
        %3768 = vmatpush1.msra.mxu0 0.0
        %3769 = vmatprep.subr.mxu0 0.0
        %3770 = vmatpush1.msra.mxu0 0.0
        %3771 = vmatprep.subr.mxu0 0.0
        %3772 = vmatpush1.msra.mxu0 0.0
        %3773 = vmatprep.subr.mxu0 0.0
        %3774 = vmatpush1.msra.mxu0 0.0
        %3775 = vmatprep.subr.mxu0 0.0
        %3776 = vmatpush1.msra.mxu0 0.0
        %3777 = vmatprep.subr.mxu0 0.0
        %3778 = vmatpush1.msra.mxu0 0.0
        %3779 = vmatprep.subr.mxu0 0.0
        %3780 = vmatpush1.msra.mxu0 0.0
        %3781 = vmatprep.subr.mxu0 0.0
        %3782 = vmatpush1.msra.mxu0 0.0
        %3783 = vmatprep.subr.mxu0 0.0
        %3784 = vmatpush1.msra.mxu0 0.0
        %3785 = vmatprep.subr.mxu0 0.0
        %3786 = vmatpush1.msra.mxu0 0.0
        %3787 = vmatprep.subr.mxu0 0.0
        %3788 = vmatpush1.msra.mxu0 0.0
        %3789 = vmatprep.subr.mxu0 0.0
        %3790 = vmatpush1.msra.mxu0 0.0
        %3791 = vmatprep.subr.mxu0 0.0
        %3792 = vmatpush1.msra.mxu0 0.0
        %3793 = vmatprep.subr.mxu0 0.0
        %3794 = vmatpush1.msra.mxu0 0.0
        %3795 = vmatprep.subr.mxu0 0.0
        %3796 = vmatpush1.msra.mxu0 0.0
        %3797 = vmatprep.subr.mxu0 0.0
        %3798 = vmatpush1.msra.mxu0 0.0
        %3799 = vmatprep.subr.mxu0 0.0
        %3800 = vmatpush1.msra.mxu0 0.0
        %3801 = vmatprep.subr.mxu0 0.0
        %3802 = vmatpush1.msra.mxu0 0.0
        %3803 = vmatprep.subr.mxu0 0.0
        %3804 = vmatpush1.msra.mxu0 0.0
        %3805 = vmatprep.subr.mxu0 0.0
        %3806 = vmatpush1.msra.mxu0 0.0
        %3807 = vmatprep.subr.mxu0 0.0
        %3808 = vmatpush1.msra.mxu0 0.0
        %3809 = vmatprep.subr.mxu0 0.0
        %3810 = vmatpush1.msra.mxu0 0.0
        %3811 = vmatprep.subr.mxu0 0.0
        %3812 = vmatpush1.msra.mxu0 0.0
        %3813 = vmatprep.mubr.f32.mxu0 0.0
        %v3814 = vand.u32 %v3198, 4294901760
        %3815 = vmatmul.mubr.f32.gmra.mrb[0].mxu0 %v3814
        %v3816 = vpop.f32.mrb[0].mxu0
        %v3817 = vadd.f32 %v3731, %v3816
        %v3818 = vpop.f32.mrb[0].mxu0
        %v3819 = vadd.f32 %v3733, %v3818
        %3820 = vdwg.mxu0
        %s3821 = scalar_lea.vmem %s374, 16 [#allocation5]
        %v3822 = vld [vmem:[%s3821] sm:$0xff]
        %v3823 = vld [vmem:[%s3821 + $0x8] sm:$0xff]
        %v3824 = vld [vmem:[%s4] sm:$0xff]
        %v3825 = vld [vmem:[%s4 + $0x8] sm:$0xff]
        %3826 = vrot.lane.b32.xlu0 %v3822, 17
        %v3827 = vpop.permute.xlu0 %3826
        %3828 = vrot.lane.b32.xlu0 %v3817, 17
        %v3829 = vpop.permute.xlu0 %3828
        %3830 = vrot.lane.b32.xlu0 %v3823, 17
        %v3831 = vpop.permute.xlu0 %3830
        %3832 = vrot.lane.b32.xlu0 %v3819, 17
        %v3833 = vpop.permute.xlu0 %3832
        %v3834 = vsel %vm1077, %v3827, %v3831
        %v3835 = vsel %vm1077, %v3829, %v3833
        %v3836 = vsel %vm1077, %v3831, %v3827
        %v3837 = vsel %vm1077, %v3833, %v3829
        %v3838 = vld [vmem:[%s3] ss:$8 sm:$0x3]
        %v3840 = vlaneseq
        %v3841 = vshrl.u32 %v3840, 7
        %v3842 = vsub.s32 0, %v3841
        %v3843 = vrot.slane %v3838, %v3842
        %v3844 = vlaneseq
        %v3845 = vshrl.u32 %v3844, 7
        %v3846 = vsub.s32 1, %v3845
        %v3847 = vrot.slane %v3838, %v3846
        %v3850 = vmul.f32 %v3836, %v3843
        %v3851 = vmul.f32 %v3834, %v3847
        %v3852 = vmul.f32 %v3837, %v3843
        %v3853 = vmul.f32 %v3835, %v3847
        %3854 = vrot.lane.b32.xlu0 %v3822, 16
        %v3855 = vpop.permute.xlu0 %3854
        %3856 = vrot.lane.b32.xlu0 %v3817, 16
        %v3857 = vpop.permute.xlu0 %3856
        %3858 = vrot.lane.b32.xlu0 %v3823, 16
        %v3859 = vpop.permute.xlu0 %3858
        %3860 = vrot.lane.b32.xlu0 %v3819, 16
        %v3861 = vpop.permute.xlu0 %3860
        %v3862 = vsel %vm1106, %v3855, %v3859
        %v3863 = vsel %vm1106, %v3857, %v3861
        %v3864 = vsel %vm1106, %v3859, %v3855
        %v3865 = vsel %vm1106, %v3861, %v3857
        %v3866 = vld [vmem:[%s1111] ss:$8 sm:$0x3]
        %v3868 = vlaneseq
        %v3869 = vshrl.u32 %v3868, 7
        %v3870 = vsub.s32 0, %v3869
        %v3871 = vrot.slane %v3866, %v3870
        %v3872 = vlaneseq
        %v3873 = vshrl.u32 %v3872, 7
        %v3874 = vsub.s32 1, %v3873
        %v3875 = vrot.slane %v3866, %v3874
        %v3878 = vmul.f32 %v3864, %v3871
        %v3879 = vmul.f32 %v3862, %v3875
        %v3880 = vmul.f32 %v3865, %v3871
        %v3881 = vmul.f32 %v3863, %v3875
        %3882 = vrot.lane.b32.xlu0 %v3822, 15
        %v3883 = vpop.permute.xlu0 %3882
        %3884 = vrot.lane.b32.xlu0 %v3817, 15
        %v3885 = vpop.permute.xlu0 %3884
        %3886 = vrot.lane.b32.xlu0 %v3823, 15
        %v3887 = vpop.permute.xlu0 %3886
        %3888 = vrot.lane.b32.xlu0 %v3819, 15
        %v3889 = vpop.permute.xlu0 %3888
        %v3890 = vsel %vm1136, %v3883, %v3887
        %v3891 = vsel %vm1136, %v3885, %v3889
        %v3892 = vsel %vm1136, %v3887, %v3883
        %v3893 = vsel %vm1136, %v3889, %v3885
        %v3894 = vld [vmem:[%s1141] ss:$8 sm:$0x3]
        %v3896 = vlaneseq
        %v3897 = vshrl.u32 %v3896, 7
        %v3898 = vsub.s32 0, %v3897
        %v3899 = vrot.slane %v3894, %v3898
        %v3900 = vlaneseq
        %v3901 = vshrl.u32 %v3900, 7
        %v3902 = vsub.s32 1, %v3901
        %v3903 = vrot.slane %v3894, %v3902
        %v3906 = vmul.f32 %v3892, %v3899
        %v3907 = vmul.f32 %v3890, %v3903
        %v3908 = vmul.f32 %v3893, %v3899
        %v3909 = vmul.f32 %v3891, %v3903
        %3910 = vrot.lane.b32.xlu0 %v3822, 1
        %v3911 = vpop.permute.xlu0 %3910
        %3912 = vrot.lane.b32.xlu0 %v3817, 1
        %v3913 = vpop.permute.xlu0 %3912
        %3914 = vrot.lane.b32.xlu0 %v3823, 1
        %v3915 = vpop.permute.xlu0 %3914
        %3916 = vrot.lane.b32.xlu0 %v3819, 1
        %v3917 = vpop.permute.xlu0 %3916
        %v3918 = vsel %vm1166, %v3911, %v3915
        %v3919 = vsel %vm1166, %v3913, %v3917
        %v3920 = vsel %vm1166, %v3915, %v3911
        %v3921 = vsel %vm1166, %v3917, %v3913
        %v3922 = vld [vmem:[%s1171] ss:$8 sm:$0x3]
        %v3924 = vlaneseq
        %v3925 = vshrl.u32 %v3924, 7
        %v3926 = vsub.s32 0, %v3925
        %v3927 = vrot.slane %v3922, %v3926
        %v3928 = vlaneseq
        %v3929 = vshrl.u32 %v3928, 7
        %v3930 = vsub.s32 1, %v3929
        %v3931 = vrot.slane %v3922, %v3930
        %v3934 = vmul.f32 %v3920, %v3927
        %v3935 = vmul.f32 %v3918, %v3931
        %v3936 = vmul.f32 %v3921, %v3927
        %v3937 = vmul.f32 %v3919, %v3931
        %3938 = vrot.lane.b32.xlu0 %v3822, 127
        %v3939 = vpop.permute.xlu0 %3938
        %3940 = vrot.lane.b32.xlu0 %v3817, 127
        %v3941 = vpop.permute.xlu0 %3940
        %3942 = vrot.lane.b32.xlu0 %v3823, 127
        %v3943 = vpop.permute.xlu0 %3942
        %3944 = vrot.lane.b32.xlu0 %v3819, 127
        %v3945 = vpop.permute.xlu0 %3944
        %v3946 = vsel %vm1196, %v3939, %v3943
        %v3947 = vsel %vm1196, %v3941, %v3945
        %v3948 = vsel %vm1196, %v3943, %v3939
        %v3949 = vsel %vm1196, %v3945, %v3941
        %v3950 = vld [vmem:[%s1201] ss:$8 sm:$0x3]
        %v3952 = vlaneseq
        %v3953 = vshrl.u32 %v3952, 7
        %v3954 = vsub.s32 0, %v3953
        %v3955 = vrot.slane %v3950, %v3954
        %v3956 = vlaneseq
        %v3957 = vshrl.u32 %v3956, 7
        %v3958 = vsub.s32 1, %v3957
        %v3959 = vrot.slane %v3950, %v3958
        %v3962 = vmul.f32 %v3946, %v3955
        %v3963 = vmul.f32 %v3948, %v3959
        %v3964 = vmul.f32 %v3947, %v3955
        %v3965 = vmul.f32 %v3949, %v3959
        %3966 = vrot.lane.b32.xlu0 %v3822, 113
        %v3967 = vpop.permute.xlu0 %3966
        %3968 = vrot.lane.b32.xlu0 %v3817, 113
        %v3969 = vpop.permute.xlu0 %3968
        %3970 = vrot.lane.b32.xlu0 %v3823, 113
        %v3971 = vpop.permute.xlu0 %3970
        %3972 = vrot.lane.b32.xlu0 %v3819, 113
        %v3973 = vpop.permute.xlu0 %3972
        %v3974 = vsel %vm1226, %v3967, %v3971
        %v3975 = vsel %vm1226, %v3969, %v3973
        %v3976 = vsel %vm1226, %v3971, %v3967
        %v3977 = vsel %vm1226, %v3973, %v3969
        %v3978 = vld [vmem:[%s1231] ss:$8 sm:$0x3]
        %v3980 = vlaneseq
        %v3981 = vshrl.u32 %v3980, 7
        %v3982 = vsub.s32 0, %v3981
        %v3983 = vrot.slane %v3978, %v3982
        %v3984 = vlaneseq
        %v3985 = vshrl.u32 %v3984, 7
        %v3986 = vsub.s32 1, %v3985
        %v3987 = vrot.slane %v3978, %v3986
        %v3990 = vmul.f32 %v3974, %v3983
        %v3991 = vmul.f32 %v3976, %v3987
        %v3992 = vmul.f32 %v3975, %v3983
        %v3993 = vmul.f32 %v3977, %v3987
        %3994 = vrot.lane.b32.xlu0 %v3822, 112
        %v3995 = vpop.permute.xlu0 %3994
        %3996 = vrot.lane.b32.xlu0 %v3817, 112
        %v3997 = vpop.permute.xlu0 %3996
        %3998 = vrot.lane.b32.xlu0 %v3823, 112
        %v3999 = vpop.permute.xlu0 %3998
        %4000 = vrot.lane.b32.xlu0 %v3819, 112
        %v4001 = vpop.permute.xlu0 %4000
        %v4002 = vsel %vm1256, %v3995, %v3999
        %v4003 = vsel %vm1256, %v3997, %v4001
        %v4004 = vsel %vm1256, %v3999, %v3995
        %v4005 = vsel %vm1256, %v4001, %v3997
        %v4006 = vld [vmem:[%s1261] ss:$8 sm:$0x3]
        %v4008 = vlaneseq
        %v4009 = vshrl.u32 %v4008, 7
        %v4010 = vsub.s32 0, %v4009
        %v4011 = vrot.slane %v4006, %v4010
        %v4012 = vlaneseq
        %v4013 = vshrl.u32 %v4012, 7
        %v4014 = vsub.s32 1, %v4013
        %v4015 = vrot.slane %v4006, %v4014
        %v4018 = vmul.f32 %v4002, %v4011
        %v4019 = vmul.f32 %v4004, %v4015
        %v4020 = vmul.f32 %v4003, %v4011
        %v4021 = vmul.f32 %v4005, %v4015
        %4022 = vrot.lane.b32.xlu0 %v3822, 111
        %v4023 = vpop.permute.xlu0 %4022
        %4024 = vrot.lane.b32.xlu0 %v3817, 111
        %v4025 = vpop.permute.xlu0 %4024
        %4026 = vrot.lane.b32.xlu0 %v3823, 111
        %v4027 = vpop.permute.xlu0 %4026
        %4028 = vrot.lane.b32.xlu0 %v3819, 111
        %v4029 = vpop.permute.xlu0 %4028
        %v4030 = vsel %vm1286, %v4023, %v4027
        %v4031 = vsel %vm1286, %v4025, %v4029
        %v4032 = vsel %vm1286, %v4027, %v4023
        %v4033 = vsel %vm1286, %v4029, %v4025
        %v4034 = vld [vmem:[%s1291] ss:$8 sm:$0x3]
        %v4036 = vlaneseq
        %v4037 = vshrl.u32 %v4036, 7
        %v4038 = vsub.s32 0, %v4037
        %v4039 = vrot.slane %v4034, %v4038
        %v4040 = vlaneseq
        %v4041 = vshrl.u32 %v4040, 7
        %v4042 = vsub.s32 1, %v4041
        %v4043 = vrot.slane %v4034, %v4042
        %v4046 = vmul.f32 %v4030, %v4039
        %v4047 = vmul.f32 %v4032, %v4043
        %v4048 = vmul.f32 %v4031, %v4039
        %v4049 = vmul.f32 %v4033, %v4043
        %v4051 = vsel %vm1308, %v3825, 0
        %v4053 = vand.u32 %v3851, 4294901760
        %4054 = vmatprep.subr.mxu0 %v4053
        %v4055 = vand.u32 %v3850, 4294901760
        %4056 = vmatpush1.msra.mxu0 %v4055
        %v4057 = vand.u32 %v3853, 4294901760
        %4058 = vmatprep.subr.mxu0 %v4057
        %v4059 = vand.u32 %v3852, 4294901760
        %4060 = vmatpush1.msra.mxu0 %v4059
        %v4061 = vand.u32 %v3879, 4294901760
        %4062 = vmatprep.subr.mxu0 %v4061
        %v4063 = vand.u32 %v3878, 4294901760
        %4064 = vmatpush1.msra.mxu0 %v4063
        %v4065 = vand.u32 %v3881, 4294901760
        %4066 = vmatprep.subr.mxu0 %v4065
        %v4067 = vand.u32 %v3880, 4294901760
        %4068 = vmatpush1.msra.mxu0 %v4067
        %v4069 = vand.u32 %v3907, 4294901760
        %4070 = vmatprep.subr.mxu0 %v4069
        %v4071 = vand.u32 %v3906, 4294901760
        %4072 = vmatpush1.msra.mxu0 %v4071
        %v4073 = vand.u32 %v3909, 4294901760
        %4074 = vmatprep.subr.mxu0 %v4073
        %v4075 = vand.u32 %v3908, 4294901760
        %4076 = vmatpush1.msra.mxu0 %v4075
        %v4077 = vand.u32 %v3935, 4294901760
        %4078 = vmatprep.subr.mxu0 %v4077
        %v4079 = vand.u32 %v3934, 4294901760
        %4080 = vmatpush1.msra.mxu0 %v4079
        %v4081 = vand.u32 %v3937, 4294901760
        %4082 = vmatprep.subr.mxu0 %v4081
        %v4083 = vand.u32 %v3936, 4294901760
        %4084 = vmatpush1.msra.mxu0 %v4083
        %v4085 = vand.u32 %v3823, 4294901760
        %4086 = vmatprep.subr.mxu0 %v4085
        %v4087 = vand.u32 %v3822, 4294901760
        %4088 = vmatpush1.msra.mxu0 %v4087
        %v4089 = vand.u32 %v3819, 4294901760
        %4090 = vmatprep.subr.mxu0 %v4089
        %v4091 = vand.u32 %v3817, 4294901760
        %4092 = vmatpush1.msra.mxu0 %v4091
        %v4093 = vand.u32 %v3963, 4294901760
        %4094 = vmatprep.subr.mxu0 %v4093
        %v4095 = vand.u32 %v3962, 4294901760
        %4096 = vmatpush1.msra.mxu0 %v4095
        %v4097 = vand.u32 %v3965, 4294901760
        %4098 = vmatprep.subr.mxu0 %v4097
        %v4099 = vand.u32 %v3964, 4294901760
        %4100 = vmatpush1.msra.mxu0 %v4099
        %v4101 = vand.u32 %v3991, 4294901760
        %4102 = vmatprep.subr.mxu0 %v4101
        %v4103 = vand.u32 %v3990, 4294901760
        %4104 = vmatpush1.msra.mxu0 %v4103
        %v4105 = vand.u32 %v3993, 4294901760
        %4106 = vmatprep.subr.mxu0 %v4105
        %v4107 = vand.u32 %v3992, 4294901760
        %4108 = vmatpush1.msra.mxu0 %v4107
        %v4109 = vand.u32 %v4019, 4294901760
        %4110 = vmatprep.subr.mxu0 %v4109
        %v4111 = vand.u32 %v4018, 4294901760
        %4112 = vmatpush1.msra.mxu0 %v4111
        %v4113 = vand.u32 %v4021, 4294901760
        %4114 = vmatprep.subr.mxu0 %v4113
        %v4115 = vand.u32 %v4020, 4294901760
        %4116 = vmatpush1.msra.mxu0 %v4115
        %v4117 = vand.u32 %v4047, 4294901760
        %4118 = vmatprep.subr.mxu0 %v4117
        %v4119 = vand.u32 %v4046, 4294901760
        %4120 = vmatpush1.msra.mxu0 %v4119
        %v4121 = vand.u32 %v4049, 4294901760
        %4122 = vmatprep.subr.mxu0 %v4121
        %v4123 = vand.u32 %v4048, 4294901760
        %4124 = vmatpush1.msra.mxu0 %v4123
        %4125 = vmatprep.subr.mxu0 0.0
        %4126 = vmatpush1.msra.mxu0 0.0
        %4127 = vmatprep.subr.mxu0 0.0
        %4128 = vmatpush1.msra.mxu0 0.0
        %4129 = vmatprep.subr.mxu0 0.0
        %4130 = vmatpush1.msra.mxu0 0.0
        %4131 = vmatprep.subr.mxu0 0.0
        %4132 = vmatpush1.msra.mxu0 0.0
        %4133 = vmatprep.subr.mxu0 0.0
        %4134 = vmatpush1.msra.mxu0 0.0
        %4135 = vmatprep.subr.mxu0 0.0
        %4136 = vmatpush1.msra.mxu0 0.0
        %4137 = vmatprep.subr.mxu0 0.0
        %4138 = vmatpush1.msra.mxu0 0.0
        %4139 = vmatprep.subr.mxu0 0.0
        %4140 = vmatpush1.msra.mxu0 0.0
        %4141 = vmatprep.subr.mxu0 0.0
        %4142 = vmatpush1.msra.mxu0 0.0
        %4143 = vmatprep.subr.mxu0 0.0
        %4144 = vmatpush1.msra.mxu0 0.0
        %4145 = vmatprep.subr.mxu0 0.0
        %4146 = vmatpush1.msra.mxu0 0.0
        %4147 = vmatprep.subr.mxu0 0.0
        %4148 = vmatpush1.msra.mxu0 0.0
        %4149 = vmatprep.subr.mxu0 0.0
        %4150 = vmatpush1.msra.mxu0 0.0
        %4151 = vmatprep.subr.mxu0 0.0
        %4152 = vmatpush1.msra.mxu0 0.0
        %v4153 = vand.u32 %v4051, 4294901760
        %v4154 = vsub.f32 %v4051, %v4153
        %v4155 = vand.u32 %v4154, 4294901760
        %v4156 = vsub.f32 %v4154, %v4155
        %v4157 = vand.u32 %v4156, 4294901760
        %4158 = vmatprep.mubr.f32.mxu0 %v4157
        %v4159 = vand.u32 %v3824, 4294901760
        %v4160 = vsub.f32 %v3824, %v4159
        %v4161 = vand.u32 %v4160, 4294901760
        %v4162 = vsub.f32 %v4160, %v4161
        %v4163 = vand.u32 %v4162, 4294901760
        %4164 = vmatmul.mubr.f32.gmra.mrb[0].mxu0 %v4163
        %v4165 = vpop.f32.mrb[0].mxu0
        %v4166 = vadd.f32 0.0, %v4165
        %v4167 = vpop.f32.mrb[0].mxu0
        %v4168 = vadd.f32 0.0, %v4167
        %4169 = vdwg.mxu0
        %v4170 = vand.u32 %v3851, 4294901760
        %v4171 = vsub.f32 %v3851, %v4170
        %v4172 = vand.u32 %v4171, 4294901760
        %v4173 = vsub.f32 %v4171, %v4172
        %v4174 = vand.u32 %v4173, 4294901760
        %4175 = vmatprep.subr.mxu0 %v4174
        %v4176 = vand.u32 %v3850, 4294901760
        %v4177 = vsub.f32 %v3850, %v4176
        %v4178 = vand.u32 %v4177, 4294901760
        %v4179 = vsub.f32 %v4177, %v4178
        %v4180 = vand.u32 %v4179, 4294901760
        %4181 = vmatpush1.msra.mxu0 %v4180
        %v4182 = vand.u32 %v3853, 4294901760
        %v4183 = vsub.f32 %v3853, %v4182
        %v4184 = vand.u32 %v4183, 4294901760
        %v4185 = vsub.f32 %v4183, %v4184
        %v4186 = vand.u32 %v4185, 4294901760
        %4187 = vmatprep.subr.mxu0 %v4186
        %v4188 = vand.u32 %v3852, 4294901760
        %v4189 = vsub.f32 %v3852, %v4188
        %v4190 = vand.u32 %v4189, 4294901760
        %v4191 = vsub.f32 %v4189, %v4190
        %v4192 = vand.u32 %v4191, 4294901760
        %4193 = vmatpush1.msra.mxu0 %v4192
        %v4194 = vand.u32 %v3879, 4294901760
        %v4195 = vsub.f32 %v3879, %v4194
        %v4196 = vand.u32 %v4195, 4294901760
        %v4197 = vsub.f32 %v4195, %v4196
        %v4198 = vand.u32 %v4197, 4294901760
        %4199 = vmatprep.subr.mxu0 %v4198
        %v4200 = vand.u32 %v3878, 4294901760
        %v4201 = vsub.f32 %v3878, %v4200
        %v4202 = vand.u32 %v4201, 4294901760
        %v4203 = vsub.f32 %v4201, %v4202
        %v4204 = vand.u32 %v4203, 4294901760
        %4205 = vmatpush1.msra.mxu0 %v4204
        %v4206 = vand.u32 %v3881, 4294901760
        %v4207 = vsub.f32 %v3881, %v4206
        %v4208 = vand.u32 %v4207, 4294901760
        %v4209 = vsub.f32 %v4207, %v4208
        %v4210 = vand.u32 %v4209, 4294901760
        %4211 = vmatprep.subr.mxu0 %v4210
        %v4212 = vand.u32 %v3880, 4294901760
        %v4213 = vsub.f32 %v3880, %v4212
        %v4214 = vand.u32 %v4213, 4294901760
        %v4215 = vsub.f32 %v4213, %v4214
        %v4216 = vand.u32 %v4215, 4294901760
        %4217 = vmatpush1.msra.mxu0 %v4216
        %v4218 = vand.u32 %v3907, 4294901760
        %v4219 = vsub.f32 %v3907, %v4218
        %v4220 = vand.u32 %v4219, 4294901760
        %v4221 = vsub.f32 %v4219, %v4220
        %v4222 = vand.u32 %v4221, 4294901760
        %4223 = vmatprep.subr.mxu0 %v4222
        %v4224 = vand.u32 %v3906, 4294901760
        %v4225 = vsub.f32 %v3906, %v4224
        %v4226 = vand.u32 %v4225, 4294901760
        %v4227 = vsub.f32 %v4225, %v4226
        %v4228 = vand.u32 %v4227, 4294901760
        %4229 = vmatpush1.msra.mxu0 %v4228
        %v4230 = vand.u32 %v3909, 4294901760
        %v4231 = vsub.f32 %v3909, %v4230
        %v4232 = vand.u32 %v4231, 4294901760
        %v4233 = vsub.f32 %v4231, %v4232
        %v4234 = vand.u32 %v4233, 4294901760
        %4235 = vmatprep.subr.mxu0 %v4234
        %v4236 = vand.u32 %v3908, 4294901760
        %v4237 = vsub.f32 %v3908, %v4236
        %v4238 = vand.u32 %v4237, 4294901760
        %v4239 = vsub.f32 %v4237, %v4238
        %v4240 = vand.u32 %v4239, 4294901760
        %4241 = vmatpush1.msra.mxu0 %v4240
        %v4242 = vand.u32 %v3935, 4294901760
        %v4243 = vsub.f32 %v3935, %v4242
        %v4244 = vand.u32 %v4243, 4294901760
        %v4245 = vsub.f32 %v4243, %v4244
        %v4246 = vand.u32 %v4245, 4294901760
        %4247 = vmatprep.subr.mxu0 %v4246
        %v4248 = vand.u32 %v3934, 4294901760
        %v4249 = vsub.f32 %v3934, %v4248
        %v4250 = vand.u32 %v4249, 4294901760
        %v4251 = vsub.f32 %v4249, %v4250
        %v4252 = vand.u32 %v4251, 4294901760
        %4253 = vmatpush1.msra.mxu0 %v4252
        %v4254 = vand.u32 %v3937, 4294901760
        %v4255 = vsub.f32 %v3937, %v4254
        %v4256 = vand.u32 %v4255, 4294901760
        %v4257 = vsub.f32 %v4255, %v4256
        %v4258 = vand.u32 %v4257, 4294901760
        %4259 = vmatprep.subr.mxu0 %v4258
        %v4260 = vand.u32 %v3936, 4294901760
        %v4261 = vsub.f32 %v3936, %v4260
        %v4262 = vand.u32 %v4261, 4294901760
        %v4263 = vsub.f32 %v4261, %v4262
        %v4264 = vand.u32 %v4263, 4294901760
        %4265 = vmatpush1.msra.mxu0 %v4264
        %v4266 = vand.u32 %v3823, 4294901760
        %v4267 = vsub.f32 %v3823, %v4266
        %v4268 = vand.u32 %v4267, 4294901760
        %v4269 = vsub.f32 %v4267, %v4268
        %v4270 = vand.u32 %v4269, 4294901760
        %4271 = vmatprep.subr.mxu0 %v4270
        %v4272 = vand.u32 %v3822, 4294901760
        %v4273 = vsub.f32 %v3822, %v4272
        %v4274 = vand.u32 %v4273, 4294901760
        %v4275 = vsub.f32 %v4273, %v4274
        %v4276 = vand.u32 %v4275, 4294901760
        %4277 = vmatpush1.msra.mxu0 %v4276
        %v4278 = vand.u32 %v3819, 4294901760
        %v4279 = vsub.f32 %v3819, %v4278
        %v4280 = vand.u32 %v4279, 4294901760
        %v4281 = vsub.f32 %v4279, %v4280
        %v4282 = vand.u32 %v4281, 4294901760
        %4283 = vmatprep.subr.mxu0 %v4282
        %v4284 = vand.u32 %v3817, 4294901760
        %v4285 = vsub.f32 %v3817, %v4284
        %v4286 = vand.u32 %v4285, 4294901760
        %v4287 = vsub.f32 %v4285, %v4286
        %v4288 = vand.u32 %v4287, 4294901760
        %4289 = vmatpush1.msra.mxu0 %v4288
        %v4290 = vand.u32 %v3963, 4294901760
        %v4291 = vsub.f32 %v3963, %v4290
        %v4292 = vand.u32 %v4291, 4294901760
        %v4293 = vsub.f32 %v4291, %v4292
        %v4294 = vand.u32 %v4293, 4294901760
        %4295 = vmatprep.subr.mxu0 %v4294
        %v4296 = vand.u32 %v3962, 4294901760
        %v4297 = vsub.f32 %v3962, %v4296
        %v4298 = vand.u32 %v4297, 4294901760
        %v4299 = vsub.f32 %v4297, %v4298
        %v4300 = vand.u32 %v4299, 4294901760
        %4301 = vmatpush1.msra.mxu0 %v4300
        %v4302 = vand.u32 %v3965, 4294901760
        %v4303 = vsub.f32 %v3965, %v4302
        %v4304 = vand.u32 %v4303, 4294901760
        %v4305 = vsub.f32 %v4303, %v4304
        %v4306 = vand.u32 %v4305, 4294901760
        %4307 = vmatprep.subr.mxu0 %v4306
        %v4308 = vand.u32 %v3964, 4294901760
        %v4309 = vsub.f32 %v3964, %v4308
        %v4310 = vand.u32 %v4309, 4294901760
        %v4311 = vsub.f32 %v4309, %v4310
        %v4312 = vand.u32 %v4311, 4294901760
        %4313 = vmatpush1.msra.mxu0 %v4312
        %v4314 = vand.u32 %v3991, 4294901760
        %v4315 = vsub.f32 %v3991, %v4314
        %v4316 = vand.u32 %v4315, 4294901760
        %v4317 = vsub.f32 %v4315, %v4316
        %v4318 = vand.u32 %v4317, 4294901760
        %4319 = vmatprep.subr.mxu0 %v4318
        %v4320 = vand.u32 %v3990, 4294901760
        %v4321 = vsub.f32 %v3990, %v4320
        %v4322 = vand.u32 %v4321, 4294901760
        %v4323 = vsub.f32 %v4321, %v4322
        %v4324 = vand.u32 %v4323, 4294901760
        %4325 = vmatpush1.msra.mxu0 %v4324
        %v4326 = vand.u32 %v3993, 4294901760
        %v4327 = vsub.f32 %v3993, %v4326
        %v4328 = vand.u32 %v4327, 4294901760
        %v4329 = vsub.f32 %v4327, %v4328
        %v4330 = vand.u32 %v4329, 4294901760
        %4331 = vmatprep.subr.mxu0 %v4330
        %v4332 = vand.u32 %v3992, 4294901760
        %v4333 = vsub.f32 %v3992, %v4332
        %v4334 = vand.u32 %v4333, 4294901760
        %v4335 = vsub.f32 %v4333, %v4334
        %v4336 = vand.u32 %v4335, 4294901760
        %4337 = vmatpush1.msra.mxu0 %v4336
        %v4338 = vand.u32 %v4019, 4294901760
        %v4339 = vsub.f32 %v4019, %v4338
        %v4340 = vand.u32 %v4339, 4294901760
        %v4341 = vsub.f32 %v4339, %v4340
        %v4342 = vand.u32 %v4341, 4294901760
        %4343 = vmatprep.subr.mxu0 %v4342
        %v4344 = vand.u32 %v4018, 4294901760
        %v4345 = vsub.f32 %v4018, %v4344
        %v4346 = vand.u32 %v4345, 4294901760
        %v4347 = vsub.f32 %v4345, %v4346
        %v4348 = vand.u32 %v4347, 4294901760
        %4349 = vmatpush1.msra.mxu0 %v4348
        %v4350 = vand.u32 %v4021, 4294901760
        %v4351 = vsub.f32 %v4021, %v4350
        %v4352 = vand.u32 %v4351, 4294901760
        %v4353 = vsub.f32 %v4351, %v4352
        %v4354 = vand.u32 %v4353, 4294901760
        %4355 = vmatprep.subr.mxu0 %v4354
        %v4356 = vand.u32 %v4020, 4294901760
        %v4357 = vsub.f32 %v4020, %v4356
        %v4358 = vand.u32 %v4357, 4294901760
        %v4359 = vsub.f32 %v4357, %v4358
        %v4360 = vand.u32 %v4359, 4294901760
        %4361 = vmatpush1.msra.mxu0 %v4360
        %v4362 = vand.u32 %v4047, 4294901760
        %v4363 = vsub.f32 %v4047, %v4362
        %v4364 = vand.u32 %v4363, 4294901760
        %v4365 = vsub.f32 %v4363, %v4364
        %v4366 = vand.u32 %v4365, 4294901760
        %4367 = vmatprep.subr.mxu0 %v4366
        %v4368 = vand.u32 %v4046, 4294901760
        %v4369 = vsub.f32 %v4046, %v4368
        %v4370 = vand.u32 %v4369, 4294901760
        %v4371 = vsub.f32 %v4369, %v4370
        %v4372 = vand.u32 %v4371, 4294901760
        %4373 = vmatpush1.msra.mxu0 %v4372
        %v4374 = vand.u32 %v4049, 4294901760
        %v4375 = vsub.f32 %v4049, %v4374
        %v4376 = vand.u32 %v4375, 4294901760
        %v4377 = vsub.f32 %v4375, %v4376
        %v4378 = vand.u32 %v4377, 4294901760
        %4379 = vmatprep.subr.mxu0 %v4378
        %v4380 = vand.u32 %v4048, 4294901760
        %v4381 = vsub.f32 %v4048, %v4380
        %v4382 = vand.u32 %v4381, 4294901760
        %v4383 = vsub.f32 %v4381, %v4382
        %v4384 = vand.u32 %v4383, 4294901760
        %4385 = vmatpush1.msra.mxu0 %v4384
        %4386 = vmatprep.subr.mxu0 0.0
        %4387 = vmatpush1.msra.mxu0 0.0
        %4388 = vmatprep.subr.mxu0 0.0
        %4389 = vmatpush1.msra.mxu0 0.0
        %4390 = vmatprep.subr.mxu0 0.0
        %4391 = vmatpush1.msra.mxu0 0.0
        %4392 = vmatprep.subr.mxu0 0.0
        %4393 = vmatpush1.msra.mxu0 0.0
        %4394 = vmatprep.subr.mxu0 0.0
        %4395 = vmatpush1.msra.mxu0 0.0
        %4396 = vmatprep.subr.mxu0 0.0
        %4397 = vmatpush1.msra.mxu0 0.0
        %4398 = vmatprep.subr.mxu0 0.0
        %4399 = vmatpush1.msra.mxu0 0.0
        %4400 = vmatprep.subr.mxu0 0.0
        %4401 = vmatpush1.msra.mxu0 0.0
        %4402 = vmatprep.subr.mxu0 0.0
        %4403 = vmatpush1.msra.mxu0 0.0
        %4404 = vmatprep.subr.mxu0 0.0
        %4405 = vmatpush1.msra.mxu0 0.0
        %4406 = vmatprep.subr.mxu0 0.0
        %4407 = vmatpush1.msra.mxu0 0.0
        %4408 = vmatprep.subr.mxu0 0.0
        %4409 = vmatpush1.msra.mxu0 0.0
        %4410 = vmatprep.subr.mxu0 0.0
        %4411 = vmatpush1.msra.mxu0 0.0
        %4412 = vmatprep.subr.mxu0 0.0
        %4413 = vmatpush1.msra.mxu0 0.0
        %v4414 = vand.u32 %v4051, 4294901760
        %4415 = vmatprep.mubr.f32.mxu0 %v4414
        %v4416 = vand.u32 %v3824, 4294901760
        %4417 = vmatmul.mubr.f32.gmra.mrb[0].mxu0 %v4416
        %v4418 = vpop.f32.mrb[0].mxu0
        %v4419 = vadd.f32 %v4166, %v4418
        %v4420 = vpop.f32.mrb[0].mxu0
        %v4421 = vadd.f32 %v4168, %v4420
        %4422 = vdwg.mxu0
        %v4423 = vand.u32 %v3851, 4294901760
        %v4424 = vsub.f32 %v3851, %v4423
        %4425 = vmatprep.subr.mxu0 %v4424
        %v4426 = vand.u32 %v3850, 4294901760
        %v4427 = vsub.f32 %v3850, %v4426
        %4428 = vmatpush1.msra.mxu0 %v4427
        %v4429 = vand.u32 %v3853, 4294901760
        %v4430 = vsub.f32 %v3853, %v4429
        %4431 = vmatprep.subr.mxu0 %v4430
        %v4432 = vand.u32 %v3852, 4294901760
        %v4433 = vsub.f32 %v3852, %v4432
        %4434 = vmatpush1.msra.mxu0 %v4433
        %v4435 = vand.u32 %v3879, 4294901760
        %v4436 = vsub.f32 %v3879, %v4435
        %4437 = vmatprep.subr.mxu0 %v4436
        %v4438 = vand.u32 %v3878, 4294901760
        %v4439 = vsub.f32 %v3878, %v4438
        %4440 = vmatpush1.msra.mxu0 %v4439
        %v4441 = vand.u32 %v3881, 4294901760
        %v4442 = vsub.f32 %v3881, %v4441
        %4443 = vmatprep.subr.mxu0 %v4442
        %v4444 = vand.u32 %v3880, 4294901760
        %v4445 = vsub.f32 %v3880, %v4444
        %4446 = vmatpush1.msra.mxu0 %v4445
        %v4447 = vand.u32 %v3907, 4294901760
        %v4448 = vsub.f32 %v3907, %v4447
        %4449 = vmatprep.subr.mxu0 %v4448
        %v4450 = vand.u32 %v3906, 4294901760
        %v4451 = vsub.f32 %v3906, %v4450
        %4452 = vmatpush1.msra.mxu0 %v4451
        %v4453 = vand.u32 %v3909, 4294901760
        %v4454 = vsub.f32 %v3909, %v4453
        %4455 = vmatprep.subr.mxu0 %v4454
        %v4456 = vand.u32 %v3908, 4294901760
        %v4457 = vsub.f32 %v3908, %v4456
        %4458 = vmatpush1.msra.mxu0 %v4457
        %v4459 = vand.u32 %v3935, 4294901760
        %v4460 = vsub.f32 %v3935, %v4459
        %4461 = vmatprep.subr.mxu0 %v4460
        %v4462 = vand.u32 %v3934, 4294901760
        %v4463 = vsub.f32 %v3934, %v4462
        %4464 = vmatpush1.msra.mxu0 %v4463
        %v4465 = vand.u32 %v3937, 4294901760
        %v4466 = vsub.f32 %v3937, %v4465
        %4467 = vmatprep.subr.mxu0 %v4466
        %v4468 = vand.u32 %v3936, 4294901760
        %v4469 = vsub.f32 %v3936, %v4468
        %4470 = vmatpush1.msra.mxu0 %v4469
        %v4471 = vand.u32 %v3823, 4294901760
        %v4472 = vsub.f32 %v3823, %v4471
        %4473 = vmatprep.subr.mxu0 %v4472
        %v4474 = vand.u32 %v3822, 4294901760
        %v4475 = vsub.f32 %v3822, %v4474
        %4476 = vmatpush1.msra.mxu0 %v4475
        %v4477 = vand.u32 %v3819, 4294901760
        %v4478 = vsub.f32 %v3819, %v4477
        %4479 = vmatprep.subr.mxu0 %v4478
        %v4480 = vand.u32 %v3817, 4294901760
        %v4481 = vsub.f32 %v3817, %v4480
        %4482 = vmatpush1.msra.mxu0 %v4481
        %v4483 = vand.u32 %v3963, 4294901760
        %v4484 = vsub.f32 %v3963, %v4483
        %4485 = vmatprep.subr.mxu0 %v4484
        %v4486 = vand.u32 %v3962, 4294901760
        %v4487 = vsub.f32 %v3962, %v4486
        %4488 = vmatpush1.msra.mxu0 %v4487
        %v4489 = vand.u32 %v3965, 4294901760
        %v4490 = vsub.f32 %v3965, %v4489
        %4491 = vmatprep.subr.mxu0 %v4490
        %v4492 = vand.u32 %v3964, 4294901760
        %v4493 = vsub.f32 %v3964, %v4492
        %4494 = vmatpush1.msra.mxu0 %v4493
        %v4495 = vand.u32 %v3991, 4294901760
        %v4496 = vsub.f32 %v3991, %v4495
        %4497 = vmatprep.subr.mxu0 %v4496
        %v4498 = vand.u32 %v3990, 4294901760
        %v4499 = vsub.f32 %v3990, %v4498
        %4500 = vmatpush1.msra.mxu0 %v4499
        %v4501 = vand.u32 %v3993, 4294901760
        %v4502 = vsub.f32 %v3993, %v4501
        %4503 = vmatprep.subr.mxu0 %v4502
        %v4504 = vand.u32 %v3992, 4294901760
        %v4505 = vsub.f32 %v3992, %v4504
        %4506 = vmatpush1.msra.mxu0 %v4505
        %v4507 = vand.u32 %v4019, 4294901760
        %v4508 = vsub.f32 %v4019, %v4507
        %4509 = vmatprep.subr.mxu0 %v4508
        %v4510 = vand.u32 %v4018, 4294901760
        %v4511 = vsub.f32 %v4018, %v4510
        %4512 = vmatpush1.msra.mxu0 %v4511
        %v4513 = vand.u32 %v4021, 4294901760
        %v4514 = vsub.f32 %v4021, %v4513
        %4515 = vmatprep.subr.mxu0 %v4514
        %v4516 = vand.u32 %v4020, 4294901760
        %v4517 = vsub.f32 %v4020, %v4516
        %4518 = vmatpush1.msra.mxu0 %v4517
        %v4519 = vand.u32 %v4047, 4294901760
        %v4520 = vsub.f32 %v4047, %v4519
        %4521 = vmatprep.subr.mxu0 %v4520
        %v4522 = vand.u32 %v4046, 4294901760
        %v4523 = vsub.f32 %v4046, %v4522
        %4524 = vmatpush1.msra.mxu0 %v4523
        %v4525 = vand.u32 %v4049, 4294901760
        %v4526 = vsub.f32 %v4049, %v4525
        %4527 = vmatprep.subr.mxu0 %v4526
        %v4528 = vand.u32 %v4048, 4294901760
        %v4529 = vsub.f32 %v4048, %v4528
        %4530 = vmatpush1.msra.mxu0 %v4529
        %4531 = vmatprep.subr.mxu0 0.0
        %4532 = vmatpush1.msra.mxu0 0.0
        %4533 = vmatprep.subr.mxu0 0.0
        %4534 = vmatpush1.msra.mxu0 0.0
        %4535 = vmatprep.subr.mxu0 0.0
        %4536 = vmatpush1.msra.mxu0 0.0
        %4537 = vmatprep.subr.mxu0 0.0
        %4538 = vmatpush1.msra.mxu0 0.0
        %4539 = vmatprep.subr.mxu0 0.0
        %4540 = vmatpush1.msra.mxu0 0.0
        %4541 = vmatprep.subr.mxu0 0.0
        %4542 = vmatpush1.msra.mxu0 0.0
        %4543 = vmatprep.subr.mxu0 0.0
        %4544 = vmatpush1.msra.mxu0 0.0
        %4545 = vmatprep.subr.mxu0 0.0
        %4546 = vmatpush1.msra.mxu0 0.0
        %4547 = vmatprep.subr.mxu0 0.0
        %4548 = vmatpush1.msra.mxu0 0.0
        %4549 = vmatprep.subr.mxu0 0.0
        %4550 = vmatpush1.msra.mxu0 0.0
        %4551 = vmatprep.subr.mxu0 0.0
        %4552 = vmatpush1.msra.mxu0 0.0
        %4553 = vmatprep.subr.mxu0 0.0
        %4554 = vmatpush1.msra.mxu0 0.0
        %4555 = vmatprep.subr.mxu0 0.0
        %4556 = vmatpush1.msra.mxu0 0.0
        %4557 = vmatprep.subr.mxu0 0.0
        %4558 = vmatpush1.msra.mxu0 0.0
        %v4559 = vand.u32 %v4051, 4294901760
        %v4560 = vsub.f32 %v4051, %v4559
        %4561 = vmatprep.mubr.f32.mxu0 %v4560
        %v4562 = vand.u32 %v3824, 4294901760
        %v4563 = vsub.f32 %v3824, %v4562
        %4564 = vmatmul.mubr.f32.gmra.mrb[0].mxu0 %v4563
        %v4565 = vpop.f32.mrb[0].mxu0
        %v4566 = vadd.f32 %v4419, %v4565
        %v4567 = vpop.f32.mrb[0].mxu0
        %v4568 = vadd.f32 %v4421, %v4567
        %4569 = vdwg.mxu0
        %v4570 = vand.u32 %v3851, 4294901760
        %4571 = vmatprep.subr.mxu0 %v4570
        %v4572 = vand.u32 %v3850, 4294901760
        %4573 = vmatpush1.msra.mxu0 %v4572
        %v4574 = vand.u32 %v3853, 4294901760
        %4575 = vmatprep.subr.mxu0 %v4574
        %v4576 = vand.u32 %v3852, 4294901760
        %4577 = vmatpush1.msra.mxu0 %v4576
        %v4578 = vand.u32 %v3879, 4294901760
        %4579 = vmatprep.subr.mxu0 %v4578
        %v4580 = vand.u32 %v3878, 4294901760
        %4581 = vmatpush1.msra.mxu0 %v4580
        %v4582 = vand.u32 %v3881, 4294901760
        %4583 = vmatprep.subr.mxu0 %v4582
        %v4584 = vand.u32 %v3880, 4294901760
        %4585 = vmatpush1.msra.mxu0 %v4584
        %v4586 = vand.u32 %v3907, 4294901760
        %4587 = vmatprep.subr.mxu0 %v4586
        %v4588 = vand.u32 %v3906, 4294901760
        %4589 = vmatpush1.msra.mxu0 %v4588
        %v4590 = vand.u32 %v3909, 4294901760
        %4591 = vmatprep.subr.mxu0 %v4590
        %v4592 = vand.u32 %v3908, 4294901760
        %4593 = vmatpush1.msra.mxu0 %v4592
        %v4594 = vand.u32 %v3935, 4294901760
        %4595 = vmatprep.subr.mxu0 %v4594
        %v4596 = vand.u32 %v3934, 4294901760
        %4597 = vmatpush1.msra.mxu0 %v4596
        %v4598 = vand.u32 %v3937, 4294901760
        %4599 = vmatprep.subr.mxu0 %v4598
        %v4600 = vand.u32 %v3936, 4294901760
        %4601 = vmatpush1.msra.mxu0 %v4600
        %v4602 = vand.u32 %v3823, 4294901760
        %4603 = vmatprep.subr.mxu0 %v4602
        %v4604 = vand.u32 %v3822, 4294901760
        %4605 = vmatpush1.msra.mxu0 %v4604
        %v4606 = vand.u32 %v3819, 4294901760
        %4607 = vmatprep.subr.mxu0 %v4606
        %v4608 = vand.u32 %v3817, 4294901760
        %4609 = vmatpush1.msra.mxu0 %v4608
        %v4610 = vand.u32 %v3963, 4294901760
        %4611 = vmatprep.subr.mxu0 %v4610
        %v4612 = vand.u32 %v3962, 4294901760
        %4613 = vmatpush1.msra.mxu0 %v4612
        %v4614 = vand.u32 %v3965, 4294901760
        %4615 = vmatprep.subr.mxu0 %v4614
        %v4616 = vand.u32 %v3964, 4294901760
        %4617 = vmatpush1.msra.mxu0 %v4616
        %v4618 = vand.u32 %v3991, 4294901760
        %4619 = vmatprep.subr.mxu0 %v4618
        %v4620 = vand.u32 %v3990, 4294901760
        %4621 = vmatpush1.msra.mxu0 %v4620
        %v4622 = vand.u32 %v3993, 4294901760
        %4623 = vmatprep.subr.mxu0 %v4622
        %v4624 = vand.u32 %v3992, 4294901760
        %4625 = vmatpush1.msra.mxu0 %v4624
        %v4626 = vand.u32 %v4019, 4294901760
        %4627 = vmatprep.subr.mxu0 %v4626
        %v4628 = vand.u32 %v4018, 4294901760
        %4629 = vmatpush1.msra.mxu0 %v4628
        %v4630 = vand.u32 %v4021, 4294901760
        %4631 = vmatprep.subr.mxu0 %v4630
        %v4632 = vand.u32 %v4020, 4294901760
        %4633 = vmatpush1.msra.mxu0 %v4632
        %v4634 = vand.u32 %v4047, 4294901760
        %4635 = vmatprep.subr.mxu0 %v4634
        %v4636 = vand.u32 %v4046, 4294901760
        %4637 = vmatpush1.msra.mxu0 %v4636
        %v4638 = vand.u32 %v4049, 4294901760
        %4639 = vmatprep.subr.mxu0 %v4638
        %v4640 = vand.u32 %v4048, 4294901760
        %4641 = vmatpush1.msra.mxu0 %v4640
        %4642 = vmatprep.subr.mxu0 0.0
        %4643 = vmatpush1.msra.mxu0 0.0
        %4644 = vmatprep.subr.mxu0 0.0
        %4645 = vmatpush1.msra.mxu0 0.0
        %4646 = vmatprep.subr.mxu0 0.0
        %4647 = vmatpush1.msra.mxu0 0.0
        %4648 = vmatprep.subr.mxu0 0.0
        %4649 = vmatpush1.msra.mxu0 0.0
        %4650 = vmatprep.subr.mxu0 0.0
        %4651 = vmatpush1.msra.mxu0 0.0
        %4652 = vmatprep.subr.mxu0 0.0
        %4653 = vmatpush1.msra.mxu0 0.0
        %4654 = vmatprep.subr.mxu0 0.0
        %4655 = vmatpush1.msra.mxu0 0.0
        %4656 = vmatprep.subr.mxu0 0.0
        %4657 = vmatpush1.msra.mxu0 0.0
        %4658 = vmatprep.subr.mxu0 0.0
        %4659 = vmatpush1.msra.mxu0 0.0
        %4660 = vmatprep.subr.mxu0 0.0
        %4661 = vmatpush1.msra.mxu0 0.0
        %4662 = vmatprep.subr.mxu0 0.0
        %4663 = vmatpush1.msra.mxu0 0.0
        %4664 = vmatprep.subr.mxu0 0.0
        %4665 = vmatpush1.msra.mxu0 0.0
        %4666 = vmatprep.subr.mxu0 0.0
        %4667 = vmatpush1.msra.mxu0 0.0
        %4668 = vmatprep.subr.mxu0 0.0
        %4669 = vmatpush1.msra.mxu0 0.0
        %v4670 = vand.u32 %v4051, 4294901760
        %v4671 = vsub.f32 %v4051, %v4670
        %v4672 = vand.u32 %v4671, 4294901760
        %4673 = vmatprep.mubr.f32.mxu0 %v4672
        %v4674 = vand.u32 %v3824, 4294901760
        %v4675 = vsub.f32 %v3824, %v4674
        %v4676 = vand.u32 %v4675, 4294901760
        %4677 = vmatmul.mubr.f32.gmra.mrb[0].mxu0 %v4676
        %v4678 = vpop.f32.mrb[0].mxu0
        %v4679 = vadd.f32 %v4566, %v4678
        %v4680 = vpop.f32.mrb[0].mxu0
        %v4681 = vadd.f32 %v4568, %v4680
        %4682 = vdwg.mxu0
        %v4683 = vand.u32 %v3851, 4294901760
        %v4684 = vsub.f32 %v3851, %v4683
        %v4685 = vand.u32 %v4684, 4294901760
        %4686 = vmatprep.subr.mxu0 %v4685
        %v4687 = vand.u32 %v3850, 4294901760
        %v4688 = vsub.f32 %v3850, %v4687
        %v4689 = vand.u32 %v4688, 4294901760
        %4690 = vmatpush1.msra.mxu0 %v4689
        %v4691 = vand.u32 %v3853, 4294901760
        %v4692 = vsub.f32 %v3853, %v4691
        %v4693 = vand.u32 %v4692, 4294901760
        %4694 = vmatprep.subr.mxu0 %v4693
        %v4695 = vand.u32 %v3852, 4294901760
        %v4696 = vsub.f32 %v3852, %v4695
        %v4697 = vand.u32 %v4696, 4294901760
        %4698 = vmatpush1.msra.mxu0 %v4697
        %v4699 = vand.u32 %v3879, 4294901760
        %v4700 = vsub.f32 %v3879, %v4699
        %v4701 = vand.u32 %v4700, 4294901760
        %4702 = vmatprep.subr.mxu0 %v4701
        %v4703 = vand.u32 %v3878, 4294901760
        %v4704 = vsub.f32 %v3878, %v4703
        %v4705 = vand.u32 %v4704, 4294901760
        %4706 = vmatpush1.msra.mxu0 %v4705
        %v4707 = vand.u32 %v3881, 4294901760
        %v4708 = vsub.f32 %v3881, %v4707
        %v4709 = vand.u32 %v4708, 4294901760
        %4710 = vmatprep.subr.mxu0 %v4709
        %v4711 = vand.u32 %v3880, 4294901760
        %v4712 = vsub.f32 %v3880, %v4711
        %v4713 = vand.u32 %v4712, 4294901760
        %4714 = vmatpush1.msra.mxu0 %v4713
        %v4715 = vand.u32 %v3907, 4294901760
        %v4716 = vsub.f32 %v3907, %v4715
        %v4717 = vand.u32 %v4716, 4294901760
        %4718 = vmatprep.subr.mxu0 %v4717
        %v4719 = vand.u32 %v3906, 4294901760
        %v4720 = vsub.f32 %v3906, %v4719
        %v4721 = vand.u32 %v4720, 4294901760
        %4722 = vmatpush1.msra.mxu0 %v4721
        %v4723 = vand.u32 %v3909, 4294901760
        %v4724 = vsub.f32 %v3909, %v4723
        %v4725 = vand.u32 %v4724, 4294901760
        %4726 = vmatprep.subr.mxu0 %v4725
        %v4727 = vand.u32 %v3908, 4294901760
        %v4728 = vsub.f32 %v3908, %v4727
        %v4729 = vand.u32 %v4728, 4294901760
        %4730 = vmatpush1.msra.mxu0 %v4729
        %v4731 = vand.u32 %v3935, 4294901760
        %v4732 = vsub.f32 %v3935, %v4731
        %v4733 = vand.u32 %v4732, 4294901760
        %4734 = vmatprep.subr.mxu0 %v4733
        %v4735 = vand.u32 %v3934, 4294901760
        %v4736 = vsub.f32 %v3934, %v4735
        %v4737 = vand.u32 %v4736, 4294901760
        %4738 = vmatpush1.msra.mxu0 %v4737
        %v4739 = vand.u32 %v3937, 4294901760
        %v4740 = vsub.f32 %v3937, %v4739
        %v4741 = vand.u32 %v4740, 4294901760
        %4742 = vmatprep.subr.mxu0 %v4741
        %v4743 = vand.u32 %v3936, 4294901760
        %v4744 = vsub.f32 %v3936, %v4743
        %v4745 = vand.u32 %v4744, 4294901760
        %4746 = vmatpush1.msra.mxu0 %v4745
        %v4747 = vand.u32 %v3823, 4294901760
        %v4748 = vsub.f32 %v3823, %v4747
        %v4749 = vand.u32 %v4748, 4294901760
        %4750 = vmatprep.subr.mxu0 %v4749
        %v4751 = vand.u32 %v3822, 4294901760
        %v4752 = vsub.f32 %v3822, %v4751
        %v4753 = vand.u32 %v4752, 4294901760
        %4754 = vmatpush1.msra.mxu0 %v4753
        %v4755 = vand.u32 %v3819, 4294901760
        %v4756 = vsub.f32 %v3819, %v4755
        %v4757 = vand.u32 %v4756, 4294901760
        %4758 = vmatprep.subr.mxu0 %v4757
        %v4759 = vand.u32 %v3817, 4294901760
        %v4760 = vsub.f32 %v3817, %v4759
        %v4761 = vand.u32 %v4760, 4294901760
        %4762 = vmatpush1.msra.mxu0 %v4761
        %v4763 = vand.u32 %v3963, 4294901760
        %v4764 = vsub.f32 %v3963, %v4763
        %v4765 = vand.u32 %v4764, 4294901760
        %4766 = vmatprep.subr.mxu0 %v4765
        %v4767 = vand.u32 %v3962, 4294901760
        %v4768 = vsub.f32 %v3962, %v4767
        %v4769 = vand.u32 %v4768, 4294901760
        %4770 = vmatpush1.msra.mxu0 %v4769
        %v4771 = vand.u32 %v3965, 4294901760
        %v4772 = vsub.f32 %v3965, %v4771
        %v4773 = vand.u32 %v4772, 4294901760
        %4774 = vmatprep.subr.mxu0 %v4773
        %v4775 = vand.u32 %v3964, 4294901760
        %v4776 = vsub.f32 %v3964, %v4775
        %v4777 = vand.u32 %v4776, 4294901760
        %4778 = vmatpush1.msra.mxu0 %v4777
        %v4779 = vand.u32 %v3991, 4294901760
        %v4780 = vsub.f32 %v3991, %v4779
        %v4781 = vand.u32 %v4780, 4294901760
        %4782 = vmatprep.subr.mxu0 %v4781
        %v4783 = vand.u32 %v3990, 4294901760
        %v4784 = vsub.f32 %v3990, %v4783
        %v4785 = vand.u32 %v4784, 4294901760
        %4786 = vmatpush1.msra.mxu0 %v4785
        %v4787 = vand.u32 %v3993, 4294901760
        %v4788 = vsub.f32 %v3993, %v4787
        %v4789 = vand.u32 %v4788, 4294901760
        %4790 = vmatprep.subr.mxu0 %v4789
        %v4791 = vand.u32 %v3992, 4294901760
        %v4792 = vsub.f32 %v3992, %v4791
        %v4793 = vand.u32 %v4792, 4294901760
        %4794 = vmatpush1.msra.mxu0 %v4793
        %v4795 = vand.u32 %v4019, 4294901760
        %v4796 = vsub.f32 %v4019, %v4795
        %v4797 = vand.u32 %v4796, 4294901760
        %4798 = vmatprep.subr.mxu0 %v4797
        %v4799 = vand.u32 %v4018, 4294901760
        %v4800 = vsub.f32 %v4018, %v4799
        %v4801 = vand.u32 %v4800, 4294901760
        %4802 = vmatpush1.msra.mxu0 %v4801
        %v4803 = vand.u32 %v4021, 4294901760
        %v4804 = vsub.f32 %v4021, %v4803
        %v4805 = vand.u32 %v4804, 4294901760
        %4806 = vmatprep.subr.mxu0 %v4805
        %v4807 = vand.u32 %v4020, 4294901760
        %v4808 = vsub.f32 %v4020, %v4807
        %v4809 = vand.u32 %v4808, 4294901760
        %4810 = vmatpush1.msra.mxu0 %v4809
        %v4811 = vand.u32 %v4047, 4294901760
        %v4812 = vsub.f32 %v4047, %v4811
        %v4813 = vand.u32 %v4812, 4294901760
        %4814 = vmatprep.subr.mxu0 %v4813
        %v4815 = vand.u32 %v4046, 4294901760
        %v4816 = vsub.f32 %v4046, %v4815
        %v4817 = vand.u32 %v4816, 4294901760
        %4818 = vmatpush1.msra.mxu0 %v4817
        %v4819 = vand.u32 %v4049, 4294901760
        %v4820 = vsub.f32 %v4049, %v4819
        %v4821 = vand.u32 %v4820, 4294901760
        %4822 = vmatprep.subr.mxu0 %v4821
        %v4823 = vand.u32 %v4048, 4294901760
        %v4824 = vsub.f32 %v4048, %v4823
        %v4825 = vand.u32 %v4824, 4294901760
        %4826 = vmatpush1.msra.mxu0 %v4825
        %4827 = vmatprep.subr.mxu0 0.0
        %4828 = vmatpush1.msra.mxu0 0.0
        %4829 = vmatprep.subr.mxu0 0.0
        %4830 = vmatpush1.msra.mxu0 0.0
        %4831 = vmatprep.subr.mxu0 0.0
        %4832 = vmatpush1.msra.mxu0 0.0
        %4833 = vmatprep.subr.mxu0 0.0
        %4834 = vmatpush1.msra.mxu0 0.0
        %4835 = vmatprep.subr.mxu0 0.0
        %4836 = vmatpush1.msra.mxu0 0.0
        %4837 = vmatprep.subr.mxu0 0.0
        %4838 = vmatpush1.msra.mxu0 0.0
        %4839 = vmatprep.subr.mxu0 0.0
        %4840 = vmatpush1.msra.mxu0 0.0
        %4841 = vmatprep.subr.mxu0 0.0
        %4842 = vmatpush1.msra.mxu0 0.0
        %4843 = vmatprep.subr.mxu0 0.0
        %4844 = vmatpush1.msra.mxu0 0.0
        %4845 = vmatprep.subr.mxu0 0.0
        %4846 = vmatpush1.msra.mxu0 0.0
        %4847 = vmatprep.subr.mxu0 0.0
        %4848 = vmatpush1.msra.mxu0 0.0
        %4849 = vmatprep.subr.mxu0 0.0
        %4850 = vmatpush1.msra.mxu0 0.0
        %4851 = vmatprep.subr.mxu0 0.0
        %4852 = vmatpush1.msra.mxu0 0.0
        %4853 = vmatprep.subr.mxu0 0.0
        %4854 = vmatpush1.msra.mxu0 0.0
        %v4855 = vand.u32 %v4051, 4294901760
        %4856 = vmatprep.mubr.f32.mxu0 %v4855
        %v4857 = vand.u32 %v3824, 4294901760
        %4858 = vmatmul.mubr.f32.gmra.mrb[0].mxu0 %v4857
        %v4859 = vpop.f32.mrb[0].mxu0
        %v4860 = vadd.f32 %v4679, %v4859
        %v4861 = vpop.f32.mrb[0].mxu0
        %v4862 = vadd.f32 %v4681, %v4861
        %4863 = vdwg.mxu0
        %v4864 = vand.u32 %v3851, 4294901760
        %4865 = vmatprep.subr.mxu0 %v4864
        %v4866 = vand.u32 %v3850, 4294901760
        %4867 = vmatpush1.msra.mxu0 %v4866
        %v4868 = vand.u32 %v3853, 4294901760
        %4869 = vmatprep.subr.mxu0 %v4868
        %v4870 = vand.u32 %v3852, 4294901760
        %4871 = vmatpush1.msra.mxu0 %v4870
        %v4872 = vand.u32 %v3879, 4294901760
        %4873 = vmatprep.subr.mxu0 %v4872
        %v4874 = vand.u32 %v3878, 4294901760
        %4875 = vmatpush1.msra.mxu0 %v4874
        %v4876 = vand.u32 %v3881, 4294901760
        %4877 = vmatprep.subr.mxu0 %v4876
        %v4878 = vand.u32 %v3880, 4294901760
        %4879 = vmatpush1.msra.mxu0 %v4878
        %v4880 = vand.u32 %v3907, 4294901760
        %4881 = vmatprep.subr.mxu0 %v4880
        %v4882 = vand.u32 %v3906, 4294901760
        %4883 = vmatpush1.msra.mxu0 %v4882
        %v4884 = vand.u32 %v3909, 4294901760
        %4885 = vmatprep.subr.mxu0 %v4884
        %v4886 = vand.u32 %v3908, 4294901760
        %4887 = vmatpush1.msra.mxu0 %v4886
        %v4888 = vand.u32 %v3935, 4294901760
        %4889 = vmatprep.subr.mxu0 %v4888
        %v4890 = vand.u32 %v3934, 4294901760
        %4891 = vmatpush1.msra.mxu0 %v4890
        %v4892 = vand.u32 %v3937, 4294901760
        %4893 = vmatprep.subr.mxu0 %v4892
        %v4894 = vand.u32 %v3936, 4294901760
        %4895 = vmatpush1.msra.mxu0 %v4894
        %v4896 = vand.u32 %v3823, 4294901760
        %4897 = vmatprep.subr.mxu0 %v4896
        %v4898 = vand.u32 %v3822, 4294901760
        %4899 = vmatpush1.msra.mxu0 %v4898
        %v4900 = vand.u32 %v3819, 4294901760
        %4901 = vmatprep.subr.mxu0 %v4900
        %v4902 = vand.u32 %v3817, 4294901760
        %4903 = vmatpush1.msra.mxu0 %v4902
        %v4904 = vand.u32 %v3963, 4294901760
        %4905 = vmatprep.subr.mxu0 %v4904
        %v4906 = vand.u32 %v3962, 4294901760
        %4907 = vmatpush1.msra.mxu0 %v4906
        %v4908 = vand.u32 %v3965, 4294901760
        %4909 = vmatprep.subr.mxu0 %v4908
        %v4910 = vand.u32 %v3964, 4294901760
        %4911 = vmatpush1.msra.mxu0 %v4910
        %v4912 = vand.u32 %v3991, 4294901760
        %4913 = vmatprep.subr.mxu0 %v4912
        %v4914 = vand.u32 %v3990, 4294901760
        %4915 = vmatpush1.msra.mxu0 %v4914
        %v4916 = vand.u32 %v3993, 4294901760
        %4917 = vmatprep.subr.mxu0 %v4916
        %v4918 = vand.u32 %v3992, 4294901760
        %4919 = vmatpush1.msra.mxu0 %v4918
        %v4920 = vand.u32 %v4019, 4294901760
        %4921 = vmatprep.subr.mxu0 %v4920
        %v4922 = vand.u32 %v4018, 4294901760
        %4923 = vmatpush1.msra.mxu0 %v4922
        %v4924 = vand.u32 %v4021, 4294901760
        %4925 = vmatprep.subr.mxu0 %v4924
        %v4926 = vand.u32 %v4020, 4294901760
        %4927 = vmatpush1.msra.mxu0 %v4926
        %v4928 = vand.u32 %v4047, 4294901760
        %4929 = vmatprep.subr.mxu0 %v4928
        %v4930 = vand.u32 %v4046, 4294901760
        %4931 = vmatpush1.msra.mxu0 %v4930
        %v4932 = vand.u32 %v4049, 4294901760
        %4933 = vmatprep.subr.mxu0 %v4932
        %v4934 = vand.u32 %v4048, 4294901760
        %4935 = vmatpush1.msra.mxu0 %v4934
        %4936 = vmatprep.subr.mxu0 0.0
        %4937 = vmatpush1.msra.mxu0 0.0
        %4938 = vmatprep.subr.mxu0 0.0
        %4939 = vmatpush1.msra.mxu0 0.0
        %4940 = vmatprep.subr.mxu0 0.0
        %4941 = vmatpush1.msra.mxu0 0.0
        %4942 = vmatprep.subr.mxu0 0.0
        %4943 = vmatpush1.msra.mxu0 0.0
        %4944 = vmatprep.subr.mxu0 0.0
        %4945 = vmatpush1.msra.mxu0 0.0
        %4946 = vmatprep.subr.mxu0 0.0
        %4947 = vmatpush1.msra.mxu0 0.0
        %4948 = vmatprep.subr.mxu0 0.0
        %4949 = vmatpush1.msra.mxu0 0.0
        %4950 = vmatprep.subr.mxu0 0.0
        %4951 = vmatpush1.msra.mxu0 0.0
        %4952 = vmatprep.subr.mxu0 0.0
        %4953 = vmatpush1.msra.mxu0 0.0
        %4954 = vmatprep.subr.mxu0 0.0
        %4955 = vmatpush1.msra.mxu0 0.0
        %4956 = vmatprep.subr.mxu0 0.0
        %4957 = vmatpush1.msra.mxu0 0.0
        %4958 = vmatprep.subr.mxu0 0.0
        %4959 = vmatpush1.msra.mxu0 0.0
        %4960 = vmatprep.subr.mxu0 0.0
        %4961 = vmatpush1.msra.mxu0 0.0
        %4962 = vmatprep.subr.mxu0 0.0
        %4963 = vmatpush1.msra.mxu0 0.0
        %v4964 = vand.u32 %v4051, 4294901760
        %4965 = vmatprep.mubr.f32.mxu0 %v4964
        %v4966 = vand.u32 %v3824, 4294901760
        %4967 = vmatmul.mubr.f32.gmra.mrb[0].mxu0 %v4966
        %v4968 = vpop.f32.mrb[0].mxu0
        %v4969 = vadd.f32 %v4860, %v4968
        %v4970 = vpop.f32.mrb[0].mxu0
        %v4971 = vadd.f32 %v4862, %v4970
        %4972 = vdwg.mxu0
        %v4973 = vld [vmem:[#allocation2] sm:$0xff]
        %v4974 = vld [vmem:[#allocation2 + $0x8] sm:$0xff]
        %v4975 = vadd.f32 %v4973, %v4969
        %v4976 = vadd.f32 %v4974, %v4971
        %v4977 = vld [vmem:[%s5] sm:$0xff]
        %v4978 = vld [vmem:[%s5 + $0x8] sm:$0xff]
        %v4979 = vadd.f32 %v4975, %v4977
        %v4980 = vadd.f32 %v4976, %v4978
        %vm4981 = vcmp.ge.f32.partialorder %v4979, 1.0
        %vm4982 = vcmp.ge.f32.partialorder %v4980, 1.0
        %v4983 = vsel %vm4981, 1, 0
        %v4984 = vsel %vm4982, 1, 0
        %v4985 = vcvt.s32.f32 %v4983
        %v4986 = vcvt.s32.f32 %v4984
        %v4987 = vsel %vm4981, 0.0, %v4979
        %v4988 = vsel %vm4982, 0.0, %v4980
        %4989 = vst [vmem:[#allocation2] sm:$0xff] %v4987
        %4990 = vst [vmem:[#allocation2 + $0x8] sm:$0xff] %v4988
        %v4991 = vld [vmem:[%s6] sm:$0xff]
        %v4992 = vld [vmem:[%s6 + $0x8] sm:$0xff]
        %4993 = vrot.lane.b32.xlu0 %v4985, 17
        %v4994 = vpop.permute.xlu0 %4993
        %4995 = vrot.lane.b32.xlu0 %v4986, 17
        %v4996 = vpop.permute.xlu0 %4995
        %v4997 = vsel %vm1077, %v4994, %v4996
        %v4998 = vsel %vm1077, %v4996, %v4994
        %v4999 = vld [vmem:[%s3] ss:$8 sm:$0x3]
        %v5001 = vlaneseq
        %v5002 = vshrl.u32 %v5001, 7
        %v5003 = vsub.s32 0, %v5002
        %v5004 = vrot.slane %v4999, %v5003
        %v5005 = vlaneseq
        %v5006 = vshrl.u32 %v5005, 7
        %v5007 = vsub.s32 1, %v5006
        %v5008 = vrot.slane %v4999, %v5007
        %v5011 = vmul.f32 %v4998, %v5004
        %v5012 = vmul.f32 %v4997, %v5008
        %5013 = vrot.lane.b32.xlu0 %v4985, 16
        %v5014 = vpop.permute.xlu0 %5013
        %5015 = vrot.lane.b32.xlu0 %v4986, 16
        %v5016 = vpop.permute.xlu0 %5015
        %v5017 = vsel %vm1106, %v5014, %v5016
        %v5018 = vsel %vm1106, %v5016, %v5014
        %v5019 = vld [vmem:[%s1111] ss:$8 sm:$0x3]
        %v5021 = vlaneseq
        %v5022 = vshrl.u32 %v5021, 7
        %v5023 = vsub.s32 0, %v5022
        %v5024 = vrot.slane %v5019, %v5023
        %v5025 = vlaneseq
        %v5026 = vshrl.u32 %v5025, 7
        %v5027 = vsub.s32 1, %v5026
        %v5028 = vrot.slane %v5019, %v5027
        %v5031 = vmul.f32 %v5018, %v5024
        %v5032 = vmul.f32 %v5017, %v5028
        %5033 = vrot.lane.b32.xlu0 %v4985, 15
        %v5034 = vpop.permute.xlu0 %5033
        %5035 = vrot.lane.b32.xlu0 %v4986, 15
        %v5036 = vpop.permute.xlu0 %5035
        %v5037 = vsel %vm1136, %v5034, %v5036
        %v5038 = vsel %vm1136, %v5036, %v5034
        %v5039 = vld [vmem:[%s1141] ss:$8 sm:$0x3]
        %v5041 = vlaneseq
        %v5042 = vshrl.u32 %v5041, 7
        %v5043 = vsub.s32 0, %v5042
        %v5044 = vrot.slane %v5039, %v5043
        %v5045 = vlaneseq
        %v5046 = vshrl.u32 %v5045, 7
        %v5047 = vsub.s32 1, %v5046
        %v5048 = vrot.slane %v5039, %v5047
        %v5051 = vmul.f32 %v5038, %v5044
        %v5052 = vmul.f32 %v5037, %v5048
        %5053 = vrot.lane.b32.xlu0 %v4985, 1
        %v5054 = vpop.permute.xlu0 %5053
        %5055 = vrot.lane.b32.xlu0 %v4986, 1
        %v5056 = vpop.permute.xlu0 %5055
        %v5057 = vsel %vm1166, %v5054, %v5056
        %v5058 = vsel %vm1166, %v5056, %v5054
        %v5059 = vld [vmem:[%s1171] ss:$8 sm:$0x3]
        %v5061 = vlaneseq
        %v5062 = vshrl.u32 %v5061, 7
        %v5063 = vsub.s32 0, %v5062
        %v5064 = vrot.slane %v5059, %v5063
        %v5065 = vlaneseq
        %v5066 = vshrl.u32 %v5065, 7
        %v5067 = vsub.s32 1, %v5066
        %v5068 = vrot.slane %v5059, %v5067
        %v5071 = vmul.f32 %v5058, %v5064
        %v5072 = vmul.f32 %v5057, %v5068
        %5073 = vrot.lane.b32.xlu0 %v4985, 127
        %v5074 = vpop.permute.xlu0 %5073
        %5075 = vrot.lane.b32.xlu0 %v4986, 127
        %v5076 = vpop.permute.xlu0 %5075
        %v5077 = vsel %vm1196, %v5074, %v5076
        %v5078 = vsel %vm1196, %v5076, %v5074
        %v5079 = vld [vmem:[%s1201] ss:$8 sm:$0x3]
        %v5081 = vlaneseq
        %v5082 = vshrl.u32 %v5081, 7
        %v5083 = vsub.s32 0, %v5082
        %v5084 = vrot.slane %v5079, %v5083
        %v5085 = vlaneseq
        %v5086 = vshrl.u32 %v5085, 7
        %v5087 = vsub.s32 1, %v5086
        %v5088 = vrot.slane %v5079, %v5087
        %v5091 = vmul.f32 %v5077, %v5084
        %v5092 = vmul.f32 %v5078, %v5088
        %5093 = vrot.lane.b32.xlu0 %v4985, 113
        %v5094 = vpop.permute.xlu0 %5093
        %5095 = vrot.lane.b32.xlu0 %v4986, 113
        %v5096 = vpop.permute.xlu0 %5095
        %v5097 = vsel %vm1226, %v5094, %v5096
        %v5098 = vsel %vm1226, %v5096, %v5094
        %v5099 = vld [vmem:[%s1231] ss:$8 sm:$0x3]
        %v5101 = vlaneseq
        %v5102 = vshrl.u32 %v5101, 7
        %v5103 = vsub.s32 0, %v5102
        %v5104 = vrot.slane %v5099, %v5103
        %v5105 = vlaneseq
        %v5106 = vshrl.u32 %v5105, 7
        %v5107 = vsub.s32 1, %v5106
        %v5108 = vrot.slane %v5099, %v5107
        %v5111 = vmul.f32 %v5097, %v5104
        %v5112 = vmul.f32 %v5098, %v5108
        %5113 = vrot.lane.b32.xlu0 %v4985, 112
        %v5114 = vpop.permute.xlu0 %5113
        %5115 = vrot.lane.b32.xlu0 %v4986, 112
        %v5116 = vpop.permute.xlu0 %5115
        %v5117 = vsel %vm1256, %v5114, %v5116
        %v5118 = vsel %vm1256, %v5116, %v5114
        %v5119 = vld [vmem:[%s1261] ss:$8 sm:$0x3]
        %v5121 = vlaneseq
        %v5122 = vshrl.u32 %v5121, 7
        %v5123 = vsub.s32 0, %v5122
        %v5124 = vrot.slane %v5119, %v5123
        %v5125 = vlaneseq
        %v5126 = vshrl.u32 %v5125, 7
        %v5127 = vsub.s32 1, %v5126
        %v5128 = vrot.slane %v5119, %v5127
        %v5131 = vmul.f32 %v5117, %v5124
        %v5132 = vmul.f32 %v5118, %v5128
        %5133 = vrot.lane.b32.xlu0 %v4985, 111
        %v5134 = vpop.permute.xlu0 %5133
        %5135 = vrot.lane.b32.xlu0 %v4986, 111
        %v5136 = vpop.permute.xlu0 %5135
        %v5137 = vsel %vm1286, %v5134, %v5136
        %v5138 = vsel %vm1286, %v5136, %v5134
        %v5139 = vld [vmem:[%s1291] ss:$8 sm:$0x3]
        %v5141 = vlaneseq
        %v5142 = vshrl.u32 %v5141, 7
        %v5143 = vsub.s32 0, %v5142
        %v5144 = vrot.slane %v5139, %v5143
        %v5145 = vlaneseq
        %v5146 = vshrl.u32 %v5145, 7
        %v5147 = vsub.s32 1, %v5146
        %v5148 = vrot.slane %v5139, %v5147
        %v5151 = vmul.f32 %v5137, %v5144
        %v5152 = vmul.f32 %v5138, %v5148
        %v5154 = vsel %vm2412, %v4991, 0
        %v5157 = vsel %vm2412, %v4992, 0
        %v5159 = vand.u32 %v5012, 4294901760
        %5160 = vmatprep.subr.mxu0 %v5159
        %v5161 = vand.u32 %v5011, 4294901760
        %5162 = vmatpush1.msra.mxu0 %v5161
        %v5163 = vand.u32 %v5032, 4294901760
        %5164 = vmatprep.subr.mxu0 %v5163
        %v5165 = vand.u32 %v5031, 4294901760
        %5166 = vmatpush1.msra.mxu0 %v5165
        %v5167 = vand.u32 %v5052, 4294901760
        %5168 = vmatprep.subr.mxu0 %v5167
        %v5169 = vand.u32 %v5051, 4294901760
        %5170 = vmatpush1.msra.mxu0 %v5169
        %v5171 = vand.u32 %v5072, 4294901760
        %5172 = vmatprep.subr.mxu0 %v5171
        %v5173 = vand.u32 %v5071, 4294901760
        %5174 = vmatpush1.msra.mxu0 %v5173
        %v5175 = vand.u32 %v4986, 4294901760
        %5176 = vmatprep.subr.mxu0 %v5175
        %v5177 = vand.u32 %v4985, 4294901760
        %5178 = vmatpush1.msra.mxu0 %v5177
        %v5179 = vand.u32 %v5092, 4294901760
        %5180 = vmatprep.subr.mxu0 %v5179
        %v5181 = vand.u32 %v5091, 4294901760
        %5182 = vmatpush1.msra.mxu0 %v5181
        %v5183 = vand.u32 %v5112, 4294901760
        %5184 = vmatprep.subr.mxu0 %v5183
        %v5185 = vand.u32 %v5111, 4294901760
        %5186 = vmatpush1.msra.mxu0 %v5185
        %v5187 = vand.u32 %v5132, 4294901760
        %5188 = vmatprep.subr.mxu0 %v5187
        %v5189 = vand.u32 %v5131, 4294901760
        %5190 = vmatpush1.msra.mxu0 %v5189
        %v5191 = vand.u32 %v5152, 4294901760
        %5192 = vmatprep.subr.mxu0 %v5191
        %v5193 = vand.u32 %v5151, 4294901760
        %5194 = vmatpush1.msra.mxu0 %v5193
        %5195 = vmatprep.subr.mxu0 0.0
        %5196 = vmatpush1.msra.mxu0 0.0
        %5197 = vmatprep.subr.mxu0 0.0
        %5198 = vmatpush1.msra.mxu0 0.0
        %5199 = vmatprep.subr.mxu0 0.0
        %5200 = vmatpush1.msra.mxu0 0.0
        %5201 = vmatprep.subr.mxu0 0.0
        %5202 = vmatpush1.msra.mxu0 0.0
        %5203 = vmatprep.subr.mxu0 0.0
        %5204 = vmatpush1.msra.mxu0 0.0
        %5205 = vmatprep.subr.mxu0 0.0
        %5206 = vmatpush1.msra.mxu0 0.0
        %5207 = vmatprep.subr.mxu0 0.0
        %5208 = vmatpush1.msra.mxu0 0.0
        %5209 = vmatprep.subr.mxu0 0.0
        %5210 = vmatpush1.msra.mxu0 0.0
        %5211 = vmatprep.subr.mxu0 0.0
        %5212 = vmatpush1.msra.mxu0 0.0
        %5213 = vmatprep.subr.mxu0 0.0
        %5214 = vmatpush1.msra.mxu0 0.0
        %5215 = vmatprep.subr.mxu0 0.0
        %5216 = vmatpush1.msra.mxu0 0.0
        %5217 = vmatprep.subr.mxu0 0.0
        %5218 = vmatpush1.msra.mxu0 0.0
        %5219 = vmatprep.subr.mxu0 0.0
        %5220 = vmatpush1.msra.mxu0 0.0
        %5221 = vmatprep.subr.mxu0 0.0
        %5222 = vmatpush1.msra.mxu0 0.0
        %5223 = vmatprep.subr.mxu0 0.0
        %5224 = vmatpush1.msra.mxu0 0.0
        %5225 = vmatprep.subr.mxu0 0.0
        %5226 = vmatpush1.msra.mxu0 0.0
        %5227 = vmatprep.subr.mxu0 0.0
        %5228 = vmatpush1.msra.mxu0 0.0
        %5229 = vmatprep.subr.mxu0 0.0
        %5230 = vmatpush1.msra.mxu0 0.0
        %5231 = vmatprep.subr.mxu0 0.0
        %5232 = vmatpush1.msra.mxu0 0.0
        %5233 = vmatprep.subr.mxu0 0.0
        %5234 = vmatpush1.msra.mxu0 0.0
        %5235 = vmatprep.subr.mxu0 0.0
        %5236 = vmatpush1.msra.mxu0 0.0
        %5237 = vmatprep.subr.mxu0 0.0
        %5238 = vmatpush1.msra.mxu0 0.0
        %5239 = vmatprep.subr.mxu0 0.0
        %5240 = vmatpush1.msra.mxu0 0.0
        %5241 = vmatprep.mubr.f32.mxu0 0.0
        %v5242 = vand.u32 %v5154, 4294901760
        %v5243 = vsub.f32 %v5154, %v5242
        %v5244 = vand.u32 %v5243, 4294901760
        %v5245 = vsub.f32 %v5243, %v5244
        %v5246 = vand.u32 %v5245, 4294901760
        %5247 = vmatmul.mubr.f32.gmra.mrb[0].mxu0 %v5246
        %v5248 = vpop.f32.mrb[0].mxu0
        %v5249 = vadd.f32 0.0, %v5248
        %v5250 = vpop.f32.mrb[0].mxu0
        %v5251 = vadd.f32 0.0, %v5250
        %5252 = vmatprep.mubr.f32.mxu0 0.0
        %v5253 = vand.u32 %v5157, 4294901760
        %v5254 = vsub.f32 %v5157, %v5253
        %v5255 = vand.u32 %v5254, 4294901760
        %v5256 = vsub.f32 %v5254, %v5255
        %v5257 = vand.u32 %v5256, 4294901760
        %5258 = vmatmul.mubr.f32.gmra.mrb[0].mxu0 %v5257
        %v5259 = vpop.f32.mrb[0].mxu0
        %v5260 = vadd.f32 0.0, %v5259
        %v5261 = vpop.f32.mrb[0].mxu0
        %v5262 = vadd.f32 0.0, %v5261
        %5263 = vdwg.mxu0
        %v5264 = vand.u32 %v5012, 4294901760
        %v5265 = vsub.f32 %v5012, %v5264
        %v5266 = vand.u32 %v5265, 4294901760
        %v5267 = vsub.f32 %v5265, %v5266
        %v5268 = vand.u32 %v5267, 4294901760
        %5269 = vmatprep.subr.mxu0 %v5268
        %v5270 = vand.u32 %v5011, 4294901760
        %v5271 = vsub.f32 %v5011, %v5270
        %v5272 = vand.u32 %v5271, 4294901760
        %v5273 = vsub.f32 %v5271, %v5272
        %v5274 = vand.u32 %v5273, 4294901760
        %5275 = vmatpush1.msra.mxu0 %v5274
        %v5276 = vand.u32 %v5032, 4294901760
        %v5277 = vsub.f32 %v5032, %v5276
        %v5278 = vand.u32 %v5277, 4294901760
        %v5279 = vsub.f32 %v5277, %v5278
        %v5280 = vand.u32 %v5279, 4294901760
        %5281 = vmatprep.subr.mxu0 %v5280
        %v5282 = vand.u32 %v5031, 4294901760
        %v5283 = vsub.f32 %v5031, %v5282
        %v5284 = vand.u32 %v5283, 4294901760
        %v5285 = vsub.f32 %v5283, %v5284
        %v5286 = vand.u32 %v5285, 4294901760
        %5287 = vmatpush1.msra.mxu0 %v5286
        %v5288 = vand.u32 %v5052, 4294901760
        %v5289 = vsub.f32 %v5052, %v5288
        %v5290 = vand.u32 %v5289, 4294901760
        %v5291 = vsub.f32 %v5289, %v5290
        %v5292 = vand.u32 %v5291, 4294901760
        %5293 = vmatprep.subr.mxu0 %v5292
        %v5294 = vand.u32 %v5051, 4294901760
        %v5295 = vsub.f32 %v5051, %v5294
        %v5296 = vand.u32 %v5295, 4294901760
        %v5297 = vsub.f32 %v5295, %v5296
        %v5298 = vand.u32 %v5297, 4294901760
        %5299 = vmatpush1.msra.mxu0 %v5298
        %v5300 = vand.u32 %v5072, 4294901760
        %v5301 = vsub.f32 %v5072, %v5300
        %v5302 = vand.u32 %v5301, 4294901760
        %v5303 = vsub.f32 %v5301, %v5302
        %v5304 = vand.u32 %v5303, 4294901760
        %5305 = vmatprep.subr.mxu0 %v5304
        %v5306 = vand.u32 %v5071, 4294901760
        %v5307 = vsub.f32 %v5071, %v5306
        %v5308 = vand.u32 %v5307, 4294901760
        %v5309 = vsub.f32 %v5307, %v5308
        %v5310 = vand.u32 %v5309, 4294901760
        %5311 = vmatpush1.msra.mxu0 %v5310
        %v5312 = vand.u32 %v4986, 4294901760
        %v5313 = vsub.f32 %v4986, %v5312
        %v5314 = vand.u32 %v5313, 4294901760
        %v5315 = vsub.f32 %v5313, %v5314
        %v5316 = vand.u32 %v5315, 4294901760
        %5317 = vmatprep.subr.mxu0 %v5316
        %v5318 = vand.u32 %v4985, 4294901760
        %v5319 = vsub.f32 %v4985, %v5318
        %v5320 = vand.u32 %v5319, 4294901760
        %v5321 = vsub.f32 %v5319, %v5320
        %v5322 = vand.u32 %v5321, 4294901760
        %5323 = vmatpush1.msra.mxu0 %v5322
        %v5324 = vand.u32 %v5092, 4294901760
        %v5325 = vsub.f32 %v5092, %v5324
        %v5326 = vand.u32 %v5325, 4294901760
        %v5327 = vsub.f32 %v5325, %v5326
        %v5328 = vand.u32 %v5327, 4294901760
        %5329 = vmatprep.subr.mxu0 %v5328
        %v5330 = vand.u32 %v5091, 4294901760
        %v5331 = vsub.f32 %v5091, %v5330
        %v5332 = vand.u32 %v5331, 4294901760
        %v5333 = vsub.f32 %v5331, %v5332
        %v5334 = vand.u32 %v5333, 4294901760
        %5335 = vmatpush1.msra.mxu0 %v5334
        %v5336 = vand.u32 %v5112, 4294901760
        %v5337 = vsub.f32 %v5112, %v5336
        %v5338 = vand.u32 %v5337, 4294901760
        %v5339 = vsub.f32 %v5337, %v5338
        %v5340 = vand.u32 %v5339, 4294901760
        %5341 = vmatprep.subr.mxu0 %v5340
        %v5342 = vand.u32 %v5111, 4294901760
        %v5343 = vsub.f32 %v5111, %v5342
        %v5344 = vand.u32 %v5343, 4294901760
        %v5345 = vsub.f32 %v5343, %v5344
        %v5346 = vand.u32 %v5345, 4294901760
        %5347 = vmatpush1.msra.mxu0 %v5346
        %v5348 = vand.u32 %v5132, 4294901760
        %v5349 = vsub.f32 %v5132, %v5348
        %v5350 = vand.u32 %v5349, 4294901760
        %v5351 = vsub.f32 %v5349, %v5350
        %v5352 = vand.u32 %v5351, 4294901760
        %5353 = vmatprep.subr.mxu0 %v5352
        %v5354 = vand.u32 %v5131, 4294901760
        %v5355 = vsub.f32 %v5131, %v5354
        %v5356 = vand.u32 %v5355, 4294901760
        %v5357 = vsub.f32 %v5355, %v5356
        %v5358 = vand.u32 %v5357, 4294901760
        %5359 = vmatpush1.msra.mxu0 %v5358
        %v5360 = vand.u32 %v5152, 4294901760
        %v5361 = vsub.f32 %v5152, %v5360
        %v5362 = vand.u32 %v5361, 4294901760
        %v5363 = vsub.f32 %v5361, %v5362
        %v5364 = vand.u32 %v5363, 4294901760
        %5365 = vmatprep.subr.mxu0 %v5364
        %v5366 = vand.u32 %v5151, 4294901760
        %v5367 = vsub.f32 %v5151, %v5366
        %v5368 = vand.u32 %v5367, 4294901760
        %v5369 = vsub.f32 %v5367, %v5368
        %v5370 = vand.u32 %v5369, 4294901760
        %5371 = vmatpush1.msra.mxu0 %v5370
        %5372 = vmatprep.subr.mxu0 0.0
        %5373 = vmatpush1.msra.mxu0 0.0
        %5374 = vmatprep.subr.mxu0 0.0
        %5375 = vmatpush1.msra.mxu0 0.0
        %5376 = vmatprep.subr.mxu0 0.0
        %5377 = vmatpush1.msra.mxu0 0.0
        %5378 = vmatprep.subr.mxu0 0.0
        %5379 = vmatpush1.msra.mxu0 0.0
        %5380 = vmatprep.subr.mxu0 0.0
        %5381 = vmatpush1.msra.mxu0 0.0
        %5382 = vmatprep.subr.mxu0 0.0
        %5383 = vmatpush1.msra.mxu0 0.0
        %5384 = vmatprep.subr.mxu0 0.0
        %5385 = vmatpush1.msra.mxu0 0.0
        %5386 = vmatprep.subr.mxu0 0.0
        %5387 = vmatpush1.msra.mxu0 0.0
        %5388 = vmatprep.subr.mxu0 0.0
        %5389 = vmatpush1.msra.mxu0 0.0
        %5390 = vmatprep.subr.mxu0 0.0
        %5391 = vmatpush1.msra.mxu0 0.0
        %5392 = vmatprep.subr.mxu0 0.0
        %5393 = vmatpush1.msra.mxu0 0.0
        %5394 = vmatprep.subr.mxu0 0.0
        %5395 = vmatpush1.msra.mxu0 0.0
        %5396 = vmatprep.subr.mxu0 0.0
        %5397 = vmatpush1.msra.mxu0 0.0
        %5398 = vmatprep.subr.mxu0 0.0
        %5399 = vmatpush1.msra.mxu0 0.0
        %5400 = vmatprep.subr.mxu0 0.0
        %5401 = vmatpush1.msra.mxu0 0.0
        %5402 = vmatprep.subr.mxu0 0.0
        %5403 = vmatpush1.msra.mxu0 0.0
        %5404 = vmatprep.subr.mxu0 0.0
        %5405 = vmatpush1.msra.mxu0 0.0
        %5406 = vmatprep.subr.mxu0 0.0
        %5407 = vmatpush1.msra.mxu0 0.0
        %5408 = vmatprep.subr.mxu0 0.0
        %5409 = vmatpush1.msra.mxu0 0.0
        %5410 = vmatprep.subr.mxu0 0.0
        %5411 = vmatpush1.msra.mxu0 0.0
        %5412 = vmatprep.subr.mxu0 0.0
        %5413 = vmatpush1.msra.mxu0 0.0
        %5414 = vmatprep.subr.mxu0 0.0
        %5415 = vmatpush1.msra.mxu0 0.0
        %5416 = vmatprep.subr.mxu0 0.0
        %5417 = vmatpush1.msra.mxu0 0.0
        %5418 = vmatprep.mubr.f32.mxu0 0.0
        %v5419 = vand.u32 %v5154, 4294901760
        %5420 = vmatmul.mubr.f32.gmra.mrb[0].mxu0 %v5419
        %v5421 = vpop.f32.mrb[0].mxu0
        %v5422 = vadd.f32 %v5249, %v5421
        %v5423 = vpop.f32.mrb[0].mxu0
        %v5424 = vadd.f32 %v5251, %v5423
        %5425 = vmatprep.mubr.f32.mxu0 0.0
        %v5426 = vand.u32 %v5157, 4294901760
        %5427 = vmatmul.mubr.f32.gmra.mrb[0].mxu0 %v5426
        %v5428 = vpop.f32.mrb[0].mxu0
        %v5429 = vadd.f32 %v5260, %v5428
        %v5430 = vpop.f32.mrb[0].mxu0
        %v5431 = vadd.f32 %v5262, %v5430
        %5432 = vdwg.mxu0
        %v5433 = vand.u32 %v5012, 4294901760
        %v5434 = vsub.f32 %v5012, %v5433
        %5435 = vmatprep.subr.mxu0 %v5434
        %v5436 = vand.u32 %v5011, 4294901760
        %v5437 = vsub.f32 %v5011, %v5436
        %5438 = vmatpush1.msra.mxu0 %v5437
        %v5439 = vand.u32 %v5032, 4294901760
        %v5440 = vsub.f32 %v5032, %v5439
        %5441 = vmatprep.subr.mxu0 %v5440
        %v5442 = vand.u32 %v5031, 4294901760
        %v5443 = vsub.f32 %v5031, %v5442
        %5444 = vmatpush1.msra.mxu0 %v5443
        %v5445 = vand.u32 %v5052, 4294901760
        %v5446 = vsub.f32 %v5052, %v5445
        %5447 = vmatprep.subr.mxu0 %v5446
        %v5448 = vand.u32 %v5051, 4294901760
        %v5449 = vsub.f32 %v5051, %v5448
        %5450 = vmatpush1.msra.mxu0 %v5449
        %v5451 = vand.u32 %v5072, 4294901760
        %v5452 = vsub.f32 %v5072, %v5451
        %5453 = vmatprep.subr.mxu0 %v5452
        %v5454 = vand.u32 %v5071, 4294901760
        %v5455 = vsub.f32 %v5071, %v5454
        %5456 = vmatpush1.msra.mxu0 %v5455
        %v5457 = vand.u32 %v4986, 4294901760
        %v5458 = vsub.f32 %v4986, %v5457
        %5459 = vmatprep.subr.mxu0 %v5458
        %v5460 = vand.u32 %v4985, 4294901760
        %v5461 = vsub.f32 %v4985, %v5460
        %5462 = vmatpush1.msra.mxu0 %v5461
        %v5463 = vand.u32 %v5092, 4294901760
        %v5464 = vsub.f32 %v5092, %v5463
        %5465 = vmatprep.subr.mxu0 %v5464
        %v5466 = vand.u32 %v5091, 4294901760
        %v5467 = vsub.f32 %v5091, %v5466
        %5468 = vmatpush1.msra.mxu0 %v5467
        %v5469 = vand.u32 %v5112, 4294901760
        %v5470 = vsub.f32 %v5112, %v5469
        %5471 = vmatprep.subr.mxu0 %v5470
        %v5472 = vand.u32 %v5111, 4294901760
        %v5473 = vsub.f32 %v5111, %v5472
        %5474 = vmatpush1.msra.mxu0 %v5473
        %v5475 = vand.u32 %v5132, 4294901760
        %v5476 = vsub.f32 %v5132, %v5475
        %5477 = vmatprep.subr.mxu0 %v5476
        %v5478 = vand.u32 %v5131, 4294901760
        %v5479 = vsub.f32 %v5131, %v5478
        %5480 = vmatpush1.msra.mxu0 %v5479
        %v5481 = vand.u32 %v5152, 4294901760
        %v5482 = vsub.f32 %v5152, %v5481
        %5483 = vmatprep.subr.mxu0 %v5482
        %v5484 = vand.u32 %v5151, 4294901760
        %v5485 = vsub.f32 %v5151, %v5484
        %5486 = vmatpush1.msra.mxu0 %v5485
        %5487 = vmatprep.subr.mxu0 0.0
        %5488 = vmatpush1.msra.mxu0 0.0
        %5489 = vmatprep.subr.mxu0 0.0
        %5490 = vmatpush1.msra.mxu0 0.0
        %5491 = vmatprep.subr.mxu0 0.0
        %5492 = vmatpush1.msra.mxu0 0.0
        %5493 = vmatprep.subr.mxu0 0.0
        %5494 = vmatpush1.msra.mxu0 0.0
        %5495 = vmatprep.subr.mxu0 0.0
        %5496 = vmatpush1.msra.mxu0 0.0
        %5497 = vmatprep.subr.mxu0 0.0
        %5498 = vmatpush1.msra.mxu0 0.0
        %5499 = vmatprep.subr.mxu0 0.0
        %5500 = vmatpush1.msra.mxu0 0.0
        %5501 = vmatprep.subr.mxu0 0.0
        %5502 = vmatpush1.msra.mxu0 0.0
        %5503 = vmatprep.subr.mxu0 0.0
        %5504 = vmatpush1.msra.mxu0 0.0
        %5505 = vmatprep.subr.mxu0 0.0
        %5506 = vmatpush1.msra.mxu0 0.0
        %5507 = vmatprep.subr.mxu0 0.0
        %5508 = vmatpush1.msra.mxu0 0.0
        %5509 = vmatprep.subr.mxu0 0.0
        %5510 = vmatpush1.msra.mxu0 0.0
        %5511 = vmatprep.subr.mxu0 0.0
        %5512 = vmatpush1.msra.mxu0 0.0
        %5513 = vmatprep.subr.mxu0 0.0
        %5514 = vmatpush1.msra.mxu0 0.0
        %5515 = vmatprep.subr.mxu0 0.0
        %5516 = vmatpush1.msra.mxu0 0.0
        %5517 = vmatprep.subr.mxu0 0.0
        %5518 = vmatpush1.msra.mxu0 0.0
        %5519 = vmatprep.subr.mxu0 0.0
        %5520 = vmatpush1.msra.mxu0 0.0
        %5521 = vmatprep.subr.mxu0 0.0
        %5522 = vmatpush1.msra.mxu0 0.0
        %5523 = vmatprep.subr.mxu0 0.0
        %5524 = vmatpush1.msra.mxu0 0.0
        %5525 = vmatprep.subr.mxu0 0.0
        %5526 = vmatpush1.msra.mxu0 0.0
        %5527 = vmatprep.subr.mxu0 0.0
        %5528 = vmatpush1.msra.mxu0 0.0
        %5529 = vmatprep.subr.mxu0 0.0
        %5530 = vmatpush1.msra.mxu0 0.0
        %5531 = vmatprep.subr.mxu0 0.0
        %5532 = vmatpush1.msra.mxu0 0.0
        %5533 = vmatprep.mubr.f32.mxu0 0.0
        %v5534 = vand.u32 %v5154, 4294901760
        %v5535 = vsub.f32 %v5154, %v5534
        %5536 = vmatmul.mubr.f32.gmra.mrb[0].mxu0 %v5535
        %v5537 = vpop.f32.mrb[0].mxu0
        %v5538 = vadd.f32 %v5422, %v5537
        %v5539 = vpop.f32.mrb[0].mxu0
        %v5540 = vadd.f32 %v5424, %v5539
        %5541 = vmatprep.mubr.f32.mxu0 0.0
        %v5542 = vand.u32 %v5157, 4294901760
        %v5543 = vsub.f32 %v5157, %v5542
        %5544 = vmatmul.mubr.f32.gmra.mrb[0].mxu0 %v5543
        %v5545 = vpop.f32.mrb[0].mxu0
        %v5546 = vadd.f32 %v5429, %v5545
        %v5547 = vpop.f32.mrb[0].mxu0
        %v5548 = vadd.f32 %v5431, %v5547
        %5549 = vdwg.mxu0
        %v5550 = vand.u32 %v5012, 4294901760
        %5551 = vmatprep.subr.mxu0 %v5550
        %v5552 = vand.u32 %v5011, 4294901760
        %5553 = vmatpush1.msra.mxu0 %v5552
        %v5554 = vand.u32 %v5032, 4294901760
        %5555 = vmatprep.subr.mxu0 %v5554
        %v5556 = vand.u32 %v5031, 4294901760
        %5557 = vmatpush1.msra.mxu0 %v5556
        %v5558 = vand.u32 %v5052, 4294901760
        %5559 = vmatprep.subr.mxu0 %v5558
        %v5560 = vand.u32 %v5051, 4294901760
        %5561 = vmatpush1.msra.mxu0 %v5560
        %v5562 = vand.u32 %v5072, 4294901760
        %5563 = vmatprep.subr.mxu0 %v5562
        %v5564 = vand.u32 %v5071, 4294901760
        %5565 = vmatpush1.msra.mxu0 %v5564
        %v5566 = vand.u32 %v4986, 4294901760
        %5567 = vmatprep.subr.mxu0 %v5566
        %v5568 = vand.u32 %v4985, 4294901760
        %5569 = vmatpush1.msra.mxu0 %v5568
        %v5570 = vand.u32 %v5092, 4294901760
        %5571 = vmatprep.subr.mxu0 %v5570
        %v5572 = vand.u32 %v5091, 4294901760
        %5573 = vmatpush1.msra.mxu0 %v5572
        %v5574 = vand.u32 %v5112, 4294901760
        %5575 = vmatprep.subr.mxu0 %v5574
        %v5576 = vand.u32 %v5111, 4294901760
        %5577 = vmatpush1.msra.mxu0 %v5576
        %v5578 = vand.u32 %v5132, 4294901760
        %5579 = vmatprep.subr.mxu0 %v5578
        %v5580 = vand.u32 %v5131, 4294901760
        %5581 = vmatpush1.msra.mxu0 %v5580
        %v5582 = vand.u32 %v5152, 4294901760
        %5583 = vmatprep.subr.mxu0 %v5582
        %v5584 = vand.u32 %v5151, 4294901760
        %5585 = vmatpush1.msra.mxu0 %v5584
        %5586 = vmatprep.subr.mxu0 0.0
        %5587 = vmatpush1.msra.mxu0 0.0
        %5588 = vmatprep.subr.mxu0 0.0
        %5589 = vmatpush1.msra.mxu0 0.0
        %5590 = vmatprep.subr.mxu0 0.0
        %5591 = vmatpush1.msra.mxu0 0.0
        %5592 = vmatprep.subr.mxu0 0.0
        %5593 = vmatpush1.msra.mxu0 0.0
        %5594 = vmatprep.subr.mxu0 0.0
        %5595 = vmatpush1.msra.mxu0 0.0
        %5596 = vmatprep.subr.mxu0 0.0
        %5597 = vmatpush1.msra.mxu0 0.0
        %5598 = vmatprep.subr.mxu0 0.0
        %5599 = vmatpush1.msra.mxu0 0.0
        %5600 = vmatprep.subr.mxu0 0.0
        %5601 = vmatpush1.msra.mxu0 0.0
        %5602 = vmatprep.subr.mxu0 0.0
        %5603 = vmatpush1.msra.mxu0 0.0
        %5604 = vmatprep.subr.mxu0 0.0
        %5605 = vmatpush1.msra.mxu0 0.0
        %5606 = vmatprep.subr.mxu0 0.0
        %5607 = vmatpush1.msra.mxu0 0.0
        %5608 = vmatprep.subr.mxu0 0.0
        %5609 = vmatpush1.msra.mxu0 0.0
        %5610 = vmatprep.subr.mxu0 0.0
        %5611 = vmatpush1.msra.mxu0 0.0
        %5612 = vmatprep.subr.mxu0 0.0
        %5613 = vmatpush1.msra.mxu0 0.0
        %5614 = vmatprep.subr.mxu0 0.0
        %5615 = vmatpush1.msra.mxu0 0.0
        %5616 = vmatprep.subr.mxu0 0.0
        %5617 = vmatpush1.msra.mxu0 0.0
        %5618 = vmatprep.subr.mxu0 0.0
        %5619 = vmatpush1.msra.mxu0 0.0
        %5620 = vmatprep.subr.mxu0 0.0
        %5621 = vmatpush1.msra.mxu0 0.0
        %5622 = vmatprep.subr.mxu0 0.0
        %5623 = vmatpush1.msra.mxu0 0.0
        %5624 = vmatprep.subr.mxu0 0.0
        %5625 = vmatpush1.msra.mxu0 0.0
        %5626 = vmatprep.subr.mxu0 0.0
        %5627 = vmatpush1.msra.mxu0 0.0
        %5628 = vmatprep.subr.mxu0 0.0
        %5629 = vmatpush1.msra.mxu0 0.0
        %5630 = vmatprep.subr.mxu0 0.0
        %5631 = vmatpush1.msra.mxu0 0.0
        %5632 = vmatprep.mubr.f32.mxu0 0.0
        %v5633 = vand.u32 %v5154, 4294901760
        %v5634 = vsub.f32 %v5154, %v5633
        %v5635 = vand.u32 %v5634, 4294901760
        %5636 = vmatmul.mubr.f32.gmra.mrb[0].mxu0 %v5635
        %v5637 = vpop.f32.mrb[0].mxu0
        %v5638 = vadd.f32 %v5538, %v5637
        %v5639 = vpop.f32.mrb[0].mxu0
        %v5640 = vadd.f32 %v5540, %v5639
        %5641 = vmatprep.mubr.f32.mxu0 0.0
        %v5642 = vand.u32 %v5157, 4294901760
        %v5643 = vsub.f32 %v5157, %v5642
        %v5644 = vand.u32 %v5643, 4294901760
        %5645 = vmatmul.mubr.f32.gmra.mrb[0].mxu0 %v5644
        %v5646 = vpop.f32.mrb[0].mxu0
        %v5647 = vadd.f32 %v5546, %v5646
        %v5648 = vpop.f32.mrb[0].mxu0
        %v5649 = vadd.f32 %v5548, %v5648
        %5650 = vdwg.mxu0
        %v5651 = vand.u32 %v5012, 4294901760
        %v5652 = vsub.f32 %v5012, %v5651
        %v5653 = vand.u32 %v5652, 4294901760
        %5654 = vmatprep.subr.mxu0 %v5653
        %v5655 = vand.u32 %v5011, 4294901760
        %v5656 = vsub.f32 %v5011, %v5655
        %v5657 = vand.u32 %v5656, 4294901760
        %5658 = vmatpush1.msra.mxu0 %v5657
        %v5659 = vand.u32 %v5032, 4294901760
        %v5660 = vsub.f32 %v5032, %v5659
        %v5661 = vand.u32 %v5660, 4294901760
        %5662 = vmatprep.subr.mxu0 %v5661
        %v5663 = vand.u32 %v5031, 4294901760
        %v5664 = vsub.f32 %v5031, %v5663
        %v5665 = vand.u32 %v5664, 4294901760
        %5666 = vmatpush1.msra.mxu0 %v5665
        %v5667 = vand.u32 %v5052, 4294901760
        %v5668 = vsub.f32 %v5052, %v5667
        %v5669 = vand.u32 %v5668, 4294901760
        %5670 = vmatprep.subr.mxu0 %v5669
        %v5671 = vand.u32 %v5051, 4294901760
        %v5672 = vsub.f32 %v5051, %v5671
        %v5673 = vand.u32 %v5672, 4294901760
        %5674 = vmatpush1.msra.mxu0 %v5673
        %v5675 = vand.u32 %v5072, 4294901760
        %v5676 = vsub.f32 %v5072, %v5675
        %v5677 = vand.u32 %v5676, 4294901760
        %5678 = vmatprep.subr.mxu0 %v5677
        %v5679 = vand.u32 %v5071, 4294901760
        %v5680 = vsub.f32 %v5071, %v5679
        %v5681 = vand.u32 %v5680, 4294901760
        %5682 = vmatpush1.msra.mxu0 %v5681
        %v5683 = vand.u32 %v4986, 4294901760
        %v5684 = vsub.f32 %v4986, %v5683
        %v5685 = vand.u32 %v5684, 4294901760
        %5686 = vmatprep.subr.mxu0 %v5685
        %v5687 = vand.u32 %v4985, 4294901760
        %v5688 = vsub.f32 %v4985, %v5687
        %v5689 = vand.u32 %v5688, 4294901760
        %5690 = vmatpush1.msra.mxu0 %v5689
        %v5691 = vand.u32 %v5092, 4294901760
        %v5692 = vsub.f32 %v5092, %v5691
        %v5693 = vand.u32 %v5692, 4294901760
        %5694 = vmatprep.subr.mxu0 %v5693
        %v5695 = vand.u32 %v5091, 4294901760
        %v5696 = vsub.f32 %v5091, %v5695
        %v5697 = vand.u32 %v5696, 4294901760
        %5698 = vmatpush1.msra.mxu0 %v5697
        %v5699 = vand.u32 %v5112, 4294901760
        %v5700 = vsub.f32 %v5112, %v5699
        %v5701 = vand.u32 %v5700, 4294901760
        %5702 = vmatprep.subr.mxu0 %v5701
        %v5703 = vand.u32 %v5111, 4294901760
        %v5704 = vsub.f32 %v5111, %v5703
        %v5705 = vand.u32 %v5704, 4294901760
        %5706 = vmatpush1.msra.mxu0 %v5705
        %v5707 = vand.u32 %v5132, 4294901760
        %v5708 = vsub.f32 %v5132, %v5707
        %v5709 = vand.u32 %v5708, 4294901760
        %5710 = vmatprep.subr.mxu0 %v5709
        %v5711 = vand.u32 %v5131, 4294901760
        %v5712 = vsub.f32 %v5131, %v5711
        %v5713 = vand.u32 %v5712, 4294901760
        %5714 = vmatpush1.msra.mxu0 %v5713
        %v5715 = vand.u32 %v5152, 4294901760
        %v5716 = vsub.f32 %v5152, %v5715
        %v5717 = vand.u32 %v5716, 4294901760
        %5718 = vmatprep.subr.mxu0 %v5717
        %v5719 = vand.u32 %v5151, 4294901760
        %v5720 = vsub.f32 %v5151, %v5719
        %v5721 = vand.u32 %v5720, 4294901760
        %5722 = vmatpush1.msra.mxu0 %v5721
        %5723 = vmatprep.subr.mxu0 0.0
        %5724 = vmatpush1.msra.mxu0 0.0
        %5725 = vmatprep.subr.mxu0 0.0
        %5726 = vmatpush1.msra.mxu0 0.0
        %5727 = vmatprep.subr.mxu0 0.0
        %5728 = vmatpush1.msra.mxu0 0.0
        %5729 = vmatprep.subr.mxu0 0.0
        %5730 = vmatpush1.msra.mxu0 0.0
        %5731 = vmatprep.subr.mxu0 0.0
        %5732 = vmatpush1.msra.mxu0 0.0
        %5733 = vmatprep.subr.mxu0 0.0
        %5734 = vmatpush1.msra.mxu0 0.0
        %5735 = vmatprep.subr.mxu0 0.0
        %5736 = vmatpush1.msra.mxu0 0.0
        %5737 = vmatprep.subr.mxu0 0.0
        %5738 = vmatpush1.msra.mxu0 0.0
        %5739 = vmatprep.subr.mxu0 0.0
        %5740 = vmatpush1.msra.mxu0 0.0
        %5741 = vmatprep.subr.mxu0 0.0
        %5742 = vmatpush1.msra.mxu0 0.0
        %5743 = vmatprep.subr.mxu0 0.0
        %5744 = vmatpush1.msra.mxu0 0.0
        %5745 = vmatprep.subr.mxu0 0.0
        %5746 = vmatpush1.msra.mxu0 0.0
        %5747 = vmatprep.subr.mxu0 0.0
        %5748 = vmatpush1.msra.mxu0 0.0
        %5749 = vmatprep.subr.mxu0 0.0
        %5750 = vmatpush1.msra.mxu0 0.0
        %5751 = vmatprep.subr.mxu0 0.0
        %5752 = vmatpush1.msra.mxu0 0.0
        %5753 = vmatprep.subr.mxu0 0.0
        %5754 = vmatpush1.msra.mxu0 0.0
        %5755 = vmatprep.subr.mxu0 0.0
        %5756 = vmatpush1.msra.mxu0 0.0
        %5757 = vmatprep.subr.mxu0 0.0
        %5758 = vmatpush1.msra.mxu0 0.0
        %5759 = vmatprep.subr.mxu0 0.0
        %5760 = vmatpush1.msra.mxu0 0.0
        %5761 = vmatprep.subr.mxu0 0.0
        %5762 = vmatpush1.msra.mxu0 0.0
        %5763 = vmatprep.subr.mxu0 0.0
        %5764 = vmatpush1.msra.mxu0 0.0
        %5765 = vmatprep.subr.mxu0 0.0
        %5766 = vmatpush1.msra.mxu0 0.0
        %5767 = vmatprep.subr.mxu0 0.0
        %5768 = vmatpush1.msra.mxu0 0.0
        %5769 = vmatprep.mubr.f32.mxu0 0.0
        %v5770 = vand.u32 %v5154, 4294901760
        %5771 = vmatmul.mubr.f32.gmra.mrb[0].mxu0 %v5770
        %v5772 = vpop.f32.mrb[0].mxu0
        %v5773 = vadd.f32 %v5638, %v5772
        %v5774 = vpop.f32.mrb[0].mxu0
        %v5775 = vadd.f32 %v5640, %v5774
        %5776 = vmatprep.mubr.f32.mxu0 0.0
        %v5777 = vand.u32 %v5157, 4294901760
        %5778 = vmatmul.mubr.f32.gmra.mrb[0].mxu0 %v5777
        %v5779 = vpop.f32.mrb[0].mxu0
        %v5780 = vadd.f32 %v5647, %v5779
        %v5781 = vpop.f32.mrb[0].mxu0
        %v5782 = vadd.f32 %v5649, %v5781
        %5783 = vdwg.mxu0
        %v5784 = vand.u32 %v5012, 4294901760
        %5785 = vmatprep.subr.mxu0 %v5784
        %v5786 = vand.u32 %v5011, 4294901760
        %5787 = vmatpush1.msra.mxu0 %v5786
        %v5788 = vand.u32 %v5032, 4294901760
        %5789 = vmatprep.subr.mxu0 %v5788
        %v5790 = vand.u32 %v5031, 4294901760
        %5791 = vmatpush1.msra.mxu0 %v5790
        %v5792 = vand.u32 %v5052, 4294901760
        %5793 = vmatprep.subr.mxu0 %v5792
        %v5794 = vand.u32 %v5051, 4294901760
        %5795 = vmatpush1.msra.mxu0 %v5794
        %v5796 = vand.u32 %v5072, 4294901760
        %5797 = vmatprep.subr.mxu0 %v5796
        %v5798 = vand.u32 %v5071, 4294901760
        %5799 = vmatpush1.msra.mxu0 %v5798
        %v5800 = vand.u32 %v4986, 4294901760
        %5801 = vmatprep.subr.mxu0 %v5800
        %v5802 = vand.u32 %v4985, 4294901760
        %5803 = vmatpush1.msra.mxu0 %v5802
        %v5804 = vand.u32 %v5092, 4294901760
        %5805 = vmatprep.subr.mxu0 %v5804
        %v5806 = vand.u32 %v5091, 4294901760
        %5807 = vmatpush1.msra.mxu0 %v5806
        %v5808 = vand.u32 %v5112, 4294901760
        %5809 = vmatprep.subr.mxu0 %v5808
        %v5810 = vand.u32 %v5111, 4294901760
        %5811 = vmatpush1.msra.mxu0 %v5810
        %v5812 = vand.u32 %v5132, 4294901760
        %5813 = vmatprep.subr.mxu0 %v5812
        %v5814 = vand.u32 %v5131, 4294901760
        %5815 = vmatpush1.msra.mxu0 %v5814
        %v5816 = vand.u32 %v5152, 4294901760
        %5817 = vmatprep.subr.mxu0 %v5816
        %v5818 = vand.u32 %v5151, 4294901760
        %5819 = vmatpush1.msra.mxu0 %v5818
        %5820 = vmatprep.subr.mxu0 0.0
        %5821 = vmatpush1.msra.mxu0 0.0
        %5822 = vmatprep.subr.mxu0 0.0
        %5823 = vmatpush1.msra.mxu0 0.0
        %5824 = vmatprep.subr.mxu0 0.0
        %5825 = vmatpush1.msra.mxu0 0.0
        %5826 = vmatprep.subr.mxu0 0.0
        %5827 = vmatpush1.msra.mxu0 0.0
        %5828 = vmatprep.subr.mxu0 0.0
        %5829 = vmatpush1.msra.mxu0 0.0
        %5830 = vmatprep.subr.mxu0 0.0
        %5831 = vmatpush1.msra.mxu0 0.0
        %5832 = vmatprep.subr.mxu0 0.0
        %5833 = vmatpush1.msra.mxu0 0.0
        %5834 = vmatprep.subr.mxu0 0.0
        %5835 = vmatpush1.msra.mxu0 0.0
        %5836 = vmatprep.subr.mxu0 0.0
        %5837 = vmatpush1.msra.mxu0 0.0
        %5838 = vmatprep.subr.mxu0 0.0
        %5839 = vmatpush1.msra.mxu0 0.0
        %5840 = vmatprep.subr.mxu0 0.0
        %5841 = vmatpush1.msra.mxu0 0.0
        %5842 = vmatprep.subr.mxu0 0.0
        %5843 = vmatpush1.msra.mxu0 0.0
        %5844 = vmatprep.subr.mxu0 0.0
        %5845 = vmatpush1.msra.mxu0 0.0
        %5846 = vmatprep.subr.mxu0 0.0
        %5847 = vmatpush1.msra.mxu0 0.0
        %5848 = vmatprep.subr.mxu0 0.0
        %5849 = vmatpush1.msra.mxu0 0.0
        %5850 = vmatprep.subr.mxu0 0.0
        %5851 = vmatpush1.msra.mxu0 0.0
        %5852 = vmatprep.subr.mxu0 0.0
        %5853 = vmatpush1.msra.mxu0 0.0
        %5854 = vmatprep.subr.mxu0 0.0
        %5855 = vmatpush1.msra.mxu0 0.0
        %5856 = vmatprep.subr.mxu0 0.0
        %5857 = vmatpush1.msra.mxu0 0.0
        %5858 = vmatprep.subr.mxu0 0.0
        %5859 = vmatpush1.msra.mxu0 0.0
        %5860 = vmatprep.subr.mxu0 0.0
        %5861 = vmatpush1.msra.mxu0 0.0
        %5862 = vmatprep.subr.mxu0 0.0
        %5863 = vmatpush1.msra.mxu0 0.0
        %5864 = vmatprep.subr.mxu0 0.0
        %5865 = vmatpush1.msra.mxu0 0.0
        %5866 = vmatprep.mubr.f32.mxu0 0.0
        %v5867 = vand.u32 %v5154, 4294901760
        %5868 = vmatmul.mubr.f32.gmra.mrb[0].mxu0 %v5867
        %v5869 = vpop.f32.mrb[0].mxu0
        %v5870 = vadd.f32 %v5773, %v5869
        %v5871 = vpop.f32.mrb[0].mxu0
        %v5872 = vadd.f32 %v5775, %v5871
        %5873 = vmatprep.mubr.f32.mxu0 0.0
        %v5874 = vand.u32 %v5157, 4294901760
        %5875 = vmatmul.mubr.f32.gmra.mrb[0].mxu0 %v5874
        %v5876 = vpop.f32.mrb[0].mxu0
        %v5877 = vadd.f32 %v5780, %v5876
        %v5878 = vpop.f32.mrb[0].mxu0
        %v5879 = vadd.f32 %v5782, %v5878
        %5880 = vdwg.mxu0
        %v5881 = vld [vmem:[#allocation3] sm:$0xff]
        %v5882 = vld [vmem:[#allocation3 + $0x8] sm:$0xff]
        %v5883 = vld [vmem:[#allocation3 + $0x10] sm:$0xff]
        %v5884 = vld [vmem:[#allocation3 + $0x18] sm:$0xff]
        %v5885 = vadd.f32 %v5881, %v5870
        %v5886 = vadd.f32 %v5882, %v5872
        %v5887 = vadd.f32 %v5883, %v5877
        %v5888 = vadd.f32 %v5884, %v5879
        %v5889 = vld [vmem:[%s7] sm:$0xff]
        %v5890 = vld [vmem:[%s7 + $0x8] sm:$0xff]
        %v5891 = vld [vmem:[%s7 + $0x10] sm:$0xff]
        %v5892 = vld [vmem:[%s7 + $0x18] sm:$0xff]
        %v5893 = vadd.f32 %v5885, %v5889
        %v5894 = vadd.f32 %v5886, %v5890
        %v5895 = vadd.f32 %v5887, %v5891
        %v5896 = vadd.f32 %v5888, %v5892
        %vm5897 = vcmp.ge.f32.partialorder %v5893, 1.0
        %vm5898 = vcmp.ge.f32.partialorder %v5894, 1.0
        %vm5899 = vcmp.ge.f32.partialorder %v5895, 1.0
        %vm5900 = vcmp.ge.f32.partialorder %v5896, 1.0
        %v5901 = vsel %vm5897, 1, 0
        %v5902 = vsel %vm5898, 1, 0
        %v5903 = vsel %vm5899, 1, 0
        %v5904 = vsel %vm5900, 1, 0
        %v5905 = vcvt.s32.f32 %v5901
        %v5906 = vcvt.s32.f32 %v5902
        %v5907 = vcvt.s32.f32 %v5903
        %v5908 = vcvt.s32.f32 %v5904
        %v5909 = vsel %vm5897, 0.0, %v5893
        %v5910 = vsel %vm5898, 0.0, %v5894
        %v5911 = vsel %vm5899, 0.0, %v5895
        %v5912 = vsel %vm5900, 0.0, %v5896
        %5913 = vst [vmem:[#allocation3] sm:$0xff] %v5909
        %5914 = vst [vmem:[#allocation3 + $0x8] sm:$0xff] %v5910
        %5915 = vst [vmem:[#allocation3 + $0x10] sm:$0xff] %v5911
        %5916 = vst [vmem:[#allocation3 + $0x18] sm:$0xff] %v5912
        %s5917 = scalar_lea.vmem %s407, 32 [#allocation6]
        %5918 = vst [vmem:[%s5917] sm:$0xff] %v5905
        %5919 = vst [vmem:[%s5917 + $0x8] sm:$0xff] %v5906
        %5920 = vst [vmem:[%s5917 + $0x10] sm:$0xff] %v5907
        %5921 = vst [vmem:[%s5917 + $0x18] sm:$0xff] %v5908
        %s5922 = sand.u32 %s223, 1
        %s5923 = sand.u32 %s223, 1
        %s5924 = smul.addr %s5923, 64
        %s5925 = scalar_lea.vmem [#allocation6], %s5924
        // Predicated region
        $region118: #{up_forward.1} parent=104 // pred_check
          %p5926 = pneg %p233
        $region119: #{up_forward.1} parent=104 // pred_check_branch
          %5928 = sbr.rel (%p5926) target = $region121
        $region120: #{up_forward.1} parent=104 // pred_region
          %s5929 = smul.u32 2, %s24
          %s5930 = smul.u32 2, %s23
          %s5931 = smul.addr %s5929, 8
          %s5932 = sadd.s32 %s5930, %s5931
          %s5933 = smul.addr %s5932, 8
          %s5934 = scalar_lea.vmem %s8, %s5933
          // Predicated region
          $region122: #{up_forward.1} parent=120 // pred_check
            _
          $region123: #{up_forward.1} parent=120 // pred_check_branch
            %5936 = sbr.rel (0) target = $region125
          $region124: #{up_forward.1} parent=120 // pred_region
            // Predicated region
            $region126: #{up_forward.1} parent=124 // pred_check
              _
            $region127: #{up_forward.1} parent=124 // pred_check_branch
              %5938 = sbr.rel (0) target = $region129
            $region128: #{up_forward.1} parent=124 // pred_region
              loop: start=0, step=1, limit=1
              $region130: #{up_forward.1} parent=128 // loop_pre_header
                _
              $region131: #{up_forward.1} parent=128 // loop_header
                %s5940 = sphi 0, %s5944
                %p5941 = scmp.ge.s32.totalorder %s5940, 1
                %s5945 = sphi %s5925, %s5925
                %s5946 = sphi %s5934, %s5934
              $region132: #{up_forward.1} parent=128 // loop_header_branch
                %5943 = sbr.rel (%p5941) target = $region136
              $region133: #{up_forward.1} parent=128 // loop_body
                %v5947 = vld [vmem:[%s5945] sm:$0xff]
                %5948 = vst [vmem:[%s5946] sm:$0xff] %v5947
                %v5949 = vld [vmem:[%s5945 + $0x8] sm:$0xff]
                %5950 = vst [vmem:[%s5946 + $0x8] sm:$0xff] %v5949
                %v5951 = vld [vmem:[%s5945 + $0x10] sm:$0xff]
                %5952 = vst [vmem:[%s5946 + $0x20] sm:$0xff] %v5951
                %v5953 = vld [vmem:[%s5945 + $0x18] sm:$0xff]
                %5954 = vst [vmem:[%s5946 + $0x28] sm:$0xff] %v5953
                %v5955 = vld [vmem:[%s5945 + $0x20] sm:$0xff]
                %5956 = vst [vmem:[%s5946 + $0x40] sm:$0xff] %v5955
                %v5957 = vld [vmem:[%s5945 + $0x28] sm:$0xff]
                %5958 = vst [vmem:[%s5946 + $0x48] sm:$0xff] %v5957
                %v5959 = vld [vmem:[%s5945 + $0x30] sm:$0xff]
                %5960 = vst [vmem:[%s5946 + $0x60] sm:$0xff] %v5959
                %v5961 = vld [vmem:[%s5945 + $0x38] sm:$0xff]
                %5962 = vst [vmem:[%s5946 + $0x68] sm:$0xff] %v5961
              $region134: #{up_forward.1} parent=128 // loop_footer
                %s5944 = sadd.s32 1, %s5940
              $region135: #{up_forward.1} parent=128 // loop_footer_branch
                %5939 = sbr.rel target = $region131
              $region136: #{up_forward.1} parent=128 // loop_exit
                _
            $region129: #{up_forward.1} parent=124 // pred_fallthru
              _
            // Predicated region
            $region137: #{up_forward.1} parent=124 // pred_check
              _
            $region138: #{up_forward.1} parent=124 // pred_check_branch
              %5964 = sbr.rel target = $region140
            $region139: #{up_forward.1} parent=124 // pred_region
              _
            $region140: #{up_forward.1} parent=124 // pred_fallthru
              _
          $region125: #{up_forward.1} parent=120 // pred_fallthru
            _
          %5965 = vnop
        $region121: #{up_forward.1} parent=104 // pred_fallthru
          _
      $region105: #{up_forward.1} parent=5 // pred_fallthru
        _
      %p5966 = scmp.le.s32.totalorder 2, %s14
      // Predicated region
      $region141: #{up_forward.1} parent=5 // pred_check
        %p5967 = pneg %p5966
      $region142: #{up_forward.1} parent=5 // pred_check_branch
        %5969 = sbr.rel (%p5967) target = $region144
      $region143: #{up_forward.1} parent=5 // pred_region
        %s5970 = ssub.s32 %s14, 2
        // Predicated region
        $region145: #{up_forward.1} parent=143 // pred_check
          %p5971 = pneg %p239
        $region146: #{up_forward.1} parent=143 // pred_check_branch
          %5973 = sbr.rel (%p5971) target = $region148
        $region147: #{up_forward.1} parent=143 // pred_region
          %s5974 = sand.u32 %s224, 1
          %s5975 = sand.u32 %s224, 1
          %s5976 = smul.addr %s5975, 64
          %s5977 = scalar_lea.vmem [#allocation6], %s5976
        $region148: #{up_forward.1} parent=143 // pred_fallthru
          _
      $region144: #{up_forward.1} parent=5 // pred_fallthru
        _
    $region6: #{up_forward.1} parent=1 // loop_footer
      %s18 = sadd.s32 1, %s14
    $region7: #{up_forward.1} parent=1 // loop_footer_branch
      %13 = sbr.rel target = $region3
    $region8: #{up_forward.1} parent=1 // loop_exit
      _

</llo_original>
